<compile_context>
chip_gen: v7x
topology: tpu7x:2x2x1
jax: 0.10.0
libtpu: 0.0.40
codegen_flags: <defaults>
</compile_context>

<pallas_src>
import jax
import jax.numpy as jnp
from jax.experimental import pallas as pl
from jax.experimental.pallas import tpu as pltpu


# Logical (PyTorch) layer dims.  Widths < 128 are zero-padded to 128 lanes in
# glue (FLOP-free: padded weight columns/rows and biases are zero).
LAYER_DIMS = [(3072, 1024), (1024, 512), (512, 256), (256, 128),
              (128, 64), (64, 32), (32, 10)]
LANE = 128
NUM_CLASSES = 10


def _pad_dim(d):
    return max(d, LANE)


PADDED_DIMS = [(_pad_dim(fi), _pad_dim(fo)) for fi, fo in LAYER_DIMS]


def fcnn_kernel(x_ref,
                w1_ref, b1_ref, w2_ref, b2_ref, w3_ref, b3_ref, w4_ref, b4_ref,
                w5_ref, b5_ref, w6_ref, b6_ref, w7_ref, b7_ref,
                out_ref):
    """Fused eval-mode MLP for one batch tile.

    bf16 activations between layers (native MXU), f32 accumulation, f32 bias
    (BN already folded into layers 1-2 in glue), ReLU on layers 1-6.
    """
    def layer(h, w_ref, b_ref):
        acc = jnp.dot(h, w_ref[...], preferred_element_type=jnp.float32)
        acc = acc + b_ref[...]
        acc = jnp.maximum(acc, 0.0)
        return acc.astype(jnp.bfloat16)

    h = x_ref[...]                                  # (TILE_B, 3072) bf16
    h = layer(h, w1_ref, b1_ref)                    # Linear+BN1(folded)+ReLU
    h = layer(h, w2_ref, b2_ref)                    # Linear+BN2(folded)+ReLU
    h = layer(h, w3_ref, b3_ref)                    # Linear+ReLU
    h = layer(h, w4_ref, b4_ref)                    # Linear+ReLU
    h = layer(h, w5_ref, b5_ref)                    # Linear+ReLU (128-lane padded)
    h = layer(h, w6_ref, b6_ref)                    # Linear+ReLU (128-lane padded)
    acc = jnp.dot(h, w7_ref[...], preferred_element_type=jnp.float32) + b7_ref[...]
    out_ref[...] = acc.astype(out_ref.dtype)        # (TILE_B, 128) f32, lane-dense


def _round_up(x, m):
    return (x + m - 1) // m * m


def _device_kind():
    try:
        return jax.devices()[0].device_kind.lower()
    except Exception:
        return ""


def _pick_tile_b(B, kind):
    """Chip-aware batch-tile selection (see perf notes at top of file)."""
    is_v5 = "v5" in kind
    is_v7 = "v7" in kind
    mxu_rows = 128 if is_v5 else 256        # v5e MXU is 128x128; v6e/v7x 256-wide
    if B <= 16:
        return 16                           # bf16 packs 16 rows per vreg
    tile = min(mxu_rows, _round_up(B, 16))
    if is_v7 and _round_up(B, tile) // tile < 2:
        # guarantee >= 2 parallel grid steps so both v7x TensorCores get work
        tile = max(16, min(tile, _round_up(-(-B // 2), 16)))
    return tile


def fcnn_forward(x_nchw, params):
    """x_nchw: (B, 3, 32, 32) float32.  params: dict from init_params."""
    B = x_nchw.shape[0]
    x_flat = x_nchw.reshape(B, -1).astype(jnp.bfloat16)      # nn.Flatten (+ bf16)

    tile_b = _pick_tile_b(B, _device_kind())
    b_pad = _round_up(B, tile_b)
    if b_pad != B:
        x_flat = jnp.pad(x_flat, ((0, b_pad - B), (0, 0)))

    weights = [params[f"w{i}"] for i in range(1, 8)]
    biases = [params[f"b{i}"] for i in range(1, 8)]

    operands = [x_flat]
    for w, b in zip(weights, biases):
        operands += [w, b]

    # x / out are batch-tiled; weights & biases are full-array blocks whose
    # block index never changes with the grid step -> VMEM-resident. They are
    # fetched exactly once, so single-buffer them (Buffered(1)) to save VMEM.
    in_specs = [pl.BlockSpec((tile_b, 3072), lambda i: (i, 0))]
    for w, b in zip(weights, biases):
        in_specs.append(pl.BlockSpec(w.shape, lambda i: (0, 0),
                                     pipeline_mode=pl.Buffered(1)))
        in_specs.append(pl.BlockSpec(b.shape, lambda i: (0, 0),
                                     pipeline_mode=pl.Buffered(1)))

    flops_per_row = 2 * sum(int(w.shape[0]) * int(w.shape[1]) for w in weights)
    weight_bytes = sum(int(w.size) * w.dtype.itemsize for w in weights)
    bias_bytes = sum(int(b.size) * b.dtype.itemsize for b in biases)
    bytes_accessed = (weight_bytes + bias_bytes
                      + int(x_flat.size) * x_flat.dtype.itemsize
                      + b_pad * LANE * 4)

    out = pl.pallas_call(
        fcnn_kernel,
        out_shape=jax.ShapeDtypeStruct((b_pad, LANE), jnp.float32),
        grid_spec=pltpu.PrefetchScalarGridSpec(
            num_scalar_prefetch=0,
            grid=(b_pad // tile_b,),
            in_specs=in_specs,
            out_specs=pl.BlockSpec((tile_b, LANE), lambda i: (i, 0)),
        ),
        compiler_params=pltpu.CompilerParams(
            dimension_semantics=("parallel",),          # batch tiles -> v7x 2 TCs
            vmem_limit_bytes=48 * 1024 * 1024,          # fits v7x 64 MiB/TC VMEM
        ),
        cost_estimate=pl.CostEstimate(
            flops=int(b_pad * flops_per_row),
            transcendentals=0,
            bytes_accessed=int(bytes_accessed),
        ),
    )(*operands)
    return out[:B, :NUM_CLASSES]                        # trim batch pad + lane pad


def init_params(key):
    """Deterministic synthetic parameters matching the PyTorch module shapes.

    Linear weights are stored transposed to (in, out); BatchNorm1d (eval mode,
    default running stats) is folded into layers 1-2; every hidden/output
    width < 128 is zero-padded to 128 lanes (and the next layer's input rows
    likewise), so all kernel tensors are lane-dense.  Weights are cast to
    bf16; biases stay f32.
    """
    keys = jax.random.split(key, 2 * len(LAYER_DIMS) + 4)
    k = iter(keys)

    w_f32, b_f32 = [], []
    for fan_in, fan_out in LAYER_DIMS:
        bound = 1.0 / jnp.sqrt(fan_in)
        w = jax.random.uniform(next(k), (fan_in, fan_out), jnp.float32,
                               minval=-bound, maxval=bound)
        b = jax.random.uniform(next(k), (1, fan_out), jnp.float32,
                               minval=-bound, maxval=bound)
        w_f32.append(w)
        b_f32.append(b)

    # BatchNorm1d(1024) and BatchNorm1d(512), eval mode, folded exactly:
    #   (x @ w + b) * scale + shift == x @ (w * scale) + (b * scale + shift)
    eps = 1e-5
    for idx, feat in [(0, 1024), (1, 512)]:
        gamma = 1.0 + 0.1 * jax.random.normal(next(k), (1, feat), jnp.float32)
        beta = 0.1 * jax.random.normal(next(k), (1, feat), jnp.float32)
        running_mean = jnp.zeros((1, feat), jnp.float32)   # PyTorch default init
        running_var = jnp.ones((1, feat), jnp.float32)     # PyTorch default init
        scale = gamma / jnp.sqrt(running_var + eps)
        shift = beta - running_mean * scale
        w_f32[idx] = w_f32[idx] * scale
        b_f32[idx] = b_f32[idx] * scale + shift

    # Zero-pad every layer to its lane-dense (padded) shape.  Padded output
    # columns have zero weight + zero bias -> ReLU gives exact zeros; padded
    # input rows of the next layer are zero -> no contribution.  Exact.
    for i, ((fi, fo), (pfi, pfo)) in enumerate(zip(LAYER_DIMS, PADDED_DIMS)):
        w_f32[i] = jnp.pad(w_f32[i], ((0, pfi - fi), (0, pfo - fo)))
        b_f32[i] = jnp.pad(b_f32[i], ((0, 0), (0, pfo - fo)))

    params = {}
    for i, (w, b) in enumerate(zip(w_f32, b_f32), start=1):
        params[f"w{i}"] = w.astype(jnp.bfloat16)    # bf16 weights halve HBM bytes
        params[f"b{i}"] = b                          # biases stay f32
    return params


def reference_forward(x_nchw, params):
    """Pure-JAX reference with the same numerics (bf16 acts/weights, f32 acc)."""
    B = x_nchw.shape[0]
    h = x_nchw.reshape(B, -1).astype(jnp.bfloat16)
    out = None
    for i in range(1, 8):
        acc = jnp.dot(h, params[f"w{i}"], preferred_element_type=jnp.float32)
        acc = acc + params[f"b{i}"]
        if i < 7:
            h = jnp.maximum(acc, 0.0).astype(jnp.bfloat16)
        else:
            out = acc
    return out[:, :NUM_CLASSES]


if __name__ == "__main__":
    key = jax.random.PRNGKey(0)
    k_param, k_x = jax.random.split(key)
    params = init_params(k_param)

    B = 8
    x = jax.random.normal(k_x, (B, 3, 32, 32), jnp.float32)   # NCHW like PyTorch

    out = fcnn_forward(x, params)
    out = jax.block_until_ready(out)

    ref = reference_forward(x, params)
    assert out.shape == (B, NUM_CLASSES)
    assert jnp.allclose(out, ref, atol=2e-2, rtol=2e-2), "mismatch vs JAX reference"
    print("KERNEL_OK")
</pallas_src>

<mosaic_0001>
module attributes {stable_mosaic.version = 11 : i64} {
  func.func @fcnn_kernel(%arg0: i32, %arg1: memref<16x3072xbf16, #tpu.memory_space<vmem>>, %arg2: memref<3072x1024xbf16, #tpu.memory_space<vmem>>, %arg3: memref<1x1024xf32, #tpu.memory_space<vmem>>, %arg4: memref<1024x512xbf16, #tpu.memory_space<vmem>>, %arg5: memref<1x512xf32, #tpu.memory_space<vmem>>, %arg6: memref<512x256xbf16, #tpu.memory_space<vmem>>, %arg7: memref<1x256xf32, #tpu.memory_space<vmem>>, %arg8: memref<256x128xbf16, #tpu.memory_space<vmem>>, %arg9: memref<1x128xf32, #tpu.memory_space<vmem>>, %arg10: memref<128x128xbf16, #tpu.memory_space<vmem>>, %arg11: memref<1x128xf32, #tpu.memory_space<vmem>>, %arg12: memref<128x128xbf16, #tpu.memory_space<vmem>>, %arg13: memref<1x128xf32, #tpu.memory_space<vmem>>, %arg14: memref<128x128xbf16, #tpu.memory_space<vmem>>, %arg15: memref<1x128xf32, #tpu.memory_space<vmem>>, %arg16: memref<16x128xf32, #tpu.memory_space<vmem>>) attributes {dimension_semantics = [#tpu.dimension_semantics<parallel>], iteration_bounds = array<i64: 1>, scalar_prefetch = 0 : i64, scratch_operands = 0 : i64, tpu.core_type = #tpu.core_type<tc>, window_params = [{transform_indices = @transform_0, window_bounds = array<i64: 16, 3072>}, {pipeline_mode = #tpu.pipeline_mode<synchronous>, transform_indices = @transform_1, window_bounds = array<i64: 3072, 1024>}, {pipeline_mode = #tpu.pipeline_mode<synchronous>, transform_indices = @transform_2, window_bounds = array<i64: 1, 1024>}, {pipeline_mode = #tpu.pipeline_mode<synchronous>, transform_indices = @transform_3, window_bounds = array<i64: 1024, 512>}, {pipeline_mode = #tpu.pipeline_mode<synchronous>, transform_indices = @transform_4, window_bounds = array<i64: 1, 512>}, {pipeline_mode = #tpu.pipeline_mode<synchronous>, transform_indices = @transform_5, window_bounds = array<i64: 512, 256>}, {pipeline_mode = #tpu.pipeline_mode<synchronous>, transform_indices = @transform_6, window_bounds = array<i64: 1, 256>}, {pipeline_mode = #tpu.pipeline_mode<synchronous>, transform_indices = @transform_7, window_bounds = array<i64: 256, 128>}, {pipeline_mode = #tpu.pipeline_mode<synchronous>, transform_indices = @transform_8, window_bounds = array<i64: 1, 128>}, {pipeline_mode = #tpu.pipeline_mode<synchronous>, transform_indices = @transform_9, window_bounds = array<i64: 128, 128>}, {pipeline_mode = #tpu.pipeline_mode<synchronous>, transform_indices = @transform_10, window_bounds = array<i64: 1, 128>}, {pipeline_mode = #tpu.pipeline_mode<synchronous>, transform_indices = @transform_11, window_bounds = array<i64: 128, 128>}, {pipeline_mode = #tpu.pipeline_mode<synchronous>, transform_indices = @transform_12, window_bounds = array<i64: 1, 128>}, {pipeline_mode = #tpu.pipeline_mode<synchronous>, transform_indices = @transform_13, window_bounds = array<i64: 128, 128>}, {pipeline_mode = #tpu.pipeline_mode<synchronous>, transform_indices = @transform_14, window_bounds = array<i64: 1, 128>}, {transform_indices = @transform_15, window_bounds = array<i64: 16, 128>}]} {
    %c0 = arith.constant 0 : index
    %c0_0 = arith.constant 0 : index
    %0 = vector.load %arg1[%c0, %c0_0] : memref<16x3072xbf16, #tpu.memory_space<vmem>>, vector<16x3072xbf16>
    %c0_1 = arith.constant 0 : index
    %c0_2 = arith.constant 0 : index
    %1 = vector.load %arg2[%c0_1, %c0_2] : memref<3072x1024xbf16, #tpu.memory_space<vmem>>, vector<3072x1024xbf16>
    %cst = arith.constant dense<0.000000e+00> : vector<16x1024xf32>
    %2 = tpu.matmul %0, %1, %cst {dimension_numbers = #tpu.dot_dimension_numbers<[1], [0], [0], [1], [0, 0, 1, 1], [], []>} : vector<16x3072xbf16>, vector<3072x1024xbf16>, vector<16x1024xf32> -> vector<16x1024xf32>
    %c0_3 = arith.constant 0 : index
    %c0_4 = arith.constant 0 : index
    %3 = vector.load %arg3[%c0_3, %c0_4] : memref<1x1024xf32, #tpu.memory_space<vmem>>, vector<1x1024xf32>
    %4 = vector.broadcast %3 : vector<1x1024xf32> to vector<16x1024xf32>
    %5 = arith.addf %2, %4 : vector<16x1024xf32>
    %cst_5 = arith.constant 0.000000e+00 : f32
    %6 = vector.broadcast %cst_5 : f32 to vector<16x1024xf32>
    %7 = arith.maximumf %5, %6 : vector<16x1024xf32>
    %8 = arith.truncf %7 : vector<16x1024xf32> to vector<16x1024xbf16>
    %c0_6 = arith.constant 0 : index
    %c0_7 = arith.constant 0 : index
    %9 = vector.load %arg4[%c0_6, %c0_7] : memref<1024x512xbf16, #tpu.memory_space<vmem>>, vector<1024x512xbf16>
    %cst_8 = arith.constant dense<0.000000e+00> : vector<16x512xf32>
    %10 = tpu.matmul %8, %9, %cst_8 {dimension_numbers = #tpu.dot_dimension_numbers<[1], [0], [0], [1], [0, 0, 1, 1], [], []>} : vector<16x1024xbf16>, vector<1024x512xbf16>, vector<16x512xf32> -> vector<16x512xf32>
    %c0_9 = arith.constant 0 : index
    %c0_10 = arith.constant 0 : index
    %11 = vector.load %arg5[%c0_9, %c0_10] : memref<1x512xf32, #tpu.memory_space<vmem>>, vector<1x512xf32>
    %12 = vector.broadcast %11 : vector<1x512xf32> to vector<16x512xf32>
    %13 = arith.addf %10, %12 : vector<16x512xf32>
    %cst_11 = arith.constant 0.000000e+00 : f32
    %14 = vector.broadcast %cst_11 : f32 to vector<16x512xf32>
    %15 = arith.maximumf %13, %14 : vector<16x512xf32>
    %16 = arith.truncf %15 : vector<16x512xf32> to vector<16x512xbf16>
    %c0_12 = arith.constant 0 : index
    %c0_13 = arith.constant 0 : index
    %17 = vector.load %arg6[%c0_12, %c0_13] : memref<512x256xbf16, #tpu.memory_space<vmem>>, vector<512x256xbf16>
    %cst_14 = arith.constant dense<0.000000e+00> : vector<16x256xf32>
    %18 = tpu.matmul %16, %17, %cst_14 {dimension_numbers = #tpu.dot_dimension_numbers<[1], [0], [0], [1], [0, 0, 1, 1], [], []>} : vector<16x512xbf16>, vector<512x256xbf16>, vector<16x256xf32> -> vector<16x256xf32>
    %c0_15 = arith.constant 0 : index
    %c0_16 = arith.constant 0 : index
    %19 = vector.load %arg7[%c0_15, %c0_16] : memref<1x256xf32, #tpu.memory_space<vmem>>, vector<1x256xf32>
    %20 = vector.broadcast %19 : vector<1x256xf32> to vector<16x256xf32>
    %21 = arith.addf %18, %20 : vector<16x256xf32>
    %cst_17 = arith.constant 0.000000e+00 : f32
    %22 = vector.broadcast %cst_17 : f32 to vector<16x256xf32>
    %23 = arith.maximumf %21, %22 : vector<16x256xf32>
    %24 = arith.truncf %23 : vector<16x256xf32> to vector<16x256xbf16>
    %c0_18 = arith.constant 0 : index
    %c0_19 = arith.constant 0 : index
    %25 = vector.load %arg8[%c0_18, %c0_19] : memref<256x128xbf16, #tpu.memory_space<vmem>>, vector<256x128xbf16>
    %cst_20 = arith.constant dense<0.000000e+00> : vector<16x128xf32>
    %26 = tpu.matmul %24, %25, %cst_20 {dimension_numbers = #tpu.dot_dimension_numbers<[1], [0], [0], [1], [0, 0, 1, 1], [], []>} : vector<16x256xbf16>, vector<256x128xbf16>, vector<16x128xf32> -> vector<16x128xf32>
    %c0_21 = arith.constant 0 : index
    %c0_22 = arith.constant 0 : index
    %27 = vector.load %arg9[%c0_21, %c0_22] : memref<1x128xf32, #tpu.memory_space<vmem>>, vector<1x128xf32>
    %28 = vector.broadcast %27 : vector<1x128xf32> to vector<16x128xf32>
    %29 = arith.addf %26, %28 : vector<16x128xf32>
    %cst_23 = arith.constant 0.000000e+00 : f32
    %30 = vector.broadcast %cst_23 : f32 to vector<16x128xf32>
    %31 = arith.maximumf %29, %30 : vector<16x128xf32>
    %32 = arith.truncf %31 : vector<16x128xf32> to vector<16x128xbf16>
    %c0_24 = arith.constant 0 : index
    %c0_25 = arith.constant 0 : index
    %33 = vector.load %arg10[%c0_24, %c0_25] : memref<128x128xbf16, #tpu.memory_space<vmem>>, vector<128x128xbf16>
    %cst_26 = arith.constant dense<0.000000e+00> : vector<16x128xf32>
    %34 = tpu.matmul %32, %33, %cst_26 {dimension_numbers = #tpu.dot_dimension_numbers<[1], [0], [0], [1], [0, 0, 1, 1], [], []>} : vector<16x128xbf16>, vector<128x128xbf16>, vector<16x128xf32> -> vector<16x128xf32>
    %c0_27 = arith.constant 0 : index
    %c0_28 = arith.constant 0 : index
    %35 = vector.load %arg11[%c0_27, %c0_28] : memref<1x128xf32, #tpu.memory_space<vmem>>, vector<1x128xf32>
    %36 = vector.broadcast %35 : vector<1x128xf32> to vector<16x128xf32>
    %37 = arith.addf %34, %36 : vector<16x128xf32>
    %cst_29 = arith.constant 0.000000e+00 : f32
    %38 = vector.broadcast %cst_29 : f32 to vector<16x128xf32>
    %39 = arith.maximumf %37, %38 : vector<16x128xf32>
    %40 = arith.truncf %39 : vector<16x128xf32> to vector<16x128xbf16>
    %c0_30 = arith.constant 0 : index
    %c0_31 = arith.constant 0 : index
    %41 = vector.load %arg12[%c0_30, %c0_31] : memref<128x128xbf16, #tpu.memory_space<vmem>>, vector<128x128xbf16>
    %cst_32 = arith.constant dense<0.000000e+00> : vector<16x128xf32>
    %42 = tpu.matmul %40, %41, %cst_32 {dimension_numbers = #tpu.dot_dimension_numbers<[1], [0], [0], [1], [0, 0, 1, 1], [], []>} : vector<16x128xbf16>, vector<128x128xbf16>, vector<16x128xf32> -> vector<16x128xf32>
    %c0_33 = arith.constant 0 : index
    %c0_34 = arith.constant 0 : index
    %43 = vector.load %arg13[%c0_33, %c0_34] : memref<1x128xf32, #tpu.memory_space<vmem>>, vector<1x128xf32>
    %44 = vector.broadcast %43 : vector<1x128xf32> to vector<16x128xf32>
    %45 = arith.addf %42, %44 : vector<16x128xf32>
    %cst_35 = arith.constant 0.000000e+00 : f32
    %46 = vector.broadcast %cst_35 : f32 to vector<16x128xf32>
    %47 = arith.maximumf %45, %46 : vector<16x128xf32>
    %48 = arith.truncf %47 : vector<16x128xf32> to vector<16x128xbf16>
    %c0_36 = arith.constant 0 : index
    %c0_37 = arith.constant 0 : index
    %49 = vector.load %arg14[%c0_36, %c0_37] : memref<128x128xbf16, #tpu.memory_space<vmem>>, vector<128x128xbf16>
    %cst_38 = arith.constant dense<0.000000e+00> : vector<16x128xf32>
    %50 = tpu.matmul %48, %49, %cst_38 {dimension_numbers = #tpu.dot_dimension_numbers<[1], [0], [0], [1], [0, 0, 1, 1], [], []>} : vector<16x128xbf16>, vector<128x128xbf16>, vector<16x128xf32> -> vector<16x128xf32>
    %c0_39 = arith.constant 0 : index
    %c0_40 = arith.constant 0 : index
    %51 = vector.load %arg15[%c0_39, %c0_40] : memref<1x128xf32, #tpu.memory_space<vmem>>, vector<1x128xf32>
    %52 = vector.broadcast %51 : vector<1x128xf32> to vector<16x128xf32>
    %53 = arith.addf %50, %52 : vector<16x128xf32>
    %c0_41 = arith.constant 0 : index
    %c0_42 = arith.constant 0 : index
    %54 = vector.load %arg16[%c0_41, %c0_42] : memref<16x128xf32, #tpu.memory_space<vmem>>, vector<16x128xf32>
    tpu.vector_store %arg16[%c0_41, %c0_42], %53 {strides = array<i32>} : memref<16x128xf32, #tpu.memory_space<vmem>>, vector<16x128xf32>,
    return
  }
  func.func @transform_0(%arg0: i32) -> (i32, i32) {
    %c0_i32 = arith.constant 0 : i32
    %c0_i32_0 = arith.constant 0 : i32
    return %arg0, %c0_i32 : i32, i32
  }
  func.func @transform_1(%arg0: i32) -> (i32, i32) {
    %c0_i32 = arith.constant 0 : i32
    %c0_i32_0 = arith.constant 0 : i32
    %c0_i32_1 = arith.constant 0 : i32
    return %c0_i32, %c0_i32_0 : i32, i32
  }
  func.func @transform_2(%arg0: i32) -> (i32, i32) {
    %c0_i32 = arith.constant 0 : i32
    %c0_i32_0 = arith.constant 0 : i32
    %c0_i32_1 = arith.constant 0 : i32
    return %c0_i32, %c0_i32_0 : i32, i32
  }
  func.func @transform_3(%arg0: i32) -> (i32, i32) {
    %c0_i32 = arith.constant 0 : i32
    %c0_i32_0 = arith.constant 0 : i32
    %c0_i32_1 = arith.constant 0 : i32
    return %c0_i32, %c0_i32_0 : i32, i32
  }
  func.func @transform_4(%arg0: i32) -> (i32, i32) {
    %c0_i32 = arith.constant 0 : i32
    %c0_i32_0 = arith.constant 0 : i32
    %c0_i32_1 = arith.constant 0 : i32
    return %c0_i32, %c0_i32_0 : i32, i32
  }
  func.func @transform_5(%arg0: i32) -> (i32, i32) {
    %c0_i32 = arith.constant 0 : i32
    %c0_i32_0 = arith.constant 0 : i32
    %c0_i32_1 = arith.constant 0 : i32
    return %c0_i32, %c0_i32_0 : i32, i32
  }
  func.func @transform_6(%arg0: i32) -> (i32, i32) {
    %c0_i32 = arith.constant 0 : i32
    %c0_i32_0 = arith.constant 0 : i32
    %c0_i32_1 = arith.constant 0 : i32
    return %c0_i32, %c0_i32_0 : i32, i32
  }
  func.func @transform_7(%arg0: i32) -> (i32, i32) {
    %c0_i32 = arith.constant 0 : i32
    %c0_i32_0 = arith.constant 0 : i32
    %c0_i32_1 = arith.constant 0 : i32
    return %c0_i32, %c0_i32_0 : i32, i32
  }
  func.func @transform_8(%arg0: i32) -> (i32, i32) {
    %c0_i32 = arith.constant 0 : i32
    %c0_i32_0 = arith.constant 0 : i32
    %c0_i32_1 = arith.constant 0 : i32
    return %c0_i32, %c0_i32_0 : i32, i32
  }
  func.func @transform_9(%arg0: i32) -> (i32, i32) {
    %c0_i32 = arith.constant 0 : i32
    %c0_i32_0 = arith.constant 0 : i32
    %c0_i32_1 = arith.constant 0 : i32
    return %c0_i32, %c0_i32_0 : i32, i32
  }
  func.func @transform_10(%arg0: i32) -> (i32, i32) {
    %c0_i32 = arith.constant 0 : i32
    %c0_i32_0 = arith.constant 0 : i32
    %c0_i32_1 = arith.constant 0 : i32
    return %c0_i32, %c0_i32_0 : i32, i32
  }
  func.func @transform_11(%arg0: i32) -> (i32, i32) {
    %c0_i32 = arith.constant 0 : i32
    %c0_i32_0 = arith.constant 0 : i32
    %c0_i32_1 = arith.constant 0 : i32
    return %c0_i32, %c0_i32_0 : i32, i32
  }
  func.func @transform_12(%arg0: i32) -> (i32, i32) {
    %c0_i32 = arith.constant 0 : i32
    %c0_i32_0 = arith.constant 0 : i32
    %c0_i32_1 = arith.constant 0 : i32
    return %c0_i32, %c0_i32_0 : i32, i32
  }
  func.func @transform_13(%arg0: i32) -> (i32, i32) {
    %c0_i32 = arith.constant 0 : i32
    %c0_i32_0 = arith.constant 0 : i32
    %c0_i32_1 = arith.constant 0 : i32
    return %c0_i32, %c0_i32_0 : i32, i32
  }
  func.func @transform_14(%arg0: i32) -> (i32, i32) {
    %c0_i32 = arith.constant 0 : i32
    %c0_i32_0 = arith.constant 0 : i32
    %c0_i32_1 = arith.constant 0 : i32
    return %c0_i32, %c0_i32_0 : i32, i32
  }
  func.func @transform_15(%arg0: i32) -> (i32, i32) {
    %c0_i32 = arith.constant 0 : i32
    %c0_i32_0 = arith.constant 0 : i32
    return %arg0, %c0_i32 : i32, i32
  }
}

</mosaic_0001>

<llo_original>
// kernel: tpu_custom_call.1
$region0: #{tpu_custom_call.1}
  #allocation0 [shape = 'u32[]', space=smem, size = 0x4, offset = 0x4, fixed_abs, tag = 'smem constant byte address 0x4 - core index']
  #allocation1 [shape = 'u32[144,128]{1,0:T(1,128)}', space=vmem, size = 0x12000, scoped, tag = 'internal scratch']
  %s0 = inlined_call_operand.hbm [shape: bf16[16,3072], index: 0, kind: input, shape index: {}]
  %s1 = inlined_call_operand.hbm [shape: bf16[3072,1024], index: 1, kind: input, shape index: {}]
  %s2 = inlined_call_operand.hbm [shape: f32[1,1024], index: 2, kind: input, shape index: {}]
  %s3 = inlined_call_operand.hbm [shape: bf16[1024,512], index: 3, kind: input, shape index: {}]
  %s4 = inlined_call_operand.hbm [shape: f32[1,512], index: 4, kind: input, shape index: {}]
  %s5 = inlined_call_operand.hbm [shape: bf16[512,256], index: 5, kind: input, shape index: {}]
  %s6 = inlined_call_operand.hbm [shape: f32[1,256], index: 6, kind: input, shape index: {}]
  %s7 = inlined_call_operand.hbm [shape: bf16[256,128], index: 7, kind: input, shape index: {}]
  %s8 = inlined_call_operand.hbm [shape: f32[1,128], index: 8, kind: input, shape index: {}]
  %s9 = inlined_call_operand.hbm [shape: bf16[128,128], index: 9, kind: input, shape index: {}]
  %s10 = inlined_call_operand.hbm [shape: f32[1,128], index: 10, kind: input, shape index: {}]
  %s11 = inlined_call_operand.hbm [shape: bf16[128,128], index: 11, kind: input, shape index: {}]
  %s12 = inlined_call_operand.hbm [shape: f32[1,128], index: 12, kind: input, shape index: {}]
  %s13 = inlined_call_operand.hbm [shape: bf16[128,128], index: 13, kind: input, shape index: {}]
  %s14 = inlined_call_operand.hbm [shape: f32[1,128], index: 14, kind: input, shape index: {}]
  %s15 = inlined_call_operand.hbm [shape: f32[16,128], index: 15, kind: output, shape index: {}]
  %s16 = sld [smem:[#allocation0]]
  $region130: #{tpu_custom_call.1} parent=0
    _
  %s18 = ssub.s32 1, %s16
  %s19 = scalar_select 0, %s18, %s16
  $region1: #{tpu_custom_call.1} parent=0
    #allocation2 [shape = 'u8[98304]{0}', space=vmem, size = 0x18000, scoped, tag = 'input window, operand 0, single buffered']
    #allocation3 [shape = 's32[1]{0}', space=sflag, size = 0x4, scoped, tag = 'scoped memory for tpu_custom_call.1']
    #allocation4 [shape = 's32[1]{0}', space=sflag, size = 0x4, scoped, tag = 'scoped memory for tpu_custom_call.1']
    #allocation5 [shape = 'u8[6291456]{0}', space=vmem, size = 0x600000, scoped, tag = 'input window, operand 1, single buffered']
    #allocation6 [shape = 's32[1]{0}', space=sflag, size = 0x4, scoped, tag = 'scoped memory for tpu_custom_call.1']
    #allocation7 [shape = 'u8[4096]{0}', space=vmem, size = 0x1000, scoped, tag = 'input window, operand 2, single buffered']
    #allocation8 [shape = 'u8[1048576]{0}', space=vmem, size = 0x100000, scoped, tag = 'input window, operand 3, single buffered']
    #allocation9 [shape = 's32[1]{0}', space=sflag, size = 0x4, scoped, tag = 'scoped memory for tpu_custom_call.1']
    #allocation10 [shape = 'u8[2048]{0}', space=vmem, size = 0x800, scoped, tag = 'input window, operand 4, single buffered']
    #allocation11 [shape = 'u8[262144]{0}', space=vmem, size = 0x40000, scoped, tag = 'input window, operand 5, single buffered']
    #allocation12 [shape = 's32[1]{0}', space=sflag, size = 0x4, scoped, tag = 'scoped memory for tpu_custom_call.1']
    #allocation13 [shape = 'u8[1024]{0}', space=vmem, size = 0x400, scoped, tag = 'input window, operand 6, single buffered']
    #allocation14 [shape = 'u8[65536]{0}', space=vmem, size = 0x10000, scoped, tag = 'input window, operand 7, single buffered']
    #allocation15 [shape = 's32[1]{0}', space=sflag, size = 0x4, scoped, tag = 'scoped memory for tpu_custom_call.1']
    #allocation16 [shape = 'u8[512]{0}', space=vmem, size = 0x400, scoped, tag = 'input window, operand 8, single buffered']
    #allocation17 [shape = 'u8[32768]{0}', space=vmem, size = 0x8000, scoped, tag = 'input window, operand 9, single buffered']
    #allocation18 [shape = 's32[1]{0}', space=sflag, size = 0x4, scoped, tag = 'scoped memory for tpu_custom_call.1']
    #allocation19 [shape = 'u8[512]{0}', space=vmem, size = 0x400, scoped, tag = 'input window, operand 10, single buffered']
    #allocation20 [shape = 'u8[32768]{0}', space=vmem, size = 0x8000, scoped, tag = 'input window, operand 11, single buffered']
    #allocation21 [shape = 's32[1]{0}', space=sflag, size = 0x4, scoped, tag = 'scoped memory for tpu_custom_call.1']
    #allocation22 [shape = 'u8[512]{0}', space=vmem, size = 0x400, scoped, tag = 'input window, operand 12, single buffered']
    #allocation23 [shape = 'u8[32768]{0}', space=vmem, size = 0x8000, scoped, tag = 'input window, operand 13, single buffered']
    #allocation24 [shape = 's32[1]{0}', space=sflag, size = 0x4, scoped, tag = 'scoped memory for tpu_custom_call.1']
    #allocation25 [shape = 'u8[512]{0}', space=vmem, size = 0x400, scoped, tag = 'input window, operand 14, single buffered']
    #allocation26 [shape = 'u8[8192]{0}', space=vmem, size = 0x2000, scoped, tag = 'output window, operand 0, single buffered']
    %20 = vsyncpa [#allocation3], 0
    %21 = vsyncpa [#allocation6], 0
    %22 = vsyncpa [#allocation9], 0
    %23 = vsyncpa [#allocation12], 0
    %24 = vsyncpa [#allocation15], 0
    %25 = vsyncpa [#allocation18], 0
    %26 = vsyncpa [#allocation21], 0
    %27 = vsyncpa [#allocation24], 0
    %28 = vsyncpa [#allocation4], 0
    // Predicated region
    $region2: #{tpu_custom_call.1} parent=1 // pred_check
      _
    $region3: #{tpu_custom_call.1} parent=1 // pred_check_branch
      %30 = sbr.rel (0) target = $region5
    $region4: #{tpu_custom_call.1} parent=1 // pred_region
      %s32 = ssub.s32 3072, 3072
      %33 = vsyncadd [#allocation3], %s32
      %s34 = sshll.u32 [#allocation2], 4
      %s35 = int_to_ptr.vmem [resolvable:$true] %s34
      %40 = dma.hbm_to_vmem [thread:$0]  %s0, 3072, %s35, [#allocation3], 1536, 1536, 96
    $region5: #{tpu_custom_call.1} parent=1 // pred_fallthru
      _
    // Predicated region
    $region6: #{tpu_custom_call.1} parent=1 // pred_check
      _
    $region7: #{tpu_custom_call.1} parent=1 // pred_check_branch
      %42 = sbr.rel (0) target = $region9
    $region8: #{tpu_custom_call.1} parent=1 // pred_region
      %s44 = ssub.s32 196608, 196608
      %45 = vsyncadd [#allocation6], %s44
      %s46 = sshll.u32 [#allocation5], 4
      %s47 = int_to_ptr.vmem [resolvable:$true] %s46
      %52 = dma.hbm_to_vmem [thread:$0]  %s1, 196608, %s47, [#allocation6], 512, 512, 32
    $region9: #{tpu_custom_call.1} parent=1 // pred_fallthru
      _
    // Predicated region
    $region10: #{tpu_custom_call.1} parent=1 // pred_check
      _
    $region11: #{tpu_custom_call.1} parent=1 // pred_check_branch
      %54 = sbr.rel (0) target = $region13
    $region12: #{tpu_custom_call.1} parent=1 // pred_region
      %s56 = ssub.s32 128, 128
      %57 = vsyncadd [#allocation6], %s56
      %s59 = sshll.u32 [#allocation7], 4
      %s60 = int_to_ptr.vmem [resolvable:$true] %s59
      %62 = dma.hbm_to_vmem [thread:$0]  %s2, 128, %s60, [#allocation6]
    $region13: #{tpu_custom_call.1} parent=1 // pred_fallthru
      _
    // Predicated region
    $region14: #{tpu_custom_call.1} parent=1 // pred_check
      _
    $region15: #{tpu_custom_call.1} parent=1 // pred_check_branch
      %64 = sbr.rel (0) target = $region17
    $region16: #{tpu_custom_call.1} parent=1 // pred_region
      %s66 = ssub.s32 32768, 32768
      %67 = vsyncadd [#allocation9], %s66
      %s68 = sshll.u32 [#allocation8], 4
      %s69 = int_to_ptr.vmem [resolvable:$true] %s68
      %74 = dma.hbm_to_vmem [thread:$0]  %s3, 32768, %s69, [#allocation9], 256, 256, 16
    $region17: #{tpu_custom_call.1} parent=1 // pred_fallthru
      _
    // Predicated region
    $region18: #{tpu_custom_call.1} parent=1 // pred_check
      _
    $region19: #{tpu_custom_call.1} parent=1 // pred_check_branch
      %76 = sbr.rel (0) target = $region21
    $region20: #{tpu_custom_call.1} parent=1 // pred_region
      %s78 = ssub.s32 64, 64
      %79 = vsyncadd [#allocation9], %s78
      %s81 = sshll.u32 [#allocation10], 4
      %s82 = int_to_ptr.vmem [resolvable:$true] %s81
      %84 = dma.hbm_to_vmem [thread:$0]  %s4, 64, %s82, [#allocation9]
    $region21: #{tpu_custom_call.1} parent=1 // pred_fallthru
      _
    // Predicated region
    $region22: #{tpu_custom_call.1} parent=1 // pred_check
      _
    $region23: #{tpu_custom_call.1} parent=1 // pred_check_branch
      %86 = sbr.rel (0) target = $region25
    $region24: #{tpu_custom_call.1} parent=1 // pred_region
      %s88 = ssub.s32 8192, 8192
      %89 = vsyncadd [#allocation12], %s88
      %s90 = sshll.u32 [#allocation11], 4
      %s91 = int_to_ptr.vmem [resolvable:$true] %s90
      %96 = dma.hbm_to_vmem [thread:$0]  %s5, 8192, %s91, [#allocation12], 128, 128, 8
    $region25: #{tpu_custom_call.1} parent=1 // pred_fallthru
      _
    // Predicated region
    $region26: #{tpu_custom_call.1} parent=1 // pred_check
      _
    $region27: #{tpu_custom_call.1} parent=1 // pred_check_branch
      %98 = sbr.rel (0) target = $region29
    $region28: #{tpu_custom_call.1} parent=1 // pred_region
      %s100 = ssub.s32 32, 32
      %101 = vsyncadd [#allocation12], %s100
      %s103 = sshll.u32 [#allocation13], 4
      %s104 = int_to_ptr.vmem [resolvable:$true] %s103
      %106 = dma.hbm_to_vmem [thread:$0]  %s6, 32, %s104, [#allocation12]
    $region29: #{tpu_custom_call.1} parent=1 // pred_fallthru
      _
    // Predicated region
    $region30: #{tpu_custom_call.1} parent=1 // pred_check
      _
    $region31: #{tpu_custom_call.1} parent=1 // pred_check_branch
      %108 = sbr.rel (0) target = $region33
    $region32: #{tpu_custom_call.1} parent=1 // pred_region
      %s110 = ssub.s32 2048, 2048
      %111 = vsyncadd [#allocation15], %s110
      %s112 = sshll.u32 [#allocation14], 4
      %s113 = int_to_ptr.vmem [resolvable:$true] %s112
      %118 = dma.hbm_to_vmem [thread:$0]  %s7, 2048, %s113, [#allocation15], 64, 64, 4
    $region33: #{tpu_custom_call.1} parent=1 // pred_fallthru
      _
    // Predicated region
    $region34: #{tpu_custom_call.1} parent=1 // pred_check
      _
    $region35: #{tpu_custom_call.1} parent=1 // pred_check_branch
      %120 = sbr.rel (0) target = $region37
    $region36: #{tpu_custom_call.1} parent=1 // pred_region
      %s122 = ssub.s32 16, 16
      %123 = vsyncadd [#allocation15], %s122
      %s125 = sshll.u32 [#allocation16], 4
      %s126 = int_to_ptr.vmem [resolvable:$true] %s125
      %128 = dma.hbm_to_vmem [thread:$0]  %s8, 16, %s126, [#allocation15]
    $region37: #{tpu_custom_call.1} parent=1 // pred_fallthru
      _
    // Predicated region
    $region38: #{tpu_custom_call.1} parent=1 // pred_check
      _
    $region39: #{tpu_custom_call.1} parent=1 // pred_check_branch
      %130 = sbr.rel (0) target = $region41
    $region40: #{tpu_custom_call.1} parent=1 // pred_region
      %s132 = ssub.s32 1024, 1024
      %133 = vsyncadd [#allocation18], %s132
      %s134 = sshll.u32 [#allocation17], 4
      %s135 = int_to_ptr.vmem [resolvable:$true] %s134
      %140 = dma.hbm_to_vmem [thread:$0]  %s9, 1024, %s135, [#allocation18], 64, 64, 4
    $region41: #{tpu_custom_call.1} parent=1 // pred_fallthru
      _
    // Predicated region
    $region42: #{tpu_custom_call.1} parent=1 // pred_check
      _
    $region43: #{tpu_custom_call.1} parent=1 // pred_check_branch
      %142 = sbr.rel (0) target = $region45
    $region44: #{tpu_custom_call.1} parent=1 // pred_region
      %s144 = ssub.s32 16, 16
      %145 = vsyncadd [#allocation18], %s144
      %s147 = sshll.u32 [#allocation19], 4
      %s148 = int_to_ptr.vmem [resolvable:$true] %s147
      %150 = dma.hbm_to_vmem [thread:$0]  %s10, 16, %s148, [#allocation18]
    $region45: #{tpu_custom_call.1} parent=1 // pred_fallthru
      _
    // Predicated region
    $region46: #{tpu_custom_call.1} parent=1 // pred_check
      _
    $region47: #{tpu_custom_call.1} parent=1 // pred_check_branch
      %152 = sbr.rel (0) target = $region49
    $region48: #{tpu_custom_call.1} parent=1 // pred_region
      %s154 = ssub.s32 1024, 1024
      %155 = vsyncadd [#allocation21], %s154
      %s156 = sshll.u32 [#allocation20], 4
      %s157 = int_to_ptr.vmem [resolvable:$true] %s156
      %162 = dma.hbm_to_vmem [thread:$0]  %s11, 1024, %s157, [#allocation21], 64, 64, 4
    $region49: #{tpu_custom_call.1} parent=1 // pred_fallthru
      _
    // Predicated region
    $region50: #{tpu_custom_call.1} parent=1 // pred_check
      _
    $region51: #{tpu_custom_call.1} parent=1 // pred_check_branch
      %164 = sbr.rel (0) target = $region53
    $region52: #{tpu_custom_call.1} parent=1 // pred_region
      %s166 = ssub.s32 16, 16
      %167 = vsyncadd [#allocation21], %s166
      %s169 = sshll.u32 [#allocation22], 4
      %s170 = int_to_ptr.vmem [resolvable:$true] %s169
      %172 = dma.hbm_to_vmem [thread:$0]  %s12, 16, %s170, [#allocation21]
    $region53: #{tpu_custom_call.1} parent=1 // pred_fallthru
      _
    // Predicated region
    $region54: #{tpu_custom_call.1} parent=1 // pred_check
      _
    $region55: #{tpu_custom_call.1} parent=1 // pred_check_branch
      %174 = sbr.rel (0) target = $region57
    $region56: #{tpu_custom_call.1} parent=1 // pred_region
      %s176 = ssub.s32 1024, 1024
      %177 = vsyncadd [#allocation24], %s176
      %s178 = sshll.u32 [#allocation23], 4
      %s179 = int_to_ptr.vmem [resolvable:$true] %s178
      %184 = dma.hbm_to_vmem [thread:$0]  %s13, 1024, %s179, [#allocation24], 64, 64, 4
    $region57: #{tpu_custom_call.1} parent=1 // pred_fallthru
      _
    // Predicated region
    $region58: #{tpu_custom_call.1} parent=1 // pred_check
      _
    $region59: #{tpu_custom_call.1} parent=1 // pred_check_branch
      %186 = sbr.rel (0) target = $region61
    $region60: #{tpu_custom_call.1} parent=1 // pred_region
      %s188 = ssub.s32 16, 16
      %189 = vsyncadd [#allocation24], %s188
      %s191 = sshll.u32 [#allocation25], 4
      %s192 = int_to_ptr.vmem [resolvable:$true] %s191
      %194 = dma.hbm_to_vmem [thread:$0]  %s14, 16, %s192, [#allocation24]
    $region61: #{tpu_custom_call.1} parent=1 // pred_fallthru
      _
    // Predicated region
    $region62: #{tpu_custom_call.1} parent=1 // pred_check
      _
    $region63: #{tpu_custom_call.1} parent=1 // pred_check_branch
      %196 = sbr.rel (0) target = $region65
    $region64: #{tpu_custom_call.1} parent=1 // pred_region
      %197 = dma.done [#allocation3], 3072
    $region65: #{tpu_custom_call.1} parent=1 // pred_fallthru
      _
    // Predicated region
    $region66: #{tpu_custom_call.1} parent=1 // pred_check
      _
    $region67: #{tpu_custom_call.1} parent=1 // pred_check_branch
      %199 = sbr.rel (0) target = $region69
    $region68: #{tpu_custom_call.1} parent=1 // pred_region
      %200 = dma.done [#allocation6], 196608
    $region69: #{tpu_custom_call.1} parent=1 // pred_fallthru
      _
    // Predicated region
    $region70: #{tpu_custom_call.1} parent=1 // pred_check
      _
    $region71: #{tpu_custom_call.1} parent=1 // pred_check_branch
      %202 = sbr.rel (0) target = $region73
    $region72: #{tpu_custom_call.1} parent=1 // pred_region
      %203 = dma.done [#allocation6], 128
    $region73: #{tpu_custom_call.1} parent=1 // pred_fallthru
      _
    // Predicated region
    $region74: #{tpu_custom_call.1} parent=1 // pred_check
      _
    $region75: #{tpu_custom_call.1} parent=1 // pred_check_branch
      %205 = sbr.rel (0) target = $region77
    $region76: #{tpu_custom_call.1} parent=1 // pred_region
      %206 = dma.done [#allocation9], 32768
    $region77: #{tpu_custom_call.1} parent=1 // pred_fallthru
      _
    // Predicated region
    $region78: #{tpu_custom_call.1} parent=1 // pred_check
      _
    $region79: #{tpu_custom_call.1} parent=1 // pred_check_branch
      %208 = sbr.rel (0) target = $region81
    $region80: #{tpu_custom_call.1} parent=1 // pred_region
      %209 = dma.done [#allocation9], 64
    $region81: #{tpu_custom_call.1} parent=1 // pred_fallthru
      _
    // Predicated region
    $region82: #{tpu_custom_call.1} parent=1 // pred_check
      _
    $region83: #{tpu_custom_call.1} parent=1 // pred_check_branch
      %211 = sbr.rel (0) target = $region85
    $region84: #{tpu_custom_call.1} parent=1 // pred_region
      %212 = dma.done [#allocation12], 8192
    $region85: #{tpu_custom_call.1} parent=1 // pred_fallthru
      _
    // Predicated region
    $region86: #{tpu_custom_call.1} parent=1 // pred_check
      _
    $region87: #{tpu_custom_call.1} parent=1 // pred_check_branch
      %214 = sbr.rel (0) target = $region89
    $region88: #{tpu_custom_call.1} parent=1 // pred_region
      %215 = dma.done [#allocation12], 32
    $region89: #{tpu_custom_call.1} parent=1 // pred_fallthru
      _
    // Predicated region
    $region90: #{tpu_custom_call.1} parent=1 // pred_check
      _
    $region91: #{tpu_custom_call.1} parent=1 // pred_check_branch
      %217 = sbr.rel (0) target = $region93
    $region92: #{tpu_custom_call.1} parent=1 // pred_region
      %218 = dma.done [#allocation15], 2048
    $region93: #{tpu_custom_call.1} parent=1 // pred_fallthru
      _
    // Predicated region
    $region94: #{tpu_custom_call.1} parent=1 // pred_check
      _
    $region95: #{tpu_custom_call.1} parent=1 // pred_check_branch
      %220 = sbr.rel (0) target = $region97
    $region96: #{tpu_custom_call.1} parent=1 // pred_region
      %221 = dma.done [#allocation15], 16
    $region97: #{tpu_custom_call.1} parent=1 // pred_fallthru
      _
    // Predicated region
    $region98: #{tpu_custom_call.1} parent=1 // pred_check
      _
    $region99: #{tpu_custom_call.1} parent=1 // pred_check_branch
      %223 = sbr.rel (0) target = $region101
    $region100: #{tpu_custom_call.1} parent=1 // pred_region
      %224 = dma.done [#allocation18], 1024
    $region101: #{tpu_custom_call.1} parent=1 // pred_fallthru
      _
    // Predicated region
    $region102: #{tpu_custom_call.1} parent=1 // pred_check
      _
    $region103: #{tpu_custom_call.1} parent=1 // pred_check_branch
      %226 = sbr.rel (0) target = $region105
    $region104: #{tpu_custom_call.1} parent=1 // pred_region
      %227 = dma.done [#allocation18], 16
    $region105: #{tpu_custom_call.1} parent=1 // pred_fallthru
      _
    // Predicated region
    $region106: #{tpu_custom_call.1} parent=1 // pred_check
      _
    $region107: #{tpu_custom_call.1} parent=1 // pred_check_branch
      %229 = sbr.rel (0) target = $region109
    $region108: #{tpu_custom_call.1} parent=1 // pred_region
      %230 = dma.done [#allocation21], 1024
    $region109: #{tpu_custom_call.1} parent=1 // pred_fallthru
      _
    // Predicated region
    $region110: #{tpu_custom_call.1} parent=1 // pred_check
      _
    $region111: #{tpu_custom_call.1} parent=1 // pred_check_branch
      %232 = sbr.rel (0) target = $region113
    $region112: #{tpu_custom_call.1} parent=1 // pred_region
      %233 = dma.done [#allocation21], 16
    $region113: #{tpu_custom_call.1} parent=1 // pred_fallthru
      _
    // Predicated region
    $region114: #{tpu_custom_call.1} parent=1 // pred_check
      _
    $region115: #{tpu_custom_call.1} parent=1 // pred_check_branch
      %235 = sbr.rel (0) target = $region117
    $region116: #{tpu_custom_call.1} parent=1 // pred_region
      %236 = dma.done [#allocation24], 1024
    $region117: #{tpu_custom_call.1} parent=1 // pred_fallthru
      _
    // Predicated region
    $region118: #{tpu_custom_call.1} parent=1 // pred_check
      _
    $region119: #{tpu_custom_call.1} parent=1 // pred_check_branch
      %238 = sbr.rel (0) target = $region121
    $region120: #{tpu_custom_call.1} parent=1 // pred_region
      %239 = dma.done [#allocation24], 16
    $region121: #{tpu_custom_call.1} parent=1 // pred_fallthru
      _
    %v241 = vld [vmem:[#allocation2] sm:$0xff]
    %v242 = vld [vmem:[#allocation2 + $0x8] sm:$0xff]
    %v243 = vld [vmem:[#allocation2 + $0x10] sm:$0xff]
    %v244 = vld [vmem:[#allocation2 + $0x18] sm:$0xff]
    %v245 = vld [vmem:[#allocation2 + $0x20] sm:$0xff]
    %v246 = vld [vmem:[#allocation2 + $0x28] sm:$0xff]
    %v247 = vld [vmem:[#allocation2 + $0x30] sm:$0xff]
    %v248 = vld [vmem:[#allocation2 + $0x38] sm:$0xff]
    %v249 = vld [vmem:[#allocation2 + $0x40] sm:$0xff]
    %v250 = vld [vmem:[#allocation2 + $0x48] sm:$0xff]
    %v251 = vld [vmem:[#allocation2 + $0x50] sm:$0xff]
    %v252 = vld [vmem:[#allocation2 + $0x58] sm:$0xff]
    %v253 = vld [vmem:[#allocation2 + $0x60] sm:$0xff]
    %v254 = vld [vmem:[#allocation2 + $0x68] sm:$0xff]
    %v255 = vld [vmem:[#allocation2 + $0x70] sm:$0xff]
    %v256 = vld [vmem:[#allocation2 + $0x78] sm:$0xff]
    %v257 = vld [vmem:[#allocation2 + $0x80] sm:$0xff]
    %v258 = vld [vmem:[#allocation2 + $0x88] sm:$0xff]
    %v259 = vld [vmem:[#allocation2 + $0x90] sm:$0xff]
    %v260 = vld [vmem:[#allocation2 + $0x98] sm:$0xff]
    %v261 = vld [vmem:[#allocation2 + $0xa0] sm:$0xff]
    %v262 = vld [vmem:[#allocation2 + $0xa8] sm:$0xff]
    %v263 = vld [vmem:[#allocation2 + $0xb0] sm:$0xff]
    %v264 = vld [vmem:[#allocation2 + $0xb8] sm:$0xff]
    %v265 = vld [vmem:[#allocation5] sm:$0xff]
    %v266 = vld [vmem:[#allocation5 + $0x8] sm:$0xff]
    %v267 = vld [vmem:[#allocation5 + $0x10] sm:$0xff]
    %v268 = vld [vmem:[#allocation5 + $0x18] sm:$0xff]
    %v269 = vld [vmem:[#allocation5 + $0x20] sm:$0xff]
    %v270 = vld [vmem:[#allocation5 + $0x28] sm:$0xff]
    %v271 = vld [vmem:[#allocation5 + $0x30] sm:$0xff]
    %v272 = vld [vmem:[#allocation5 + $0x38] sm:$0xff]
    %v273 = vld [vmem:[#allocation5 + $0x40] sm:$0xff]
    %v274 = vld [vmem:[#allocation5 + $0x48] sm:$0xff]
    %v275 = vld [vmem:[#allocation5 + $0x50] sm:$0xff]
    %v276 = vld [vmem:[#allocation5 + $0x58] sm:$0xff]
    %v277 = vld [vmem:[#allocation5 + $0x60] sm:$0xff]
    %v278 = vld [vmem:[#allocation5 + $0x68] sm:$0xff]
    %v279 = vld [vmem:[#allocation5 + $0x70] sm:$0xff]
    %v280 = vld [vmem:[#allocation5 + $0x78] sm:$0xff]
    %v281 = vld [vmem:[#allocation5 + $0x80] sm:$0xff]
    %v282 = vld [vmem:[#allocation5 + $0x88] sm:$0xff]
    %v283 = vld [vmem:[#allocation5 + $0x90] sm:$0xff]
    %v284 = vld [vmem:[#allocation5 + $0x98] sm:$0xff]
    %v285 = vld [vmem:[#allocation5 + $0xa0] sm:$0xff]
    %v286 = vld [vmem:[#allocation5 + $0xa8] sm:$0xff]
    %v287 = vld [vmem:[#allocation5 + $0xb0] sm:$0xff]
    %v288 = vld [vmem:[#allocation5 + $0xb8] sm:$0xff]
    %v289 = vld [vmem:[#allocation5 + $0xc0] sm:$0xff]
    %v290 = vld [vmem:[#allocation5 + $0xc8] sm:$0xff]
    %v291 = vld [vmem:[#allocation5 + $0xd0] sm:$0xff]
    %v292 = vld [vmem:[#allocation5 + $0xd8] sm:$0xff]
    %v293 = vld [vmem:[#allocation5 + $0xe0] sm:$0xff]
    %v294 = vld [vmem:[#allocation5 + $0xe8] sm:$0xff]
    %v295 = vld [vmem:[#allocation5 + $0xf0] sm:$0xff]
    %v296 = vld [vmem:[#allocation5 + $0xf8] sm:$0xff]
    %v297 = vld [vmem:[#allocation5 + $0x100] sm:$0xff]
    %v298 = vld [vmem:[#allocation5 + $0x108] sm:$0xff]
    %v299 = vld [vmem:[#allocation5 + $0x110] sm:$0xff]
    %v300 = vld [vmem:[#allocation5 + $0x118] sm:$0xff]
    %v301 = vld [vmem:[#allocation5 + $0x120] sm:$0xff]
    %v302 = vld [vmem:[#allocation5 + $0x128] sm:$0xff]
    %v303 = vld [vmem:[#allocation5 + $0x130] sm:$0xff]
    %v304 = vld [vmem:[#allocation5 + $0x138] sm:$0xff]
    %v305 = vld [vmem:[#allocation5 + $0x140] sm:$0xff]
    %v306 = vld [vmem:[#allocation5 + $0x148] sm:$0xff]
    %v307 = vld [vmem:[#allocation5 + $0x150] sm:$0xff]
    %v308 = vld [vmem:[#allocation5 + $0x158] sm:$0xff]
    %v309 = vld [vmem:[#allocation5 + $0x160] sm:$0xff]
    %v310 = vld [vmem:[#allocation5 + $0x168] sm:$0xff]
    %v311 = vld [vmem:[#allocation5 + $0x170] sm:$0xff]
    %v312 = vld [vmem:[#allocation5 + $0x178] sm:$0xff]
    %v313 = vld [vmem:[#allocation5 + $0x180] sm:$0xff]
    %v314 = vld [vmem:[#allocation5 + $0x188] sm:$0xff]
    %v315 = vld [vmem:[#allocation5 + $0x190] sm:$0xff]
    %v316 = vld [vmem:[#allocation5 + $0x198] sm:$0xff]
    %v317 = vld [vmem:[#allocation5 + $0x1a0] sm:$0xff]
    %v318 = vld [vmem:[#allocation5 + $0x1a8] sm:$0xff]
    %v319 = vld [vmem:[#allocation5 + $0x1b0] sm:$0xff]
    %v320 = vld [vmem:[#allocation5 + $0x1b8] sm:$0xff]
    %v321 = vld [vmem:[#allocation5 + $0x1c0] sm:$0xff]
    %v322 = vld [vmem:[#allocation5 + $0x1c8] sm:$0xff]
    %v323 = vld [vmem:[#allocation5 + $0x1d0] sm:$0xff]
    %v324 = vld [vmem:[#allocation5 + $0x1d8] sm:$0xff]
    %v325 = vld [vmem:[#allocation5 + $0x1e0] sm:$0xff]
    %v326 = vld [vmem:[#allocation5 + $0x1e8] sm:$0xff]
    %v327 = vld [vmem:[#allocation5 + $0x1f0] sm:$0xff]
    %v328 = vld [vmem:[#allocation5 + $0x1f8] sm:$0xff]
    %v329 = vld [vmem:[#allocation5 + $0x200] sm:$0xff]
    %v330 = vld [vmem:[#allocation5 + $0x208] sm:$0xff]
    %v331 = vld [vmem:[#allocation5 + $0x210] sm:$0xff]
    %v332 = vld [vmem:[#allocation5 + $0x218] sm:$0xff]
    %v333 = vld [vmem:[#allocation5 + $0x220] sm:$0xff]
    %v334 = vld [vmem:[#allocation5 + $0x228] sm:$0xff]
    %v335 = vld [vmem:[#allocation5 + $0x230] sm:$0xff]
    %v336 = vld [vmem:[#allocation5 + $0x238] sm:$0xff]
    %v337 = vld [vmem:[#allocation5 + $0x240] sm:$0xff]
    %v338 = vld [vmem:[#allocation5 + $0x248] sm:$0xff]
    %v339 = vld [vmem:[#allocation5 + $0x250] sm:$0xff]
    %v340 = vld [vmem:[#allocation5 + $0x258] sm:$0xff]
    %v341 = vld [vmem:[#allocation5 + $0x260] sm:$0xff]
    %v342 = vld [vmem:[#allocation5 + $0x268] sm:$0xff]
    %v343 = vld [vmem:[#allocation5 + $0x270] sm:$0xff]
    %v344 = vld [vmem:[#allocation5 + $0x278] sm:$0xff]
    %v345 = vld [vmem:[#allocation5 + $0x280] sm:$0xff]
    %v346 = vld [vmem:[#allocation5 + $0x288] sm:$0xff]
    %v347 = vld [vmem:[#allocation5 + $0x290] sm:$0xff]
    %v348 = vld [vmem:[#allocation5 + $0x298] sm:$0xff]
    %v349 = vld [vmem:[#allocation5 + $0x2a0] sm:$0xff]
    %v350 = vld [vmem:[#allocation5 + $0x2a8] sm:$0xff]
    %v351 = vld [vmem:[#allocation5 + $0x2b0] sm:$0xff]
    %v352 = vld [vmem:[#allocation5 + $0x2b8] sm:$0xff]
    %v353 = vld [vmem:[#allocation5 + $0x2c0] sm:$0xff]
    %v354 = vld [vmem:[#allocation5 + $0x2c8] sm:$0xff]
    %v355 = vld [vmem:[#allocation5 + $0x2d0] sm:$0xff]
    %v356 = vld [vmem:[#allocation5 + $0x2d8] sm:$0xff]
    %v357 = vld [vmem:[#allocation5 + $0x2e0] sm:$0xff]
    %v358 = vld [vmem:[#allocation5 + $0x2e8] sm:$0xff]
    %v359 = vld [vmem:[#allocation5 + $0x2f0] sm:$0xff]
    %v360 = vld [vmem:[#allocation5 + $0x2f8] sm:$0xff]
    %v361 = vld [vmem:[#allocation5 + $0x300] sm:$0xff]
    %v362 = vld [vmem:[#allocation5 + $0x308] sm:$0xff]
    %v363 = vld [vmem:[#allocation5 + $0x310] sm:$0xff]
    %v364 = vld [vmem:[#allocation5 + $0x318] sm:$0xff]
    %v365 = vld [vmem:[#allocation5 + $0x320] sm:$0xff]
    %v366 = vld [vmem:[#allocation5 + $0x328] sm:$0xff]
    %v367 = vld [vmem:[#allocation5 + $0x330] sm:$0xff]
    %v368 = vld [vmem:[#allocation5 + $0x338] sm:$0xff]
    %v369 = vld [vmem:[#allocation5 + $0x340] sm:$0xff]
    %v370 = vld [vmem:[#allocation5 + $0x348] sm:$0xff]
    %v371 = vld [vmem:[#allocation5 + $0x350] sm:$0xff]
    %v372 = vld [vmem:[#allocation5 + $0x358] sm:$0xff]
    %v373 = vld [vmem:[#allocation5 + $0x360] sm:$0xff]
    %v374 = vld [vmem:[#allocation5 + $0x368] sm:$0xff]
    %v375 = vld [vmem:[#allocation5 + $0x370] sm:$0xff]
    %v376 = vld [vmem:[#allocation5 + $0x378] sm:$0xff]
    %v377 = vld [vmem:[#allocation5 + $0x380] sm:$0xff]
    %v378 = vld [vmem:[#allocation5 + $0x388] sm:$0xff]
    %v379 = vld [vmem:[#allocation5 + $0x390] sm:$0xff]
    %v380 = vld [vmem:[#allocation5 + $0x398] sm:$0xff]
    %v381 = vld [vmem:[#allocation5 + $0x3a0] sm:$0xff]
    %v382 = vld [vmem:[#allocation5 + $0x3a8] sm:$0xff]
    %v383 = vld [vmem:[#allocation5 + $0x3b0] sm:$0xff]
    %v384 = vld [vmem:[#allocation5 + $0x3b8] sm:$0xff]
    %v385 = vld [vmem:[#allocation5 + $0x3c0] sm:$0xff]
    %v386 = vld [vmem:[#allocation5 + $0x3c8] sm:$0xff]
    %v387 = vld [vmem:[#allocation5 + $0x3d0] sm:$0xff]
    %v388 = vld [vmem:[#allocation5 + $0x3d8] sm:$0xff]
    %v389 = vld [vmem:[#allocation5 + $0x3e0] sm:$0xff]
    %v390 = vld [vmem:[#allocation5 + $0x3e8] sm:$0xff]
    %v391 = vld [vmem:[#allocation5 + $0x3f0] sm:$0xff]
    %v392 = vld [vmem:[#allocation5 + $0x3f8] sm:$0xff]
    %v393 = vld [vmem:[#allocation5 + $0x400] sm:$0xff]
    %v394 = vld [vmem:[#allocation5 + $0x408] sm:$0xff]
    %v395 = vld [vmem:[#allocation5 + $0x410] sm:$0xff]
    %v396 = vld [vmem:[#allocation5 + $0x418] sm:$0xff]
    %v397 = vld [vmem:[#allocation5 + $0x420] sm:$0xff]
    %v398 = vld [vmem:[#allocation5 + $0x428] sm:$0xff]
    %v399 = vld [vmem:[#allocation5 + $0x430] sm:$0xff]
    %v400 = vld [vmem:[#allocation5 + $0x438] sm:$0xff]
    %v401 = vld [vmem:[#allocation5 + $0x440] sm:$0xff]
    %v402 = vld [vmem:[#allocation5 + $0x448] sm:$0xff]
    %v403 = vld [vmem:[#allocation5 + $0x450] sm:$0xff]
    %v404 = vld [vmem:[#allocation5 + $0x458] sm:$0xff]
    %v405 = vld [vmem:[#allocation5 + $0x460] sm:$0xff]
    %v406 = vld [vmem:[#allocation5 + $0x468] sm:$0xff]
    %v407 = vld [vmem:[#allocation5 + $0x470] sm:$0xff]
    %v408 = vld [vmem:[#allocation5 + $0x478] sm:$0xff]
    %v409 = vld [vmem:[#allocation5 + $0x480] sm:$0xff]
    %v410 = vld [vmem:[#allocation5 + $0x488] sm:$0xff]
    %v411 = vld [vmem:[#allocation5 + $0x490] sm:$0xff]
    %v412 = vld [vmem:[#allocation5 + $0x498] sm:$0xff]
    %v413 = vld [vmem:[#allocation5 + $0x4a0] sm:$0xff]
    %v414 = vld [vmem:[#allocation5 + $0x4a8] sm:$0xff]
    %v415 = vld [vmem:[#allocation5 + $0x4b0] sm:$0xff]
    %v416 = vld [vmem:[#allocation5 + $0x4b8] sm:$0xff]
    %v417 = vld [vmem:[#allocation5 + $0x4c0] sm:$0xff]
    %v418 = vld [vmem:[#allocation5 + $0x4c8] sm:$0xff]
    %v419 = vld [vmem:[#allocation5 + $0x4d0] sm:$0xff]
    %v420 = vld [vmem:[#allocation5 + $0x4d8] sm:$0xff]
    %v421 = vld [vmem:[#allocation5 + $0x4e0] sm:$0xff]
    %v422 = vld [vmem:[#allocation5 + $0x4e8] sm:$0xff]
    %v423 = vld [vmem:[#allocation5 + $0x4f0] sm:$0xff]
    %v424 = vld [vmem:[#allocation5 + $0x4f8] sm:$0xff]
    %v425 = vld [vmem:[#allocation5 + $0x500] sm:$0xff]
    %v426 = vld [vmem:[#allocation5 + $0x508] sm:$0xff]
    %v427 = vld [vmem:[#allocation5 + $0x510] sm:$0xff]
    %v428 = vld [vmem:[#allocation5 + $0x518] sm:$0xff]
    %v429 = vld [vmem:[#allocation5 + $0x520] sm:$0xff]
    %v430 = vld [vmem:[#allocation5 + $0x528] sm:$0xff]
    %v431 = vld [vmem:[#allocation5 + $0x530] sm:$0xff]
    %v432 = vld [vmem:[#allocation5 + $0x538] sm:$0xff]
    %v433 = vld [vmem:[#allocation5 + $0x540] sm:$0xff]
    %v434 = vld [vmem:[#allocation5 + $0x548] sm:$0xff]
    %v435 = vld [vmem:[#allocation5 + $0x550] sm:$0xff]
    %v436 = vld [vmem:[#allocation5 + $0x558] sm:$0xff]
    %v437 = vld [vmem:[#allocation5 + $0x560] sm:$0xff]
    %v438 = vld [vmem:[#allocation5 + $0x568] sm:$0xff]
    %v439 = vld [vmem:[#allocation5 + $0x570] sm:$0xff]
    %v440 = vld [vmem:[#allocation5 + $0x578] sm:$0xff]
    %v441 = vld [vmem:[#allocation5 + $0x580] sm:$0xff]
    %v442 = vld [vmem:[#allocation5 + $0x588] sm:$0xff]
    %v443 = vld [vmem:[#allocation5 + $0x590] sm:$0xff]
    %v444 = vld [vmem:[#allocation5 + $0x598] sm:$0xff]
    %v445 = vld [vmem:[#allocation5 + $0x5a0] sm:$0xff]
    %v446 = vld [vmem:[#allocation5 + $0x5a8] sm:$0xff]
    %v447 = vld [vmem:[#allocation5 + $0x5b0] sm:$0xff]
    %v448 = vld [vmem:[#allocation5 + $0x5b8] sm:$0xff]
    %v449 = vld [vmem:[#allocation5 + $0x5c0] sm:$0xff]
    %v450 = vld [vmem:[#allocation5 + $0x5c8] sm:$0xff]
    %v451 = vld [vmem:[#allocation5 + $0x5d0] sm:$0xff]
    %v452 = vld [vmem:[#allocation5 + $0x5d8] sm:$0xff]
    %v453 = vld [vmem:[#allocation5 + $0x5e0] sm:$0xff]
    %v454 = vld [vmem:[#allocation5 + $0x5e8] sm:$0xff]
    %v455 = vld [vmem:[#allocation5 + $0x5f0] sm:$0xff]
    %v456 = vld [vmem:[#allocation5 + $0x5f8] sm:$0xff]
    %v457 = vld [vmem:[#allocation5 + $0x600] sm:$0xff]
    %v458 = vld [vmem:[#allocation5 + $0x608] sm:$0xff]
    %v459 = vld [vmem:[#allocation5 + $0x610] sm:$0xff]
    %v460 = vld [vmem:[#allocation5 + $0x618] sm:$0xff]
    %v461 = vld [vmem:[#allocation5 + $0x620] sm:$0xff]
    %v462 = vld [vmem:[#allocation5 + $0x628] sm:$0xff]
    %v463 = vld [vmem:[#allocation5 + $0x630] sm:$0xff]
    %v464 = vld [vmem:[#allocation5 + $0x638] sm:$0xff]
    %v465 = vld [vmem:[#allocation5 + $0x640] sm:$0xff]
    %v466 = vld [vmem:[#allocation5 + $0x648] sm:$0xff]
    %v467 = vld [vmem:[#allocation5 + $0x650] sm:$0xff]
    %v468 = vld [vmem:[#allocation5 + $0x658] sm:$0xff]
    %v469 = vld [vmem:[#allocation5 + $0x660] sm:$0xff]
    %v470 = vld [vmem:[#allocation5 + $0x668] sm:$0xff]
    %v471 = vld [vmem:[#allocation5 + $0x670] sm:$0xff]
    %v472 = vld [vmem:[#allocation5 + $0x678] sm:$0xff]
    %v473 = vld [vmem:[#allocation5 + $0x680] sm:$0xff]
    %v474 = vld [vmem:[#allocation5 + $0x688] sm:$0xff]
    %v475 = vld [vmem:[#allocation5 + $0x690] sm:$0xff]
    %v476 = vld [vmem:[#allocation5 + $0x698] sm:$0xff]
    %v477 = vld [vmem:[#allocation5 + $0x6a0] sm:$0xff]
    %v478 = vld [vmem:[#allocation5 + $0x6a8] sm:$0xff]
    %v479 = vld [vmem:[#allocation5 + $0x6b0] sm:$0xff]
    %v480 = vld [vmem:[#allocation5 + $0x6b8] sm:$0xff]
    %v481 = vld [vmem:[#allocation5 + $0x6c0] sm:$0xff]
    %v482 = vld [vmem:[#allocation5 + $0x6c8] sm:$0xff]
    %v483 = vld [vmem:[#allocation5 + $0x6d0] sm:$0xff]
    %v484 = vld [vmem:[#allocation5 + $0x6d8] sm:$0xff]
    %v485 = vld [vmem:[#allocation5 + $0x6e0] sm:$0xff]
    %v486 = vld [vmem:[#allocation5 + $0x6e8] sm:$0xff]
    %v487 = vld [vmem:[#allocation5 + $0x6f0] sm:$0xff]
    %v488 = vld [vmem:[#allocation5 + $0x6f8] sm:$0xff]
    %v489 = vld [vmem:[#allocation5 + $0x700] sm:$0xff]
    %v490 = vld [vmem:[#allocation5 + $0x708] sm:$0xff]
    %v491 = vld [vmem:[#allocation5 + $0x710] sm:$0xff]
    %v492 = vld [vmem:[#allocation5 + $0x718] sm:$0xff]
    %v493 = vld [vmem:[#allocation5 + $0x720] sm:$0xff]
    %v494 = vld [vmem:[#allocation5 + $0x728] sm:$0xff]
    %v495 = vld [vmem:[#allocation5 + $0x730] sm:$0xff]
    %v496 = vld [vmem:[#allocation5 + $0x738] sm:$0xff]
    %v497 = vld [vmem:[#allocation5 + $0x740] sm:$0xff]
    %v498 = vld [vmem:[#allocation5 + $0x748] sm:$0xff]
    %v499 = vld [vmem:[#allocation5 + $0x750] sm:$0xff]
    %v500 = vld [vmem:[#allocation5 + $0x758] sm:$0xff]
    %v501 = vld [vmem:[#allocation5 + $0x760] sm:$0xff]
    %v502 = vld [vmem:[#allocation5 + $0x768] sm:$0xff]
    %v503 = vld [vmem:[#allocation5 + $0x770] sm:$0xff]
    %v504 = vld [vmem:[#allocation5 + $0x778] sm:$0xff]
    %v505 = vld [vmem:[#allocation5 + $0x780] sm:$0xff]
    %v506 = vld [vmem:[#allocation5 + $0x788] sm:$0xff]
    %v507 = vld [vmem:[#allocation5 + $0x790] sm:$0xff]
    %v508 = vld [vmem:[#allocation5 + $0x798] sm:$0xff]
    %v509 = vld [vmem:[#allocation5 + $0x7a0] sm:$0xff]
    %v510 = vld [vmem:[#allocation5 + $0x7a8] sm:$0xff]
    %v511 = vld [vmem:[#allocation5 + $0x7b0] sm:$0xff]
    %v512 = vld [vmem:[#allocation5 + $0x7b8] sm:$0xff]
    %v513 = vld [vmem:[#allocation5 + $0x7c0] sm:$0xff]
    %v514 = vld [vmem:[#allocation5 + $0x7c8] sm:$0xff]
    %v515 = vld [vmem:[#allocation5 + $0x7d0] sm:$0xff]
    %v516 = vld [vmem:[#allocation5 + $0x7d8] sm:$0xff]
    %v517 = vld [vmem:[#allocation5 + $0x7e0] sm:$0xff]
    %v518 = vld [vmem:[#allocation5 + $0x7e8] sm:$0xff]
    %v519 = vld [vmem:[#allocation5 + $0x7f0] sm:$0xff]
    %v520 = vld [vmem:[#allocation5 + $0x7f8] sm:$0xff]
    %v521 = vld [vmem:[#allocation5 + $0x800] sm:$0xff]
    %v522 = vld [vmem:[#allocation5 + $0x808] sm:$0xff]
    %v523 = vld [vmem:[#allocation5 + $0x810] sm:$0xff]
    %v524 = vld [vmem:[#allocation5 + $0x818] sm:$0xff]
    %v525 = vld [vmem:[#allocation5 + $0x820] sm:$0xff]
    %v526 = vld [vmem:[#allocation5 + $0x828] sm:$0xff]
    %v527 = vld [vmem:[#allocation5 + $0x830] sm:$0xff]
    %v528 = vld [vmem:[#allocation5 + $0x838] sm:$0xff]
    %v529 = vld [vmem:[#allocation5 + $0x840] sm:$0xff]
    %v530 = vld [vmem:[#allocation5 + $0x848] sm:$0xff]
    %v531 = vld [vmem:[#allocation5 + $0x850] sm:$0xff]
    %v532 = vld [vmem:[#allocation5 + $0x858] sm:$0xff]
    %v533 = vld [vmem:[#allocation5 + $0x860] sm:$0xff]
    %v534 = vld [vmem:[#allocation5 + $0x868] sm:$0xff]
    %v535 = vld [vmem:[#allocation5 + $0x870] sm:$0xff]
    %v536 = vld [vmem:[#allocation5 + $0x878] sm:$0xff]
    %v537 = vld [vmem:[#allocation5 + $0x880] sm:$0xff]
    %v538 = vld [vmem:[#allocation5 + $0x888] sm:$0xff]
    %v539 = vld [vmem:[#allocation5 + $0x890] sm:$0xff]
    %v540 = vld [vmem:[#allocation5 + $0x898] sm:$0xff]
    %v541 = vld [vmem:[#allocation5 + $0x8a0] sm:$0xff]
    %v542 = vld [vmem:[#allocation5 + $0x8a8] sm:$0xff]
    %v543 = vld [vmem:[#allocation5 + $0x8b0] sm:$0xff]
    %v544 = vld [vmem:[#allocation5 + $0x8b8] sm:$0xff]
    %v545 = vld [vmem:[#allocation5 + $0x8c0] sm:$0xff]
    %v546 = vld [vmem:[#allocation5 + $0x8c8] sm:$0xff]
    %v547 = vld [vmem:[#allocation5 + $0x8d0] sm:$0xff]
    %v548 = vld [vmem:[#allocation5 + $0x8d8] sm:$0xff]
    %v549 = vld [vmem:[#allocation5 + $0x8e0] sm:$0xff]
    %v550 = vld [vmem:[#allocation5 + $0x8e8] sm:$0xff]
    %v551 = vld [vmem:[#allocation5 + $0x8f0] sm:$0xff]
    %v552 = vld [vmem:[#allocation5 + $0x8f8] sm:$0xff]
    %v553 = vld [vmem:[#allocation5 + $0x900] sm:$0xff]
    %v554 = vld [vmem:[#allocation5 + $0x908] sm:$0xff]
    %v555 = vld [vmem:[#allocation5 + $0x910] sm:$0xff]
    %v556 = vld [vmem:[#allocation5 + $0x918] sm:$0xff]
    %v557 = vld [vmem:[#allocation5 + $0x920] sm:$0xff]
    %v558 = vld [vmem:[#allocation5 + $0x928] sm:$0xff]
    %v559 = vld [vmem:[#allocation5 + $0x930] sm:$0xff]
    %v560 = vld [vmem:[#allocation5 + $0x938] sm:$0xff]
    %v561 = vld [vmem:[#allocation5 + $0x940] sm:$0xff]
    %v562 = vld [vmem:[#allocation5 + $0x948] sm:$0xff]
    %v563 = vld [vmem:[#allocation5 + $0x950] sm:$0xff]
    %v564 = vld [vmem:[#allocation5 + $0x958] sm:$0xff]
    %v565 = vld [vmem:[#allocation5 + $0x960] sm:$0xff]
    %v566 = vld [vmem:[#allocation5 + $0x968] sm:$0xff]
    %v567 = vld [vmem:[#allocation5 + $0x970] sm:$0xff]
    %v568 = vld [vmem:[#allocation5 + $0x978] sm:$0xff]
    %v569 = vld [vmem:[#allocation5 + $0x980] sm:$0xff]
    %v570 = vld [vmem:[#allocation5 + $0x988] sm:$0xff]
    %v571 = vld [vmem:[#allocation5 + $0x990] sm:$0xff]
    %v572 = vld [vmem:[#allocation5 + $0x998] sm:$0xff]
    %v573 = vld [vmem:[#allocation5 + $0x9a0] sm:$0xff]
    %v574 = vld [vmem:[#allocation5 + $0x9a8] sm:$0xff]
    %v575 = vld [vmem:[#allocation5 + $0x9b0] sm:$0xff]
    %v576 = vld [vmem:[#allocation5 + $0x9b8] sm:$0xff]
    %v577 = vld [vmem:[#allocation5 + $0x9c0] sm:$0xff]
    %v578 = vld [vmem:[#allocation5 + $0x9c8] sm:$0xff]
    %v579 = vld [vmem:[#allocation5 + $0x9d0] sm:$0xff]
    %v580 = vld [vmem:[#allocation5 + $0x9d8] sm:$0xff]
    %v581 = vld [vmem:[#allocation5 + $0x9e0] sm:$0xff]
    %v582 = vld [vmem:[#allocation5 + $0x9e8] sm:$0xff]
    %v583 = vld [vmem:[#allocation5 + $0x9f0] sm:$0xff]
    %v584 = vld [vmem:[#allocation5 + $0x9f8] sm:$0xff]
    %v585 = vld [vmem:[#allocation5 + $0xa00] sm:$0xff]
    %v586 = vld [vmem:[#allocation5 + $0xa08] sm:$0xff]
    %v587 = vld [vmem:[#allocation5 + $0xa10] sm:$0xff]
    %v588 = vld [vmem:[#allocation5 + $0xa18] sm:$0xff]
    %v589 = vld [vmem:[#allocation5 + $0xa20] sm:$0xff]
    %v590 = vld [vmem:[#allocation5 + $0xa28] sm:$0xff]
    %v591 = vld [vmem:[#allocation5 + $0xa30] sm:$0xff]
    %v592 = vld [vmem:[#allocation5 + $0xa38] sm:$0xff]
    %v593 = vld [vmem:[#allocation5 + $0xa40] sm:$0xff]
    %v594 = vld [vmem:[#allocation5 + $0xa48] sm:$0xff]
    %v595 = vld [vmem:[#allocation5 + $0xa50] sm:$0xff]
    %v596 = vld [vmem:[#allocation5 + $0xa58] sm:$0xff]
    %v597 = vld [vmem:[#allocation5 + $0xa60] sm:$0xff]
    %v598 = vld [vmem:[#allocation5 + $0xa68] sm:$0xff]
    %v599 = vld [vmem:[#allocation5 + $0xa70] sm:$0xff]
    %v600 = vld [vmem:[#allocation5 + $0xa78] sm:$0xff]
    %v601 = vld [vmem:[#allocation5 + $0xa80] sm:$0xff]
    %v602 = vld [vmem:[#allocation5 + $0xa88] sm:$0xff]
    %v603 = vld [vmem:[#allocation5 + $0xa90] sm:$0xff]
    %v604 = vld [vmem:[#allocation5 + $0xa98] sm:$0xff]
    %v605 = vld [vmem:[#allocation5 + $0xaa0] sm:$0xff]
    %v606 = vld [vmem:[#allocation5 + $0xaa8] sm:$0xff]
    %v607 = vld [vmem:[#allocation5 + $0xab0] sm:$0xff]
    %v608 = vld [vmem:[#allocation5 + $0xab8] sm:$0xff]
    %v609 = vld [vmem:[#allocation5 + $0xac0] sm:$0xff]
    %v610 = vld [vmem:[#allocation5 + $0xac8] sm:$0xff]
    %v611 = vld [vmem:[#allocation5 + $0xad0] sm:$0xff]
    %v612 = vld [vmem:[#allocation5 + $0xad8] sm:$0xff]
    %v613 = vld [vmem:[#allocation5 + $0xae0] sm:$0xff]
    %v614 = vld [vmem:[#allocation5 + $0xae8] sm:$0xff]
    %v615 = vld [vmem:[#allocation5 + $0xaf0] sm:$0xff]
    %v616 = vld [vmem:[#allocation5 + $0xaf8] sm:$0xff]
    %v617 = vld [vmem:[#allocation5 + $0xb00] sm:$0xff]
    %v618 = vld [vmem:[#allocation5 + $0xb08] sm:$0xff]
    %v619 = vld [vmem:[#allocation5 + $0xb10] sm:$0xff]
    %v620 = vld [vmem:[#allocation5 + $0xb18] sm:$0xff]
    %v621 = vld [vmem:[#allocation5 + $0xb20] sm:$0xff]
    %v622 = vld [vmem:[#allocation5 + $0xb28] sm:$0xff]
    %v623 = vld [vmem:[#allocation5 + $0xb30] sm:$0xff]
    %v624 = vld [vmem:[#allocation5 + $0xb38] sm:$0xff]
    %v625 = vld [vmem:[#allocation5 + $0xb40] sm:$0xff]
    %v626 = vld [vmem:[#allocation5 + $0xb48] sm:$0xff]
    %v627 = vld [vmem:[#allocation5 + $0xb50] sm:$0xff]
    %v628 = vld [vmem:[#allocation5 + $0xb58] sm:$0xff]
    %v629 = vld [vmem:[#allocation5 + $0xb60] sm:$0xff]
    %v630 = vld [vmem:[#allocation5 + $0xb68] sm:$0xff]
    %v631 = vld [vmem:[#allocation5 + $0xb70] sm:$0xff]
    %v632 = vld [vmem:[#allocation5 + $0xb78] sm:$0xff]
    %v633 = vld [vmem:[#allocation5 + $0xb80] sm:$0xff]
    %v634 = vld [vmem:[#allocation5 + $0xb88] sm:$0xff]
    %v635 = vld [vmem:[#allocation5 + $0xb90] sm:$0xff]
    %v636 = vld [vmem:[#allocation5 + $0xb98] sm:$0xff]
    %v637 = vld [vmem:[#allocation5 + $0xba0] sm:$0xff]
    %v638 = vld [vmem:[#allocation5 + $0xba8] sm:$0xff]
    %v639 = vld [vmem:[#allocation5 + $0xbb0] sm:$0xff]
    %v640 = vld [vmem:[#allocation5 + $0xbb8] sm:$0xff]
    %v641 = vld [vmem:[#allocation5 + $0xbc0] sm:$0xff]
    %v642 = vld [vmem:[#allocation5 + $0xbc8] sm:$0xff]
    %v643 = vld [vmem:[#allocation5 + $0xbd0] sm:$0xff]
    %v644 = vld [vmem:[#allocation5 + $0xbd8] sm:$0xff]
    %v645 = vld [vmem:[#allocation5 + $0xbe0] sm:$0xff]
    %v646 = vld [vmem:[#allocation5 + $0xbe8] sm:$0xff]
    %v647 = vld [vmem:[#allocation5 + $0xbf0] sm:$0xff]
    %v648 = vld [vmem:[#allocation5 + $0xbf8] sm:$0xff]
    %v649 = vld [vmem:[#allocation5 + $0xc00] sm:$0xff]
    %v650 = vld [vmem:[#allocation5 + $0xc08] sm:$0xff]
    %v651 = vld [vmem:[#allocation5 + $0xc10] sm:$0xff]
    %v652 = vld [vmem:[#allocation5 + $0xc18] sm:$0xff]
    %v653 = vld [vmem:[#allocation5 + $0xc20] sm:$0xff]
    %v654 = vld [vmem:[#allocation5 + $0xc28] sm:$0xff]
    %v655 = vld [vmem:[#allocation5 + $0xc30] sm:$0xff]
    %v656 = vld [vmem:[#allocation5 + $0xc38] sm:$0xff]
    %v657 = vld [vmem:[#allocation5 + $0xc40] sm:$0xff]
    %v658 = vld [vmem:[#allocation5 + $0xc48] sm:$0xff]
    %v659 = vld [vmem:[#allocation5 + $0xc50] sm:$0xff]
    %v660 = vld [vmem:[#allocation5 + $0xc58] sm:$0xff]
    %v661 = vld [vmem:[#allocation5 + $0xc60] sm:$0xff]
    %v662 = vld [vmem:[#allocation5 + $0xc68] sm:$0xff]
    %v663 = vld [vmem:[#allocation5 + $0xc70] sm:$0xff]
    %v664 = vld [vmem:[#allocation5 + $0xc78] sm:$0xff]
    %v665 = vld [vmem:[#allocation5 + $0xc80] sm:$0xff]
    %v666 = vld [vmem:[#allocation5 + $0xc88] sm:$0xff]
    %v667 = vld [vmem:[#allocation5 + $0xc90] sm:$0xff]
    %v668 = vld [vmem:[#allocation5 + $0xc98] sm:$0xff]
    %v669 = vld [vmem:[#allocation5 + $0xca0] sm:$0xff]
    %v670 = vld [vmem:[#allocation5 + $0xca8] sm:$0xff]
    %v671 = vld [vmem:[#allocation5 + $0xcb0] sm:$0xff]
    %v672 = vld [vmem:[#allocation5 + $0xcb8] sm:$0xff]
    %v673 = vld [vmem:[#allocation5 + $0xcc0] sm:$0xff]
    %v674 = vld [vmem:[#allocation5 + $0xcc8] sm:$0xff]
    %v675 = vld [vmem:[#allocation5 + $0xcd0] sm:$0xff]
    %v676 = vld [vmem:[#allocation5 + $0xcd8] sm:$0xff]
    %v677 = vld [vmem:[#allocation5 + $0xce0] sm:$0xff]
    %v678 = vld [vmem:[#allocation5 + $0xce8] sm:$0xff]
    %v679 = vld [vmem:[#allocation5 + $0xcf0] sm:$0xff]
    %v680 = vld [vmem:[#allocation5 + $0xcf8] sm:$0xff]
    %v681 = vld [vmem:[#allocation5 + $0xd00] sm:$0xff]
    %v682 = vld [vmem:[#allocation5 + $0xd08] sm:$0xff]
    %v683 = vld [vmem:[#allocation5 + $0xd10] sm:$0xff]
    %v684 = vld [vmem:[#allocation5 + $0xd18] sm:$0xff]
    %v685 = vld [vmem:[#allocation5 + $0xd20] sm:$0xff]
    %v686 = vld [vmem:[#allocation5 + $0xd28] sm:$0xff]
    %v687 = vld [vmem:[#allocation5 + $0xd30] sm:$0xff]
    %v688 = vld [vmem:[#allocation5 + $0xd38] sm:$0xff]
    %v689 = vld [vmem:[#allocation5 + $0xd40] sm:$0xff]
    %v690 = vld [vmem:[#allocation5 + $0xd48] sm:$0xff]
    %v691 = vld [vmem:[#allocation5 + $0xd50] sm:$0xff]
    %v692 = vld [vmem:[#allocation5 + $0xd58] sm:$0xff]
    %v693 = vld [vmem:[#allocation5 + $0xd60] sm:$0xff]
    %v694 = vld [vmem:[#allocation5 + $0xd68] sm:$0xff]
    %v695 = vld [vmem:[#allocation5 + $0xd70] sm:$0xff]
    %v696 = vld [vmem:[#allocation5 + $0xd78] sm:$0xff]
    %v697 = vld [vmem:[#allocation5 + $0xd80] sm:$0xff]
    %v698 = vld [vmem:[#allocation5 + $0xd88] sm:$0xff]
    %v699 = vld [vmem:[#allocation5 + $0xd90] sm:$0xff]
    %v700 = vld [vmem:[#allocation5 + $0xd98] sm:$0xff]
    %v701 = vld [vmem:[#allocation5 + $0xda0] sm:$0xff]
    %v702 = vld [vmem:[#allocation5 + $0xda8] sm:$0xff]
    %v703 = vld [vmem:[#allocation5 + $0xdb0] sm:$0xff]
    %v704 = vld [vmem:[#allocation5 + $0xdb8] sm:$0xff]
    %v705 = vld [vmem:[#allocation5 + $0xdc0] sm:$0xff]
    %v706 = vld [vmem:[#allocation5 + $0xdc8] sm:$0xff]
    %v707 = vld [vmem:[#allocation5 + $0xdd0] sm:$0xff]
    %v708 = vld [vmem:[#allocation5 + $0xdd8] sm:$0xff]
    %v709 = vld [vmem:[#allocation5 + $0xde0] sm:$0xff]
    %v710 = vld [vmem:[#allocation5 + $0xde8] sm:$0xff]
    %v711 = vld [vmem:[#allocation5 + $0xdf0] sm:$0xff]
    %v712 = vld [vmem:[#allocation5 + $0xdf8] sm:$0xff]
    %v713 = vld [vmem:[#allocation5 + $0xe00] sm:$0xff]
    %v714 = vld [vmem:[#allocation5 + $0xe08] sm:$0xff]
    %v715 = vld [vmem:[#allocation5 + $0xe10] sm:$0xff]
    %v716 = vld [vmem:[#allocation5 + $0xe18] sm:$0xff]
    %v717 = vld [vmem:[#allocation5 + $0xe20] sm:$0xff]
    %v718 = vld [vmem:[#allocation5 + $0xe28] sm:$0xff]
    %v719 = vld [vmem:[#allocation5 + $0xe30] sm:$0xff]
    %v720 = vld [vmem:[#allocation5 + $0xe38] sm:$0xff]
    %v721 = vld [vmem:[#allocation5 + $0xe40] sm:$0xff]
    %v722 = vld [vmem:[#allocation5 + $0xe48] sm:$0xff]
    %v723 = vld [vmem:[#allocation5 + $0xe50] sm:$0xff]
    %v724 = vld [vmem:[#allocation5 + $0xe58] sm:$0xff]
    %v725 = vld [vmem:[#allocation5 + $0xe60] sm:$0xff]
    %v726 = vld [vmem:[#allocation5 + $0xe68] sm:$0xff]
    %v727 = vld [vmem:[#allocation5 + $0xe70] sm:$0xff]
    %v728 = vld [vmem:[#allocation5 + $0xe78] sm:$0xff]
    %v729 = vld [vmem:[#allocation5 + $0xe80] sm:$0xff]
    %v730 = vld [vmem:[#allocation5 + $0xe88] sm:$0xff]
    %v731 = vld [vmem:[#allocation5 + $0xe90] sm:$0xff]
    %v732 = vld [vmem:[#allocation5 + $0xe98] sm:$0xff]
    %v733 = vld [vmem:[#allocation5 + $0xea0] sm:$0xff]
    %v734 = vld [vmem:[#allocation5 + $0xea8] sm:$0xff]
    %v735 = vld [vmem:[#allocation5 + $0xeb0] sm:$0xff]
    %v736 = vld [vmem:[#allocation5 + $0xeb8] sm:$0xff]
    %v737 = vld [vmem:[#allocation5 + $0xec0] sm:$0xff]
    %v738 = vld [vmem:[#allocation5 + $0xec8] sm:$0xff]
    %v739 = vld [vmem:[#allocation5 + $0xed0] sm:$0xff]
    %v740 = vld [vmem:[#allocation5 + $0xed8] sm:$0xff]
    %v741 = vld [vmem:[#allocation5 + $0xee0] sm:$0xff]
    %v742 = vld [vmem:[#allocation5 + $0xee8] sm:$0xff]
    %v743 = vld [vmem:[#allocation5 + $0xef0] sm:$0xff]
    %v744 = vld [vmem:[#allocation5 + $0xef8] sm:$0xff]
    %v745 = vld [vmem:[#allocation5 + $0xf00] sm:$0xff]
    %v746 = vld [vmem:[#allocation5 + $0xf08] sm:$0xff]
    %v747 = vld [vmem:[#allocation5 + $0xf10] sm:$0xff]
    %v748 = vld [vmem:[#allocation5 + $0xf18] sm:$0xff]
    %v749 = vld [vmem:[#allocation5 + $0xf20] sm:$0xff]
    %v750 = vld [vmem:[#allocation5 + $0xf28] sm:$0xff]
    %v751 = vld [vmem:[#allocation5 + $0xf30] sm:$0xff]
    %v752 = vld [vmem:[#allocation5 + $0xf38] sm:$0xff]
    %v753 = vld [vmem:[#allocation5 + $0xf40] sm:$0xff]
    %v754 = vld [vmem:[#allocation5 + $0xf48] sm:$0xff]
    %v755 = vld [vmem:[#allocation5 + $0xf50] sm:$0xff]
    %v756 = vld [vmem:[#allocation5 + $0xf58] sm:$0xff]
    %v757 = vld [vmem:[#allocation5 + $0xf60] sm:$0xff]
    %v758 = vld [vmem:[#allocation5 + $0xf68] sm:$0xff]
    %v759 = vld [vmem:[#allocation5 + $0xf70] sm:$0xff]
    %v760 = vld [vmem:[#allocation5 + $0xf78] sm:$0xff]
    %v761 = vld [vmem:[#allocation5 + $0xf80] sm:$0xff]
    %v762 = vld [vmem:[#allocation5 + $0xf88] sm:$0xff]
    %v763 = vld [vmem:[#allocation5 + $0xf90] sm:$0xff]
    %v764 = vld [vmem:[#allocation5 + $0xf98] sm:$0xff]
    %v765 = vld [vmem:[#allocation5 + $0xfa0] sm:$0xff]
    %v766 = vld [vmem:[#allocation5 + $0xfa8] sm:$0xff]
    %v767 = vld [vmem:[#allocation5 + $0xfb0] sm:$0xff]
    %v768 = vld [vmem:[#allocation5 + $0xfb8] sm:$0xff]
    %v769 = vld [vmem:[#allocation5 + $0xfc0] sm:$0xff]
    %v770 = vld [vmem:[#allocation5 + $0xfc8] sm:$0xff]
    %v771 = vld [vmem:[#allocation5 + $0xfd0] sm:$0xff]
    %v772 = vld [vmem:[#allocation5 + $0xfd8] sm:$0xff]
    %v773 = vld [vmem:[#allocation5 + $0xfe0] sm:$0xff]
    %v774 = vld [vmem:[#allocation5 + $0xfe8] sm:$0xff]
    %v775 = vld [vmem:[#allocation5 + $0xff0] sm:$0xff]
    %v776 = vld [vmem:[#allocation5 + $0xff8] sm:$0xff]
    %v777 = vld [vmem:[#allocation5 + $0x1000] sm:$0xff]
    %v778 = vld [vmem:[#allocation5 + $0x1008] sm:$0xff]
    %v779 = vld [vmem:[#allocation5 + $0x1010] sm:$0xff]
    %v780 = vld [vmem:[#allocation5 + $0x1018] sm:$0xff]
    %v781 = vld [vmem:[#allocation5 + $0x1020] sm:$0xff]
    %v782 = vld [vmem:[#allocation5 + $0x1028] sm:$0xff]
    %v783 = vld [vmem:[#allocation5 + $0x1030] sm:$0xff]
    %v784 = vld [vmem:[#allocation5 + $0x1038] sm:$0xff]
    %v785 = vld [vmem:[#allocation5 + $0x1040] sm:$0xff]
    %v786 = vld [vmem:[#allocation5 + $0x1048] sm:$0xff]
    %v787 = vld [vmem:[#allocation5 + $0x1050] sm:$0xff]
    %v788 = vld [vmem:[#allocation5 + $0x1058] sm:$0xff]
    %v789 = vld [vmem:[#allocation5 + $0x1060] sm:$0xff]
    %v790 = vld [vmem:[#allocation5 + $0x1068] sm:$0xff]
    %v791 = vld [vmem:[#allocation5 + $0x1070] sm:$0xff]
    %v792 = vld [vmem:[#allocation5 + $0x1078] sm:$0xff]
    %v793 = vld [vmem:[#allocation5 + $0x1080] sm:$0xff]
    %v794 = vld [vmem:[#allocation5 + $0x1088] sm:$0xff]
    %v795 = vld [vmem:[#allocation5 + $0x1090] sm:$0xff]
    %v796 = vld [vmem:[#allocation5 + $0x1098] sm:$0xff]
    %v797 = vld [vmem:[#allocation5 + $0x10a0] sm:$0xff]
    %v798 = vld [vmem:[#allocation5 + $0x10a8] sm:$0xff]
    %v799 = vld [vmem:[#allocation5 + $0x10b0] sm:$0xff]
    %v800 = vld [vmem:[#allocation5 + $0x10b8] sm:$0xff]
    %v801 = vld [vmem:[#allocation5 + $0x10c0] sm:$0xff]
    %v802 = vld [vmem:[#allocation5 + $0x10c8] sm:$0xff]
    %v803 = vld [vmem:[#allocation5 + $0x10d0] sm:$0xff]
    %v804 = vld [vmem:[#allocation5 + $0x10d8] sm:$0xff]
    %v805 = vld [vmem:[#allocation5 + $0x10e0] sm:$0xff]
    %v806 = vld [vmem:[#allocation5 + $0x10e8] sm:$0xff]
    %v807 = vld [vmem:[#allocation5 + $0x10f0] sm:$0xff]
    %v808 = vld [vmem:[#allocation5 + $0x10f8] sm:$0xff]
    %v809 = vld [vmem:[#allocation5 + $0x1100] sm:$0xff]
    %v810 = vld [vmem:[#allocation5 + $0x1108] sm:$0xff]
    %v811 = vld [vmem:[#allocation5 + $0x1110] sm:$0xff]
    %v812 = vld [vmem:[#allocation5 + $0x1118] sm:$0xff]
    %v813 = vld [vmem:[#allocation5 + $0x1120] sm:$0xff]
    %v814 = vld [vmem:[#allocation5 + $0x1128] sm:$0xff]
    %v815 = vld [vmem:[#allocation5 + $0x1130] sm:$0xff]
    %v816 = vld [vmem:[#allocation5 + $0x1138] sm:$0xff]
    %v817 = vld [vmem:[#allocation5 + $0x1140] sm:$0xff]
    %v818 = vld [vmem:[#allocation5 + $0x1148] sm:$0xff]
    %v819 = vld [vmem:[#allocation5 + $0x1150] sm:$0xff]
    %v820 = vld [vmem:[#allocation5 + $0x1158] sm:$0xff]
    %v821 = vld [vmem:[#allocation5 + $0x1160] sm:$0xff]
    %v822 = vld [vmem:[#allocation5 + $0x1168] sm:$0xff]
    %v823 = vld [vmem:[#allocation5 + $0x1170] sm:$0xff]
    %v824 = vld [vmem:[#allocation5 + $0x1178] sm:$0xff]
    %v825 = vld [vmem:[#allocation5 + $0x1180] sm:$0xff]
    %v826 = vld [vmem:[#allocation5 + $0x1188] sm:$0xff]
    %v827 = vld [vmem:[#allocation5 + $0x1190] sm:$0xff]
    %v828 = vld [vmem:[#allocation5 + $0x1198] sm:$0xff]
    %v829 = vld [vmem:[#allocation5 + $0x11a0] sm:$0xff]
    %v830 = vld [vmem:[#allocation5 + $0x11a8] sm:$0xff]
    %v831 = vld [vmem:[#allocation5 + $0x11b0] sm:$0xff]
    %v832 = vld [vmem:[#allocation5 + $0x11b8] sm:$0xff]
    %v833 = vld [vmem:[#allocation5 + $0x11c0] sm:$0xff]
    %v834 = vld [vmem:[#allocation5 + $0x11c8] sm:$0xff]
    %v835 = vld [vmem:[#allocation5 + $0x11d0] sm:$0xff]
    %v836 = vld [vmem:[#allocation5 + $0x11d8] sm:$0xff]
    %v837 = vld [vmem:[#allocation5 + $0x11e0] sm:$0xff]
    %v838 = vld [vmem:[#allocation5 + $0x11e8] sm:$0xff]
    %v839 = vld [vmem:[#allocation5 + $0x11f0] sm:$0xff]
    %v840 = vld [vmem:[#allocation5 + $0x11f8] sm:$0xff]
    %v841 = vld [vmem:[#allocation5 + $0x1200] sm:$0xff]
    %v842 = vld [vmem:[#allocation5 + $0x1208] sm:$0xff]
    %v843 = vld [vmem:[#allocation5 + $0x1210] sm:$0xff]
    %v844 = vld [vmem:[#allocation5 + $0x1218] sm:$0xff]
    %v845 = vld [vmem:[#allocation5 + $0x1220] sm:$0xff]
    %v846 = vld [vmem:[#allocation5 + $0x1228] sm:$0xff]
    %v847 = vld [vmem:[#allocation5 + $0x1230] sm:$0xff]
    %v848 = vld [vmem:[#allocation5 + $0x1238] sm:$0xff]
    %v849 = vld [vmem:[#allocation5 + $0x1240] sm:$0xff]
    %v850 = vld [vmem:[#allocation5 + $0x1248] sm:$0xff]
    %v851 = vld [vmem:[#allocation5 + $0x1250] sm:$0xff]
    %v852 = vld [vmem:[#allocation5 + $0x1258] sm:$0xff]
    %v853 = vld [vmem:[#allocation5 + $0x1260] sm:$0xff]
    %v854 = vld [vmem:[#allocation5 + $0x1268] sm:$0xff]
    %v855 = vld [vmem:[#allocation5 + $0x1270] sm:$0xff]
    %v856 = vld [vmem:[#allocation5 + $0x1278] sm:$0xff]
    %v857 = vld [vmem:[#allocation5 + $0x1280] sm:$0xff]
    %v858 = vld [vmem:[#allocation5 + $0x1288] sm:$0xff]
    %v859 = vld [vmem:[#allocation5 + $0x1290] sm:$0xff]
    %v860 = vld [vmem:[#allocation5 + $0x1298] sm:$0xff]
    %v861 = vld [vmem:[#allocation5 + $0x12a0] sm:$0xff]
    %v862 = vld [vmem:[#allocation5 + $0x12a8] sm:$0xff]
    %v863 = vld [vmem:[#allocation5 + $0x12b0] sm:$0xff]
    %v864 = vld [vmem:[#allocation5 + $0x12b8] sm:$0xff]
    %v865 = vld [vmem:[#allocation5 + $0x12c0] sm:$0xff]
    %v866 = vld [vmem:[#allocation5 + $0x12c8] sm:$0xff]
    %v867 = vld [vmem:[#allocation5 + $0x12d0] sm:$0xff]
    %v868 = vld [vmem:[#allocation5 + $0x12d8] sm:$0xff]
    %v869 = vld [vmem:[#allocation5 + $0x12e0] sm:$0xff]
    %v870 = vld [vmem:[#allocation5 + $0x12e8] sm:$0xff]
    %v871 = vld [vmem:[#allocation5 + $0x12f0] sm:$0xff]
    %v872 = vld [vmem:[#allocation5 + $0x12f8] sm:$0xff]
    %v873 = vld [vmem:[#allocation5 + $0x1300] sm:$0xff]
    %v874 = vld [vmem:[#allocation5 + $0x1308] sm:$0xff]
    %v875 = vld [vmem:[#allocation5 + $0x1310] sm:$0xff]
    %v876 = vld [vmem:[#allocation5 + $0x1318] sm:$0xff]
    %v877 = vld [vmem:[#allocation5 + $0x1320] sm:$0xff]
    %v878 = vld [vmem:[#allocation5 + $0x1328] sm:$0xff]
    %v879 = vld [vmem:[#allocation5 + $0x1330] sm:$0xff]
    %v880 = vld [vmem:[#allocation5 + $0x1338] sm:$0xff]
    %v881 = vld [vmem:[#allocation5 + $0x1340] sm:$0xff]
    %v882 = vld [vmem:[#allocation5 + $0x1348] sm:$0xff]
    %v883 = vld [vmem:[#allocation5 + $0x1350] sm:$0xff]
    %v884 = vld [vmem:[#allocation5 + $0x1358] sm:$0xff]
    %v885 = vld [vmem:[#allocation5 + $0x1360] sm:$0xff]
    %v886 = vld [vmem:[#allocation5 + $0x1368] sm:$0xff]
    %v887 = vld [vmem:[#allocation5 + $0x1370] sm:$0xff]
    %v888 = vld [vmem:[#allocation5 + $0x1378] sm:$0xff]
    %v889 = vld [vmem:[#allocation5 + $0x1380] sm:$0xff]
    %v890 = vld [vmem:[#allocation5 + $0x1388] sm:$0xff]
    %v891 = vld [vmem:[#allocation5 + $0x1390] sm:$0xff]
    %v892 = vld [vmem:[#allocation5 + $0x1398] sm:$0xff]
    %v893 = vld [vmem:[#allocation5 + $0x13a0] sm:$0xff]
    %v894 = vld [vmem:[#allocation5 + $0x13a8] sm:$0xff]
    %v895 = vld [vmem:[#allocation5 + $0x13b0] sm:$0xff]
    %v896 = vld [vmem:[#allocation5 + $0x13b8] sm:$0xff]
    %v897 = vld [vmem:[#allocation5 + $0x13c0] sm:$0xff]
    %v898 = vld [vmem:[#allocation5 + $0x13c8] sm:$0xff]
    %v899 = vld [vmem:[#allocation5 + $0x13d0] sm:$0xff]
    %v900 = vld [vmem:[#allocation5 + $0x13d8] sm:$0xff]
    %v901 = vld [vmem:[#allocation5 + $0x13e0] sm:$0xff]
    %v902 = vld [vmem:[#allocation5 + $0x13e8] sm:$0xff]
    %v903 = vld [vmem:[#allocation5 + $0x13f0] sm:$0xff]
    %v904 = vld [vmem:[#allocation5 + $0x13f8] sm:$0xff]
    %v905 = vld [vmem:[#allocation5 + $0x1400] sm:$0xff]
    %v906 = vld [vmem:[#allocation5 + $0x1408] sm:$0xff]
    %v907 = vld [vmem:[#allocation5 + $0x1410] sm:$0xff]
    %v908 = vld [vmem:[#allocation5 + $0x1418] sm:$0xff]
    %v909 = vld [vmem:[#allocation5 + $0x1420] sm:$0xff]
    %v910 = vld [vmem:[#allocation5 + $0x1428] sm:$0xff]
    %v911 = vld [vmem:[#allocation5 + $0x1430] sm:$0xff]
    %v912 = vld [vmem:[#allocation5 + $0x1438] sm:$0xff]
    %v913 = vld [vmem:[#allocation5 + $0x1440] sm:$0xff]
    %v914 = vld [vmem:[#allocation5 + $0x1448] sm:$0xff]
    %v915 = vld [vmem:[#allocation5 + $0x1450] sm:$0xff]
    %v916 = vld [vmem:[#allocation5 + $0x1458] sm:$0xff]
    %v917 = vld [vmem:[#allocation5 + $0x1460] sm:$0xff]
    %v918 = vld [vmem:[#allocation5 + $0x1468] sm:$0xff]
    %v919 = vld [vmem:[#allocation5 + $0x1470] sm:$0xff]
    %v920 = vld [vmem:[#allocation5 + $0x1478] sm:$0xff]
    %v921 = vld [vmem:[#allocation5 + $0x1480] sm:$0xff]
    %v922 = vld [vmem:[#allocation5 + $0x1488] sm:$0xff]
    %v923 = vld [vmem:[#allocation5 + $0x1490] sm:$0xff]
    %v924 = vld [vmem:[#allocation5 + $0x1498] sm:$0xff]
    %v925 = vld [vmem:[#allocation5 + $0x14a0] sm:$0xff]
    %v926 = vld [vmem:[#allocation5 + $0x14a8] sm:$0xff]
    %v927 = vld [vmem:[#allocation5 + $0x14b0] sm:$0xff]
    %v928 = vld [vmem:[#allocation5 + $0x14b8] sm:$0xff]
    %v929 = vld [vmem:[#allocation5 + $0x14c0] sm:$0xff]
    %v930 = vld [vmem:[#allocation5 + $0x14c8] sm:$0xff]
    %v931 = vld [vmem:[#allocation5 + $0x14d0] sm:$0xff]
    %v932 = vld [vmem:[#allocation5 + $0x14d8] sm:$0xff]
    %v933 = vld [vmem:[#allocation5 + $0x14e0] sm:$0xff]
    %v934 = vld [vmem:[#allocation5 + $0x14e8] sm:$0xff]
    %v935 = vld [vmem:[#allocation5 + $0x14f0] sm:$0xff]
    %v936 = vld [vmem:[#allocation5 + $0x14f8] sm:$0xff]
    %v937 = vld [vmem:[#allocation5 + $0x1500] sm:$0xff]
    %v938 = vld [vmem:[#allocation5 + $0x1508] sm:$0xff]
    %v939 = vld [vmem:[#allocation5 + $0x1510] sm:$0xff]
    %v940 = vld [vmem:[#allocation5 + $0x1518] sm:$0xff]
    %v941 = vld [vmem:[#allocation5 + $0x1520] sm:$0xff]
    %v942 = vld [vmem:[#allocation5 + $0x1528] sm:$0xff]
    %v943 = vld [vmem:[#allocation5 + $0x1530] sm:$0xff]
    %v944 = vld [vmem:[#allocation5 + $0x1538] sm:$0xff]
    %v945 = vld [vmem:[#allocation5 + $0x1540] sm:$0xff]
    %v946 = vld [vmem:[#allocation5 + $0x1548] sm:$0xff]
    %v947 = vld [vmem:[#allocation5 + $0x1550] sm:$0xff]
    %v948 = vld [vmem:[#allocation5 + $0x1558] sm:$0xff]
    %v949 = vld [vmem:[#allocation5 + $0x1560] sm:$0xff]
    %v950 = vld [vmem:[#allocation5 + $0x1568] sm:$0xff]
    %v951 = vld [vmem:[#allocation5 + $0x1570] sm:$0xff]
    %v952 = vld [vmem:[#allocation5 + $0x1578] sm:$0xff]
    %v953 = vld [vmem:[#allocation5 + $0x1580] sm:$0xff]
    %v954 = vld [vmem:[#allocation5 + $0x1588] sm:$0xff]
    %v955 = vld [vmem:[#allocation5 + $0x1590] sm:$0xff]
    %v956 = vld [vmem:[#allocation5 + $0x1598] sm:$0xff]
    %v957 = vld [vmem:[#allocation5 + $0x15a0] sm:$0xff]
    %v958 = vld [vmem:[#allocation5 + $0x15a8] sm:$0xff]
    %v959 = vld [vmem:[#allocation5 + $0x15b0] sm:$0xff]
    %v960 = vld [vmem:[#allocation5 + $0x15b8] sm:$0xff]
    %v961 = vld [vmem:[#allocation5 + $0x15c0] sm:$0xff]
    %v962 = vld [vmem:[#allocation5 + $0x15c8] sm:$0xff]
    %v963 = vld [vmem:[#allocation5 + $0x15d0] sm:$0xff]
    %v964 = vld [vmem:[#allocation5 + $0x15d8] sm:$0xff]
    %v965 = vld [vmem:[#allocation5 + $0x15e0] sm:$0xff]
    %v966 = vld [vmem:[#allocation5 + $0x15e8] sm:$0xff]
    %v967 = vld [vmem:[#allocation5 + $0x15f0] sm:$0xff]
    %v968 = vld [vmem:[#allocation5 + $0x15f8] sm:$0xff]
    %v969 = vld [vmem:[#allocation5 + $0x1600] sm:$0xff]
    %v970 = vld [vmem:[#allocation5 + $0x1608] sm:$0xff]
    %v971 = vld [vmem:[#allocation5 + $0x1610] sm:$0xff]
    %v972 = vld [vmem:[#allocation5 + $0x1618] sm:$0xff]
    %v973 = vld [vmem:[#allocation5 + $0x1620] sm:$0xff]
    %v974 = vld [vmem:[#allocation5 + $0x1628] sm:$0xff]
    %v975 = vld [vmem:[#allocation5 + $0x1630] sm:$0xff]
    %v976 = vld [vmem:[#allocation5 + $0x1638] sm:$0xff]
    %v977 = vld [vmem:[#allocation5 + $0x1640] sm:$0xff]
    %v978 = vld [vmem:[#allocation5 + $0x1648] sm:$0xff]
    %v979 = vld [vmem:[#allocation5 + $0x1650] sm:$0xff]
    %v980 = vld [vmem:[#allocation5 + $0x1658] sm:$0xff]
    %v981 = vld [vmem:[#allocation5 + $0x1660] sm:$0xff]
    %v982 = vld [vmem:[#allocation5 + $0x1668] sm:$0xff]
    %v983 = vld [vmem:[#allocation5 + $0x1670] sm:$0xff]
    %v984 = vld [vmem:[#allocation5 + $0x1678] sm:$0xff]
    %v985 = vld [vmem:[#allocation5 + $0x1680] sm:$0xff]
    %v986 = vld [vmem:[#allocation5 + $0x1688] sm:$0xff]
    %v987 = vld [vmem:[#allocation5 + $0x1690] sm:$0xff]
    %v988 = vld [vmem:[#allocation5 + $0x1698] sm:$0xff]
    %v989 = vld [vmem:[#allocation5 + $0x16a0] sm:$0xff]
    %v990 = vld [vmem:[#allocation5 + $0x16a8] sm:$0xff]
    %v991 = vld [vmem:[#allocation5 + $0x16b0] sm:$0xff]
    %v992 = vld [vmem:[#allocation5 + $0x16b8] sm:$0xff]
    %v993 = vld [vmem:[#allocation5 + $0x16c0] sm:$0xff]
    %v994 = vld [vmem:[#allocation5 + $0x16c8] sm:$0xff]
    %v995 = vld [vmem:[#allocation5 + $0x16d0] sm:$0xff]
    %v996 = vld [vmem:[#allocation5 + $0x16d8] sm:$0xff]
    %v997 = vld [vmem:[#allocation5 + $0x16e0] sm:$0xff]
    %v998 = vld [vmem:[#allocation5 + $0x16e8] sm:$0xff]
    %v999 = vld [vmem:[#allocation5 + $0x16f0] sm:$0xff]
    %v1000 = vld [vmem:[#allocation5 + $0x16f8] sm:$0xff]
    %v1001 = vld [vmem:[#allocation5 + $0x1700] sm:$0xff]
    %v1002 = vld [vmem:[#allocation5 + $0x1708] sm:$0xff]
    %v1003 = vld [vmem:[#allocation5 + $0x1710] sm:$0xff]
    %v1004 = vld [vmem:[#allocation5 + $0x1718] sm:$0xff]
    %v1005 = vld [vmem:[#allocation5 + $0x1720] sm:$0xff]
    %v1006 = vld [vmem:[#allocation5 + $0x1728] sm:$0xff]
    %v1007 = vld [vmem:[#allocation5 + $0x1730] sm:$0xff]
    %v1008 = vld [vmem:[#allocation5 + $0x1738] sm:$0xff]
    %v1009 = vld [vmem:[#allocation5 + $0x1740] sm:$0xff]
    %v1010 = vld [vmem:[#allocation5 + $0x1748] sm:$0xff]
    %v1011 = vld [vmem:[#allocation5 + $0x1750] sm:$0xff]
    %v1012 = vld [vmem:[#allocation5 + $0x1758] sm:$0xff]
    %v1013 = vld [vmem:[#allocation5 + $0x1760] sm:$0xff]
    %v1014 = vld [vmem:[#allocation5 + $0x1768] sm:$0xff]
    %v1015 = vld [vmem:[#allocation5 + $0x1770] sm:$0xff]
    %v1016 = vld [vmem:[#allocation5 + $0x1778] sm:$0xff]
    %v1017 = vld [vmem:[#allocation5 + $0x1780] sm:$0xff]
    %v1018 = vld [vmem:[#allocation5 + $0x1788] sm:$0xff]
    %v1019 = vld [vmem:[#allocation5 + $0x1790] sm:$0xff]
    %v1020 = vld [vmem:[#allocation5 + $0x1798] sm:$0xff]
    %v1021 = vld [vmem:[#allocation5 + $0x17a0] sm:$0xff]
    %v1022 = vld [vmem:[#allocation5 + $0x17a8] sm:$0xff]
    %v1023 = vld [vmem:[#allocation5 + $0x17b0] sm:$0xff]
    %v1024 = vld [vmem:[#allocation5 + $0x17b8] sm:$0xff]
    %v1025 = vld [vmem:[#allocation5 + $0x17c0] sm:$0xff]
    %v1026 = vld [vmem:[#allocation5 + $0x17c8] sm:$0xff]
    %v1027 = vld [vmem:[#allocation5 + $0x17d0] sm:$0xff]
    %v1028 = vld [vmem:[#allocation5 + $0x17d8] sm:$0xff]
    %v1029 = vld [vmem:[#allocation5 + $0x17e0] sm:$0xff]
    %v1030 = vld [vmem:[#allocation5 + $0x17e8] sm:$0xff]
    %v1031 = vld [vmem:[#allocation5 + $0x17f0] sm:$0xff]
    %v1032 = vld [vmem:[#allocation5 + $0x17f8] sm:$0xff]
    %v1033 = vld [vmem:[#allocation5 + $0x1800] sm:$0xff]
    %v1034 = vld [vmem:[#allocation5 + $0x1808] sm:$0xff]
    %v1035 = vld [vmem:[#allocation5 + $0x1810] sm:$0xff]
    %v1036 = vld [vmem:[#allocation5 + $0x1818] sm:$0xff]
    %v1037 = vld [vmem:[#allocation5 + $0x1820] sm:$0xff]
    %v1038 = vld [vmem:[#allocation5 + $0x1828] sm:$0xff]
    %v1039 = vld [vmem:[#allocation5 + $0x1830] sm:$0xff]
    %v1040 = vld [vmem:[#allocation5 + $0x1838] sm:$0xff]
    %v1041 = vld [vmem:[#allocation5 + $0x1840] sm:$0xff]
    %v1042 = vld [vmem:[#allocation5 + $0x1848] sm:$0xff]
    %v1043 = vld [vmem:[#allocation5 + $0x1850] sm:$0xff]
    %v1044 = vld [vmem:[#allocation5 + $0x1858] sm:$0xff]
    %v1045 = vld [vmem:[#allocation5 + $0x1860] sm:$0xff]
    %v1046 = vld [vmem:[#allocation5 + $0x1868] sm:$0xff]
    %v1047 = vld [vmem:[#allocation5 + $0x1870] sm:$0xff]
    %v1048 = vld [vmem:[#allocation5 + $0x1878] sm:$0xff]
    %v1049 = vld [vmem:[#allocation5 + $0x1880] sm:$0xff]
    %v1050 = vld [vmem:[#allocation5 + $0x1888] sm:$0xff]
    %v1051 = vld [vmem:[#allocation5 + $0x1890] sm:$0xff]
    %v1052 = vld [vmem:[#allocation5 + $0x1898] sm:$0xff]
    %v1053 = vld [vmem:[#allocation5 + $0x18a0] sm:$0xff]
    %v1054 = vld [vmem:[#allocation5 + $0x18a8] sm:$0xff]
    %v1055 = vld [vmem:[#allocation5 + $0x18b0] sm:$0xff]
    %v1056 = vld [vmem:[#allocation5 + $0x18b8] sm:$0xff]
    %v1057 = vld [vmem:[#allocation5 + $0x18c0] sm:$0xff]
    %v1058 = vld [vmem:[#allocation5 + $0x18c8] sm:$0xff]
    %v1059 = vld [vmem:[#allocation5 + $0x18d0] sm:$0xff]
    %v1060 = vld [vmem:[#allocation5 + $0x18d8] sm:$0xff]
    %v1061 = vld [vmem:[#allocation5 + $0x18e0] sm:$0xff]
    %v1062 = vld [vmem:[#allocation5 + $0x18e8] sm:$0xff]
    %v1063 = vld [vmem:[#allocation5 + $0x18f0] sm:$0xff]
    %v1064 = vld [vmem:[#allocation5 + $0x18f8] sm:$0xff]
    %v1065 = vld [vmem:[#allocation5 + $0x1900] sm:$0xff]
    %v1066 = vld [vmem:[#allocation5 + $0x1908] sm:$0xff]
    %v1067 = vld [vmem:[#allocation5 + $0x1910] sm:$0xff]
    %v1068 = vld [vmem:[#allocation5 + $0x1918] sm:$0xff]
    %v1069 = vld [vmem:[#allocation5 + $0x1920] sm:$0xff]
    %v1070 = vld [vmem:[#allocation5 + $0x1928] sm:$0xff]
    %v1071 = vld [vmem:[#allocation5 + $0x1930] sm:$0xff]
    %v1072 = vld [vmem:[#allocation5 + $0x1938] sm:$0xff]
    %v1073 = vld [vmem:[#allocation5 + $0x1940] sm:$0xff]
    %v1074 = vld [vmem:[#allocation5 + $0x1948] sm:$0xff]
    %v1075 = vld [vmem:[#allocation5 + $0x1950] sm:$0xff]
    %v1076 = vld [vmem:[#allocation5 + $0x1958] sm:$0xff]
    %v1077 = vld [vmem:[#allocation5 + $0x1960] sm:$0xff]
    %v1078 = vld [vmem:[#allocation5 + $0x1968] sm:$0xff]
    %v1079 = vld [vmem:[#allocation5 + $0x1970] sm:$0xff]
    %v1080 = vld [vmem:[#allocation5 + $0x1978] sm:$0xff]
    %v1081 = vld [vmem:[#allocation5 + $0x1980] sm:$0xff]
    %v1082 = vld [vmem:[#allocation5 + $0x1988] sm:$0xff]
    %v1083 = vld [vmem:[#allocation5 + $0x1990] sm:$0xff]
    %v1084 = vld [vmem:[#allocation5 + $0x1998] sm:$0xff]
    %v1085 = vld [vmem:[#allocation5 + $0x19a0] sm:$0xff]
    %v1086 = vld [vmem:[#allocation5 + $0x19a8] sm:$0xff]
    %v1087 = vld [vmem:[#allocation5 + $0x19b0] sm:$0xff]
    %v1088 = vld [vmem:[#allocation5 + $0x19b8] sm:$0xff]
    %v1089 = vld [vmem:[#allocation5 + $0x19c0] sm:$0xff]
    %v1090 = vld [vmem:[#allocation5 + $0x19c8] sm:$0xff]
    %v1091 = vld [vmem:[#allocation5 + $0x19d0] sm:$0xff]
    %v1092 = vld [vmem:[#allocation5 + $0x19d8] sm:$0xff]
    %v1093 = vld [vmem:[#allocation5 + $0x19e0] sm:$0xff]
    %v1094 = vld [vmem:[#allocation5 + $0x19e8] sm:$0xff]
    %v1095 = vld [vmem:[#allocation5 + $0x19f0] sm:$0xff]
    %v1096 = vld [vmem:[#allocation5 + $0x19f8] sm:$0xff]
    %v1097 = vld [vmem:[#allocation5 + $0x1a00] sm:$0xff]
    %v1098 = vld [vmem:[#allocation5 + $0x1a08] sm:$0xff]
    %v1099 = vld [vmem:[#allocation5 + $0x1a10] sm:$0xff]
    %v1100 = vld [vmem:[#allocation5 + $0x1a18] sm:$0xff]
    %v1101 = vld [vmem:[#allocation5 + $0x1a20] sm:$0xff]
    %v1102 = vld [vmem:[#allocation5 + $0x1a28] sm:$0xff]
    %v1103 = vld [vmem:[#allocation5 + $0x1a30] sm:$0xff]
    %v1104 = vld [vmem:[#allocation5 + $0x1a38] sm:$0xff]
    %v1105 = vld [vmem:[#allocation5 + $0x1a40] sm:$0xff]
    %v1106 = vld [vmem:[#allocation5 + $0x1a48] sm:$0xff]
    %v1107 = vld [vmem:[#allocation5 + $0x1a50] sm:$0xff]
    %v1108 = vld [vmem:[#allocation5 + $0x1a58] sm:$0xff]
    %v1109 = vld [vmem:[#allocation5 + $0x1a60] sm:$0xff]
    %v1110 = vld [vmem:[#allocation5 + $0x1a68] sm:$0xff]
    %v1111 = vld [vmem:[#allocation5 + $0x1a70] sm:$0xff]
    %v1112 = vld [vmem:[#allocation5 + $0x1a78] sm:$0xff]
    %v1113 = vld [vmem:[#allocation5 + $0x1a80] sm:$0xff]
    %v1114 = vld [vmem:[#allocation5 + $0x1a88] sm:$0xff]
    %v1115 = vld [vmem:[#allocation5 + $0x1a90] sm:$0xff]
    %v1116 = vld [vmem:[#allocation5 + $0x1a98] sm:$0xff]
    %v1117 = vld [vmem:[#allocation5 + $0x1aa0] sm:$0xff]
    %v1118 = vld [vmem:[#allocation5 + $0x1aa8] sm:$0xff]
    %v1119 = vld [vmem:[#allocation5 + $0x1ab0] sm:$0xff]
    %v1120 = vld [vmem:[#allocation5 + $0x1ab8] sm:$0xff]
    %v1121 = vld [vmem:[#allocation5 + $0x1ac0] sm:$0xff]
    %v1122 = vld [vmem:[#allocation5 + $0x1ac8] sm:$0xff]
    %v1123 = vld [vmem:[#allocation5 + $0x1ad0] sm:$0xff]
    %v1124 = vld [vmem:[#allocation5 + $0x1ad8] sm:$0xff]
    %v1125 = vld [vmem:[#allocation5 + $0x1ae0] sm:$0xff]
    %v1126 = vld [vmem:[#allocation5 + $0x1ae8] sm:$0xff]
    %v1127 = vld [vmem:[#allocation5 + $0x1af0] sm:$0xff]
    %v1128 = vld [vmem:[#allocation5 + $0x1af8] sm:$0xff]
    %v1129 = vld [vmem:[#allocation5 + $0x1b00] sm:$0xff]
    %v1130 = vld [vmem:[#allocation5 + $0x1b08] sm:$0xff]
    %v1131 = vld [vmem:[#allocation5 + $0x1b10] sm:$0xff]
    %v1132 = vld [vmem:[#allocation5 + $0x1b18] sm:$0xff]
    %v1133 = vld [vmem:[#allocation5 + $0x1b20] sm:$0xff]
    %v1134 = vld [vmem:[#allocation5 + $0x1b28] sm:$0xff]
    %v1135 = vld [vmem:[#allocation5 + $0x1b30] sm:$0xff]
    %v1136 = vld [vmem:[#allocation5 + $0x1b38] sm:$0xff]
    %v1137 = vld [vmem:[#allocation5 + $0x1b40] sm:$0xff]
    %v1138 = vld [vmem:[#allocation5 + $0x1b48] sm:$0xff]
    %v1139 = vld [vmem:[#allocation5 + $0x1b50] sm:$0xff]
    %v1140 = vld [vmem:[#allocation5 + $0x1b58] sm:$0xff]
    %v1141 = vld [vmem:[#allocation5 + $0x1b60] sm:$0xff]
    %v1142 = vld [vmem:[#allocation5 + $0x1b68] sm:$0xff]
    %v1143 = vld [vmem:[#allocation5 + $0x1b70] sm:$0xff]
    %v1144 = vld [vmem:[#allocation5 + $0x1b78] sm:$0xff]
    %v1145 = vld [vmem:[#allocation5 + $0x1b80] sm:$0xff]
    %v1146 = vld [vmem:[#allocation5 + $0x1b88] sm:$0xff]
    %v1147 = vld [vmem:[#allocation5 + $0x1b90] sm:$0xff]
    %v1148 = vld [vmem:[#allocation5 + $0x1b98] sm:$0xff]
    %v1149 = vld [vmem:[#allocation5 + $0x1ba0] sm:$0xff]
    %v1150 = vld [vmem:[#allocation5 + $0x1ba8] sm:$0xff]
    %v1151 = vld [vmem:[#allocation5 + $0x1bb0] sm:$0xff]
    %v1152 = vld [vmem:[#allocation5 + $0x1bb8] sm:$0xff]
    %v1153 = vld [vmem:[#allocation5 + $0x1bc0] sm:$0xff]
    %v1154 = vld [vmem:[#allocation5 + $0x1bc8] sm:$0xff]
    %v1155 = vld [vmem:[#allocation5 + $0x1bd0] sm:$0xff]
    %v1156 = vld [vmem:[#allocation5 + $0x1bd8] sm:$0xff]
    %v1157 = vld [vmem:[#allocation5 + $0x1be0] sm:$0xff]
    %v1158 = vld [vmem:[#allocation5 + $0x1be8] sm:$0xff]
    %v1159 = vld [vmem:[#allocation5 + $0x1bf0] sm:$0xff]
    %v1160 = vld [vmem:[#allocation5 + $0x1bf8] sm:$0xff]
    %v1161 = vld [vmem:[#allocation5 + $0x1c00] sm:$0xff]
    %v1162 = vld [vmem:[#allocation5 + $0x1c08] sm:$0xff]
    %v1163 = vld [vmem:[#allocation5 + $0x1c10] sm:$0xff]
    %v1164 = vld [vmem:[#allocation5 + $0x1c18] sm:$0xff]
    %v1165 = vld [vmem:[#allocation5 + $0x1c20] sm:$0xff]
    %v1166 = vld [vmem:[#allocation5 + $0x1c28] sm:$0xff]
    %v1167 = vld [vmem:[#allocation5 + $0x1c30] sm:$0xff]
    %v1168 = vld [vmem:[#allocation5 + $0x1c38] sm:$0xff]
    %v1169 = vld [vmem:[#allocation5 + $0x1c40] sm:$0xff]
    %v1170 = vld [vmem:[#allocation5 + $0x1c48] sm:$0xff]
    %v1171 = vld [vmem:[#allocation5 + $0x1c50] sm:$0xff]
    %v1172 = vld [vmem:[#allocation5 + $0x1c58] sm:$0xff]
    %v1173 = vld [vmem:[#allocation5 + $0x1c60] sm:$0xff]
    %v1174 = vld [vmem:[#allocation5 + $0x1c68] sm:$0xff]
    %v1175 = vld [vmem:[#allocation5 + $0x1c70] sm:$0xff]
    %v1176 = vld [vmem:[#allocation5 + $0x1c78] sm:$0xff]
    %v1177 = vld [vmem:[#allocation5 + $0x1c80] sm:$0xff]
    %v1178 = vld [vmem:[#allocation5 + $0x1c88] sm:$0xff]
    %v1179 = vld [vmem:[#allocation5 + $0x1c90] sm:$0xff]
    %v1180 = vld [vmem:[#allocation5 + $0x1c98] sm:$0xff]
    %v1181 = vld [vmem:[#allocation5 + $0x1ca0] sm:$0xff]
    %v1182 = vld [vmem:[#allocation5 + $0x1ca8] sm:$0xff]
    %v1183 = vld [vmem:[#allocation5 + $0x1cb0] sm:$0xff]
    %v1184 = vld [vmem:[#allocation5 + $0x1cb8] sm:$0xff]
    %v1185 = vld [vmem:[#allocation5 + $0x1cc0] sm:$0xff]
    %v1186 = vld [vmem:[#allocation5 + $0x1cc8] sm:$0xff]
    %v1187 = vld [vmem:[#allocation5 + $0x1cd0] sm:$0xff]
    %v1188 = vld [vmem:[#allocation5 + $0x1cd8] sm:$0xff]
    %v1189 = vld [vmem:[#allocation5 + $0x1ce0] sm:$0xff]
    %v1190 = vld [vmem:[#allocation5 + $0x1ce8] sm:$0xff]
    %v1191 = vld [vmem:[#allocation5 + $0x1cf0] sm:$0xff]
    %v1192 = vld [vmem:[#allocation5 + $0x1cf8] sm:$0xff]
    %v1193 = vld [vmem:[#allocation5 + $0x1d00] sm:$0xff]
    %v1194 = vld [vmem:[#allocation5 + $0x1d08] sm:$0xff]
    %v1195 = vld [vmem:[#allocation5 + $0x1d10] sm:$0xff]
    %v1196 = vld [vmem:[#allocation5 + $0x1d18] sm:$0xff]
    %v1197 = vld [vmem:[#allocation5 + $0x1d20] sm:$0xff]
    %v1198 = vld [vmem:[#allocation5 + $0x1d28] sm:$0xff]
    %v1199 = vld [vmem:[#allocation5 + $0x1d30] sm:$0xff]
    %v1200 = vld [vmem:[#allocation5 + $0x1d38] sm:$0xff]
    %v1201 = vld [vmem:[#allocation5 + $0x1d40] sm:$0xff]
    %v1202 = vld [vmem:[#allocation5 + $0x1d48] sm:$0xff]
    %v1203 = vld [vmem:[#allocation5 + $0x1d50] sm:$0xff]
    %v1204 = vld [vmem:[#allocation5 + $0x1d58] sm:$0xff]
    %v1205 = vld [vmem:[#allocation5 + $0x1d60] sm:$0xff]
    %v1206 = vld [vmem:[#allocation5 + $0x1d68] sm:$0xff]
    %v1207 = vld [vmem:[#allocation5 + $0x1d70] sm:$0xff]
    %v1208 = vld [vmem:[#allocation5 + $0x1d78] sm:$0xff]
    %v1209 = vld [vmem:[#allocation5 + $0x1d80] sm:$0xff]
    %v1210 = vld [vmem:[#allocation5 + $0x1d88] sm:$0xff]
    %v1211 = vld [vmem:[#allocation5 + $0x1d90] sm:$0xff]
    %v1212 = vld [vmem:[#allocation5 + $0x1d98] sm:$0xff]
    %v1213 = vld [vmem:[#allocation5 + $0x1da0] sm:$0xff]
    %v1214 = vld [vmem:[#allocation5 + $0x1da8] sm:$0xff]
    %v1215 = vld [vmem:[#allocation5 + $0x1db0] sm:$0xff]
    %v1216 = vld [vmem:[#allocation5 + $0x1db8] sm:$0xff]
    %v1217 = vld [vmem:[#allocation5 + $0x1dc0] sm:$0xff]
    %v1218 = vld [vmem:[#allocation5 + $0x1dc8] sm:$0xff]
    %v1219 = vld [vmem:[#allocation5 + $0x1dd0] sm:$0xff]
    %v1220 = vld [vmem:[#allocation5 + $0x1dd8] sm:$0xff]
    %v1221 = vld [vmem:[#allocation5 + $0x1de0] sm:$0xff]
    %v1222 = vld [vmem:[#allocation5 + $0x1de8] sm:$0xff]
    %v1223 = vld [vmem:[#allocation5 + $0x1df0] sm:$0xff]
    %v1224 = vld [vmem:[#allocation5 + $0x1df8] sm:$0xff]
    %v1225 = vld [vmem:[#allocation5 + $0x1e00] sm:$0xff]
    %v1226 = vld [vmem:[#allocation5 + $0x1e08] sm:$0xff]
    %v1227 = vld [vmem:[#allocation5 + $0x1e10] sm:$0xff]
    %v1228 = vld [vmem:[#allocation5 + $0x1e18] sm:$0xff]
    %v1229 = vld [vmem:[#allocation5 + $0x1e20] sm:$0xff]
    %v1230 = vld [vmem:[#allocation5 + $0x1e28] sm:$0xff]
    %v1231 = vld [vmem:[#allocation5 + $0x1e30] sm:$0xff]
    %v1232 = vld [vmem:[#allocation5 + $0x1e38] sm:$0xff]
    %v1233 = vld [vmem:[#allocation5 + $0x1e40] sm:$0xff]
    %v1234 = vld [vmem:[#allocation5 + $0x1e48] sm:$0xff]
    %v1235 = vld [vmem:[#allocation5 + $0x1e50] sm:$0xff]
    %v1236 = vld [vmem:[#allocation5 + $0x1e58] sm:$0xff]
    %v1237 = vld [vmem:[#allocation5 + $0x1e60] sm:$0xff]
    %v1238 = vld [vmem:[#allocation5 + $0x1e68] sm:$0xff]
    %v1239 = vld [vmem:[#allocation5 + $0x1e70] sm:$0xff]
    %v1240 = vld [vmem:[#allocation5 + $0x1e78] sm:$0xff]
    %v1241 = vld [vmem:[#allocation5 + $0x1e80] sm:$0xff]
    %v1242 = vld [vmem:[#allocation5 + $0x1e88] sm:$0xff]
    %v1243 = vld [vmem:[#allocation5 + $0x1e90] sm:$0xff]
    %v1244 = vld [vmem:[#allocation5 + $0x1e98] sm:$0xff]
    %v1245 = vld [vmem:[#allocation5 + $0x1ea0] sm:$0xff]
    %v1246 = vld [vmem:[#allocation5 + $0x1ea8] sm:$0xff]
    %v1247 = vld [vmem:[#allocation5 + $0x1eb0] sm:$0xff]
    %v1248 = vld [vmem:[#allocation5 + $0x1eb8] sm:$0xff]
    %v1249 = vld [vmem:[#allocation5 + $0x1ec0] sm:$0xff]
    %v1250 = vld [vmem:[#allocation5 + $0x1ec8] sm:$0xff]
    %v1251 = vld [vmem:[#allocation5 + $0x1ed0] sm:$0xff]
    %v1252 = vld [vmem:[#allocation5 + $0x1ed8] sm:$0xff]
    %v1253 = vld [vmem:[#allocation5 + $0x1ee0] sm:$0xff]
    %v1254 = vld [vmem:[#allocation5 + $0x1ee8] sm:$0xff]
    %v1255 = vld [vmem:[#allocation5 + $0x1ef0] sm:$0xff]
    %v1256 = vld [vmem:[#allocation5 + $0x1ef8] sm:$0xff]
    %v1257 = vld [vmem:[#allocation5 + $0x1f00] sm:$0xff]
    %v1258 = vld [vmem:[#allocation5 + $0x1f08] sm:$0xff]
    %v1259 = vld [vmem:[#allocation5 + $0x1f10] sm:$0xff]
    %v1260 = vld [vmem:[#allocation5 + $0x1f18] sm:$0xff]
    %v1261 = vld [vmem:[#allocation5 + $0x1f20] sm:$0xff]
    %v1262 = vld [vmem:[#allocation5 + $0x1f28] sm:$0xff]
    %v1263 = vld [vmem:[#allocation5 + $0x1f30] sm:$0xff]
    %v1264 = vld [vmem:[#allocation5 + $0x1f38] sm:$0xff]
    %v1265 = vld [vmem:[#allocation5 + $0x1f40] sm:$0xff]
    %v1266 = vld [vmem:[#allocation5 + $0x1f48] sm:$0xff]
    %v1267 = vld [vmem:[#allocation5 + $0x1f50] sm:$0xff]
    %v1268 = vld [vmem:[#allocation5 + $0x1f58] sm:$0xff]
    %v1269 = vld [vmem:[#allocation5 + $0x1f60] sm:$0xff]
    %v1270 = vld [vmem:[#allocation5 + $0x1f68] sm:$0xff]
    %v1271 = vld [vmem:[#allocation5 + $0x1f70] sm:$0xff]
    %v1272 = vld [vmem:[#allocation5 + $0x1f78] sm:$0xff]
    %v1273 = vld [vmem:[#allocation5 + $0x1f80] sm:$0xff]
    %v1274 = vld [vmem:[#allocation5 + $0x1f88] sm:$0xff]
    %v1275 = vld [vmem:[#allocation5 + $0x1f90] sm:$0xff]
    %v1276 = vld [vmem:[#allocation5 + $0x1f98] sm:$0xff]
    %v1277 = vld [vmem:[#allocation5 + $0x1fa0] sm:$0xff]
    %v1278 = vld [vmem:[#allocation5 + $0x1fa8] sm:$0xff]
    %v1279 = vld [vmem:[#allocation5 + $0x1fb0] sm:$0xff]
    %v1280 = vld [vmem:[#allocation5 + $0x1fb8] sm:$0xff]
    %v1281 = vld [vmem:[#allocation5 + $0x1fc0] sm:$0xff]
    %v1282 = vld [vmem:[#allocation5 + $0x1fc8] sm:$0xff]
    %v1283 = vld [vmem:[#allocation5 + $0x1fd0] sm:$0xff]
    %v1284 = vld [vmem:[#allocation5 + $0x1fd8] sm:$0xff]
    %v1285 = vld [vmem:[#allocation5 + $0x1fe0] sm:$0xff]
    %v1286 = vld [vmem:[#allocation5 + $0x1fe8] sm:$0xff]
    %v1287 = vld [vmem:[#allocation5 + $0x1ff0] sm:$0xff]
    %v1288 = vld [vmem:[#allocation5 + $0x1ff8] sm:$0xff]
    %v1289 = vld [vmem:[#allocation5 + $0x2000] sm:$0xff]
    %v1290 = vld [vmem:[#allocation5 + $0x2008] sm:$0xff]
    %v1291 = vld [vmem:[#allocation5 + $0x2010] sm:$0xff]
    %v1292 = vld [vmem:[#allocation5 + $0x2018] sm:$0xff]
    %v1293 = vld [vmem:[#allocation5 + $0x2020] sm:$0xff]
    %v1294 = vld [vmem:[#allocation5 + $0x2028] sm:$0xff]
    %v1295 = vld [vmem:[#allocation5 + $0x2030] sm:$0xff]
    %v1296 = vld [vmem:[#allocation5 + $0x2038] sm:$0xff]
    %v1297 = vld [vmem:[#allocation5 + $0x2040] sm:$0xff]
    %v1298 = vld [vmem:[#allocation5 + $0x2048] sm:$0xff]
    %v1299 = vld [vmem:[#allocation5 + $0x2050] sm:$0xff]
    %v1300 = vld [vmem:[#allocation5 + $0x2058] sm:$0xff]
    %v1301 = vld [vmem:[#allocation5 + $0x2060] sm:$0xff]
    %v1302 = vld [vmem:[#allocation5 + $0x2068] sm:$0xff]
    %v1303 = vld [vmem:[#allocation5 + $0x2070] sm:$0xff]
    %v1304 = vld [vmem:[#allocation5 + $0x2078] sm:$0xff]
    %v1305 = vld [vmem:[#allocation5 + $0x2080] sm:$0xff]
    %v1306 = vld [vmem:[#allocation5 + $0x2088] sm:$0xff]
    %v1307 = vld [vmem:[#allocation5 + $0x2090] sm:$0xff]
    %v1308 = vld [vmem:[#allocation5 + $0x2098] sm:$0xff]
    %v1309 = vld [vmem:[#allocation5 + $0x20a0] sm:$0xff]
    %v1310 = vld [vmem:[#allocation5 + $0x20a8] sm:$0xff]
    %v1311 = vld [vmem:[#allocation5 + $0x20b0] sm:$0xff]
    %v1312 = vld [vmem:[#allocation5 + $0x20b8] sm:$0xff]
    %v1313 = vld [vmem:[#allocation5 + $0x20c0] sm:$0xff]
    %v1314 = vld [vmem:[#allocation5 + $0x20c8] sm:$0xff]
    %v1315 = vld [vmem:[#allocation5 + $0x20d0] sm:$0xff]
    %v1316 = vld [vmem:[#allocation5 + $0x20d8] sm:$0xff]
    %v1317 = vld [vmem:[#allocation5 + $0x20e0] sm:$0xff]
    %v1318 = vld [vmem:[#allocation5 + $0x20e8] sm:$0xff]
    %v1319 = vld [vmem:[#allocation5 + $0x20f0] sm:$0xff]
    %v1320 = vld [vmem:[#allocation5 + $0x20f8] sm:$0xff]
    %v1321 = vld [vmem:[#allocation5 + $0x2100] sm:$0xff]
    %v1322 = vld [vmem:[#allocation5 + $0x2108] sm:$0xff]
    %v1323 = vld [vmem:[#allocation5 + $0x2110] sm:$0xff]
    %v1324 = vld [vmem:[#allocation5 + $0x2118] sm:$0xff]
    %v1325 = vld [vmem:[#allocation5 + $0x2120] sm:$0xff]
    %v1326 = vld [vmem:[#allocation5 + $0x2128] sm:$0xff]
    %v1327 = vld [vmem:[#allocation5 + $0x2130] sm:$0xff]
    %v1328 = vld [vmem:[#allocation5 + $0x2138] sm:$0xff]
    %v1329 = vld [vmem:[#allocation5 + $0x2140] sm:$0xff]
    %v1330 = vld [vmem:[#allocation5 + $0x2148] sm:$0xff]
    %v1331 = vld [vmem:[#allocation5 + $0x2150] sm:$0xff]
    %v1332 = vld [vmem:[#allocation5 + $0x2158] sm:$0xff]
    %v1333 = vld [vmem:[#allocation5 + $0x2160] sm:$0xff]
    %v1334 = vld [vmem:[#allocation5 + $0x2168] sm:$0xff]
    %v1335 = vld [vmem:[#allocation5 + $0x2170] sm:$0xff]
    %v1336 = vld [vmem:[#allocation5 + $0x2178] sm:$0xff]
    %v1337 = vld [vmem:[#allocation5 + $0x2180] sm:$0xff]
    %v1338 = vld [vmem:[#allocation5 + $0x2188] sm:$0xff]
    %v1339 = vld [vmem:[#allocation5 + $0x2190] sm:$0xff]
    %v1340 = vld [vmem:[#allocation5 + $0x2198] sm:$0xff]
    %v1341 = vld [vmem:[#allocation5 + $0x21a0] sm:$0xff]
    %v1342 = vld [vmem:[#allocation5 + $0x21a8] sm:$0xff]
    %v1343 = vld [vmem:[#allocation5 + $0x21b0] sm:$0xff]
    %v1344 = vld [vmem:[#allocation5 + $0x21b8] sm:$0xff]
    %v1345 = vld [vmem:[#allocation5 + $0x21c0] sm:$0xff]
    %v1346 = vld [vmem:[#allocation5 + $0x21c8] sm:$0xff]
    %v1347 = vld [vmem:[#allocation5 + $0x21d0] sm:$0xff]
    %v1348 = vld [vmem:[#allocation5 + $0x21d8] sm:$0xff]
    %v1349 = vld [vmem:[#allocation5 + $0x21e0] sm:$0xff]
    %v1350 = vld [vmem:[#allocation5 + $0x21e8] sm:$0xff]
    %v1351 = vld [vmem:[#allocation5 + $0x21f0] sm:$0xff]
    %v1352 = vld [vmem:[#allocation5 + $0x21f8] sm:$0xff]
    %v1353 = vld [vmem:[#allocation5 + $0x2200] sm:$0xff]
    %v1354 = vld [vmem:[#allocation5 + $0x2208] sm:$0xff]
    %v1355 = vld [vmem:[#allocation5 + $0x2210] sm:$0xff]
    %v1356 = vld [vmem:[#allocation5 + $0x2218] sm:$0xff]
    %v1357 = vld [vmem:[#allocation5 + $0x2220] sm:$0xff]
    %v1358 = vld [vmem:[#allocation5 + $0x2228] sm:$0xff]
    %v1359 = vld [vmem:[#allocation5 + $0x2230] sm:$0xff]
    %v1360 = vld [vmem:[#allocation5 + $0x2238] sm:$0xff]
    %v1361 = vld [vmem:[#allocation5 + $0x2240] sm:$0xff]
    %v1362 = vld [vmem:[#allocation5 + $0x2248] sm:$0xff]
    %v1363 = vld [vmem:[#allocation5 + $0x2250] sm:$0xff]
    %v1364 = vld [vmem:[#allocation5 + $0x2258] sm:$0xff]
    %v1365 = vld [vmem:[#allocation5 + $0x2260] sm:$0xff]
    %v1366 = vld [vmem:[#allocation5 + $0x2268] sm:$0xff]
    %v1367 = vld [vmem:[#allocation5 + $0x2270] sm:$0xff]
    %v1368 = vld [vmem:[#allocation5 + $0x2278] sm:$0xff]
    %v1369 = vld [vmem:[#allocation5 + $0x2280] sm:$0xff]
    %v1370 = vld [vmem:[#allocation5 + $0x2288] sm:$0xff]
    %v1371 = vld [vmem:[#allocation5 + $0x2290] sm:$0xff]
    %v1372 = vld [vmem:[#allocation5 + $0x2298] sm:$0xff]
    %v1373 = vld [vmem:[#allocation5 + $0x22a0] sm:$0xff]
    %v1374 = vld [vmem:[#allocation5 + $0x22a8] sm:$0xff]
    %v1375 = vld [vmem:[#allocation5 + $0x22b0] sm:$0xff]
    %v1376 = vld [vmem:[#allocation5 + $0x22b8] sm:$0xff]
    %v1377 = vld [vmem:[#allocation5 + $0x22c0] sm:$0xff]
    %v1378 = vld [vmem:[#allocation5 + $0x22c8] sm:$0xff]
    %v1379 = vld [vmem:[#allocation5 + $0x22d0] sm:$0xff]
    %v1380 = vld [vmem:[#allocation5 + $0x22d8] sm:$0xff]
    %v1381 = vld [vmem:[#allocation5 + $0x22e0] sm:$0xff]
    %v1382 = vld [vmem:[#allocation5 + $0x22e8] sm:$0xff]
    %v1383 = vld [vmem:[#allocation5 + $0x22f0] sm:$0xff]
    %v1384 = vld [vmem:[#allocation5 + $0x22f8] sm:$0xff]
    %v1385 = vld [vmem:[#allocation5 + $0x2300] sm:$0xff]
    %v1386 = vld [vmem:[#allocation5 + $0x2308] sm:$0xff]
    %v1387 = vld [vmem:[#allocation5 + $0x2310] sm:$0xff]
    %v1388 = vld [vmem:[#allocation5 + $0x2318] sm:$0xff]
    %v1389 = vld [vmem:[#allocation5 + $0x2320] sm:$0xff]
    %v1390 = vld [vmem:[#allocation5 + $0x2328] sm:$0xff]
    %v1391 = vld [vmem:[#allocation5 + $0x2330] sm:$0xff]
    %v1392 = vld [vmem:[#allocation5 + $0x2338] sm:$0xff]
    %v1393 = vld [vmem:[#allocation5 + $0x2340] sm:$0xff]
    %v1394 = vld [vmem:[#allocation5 + $0x2348] sm:$0xff]
    %v1395 = vld [vmem:[#allocation5 + $0x2350] sm:$0xff]
    %v1396 = vld [vmem:[#allocation5 + $0x2358] sm:$0xff]
    %v1397 = vld [vmem:[#allocation5 + $0x2360] sm:$0xff]
    %v1398 = vld [vmem:[#allocation5 + $0x2368] sm:$0xff]
    %v1399 = vld [vmem:[#allocation5 + $0x2370] sm:$0xff]
    %v1400 = vld [vmem:[#allocation5 + $0x2378] sm:$0xff]
    %v1401 = vld [vmem:[#allocation5 + $0x2380] sm:$0xff]
    %v1402 = vld [vmem:[#allocation5 + $0x2388] sm:$0xff]
    %v1403 = vld [vmem:[#allocation5 + $0x2390] sm:$0xff]
    %v1404 = vld [vmem:[#allocation5 + $0x2398] sm:$0xff]
    %v1405 = vld [vmem:[#allocation5 + $0x23a0] sm:$0xff]
    %v1406 = vld [vmem:[#allocation5 + $0x23a8] sm:$0xff]
    %v1407 = vld [vmem:[#allocation5 + $0x23b0] sm:$0xff]
    %v1408 = vld [vmem:[#allocation5 + $0x23b8] sm:$0xff]
    %v1409 = vld [vmem:[#allocation5 + $0x23c0] sm:$0xff]
    %v1410 = vld [vmem:[#allocation5 + $0x23c8] sm:$0xff]
    %v1411 = vld [vmem:[#allocation5 + $0x23d0] sm:$0xff]
    %v1412 = vld [vmem:[#allocation5 + $0x23d8] sm:$0xff]
    %v1413 = vld [vmem:[#allocation5 + $0x23e0] sm:$0xff]
    %v1414 = vld [vmem:[#allocation5 + $0x23e8] sm:$0xff]
    %v1415 = vld [vmem:[#allocation5 + $0x23f0] sm:$0xff]
    %v1416 = vld [vmem:[#allocation5 + $0x23f8] sm:$0xff]
    %v1417 = vld [vmem:[#allocation5 + $0x2400] sm:$0xff]
    %v1418 = vld [vmem:[#allocation5 + $0x2408] sm:$0xff]
    %v1419 = vld [vmem:[#allocation5 + $0x2410] sm:$0xff]
    %v1420 = vld [vmem:[#allocation5 + $0x2418] sm:$0xff]
    %v1421 = vld [vmem:[#allocation5 + $0x2420] sm:$0xff]
    %v1422 = vld [vmem:[#allocation5 + $0x2428] sm:$0xff]
    %v1423 = vld [vmem:[#allocation5 + $0x2430] sm:$0xff]
    %v1424 = vld [vmem:[#allocation5 + $0x2438] sm:$0xff]
    %v1425 = vld [vmem:[#allocation5 + $0x2440] sm:$0xff]
    %v1426 = vld [vmem:[#allocation5 + $0x2448] sm:$0xff]
    %v1427 = vld [vmem:[#allocation5 + $0x2450] sm:$0xff]
    %v1428 = vld [vmem:[#allocation5 + $0x2458] sm:$0xff]
    %v1429 = vld [vmem:[#allocation5 + $0x2460] sm:$0xff]
    %v1430 = vld [vmem:[#allocation5 + $0x2468] sm:$0xff]
    %v1431 = vld [vmem:[#allocation5 + $0x2470] sm:$0xff]
    %v1432 = vld [vmem:[#allocation5 + $0x2478] sm:$0xff]
    %v1433 = vld [vmem:[#allocation5 + $0x2480] sm:$0xff]
    %v1434 = vld [vmem:[#allocation5 + $0x2488] sm:$0xff]
    %v1435 = vld [vmem:[#allocation5 + $0x2490] sm:$0xff]
    %v1436 = vld [vmem:[#allocation5 + $0x2498] sm:$0xff]
    %v1437 = vld [vmem:[#allocation5 + $0x24a0] sm:$0xff]
    %v1438 = vld [vmem:[#allocation5 + $0x24a8] sm:$0xff]
    %v1439 = vld [vmem:[#allocation5 + $0x24b0] sm:$0xff]
    %v1440 = vld [vmem:[#allocation5 + $0x24b8] sm:$0xff]
    %v1441 = vld [vmem:[#allocation5 + $0x24c0] sm:$0xff]
    %v1442 = vld [vmem:[#allocation5 + $0x24c8] sm:$0xff]
    %v1443 = vld [vmem:[#allocation5 + $0x24d0] sm:$0xff]
    %v1444 = vld [vmem:[#allocation5 + $0x24d8] sm:$0xff]
    %v1445 = vld [vmem:[#allocation5 + $0x24e0] sm:$0xff]
    %v1446 = vld [vmem:[#allocation5 + $0x24e8] sm:$0xff]
    %v1447 = vld [vmem:[#allocation5 + $0x24f0] sm:$0xff]
    %v1448 = vld [vmem:[#allocation5 + $0x24f8] sm:$0xff]
    %v1449 = vld [vmem:[#allocation5 + $0x2500] sm:$0xff]
    %v1450 = vld [vmem:[#allocation5 + $0x2508] sm:$0xff]
    %v1451 = vld [vmem:[#allocation5 + $0x2510] sm:$0xff]
    %v1452 = vld [vmem:[#allocation5 + $0x2518] sm:$0xff]
    %v1453 = vld [vmem:[#allocation5 + $0x2520] sm:$0xff]
    %v1454 = vld [vmem:[#allocation5 + $0x2528] sm:$0xff]
    %v1455 = vld [vmem:[#allocation5 + $0x2530] sm:$0xff]
    %v1456 = vld [vmem:[#allocation5 + $0x2538] sm:$0xff]
    %v1457 = vld [vmem:[#allocation5 + $0x2540] sm:$0xff]
    %v1458 = vld [vmem:[#allocation5 + $0x2548] sm:$0xff]
    %v1459 = vld [vmem:[#allocation5 + $0x2550] sm:$0xff]
    %v1460 = vld [vmem:[#allocation5 + $0x2558] sm:$0xff]
    %v1461 = vld [vmem:[#allocation5 + $0x2560] sm:$0xff]
    %v1462 = vld [vmem:[#allocation5 + $0x2568] sm:$0xff]
    %v1463 = vld [vmem:[#allocation5 + $0x2570] sm:$0xff]
    %v1464 = vld [vmem:[#allocation5 + $0x2578] sm:$0xff]
    %v1465 = vld [vmem:[#allocation5 + $0x2580] sm:$0xff]
    %v1466 = vld [vmem:[#allocation5 + $0x2588] sm:$0xff]
    %v1467 = vld [vmem:[#allocation5 + $0x2590] sm:$0xff]
    %v1468 = vld [vmem:[#allocation5 + $0x2598] sm:$0xff]
    %v1469 = vld [vmem:[#allocation5 + $0x25a0] sm:$0xff]
    %v1470 = vld [vmem:[#allocation5 + $0x25a8] sm:$0xff]
    %v1471 = vld [vmem:[#allocation5 + $0x25b0] sm:$0xff]
    %v1472 = vld [vmem:[#allocation5 + $0x25b8] sm:$0xff]
    %v1473 = vld [vmem:[#allocation5 + $0x25c0] sm:$0xff]
    %v1474 = vld [vmem:[#allocation5 + $0x25c8] sm:$0xff]
    %v1475 = vld [vmem:[#allocation5 + $0x25d0] sm:$0xff]
    %v1476 = vld [vmem:[#allocation5 + $0x25d8] sm:$0xff]
    %v1477 = vld [vmem:[#allocation5 + $0x25e0] sm:$0xff]
    %v1478 = vld [vmem:[#allocation5 + $0x25e8] sm:$0xff]
    %v1479 = vld [vmem:[#allocation5 + $0x25f0] sm:$0xff]
    %v1480 = vld [vmem:[#allocation5 + $0x25f8] sm:$0xff]
    %v1481 = vld [vmem:[#allocation5 + $0x2600] sm:$0xff]
    %v1482 = vld [vmem:[#allocation5 + $0x2608] sm:$0xff]
    %v1483 = vld [vmem:[#allocation5 + $0x2610] sm:$0xff]
    %v1484 = vld [vmem:[#allocation5 + $0x2618] sm:$0xff]
    %v1485 = vld [vmem:[#allocation5 + $0x2620] sm:$0xff]
    %v1486 = vld [vmem:[#allocation5 + $0x2628] sm:$0xff]
    %v1487 = vld [vmem:[#allocation5 + $0x2630] sm:$0xff]
    %v1488 = vld [vmem:[#allocation5 + $0x2638] sm:$0xff]
    %v1489 = vld [vmem:[#allocation5 + $0x2640] sm:$0xff]
    %v1490 = vld [vmem:[#allocation5 + $0x2648] sm:$0xff]
    %v1491 = vld [vmem:[#allocation5 + $0x2650] sm:$0xff]
    %v1492 = vld [vmem:[#allocation5 + $0x2658] sm:$0xff]
    %v1493 = vld [vmem:[#allocation5 + $0x2660] sm:$0xff]
    %v1494 = vld [vmem:[#allocation5 + $0x2668] sm:$0xff]
    %v1495 = vld [vmem:[#allocation5 + $0x2670] sm:$0xff]
    %v1496 = vld [vmem:[#allocation5 + $0x2678] sm:$0xff]
    %v1497 = vld [vmem:[#allocation5 + $0x2680] sm:$0xff]
    %v1498 = vld [vmem:[#allocation5 + $0x2688] sm:$0xff]
    %v1499 = vld [vmem:[#allocation5 + $0x2690] sm:$0xff]
    %v1500 = vld [vmem:[#allocation5 + $0x2698] sm:$0xff]
    %v1501 = vld [vmem:[#allocation5 + $0x26a0] sm:$0xff]
    %v1502 = vld [vmem:[#allocation5 + $0x26a8] sm:$0xff]
    %v1503 = vld [vmem:[#allocation5 + $0x26b0] sm:$0xff]
    %v1504 = vld [vmem:[#allocation5 + $0x26b8] sm:$0xff]
    %v1505 = vld [vmem:[#allocation5 + $0x26c0] sm:$0xff]
    %v1506 = vld [vmem:[#allocation5 + $0x26c8] sm:$0xff]
    %v1507 = vld [vmem:[#allocation5 + $0x26d0] sm:$0xff]
    %v1508 = vld [vmem:[#allocation5 + $0x26d8] sm:$0xff]
    %v1509 = vld [vmem:[#allocation5 + $0x26e0] sm:$0xff]
    %v1510 = vld [vmem:[#allocation5 + $0x26e8] sm:$0xff]
    %v1511 = vld [vmem:[#allocation5 + $0x26f0] sm:$0xff]
    %v1512 = vld [vmem:[#allocation5 + $0x26f8] sm:$0xff]
    %v1513 = vld [vmem:[#allocation5 + $0x2700] sm:$0xff]
    %v1514 = vld [vmem:[#allocation5 + $0x2708] sm:$0xff]
    %v1515 = vld [vmem:[#allocation5 + $0x2710] sm:$0xff]
    %v1516 = vld [vmem:[#allocation5 + $0x2718] sm:$0xff]
    %v1517 = vld [vmem:[#allocation5 + $0x2720] sm:$0xff]
    %v1518 = vld [vmem:[#allocation5 + $0x2728] sm:$0xff]
    %v1519 = vld [vmem:[#allocation5 + $0x2730] sm:$0xff]
    %v1520 = vld [vmem:[#allocation5 + $0x2738] sm:$0xff]
    %v1521 = vld [vmem:[#allocation5 + $0x2740] sm:$0xff]
    %v1522 = vld [vmem:[#allocation5 + $0x2748] sm:$0xff]
    %v1523 = vld [vmem:[#allocation5 + $0x2750] sm:$0xff]
    %v1524 = vld [vmem:[#allocation5 + $0x2758] sm:$0xff]
    %v1525 = vld [vmem:[#allocation5 + $0x2760] sm:$0xff]
    %v1526 = vld [vmem:[#allocation5 + $0x2768] sm:$0xff]
    %v1527 = vld [vmem:[#allocation5 + $0x2770] sm:$0xff]
    %v1528 = vld [vmem:[#allocation5 + $0x2778] sm:$0xff]
    %v1529 = vld [vmem:[#allocation5 + $0x2780] sm:$0xff]
    %v1530 = vld [vmem:[#allocation5 + $0x2788] sm:$0xff]
    %v1531 = vld [vmem:[#allocation5 + $0x2790] sm:$0xff]
    %v1532 = vld [vmem:[#allocation5 + $0x2798] sm:$0xff]
    %v1533 = vld [vmem:[#allocation5 + $0x27a0] sm:$0xff]
    %v1534 = vld [vmem:[#allocation5 + $0x27a8] sm:$0xff]
    %v1535 = vld [vmem:[#allocation5 + $0x27b0] sm:$0xff]
    %v1536 = vld [vmem:[#allocation5 + $0x27b8] sm:$0xff]
    %v1537 = vld [vmem:[#allocation5 + $0x27c0] sm:$0xff]
    %v1538 = vld [vmem:[#allocation5 + $0x27c8] sm:$0xff]
    %v1539 = vld [vmem:[#allocation5 + $0x27d0] sm:$0xff]
    %v1540 = vld [vmem:[#allocation5 + $0x27d8] sm:$0xff]
    %v1541 = vld [vmem:[#allocation5 + $0x27e0] sm:$0xff]
    %v1542 = vld [vmem:[#allocation5 + $0x27e8] sm:$0xff]
    %v1543 = vld [vmem:[#allocation5 + $0x27f0] sm:$0xff]
    %v1544 = vld [vmem:[#allocation5 + $0x27f8] sm:$0xff]
    %v1545 = vld [vmem:[#allocation5 + $0x2800] sm:$0xff]
    %v1546 = vld [vmem:[#allocation5 + $0x2808] sm:$0xff]
    %v1547 = vld [vmem:[#allocation5 + $0x2810] sm:$0xff]
    %v1548 = vld [vmem:[#allocation5 + $0x2818] sm:$0xff]
    %v1549 = vld [vmem:[#allocation5 + $0x2820] sm:$0xff]
    %v1550 = vld [vmem:[#allocation5 + $0x2828] sm:$0xff]
    %v1551 = vld [vmem:[#allocation5 + $0x2830] sm:$0xff]
    %v1552 = vld [vmem:[#allocation5 + $0x2838] sm:$0xff]
    %v1553 = vld [vmem:[#allocation5 + $0x2840] sm:$0xff]
    %v1554 = vld [vmem:[#allocation5 + $0x2848] sm:$0xff]
    %v1555 = vld [vmem:[#allocation5 + $0x2850] sm:$0xff]
    %v1556 = vld [vmem:[#allocation5 + $0x2858] sm:$0xff]
    %v1557 = vld [vmem:[#allocation5 + $0x2860] sm:$0xff]
    %v1558 = vld [vmem:[#allocation5 + $0x2868] sm:$0xff]
    %v1559 = vld [vmem:[#allocation5 + $0x2870] sm:$0xff]
    %v1560 = vld [vmem:[#allocation5 + $0x2878] sm:$0xff]
    %v1561 = vld [vmem:[#allocation5 + $0x2880] sm:$0xff]
    %v1562 = vld [vmem:[#allocation5 + $0x2888] sm:$0xff]
    %v1563 = vld [vmem:[#allocation5 + $0x2890] sm:$0xff]
    %v1564 = vld [vmem:[#allocation5 + $0x2898] sm:$0xff]
    %v1565 = vld [vmem:[#allocation5 + $0x28a0] sm:$0xff]
    %v1566 = vld [vmem:[#allocation5 + $0x28a8] sm:$0xff]
    %v1567 = vld [vmem:[#allocation5 + $0x28b0] sm:$0xff]
    %v1568 = vld [vmem:[#allocation5 + $0x28b8] sm:$0xff]
    %v1569 = vld [vmem:[#allocation5 + $0x28c0] sm:$0xff]
    %v1570 = vld [vmem:[#allocation5 + $0x28c8] sm:$0xff]
    %v1571 = vld [vmem:[#allocation5 + $0x28d0] sm:$0xff]
    %v1572 = vld [vmem:[#allocation5 + $0x28d8] sm:$0xff]
    %v1573 = vld [vmem:[#allocation5 + $0x28e0] sm:$0xff]
    %v1574 = vld [vmem:[#allocation5 + $0x28e8] sm:$0xff]
    %v1575 = vld [vmem:[#allocation5 + $0x28f0] sm:$0xff]
    %v1576 = vld [vmem:[#allocation5 + $0x28f8] sm:$0xff]
    %v1577 = vld [vmem:[#allocation5 + $0x2900] sm:$0xff]
    %v1578 = vld [vmem:[#allocation5 + $0x2908] sm:$0xff]
    %v1579 = vld [vmem:[#allocation5 + $0x2910] sm:$0xff]
    %v1580 = vld [vmem:[#allocation5 + $0x2918] sm:$0xff]
    %v1581 = vld [vmem:[#allocation5 + $0x2920] sm:$0xff]
    %v1582 = vld [vmem:[#allocation5 + $0x2928] sm:$0xff]
    %v1583 = vld [vmem:[#allocation5 + $0x2930] sm:$0xff]
    %v1584 = vld [vmem:[#allocation5 + $0x2938] sm:$0xff]
    %v1585 = vld [vmem:[#allocation5 + $0x2940] sm:$0xff]
    %v1586 = vld [vmem:[#allocation5 + $0x2948] sm:$0xff]
    %v1587 = vld [vmem:[#allocation5 + $0x2950] sm:$0xff]
    %v1588 = vld [vmem:[#allocation5 + $0x2958] sm:$0xff]
    %v1589 = vld [vmem:[#allocation5 + $0x2960] sm:$0xff]
    %v1590 = vld [vmem:[#allocation5 + $0x2968] sm:$0xff]
    %v1591 = vld [vmem:[#allocation5 + $0x2970] sm:$0xff]
    %v1592 = vld [vmem:[#allocation5 + $0x2978] sm:$0xff]
    %v1593 = vld [vmem:[#allocation5 + $0x2980] sm:$0xff]
    %v1594 = vld [vmem:[#allocation5 + $0x2988] sm:$0xff]
    %v1595 = vld [vmem:[#allocation5 + $0x2990] sm:$0xff]
    %v1596 = vld [vmem:[#allocation5 + $0x2998] sm:$0xff]
    %v1597 = vld [vmem:[#allocation5 + $0x29a0] sm:$0xff]
    %v1598 = vld [vmem:[#allocation5 + $0x29a8] sm:$0xff]
    %v1599 = vld [vmem:[#allocation5 + $0x29b0] sm:$0xff]
    %v1600 = vld [vmem:[#allocation5 + $0x29b8] sm:$0xff]
    %v1601 = vld [vmem:[#allocation5 + $0x29c0] sm:$0xff]
    %v1602 = vld [vmem:[#allocation5 + $0x29c8] sm:$0xff]
    %v1603 = vld [vmem:[#allocation5 + $0x29d0] sm:$0xff]
    %v1604 = vld [vmem:[#allocation5 + $0x29d8] sm:$0xff]
    %v1605 = vld [vmem:[#allocation5 + $0x29e0] sm:$0xff]
    %v1606 = vld [vmem:[#allocation5 + $0x29e8] sm:$0xff]
    %v1607 = vld [vmem:[#allocation5 + $0x29f0] sm:$0xff]
    %v1608 = vld [vmem:[#allocation5 + $0x29f8] sm:$0xff]
    %v1609 = vld [vmem:[#allocation5 + $0x2a00] sm:$0xff]
    %v1610 = vld [vmem:[#allocation5 + $0x2a08] sm:$0xff]
    %v1611 = vld [vmem:[#allocation5 + $0x2a10] sm:$0xff]
    %v1612 = vld [vmem:[#allocation5 + $0x2a18] sm:$0xff]
    %v1613 = vld [vmem:[#allocation5 + $0x2a20] sm:$0xff]
    %v1614 = vld [vmem:[#allocation5 + $0x2a28] sm:$0xff]
    %v1615 = vld [vmem:[#allocation5 + $0x2a30] sm:$0xff]
    %v1616 = vld [vmem:[#allocation5 + $0x2a38] sm:$0xff]
    %v1617 = vld [vmem:[#allocation5 + $0x2a40] sm:$0xff]
    %v1618 = vld [vmem:[#allocation5 + $0x2a48] sm:$0xff]
    %v1619 = vld [vmem:[#allocation5 + $0x2a50] sm:$0xff]
    %v1620 = vld [vmem:[#allocation5 + $0x2a58] sm:$0xff]
    %v1621 = vld [vmem:[#allocation5 + $0x2a60] sm:$0xff]
    %v1622 = vld [vmem:[#allocation5 + $0x2a68] sm:$0xff]
    %v1623 = vld [vmem:[#allocation5 + $0x2a70] sm:$0xff]
    %v1624 = vld [vmem:[#allocation5 + $0x2a78] sm:$0xff]
    %v1625 = vld [vmem:[#allocation5 + $0x2a80] sm:$0xff]
    %v1626 = vld [vmem:[#allocation5 + $0x2a88] sm:$0xff]
    %v1627 = vld [vmem:[#allocation5 + $0x2a90] sm:$0xff]
    %v1628 = vld [vmem:[#allocation5 + $0x2a98] sm:$0xff]
    %v1629 = vld [vmem:[#allocation5 + $0x2aa0] sm:$0xff]
    %v1630 = vld [vmem:[#allocation5 + $0x2aa8] sm:$0xff]
    %v1631 = vld [vmem:[#allocation5 + $0x2ab0] sm:$0xff]
    %v1632 = vld [vmem:[#allocation5 + $0x2ab8] sm:$0xff]
    %v1633 = vld [vmem:[#allocation5 + $0x2ac0] sm:$0xff]
    %v1634 = vld [vmem:[#allocation5 + $0x2ac8] sm:$0xff]
    %v1635 = vld [vmem:[#allocation5 + $0x2ad0] sm:$0xff]
    %v1636 = vld [vmem:[#allocation5 + $0x2ad8] sm:$0xff]
    %v1637 = vld [vmem:[#allocation5 + $0x2ae0] sm:$0xff]
    %v1638 = vld [vmem:[#allocation5 + $0x2ae8] sm:$0xff]
    %v1639 = vld [vmem:[#allocation5 + $0x2af0] sm:$0xff]
    %v1640 = vld [vmem:[#allocation5 + $0x2af8] sm:$0xff]
    %v1641 = vld [vmem:[#allocation5 + $0x2b00] sm:$0xff]
    %v1642 = vld [vmem:[#allocation5 + $0x2b08] sm:$0xff]
    %v1643 = vld [vmem:[#allocation5 + $0x2b10] sm:$0xff]
    %v1644 = vld [vmem:[#allocation5 + $0x2b18] sm:$0xff]
    %v1645 = vld [vmem:[#allocation5 + $0x2b20] sm:$0xff]
    %v1646 = vld [vmem:[#allocation5 + $0x2b28] sm:$0xff]
    %v1647 = vld [vmem:[#allocation5 + $0x2b30] sm:$0xff]
    %v1648 = vld [vmem:[#allocation5 + $0x2b38] sm:$0xff]
    %v1649 = vld [vmem:[#allocation5 + $0x2b40] sm:$0xff]
    %v1650 = vld [vmem:[#allocation5 + $0x2b48] sm:$0xff]
    %v1651 = vld [vmem:[#allocation5 + $0x2b50] sm:$0xff]
    %v1652 = vld [vmem:[#allocation5 + $0x2b58] sm:$0xff]
    %v1653 = vld [vmem:[#allocation5 + $0x2b60] sm:$0xff]
    %v1654 = vld [vmem:[#allocation5 + $0x2b68] sm:$0xff]
    %v1655 = vld [vmem:[#allocation5 + $0x2b70] sm:$0xff]
    %v1656 = vld [vmem:[#allocation5 + $0x2b78] sm:$0xff]
    %v1657 = vld [vmem:[#allocation5 + $0x2b80] sm:$0xff]
    %v1658 = vld [vmem:[#allocation5 + $0x2b88] sm:$0xff]
    %v1659 = vld [vmem:[#allocation5 + $0x2b90] sm:$0xff]
    %v1660 = vld [vmem:[#allocation5 + $0x2b98] sm:$0xff]
    %v1661 = vld [vmem:[#allocation5 + $0x2ba0] sm:$0xff]
    %v1662 = vld [vmem:[#allocation5 + $0x2ba8] sm:$0xff]
    %v1663 = vld [vmem:[#allocation5 + $0x2bb0] sm:$0xff]
    %v1664 = vld [vmem:[#allocation5 + $0x2bb8] sm:$0xff]
    %v1665 = vld [vmem:[#allocation5 + $0x2bc0] sm:$0xff]
    %v1666 = vld [vmem:[#allocation5 + $0x2bc8] sm:$0xff]
    %v1667 = vld [vmem:[#allocation5 + $0x2bd0] sm:$0xff]
    %v1668 = vld [vmem:[#allocation5 + $0x2bd8] sm:$0xff]
    %v1669 = vld [vmem:[#allocation5 + $0x2be0] sm:$0xff]
    %v1670 = vld [vmem:[#allocation5 + $0x2be8] sm:$0xff]
    %v1671 = vld [vmem:[#allocation5 + $0x2bf0] sm:$0xff]
    %v1672 = vld [vmem:[#allocation5 + $0x2bf8] sm:$0xff]
    %v1673 = vld [vmem:[#allocation5 + $0x2c00] sm:$0xff]
    %v1674 = vld [vmem:[#allocation5 + $0x2c08] sm:$0xff]
    %v1675 = vld [vmem:[#allocation5 + $0x2c10] sm:$0xff]
    %v1676 = vld [vmem:[#allocation5 + $0x2c18] sm:$0xff]
    %v1677 = vld [vmem:[#allocation5 + $0x2c20] sm:$0xff]
    %v1678 = vld [vmem:[#allocation5 + $0x2c28] sm:$0xff]
    %v1679 = vld [vmem:[#allocation5 + $0x2c30] sm:$0xff]
    %v1680 = vld [vmem:[#allocation5 + $0x2c38] sm:$0xff]
    %v1681 = vld [vmem:[#allocation5 + $0x2c40] sm:$0xff]
    %v1682 = vld [vmem:[#allocation5 + $0x2c48] sm:$0xff]
    %v1683 = vld [vmem:[#allocation5 + $0x2c50] sm:$0xff]
    %v1684 = vld [vmem:[#allocation5 + $0x2c58] sm:$0xff]
    %v1685 = vld [vmem:[#allocation5 + $0x2c60] sm:$0xff]
    %v1686 = vld [vmem:[#allocation5 + $0x2c68] sm:$0xff]
    %v1687 = vld [vmem:[#allocation5 + $0x2c70] sm:$0xff]
    %v1688 = vld [vmem:[#allocation5 + $0x2c78] sm:$0xff]
    %v1689 = vld [vmem:[#allocation5 + $0x2c80] sm:$0xff]
    %v1690 = vld [vmem:[#allocation5 + $0x2c88] sm:$0xff]
    %v1691 = vld [vmem:[#allocation5 + $0x2c90] sm:$0xff]
    %v1692 = vld [vmem:[#allocation5 + $0x2c98] sm:$0xff]
    %v1693 = vld [vmem:[#allocation5 + $0x2ca0] sm:$0xff]
    %v1694 = vld [vmem:[#allocation5 + $0x2ca8] sm:$0xff]
    %v1695 = vld [vmem:[#allocation5 + $0x2cb0] sm:$0xff]
    %v1696 = vld [vmem:[#allocation5 + $0x2cb8] sm:$0xff]
    %v1697 = vld [vmem:[#allocation5 + $0x2cc0] sm:$0xff]
    %v1698 = vld [vmem:[#allocation5 + $0x2cc8] sm:$0xff]
    %v1699 = vld [vmem:[#allocation5 + $0x2cd0] sm:$0xff]
    %v1700 = vld [vmem:[#allocation5 + $0x2cd8] sm:$0xff]
    %v1701 = vld [vmem:[#allocation5 + $0x2ce0] sm:$0xff]
    %v1702 = vld [vmem:[#allocation5 + $0x2ce8] sm:$0xff]
    %v1703 = vld [vmem:[#allocation5 + $0x2cf0] sm:$0xff]
    %v1704 = vld [vmem:[#allocation5 + $0x2cf8] sm:$0xff]
    %v1705 = vld [vmem:[#allocation5 + $0x2d00] sm:$0xff]
    %v1706 = vld [vmem:[#allocation5 + $0x2d08] sm:$0xff]
    %v1707 = vld [vmem:[#allocation5 + $0x2d10] sm:$0xff]
    %v1708 = vld [vmem:[#allocation5 + $0x2d18] sm:$0xff]
    %v1709 = vld [vmem:[#allocation5 + $0x2d20] sm:$0xff]
    %v1710 = vld [vmem:[#allocation5 + $0x2d28] sm:$0xff]
    %v1711 = vld [vmem:[#allocation5 + $0x2d30] sm:$0xff]
    %v1712 = vld [vmem:[#allocation5 + $0x2d38] sm:$0xff]
    %v1713 = vld [vmem:[#allocation5 + $0x2d40] sm:$0xff]
    %v1714 = vld [vmem:[#allocation5 + $0x2d48] sm:$0xff]
    %v1715 = vld [vmem:[#allocation5 + $0x2d50] sm:$0xff]
    %v1716 = vld [vmem:[#allocation5 + $0x2d58] sm:$0xff]
    %v1717 = vld [vmem:[#allocation5 + $0x2d60] sm:$0xff]
    %v1718 = vld [vmem:[#allocation5 + $0x2d68] sm:$0xff]
    %v1719 = vld [vmem:[#allocation5 + $0x2d70] sm:$0xff]
    %v1720 = vld [vmem:[#allocation5 + $0x2d78] sm:$0xff]
    %v1721 = vld [vmem:[#allocation5 + $0x2d80] sm:$0xff]
    %v1722 = vld [vmem:[#allocation5 + $0x2d88] sm:$0xff]
    %v1723 = vld [vmem:[#allocation5 + $0x2d90] sm:$0xff]
    %v1724 = vld [vmem:[#allocation5 + $0x2d98] sm:$0xff]
    %v1725 = vld [vmem:[#allocation5 + $0x2da0] sm:$0xff]
    %v1726 = vld [vmem:[#allocation5 + $0x2da8] sm:$0xff]
    %v1727 = vld [vmem:[#allocation5 + $0x2db0] sm:$0xff]
    %v1728 = vld [vmem:[#allocation5 + $0x2db8] sm:$0xff]
    %v1729 = vld [vmem:[#allocation5 + $0x2dc0] sm:$0xff]
    %v1730 = vld [vmem:[#allocation5 + $0x2dc8] sm:$0xff]
    %v1731 = vld [vmem:[#allocation5 + $0x2dd0] sm:$0xff]
    %v1732 = vld [vmem:[#allocation5 + $0x2dd8] sm:$0xff]
    %v1733 = vld [vmem:[#allocation5 + $0x2de0] sm:$0xff]
    %v1734 = vld [vmem:[#allocation5 + $0x2de8] sm:$0xff]
    %v1735 = vld [vmem:[#allocation5 + $0x2df0] sm:$0xff]
    %v1736 = vld [vmem:[#allocation5 + $0x2df8] sm:$0xff]
    %v1737 = vld [vmem:[#allocation5 + $0x2e00] sm:$0xff]
    %v1738 = vld [vmem:[#allocation5 + $0x2e08] sm:$0xff]
    %v1739 = vld [vmem:[#allocation5 + $0x2e10] sm:$0xff]
    %v1740 = vld [vmem:[#allocation5 + $0x2e18] sm:$0xff]
    %v1741 = vld [vmem:[#allocation5 + $0x2e20] sm:$0xff]
    %v1742 = vld [vmem:[#allocation5 + $0x2e28] sm:$0xff]
    %v1743 = vld [vmem:[#allocation5 + $0x2e30] sm:$0xff]
    %v1744 = vld [vmem:[#allocation5 + $0x2e38] sm:$0xff]
    %v1745 = vld [vmem:[#allocation5 + $0x2e40] sm:$0xff]
    %v1746 = vld [vmem:[#allocation5 + $0x2e48] sm:$0xff]
    %v1747 = vld [vmem:[#allocation5 + $0x2e50] sm:$0xff]
    %v1748 = vld [vmem:[#allocation5 + $0x2e58] sm:$0xff]
    %v1749 = vld [vmem:[#allocation5 + $0x2e60] sm:$0xff]
    %v1750 = vld [vmem:[#allocation5 + $0x2e68] sm:$0xff]
    %v1751 = vld [vmem:[#allocation5 + $0x2e70] sm:$0xff]
    %v1752 = vld [vmem:[#allocation5 + $0x2e78] sm:$0xff]
    %v1753 = vld [vmem:[#allocation5 + $0x2e80] sm:$0xff]
    %v1754 = vld [vmem:[#allocation5 + $0x2e88] sm:$0xff]
    %v1755 = vld [vmem:[#allocation5 + $0x2e90] sm:$0xff]
    %v1756 = vld [vmem:[#allocation5 + $0x2e98] sm:$0xff]
    %v1757 = vld [vmem:[#allocation5 + $0x2ea0] sm:$0xff]
    %v1758 = vld [vmem:[#allocation5 + $0x2ea8] sm:$0xff]
    %v1759 = vld [vmem:[#allocation5 + $0x2eb0] sm:$0xff]
    %v1760 = vld [vmem:[#allocation5 + $0x2eb8] sm:$0xff]
    %v1761 = vld [vmem:[#allocation5 + $0x2ec0] sm:$0xff]
    %v1762 = vld [vmem:[#allocation5 + $0x2ec8] sm:$0xff]
    %v1763 = vld [vmem:[#allocation5 + $0x2ed0] sm:$0xff]
    %v1764 = vld [vmem:[#allocation5 + $0x2ed8] sm:$0xff]
    %v1765 = vld [vmem:[#allocation5 + $0x2ee0] sm:$0xff]
    %v1766 = vld [vmem:[#allocation5 + $0x2ee8] sm:$0xff]
    %v1767 = vld [vmem:[#allocation5 + $0x2ef0] sm:$0xff]
    %v1768 = vld [vmem:[#allocation5 + $0x2ef8] sm:$0xff]
    %v1769 = vld [vmem:[#allocation5 + $0x2f00] sm:$0xff]
    %v1770 = vld [vmem:[#allocation5 + $0x2f08] sm:$0xff]
    %v1771 = vld [vmem:[#allocation5 + $0x2f10] sm:$0xff]
    %v1772 = vld [vmem:[#allocation5 + $0x2f18] sm:$0xff]
    %v1773 = vld [vmem:[#allocation5 + $0x2f20] sm:$0xff]
    %v1774 = vld [vmem:[#allocation5 + $0x2f28] sm:$0xff]
    %v1775 = vld [vmem:[#allocation5 + $0x2f30] sm:$0xff]
    %v1776 = vld [vmem:[#allocation5 + $0x2f38] sm:$0xff]
    %v1777 = vld [vmem:[#allocation5 + $0x2f40] sm:$0xff]
    %v1778 = vld [vmem:[#allocation5 + $0x2f48] sm:$0xff]
    %v1779 = vld [vmem:[#allocation5 + $0x2f50] sm:$0xff]
    %v1780 = vld [vmem:[#allocation5 + $0x2f58] sm:$0xff]
    %v1781 = vld [vmem:[#allocation5 + $0x2f60] sm:$0xff]
    %v1782 = vld [vmem:[#allocation5 + $0x2f68] sm:$0xff]
    %v1783 = vld [vmem:[#allocation5 + $0x2f70] sm:$0xff]
    %v1784 = vld [vmem:[#allocation5 + $0x2f78] sm:$0xff]
    %v1785 = vld [vmem:[#allocation5 + $0x2f80] sm:$0xff]
    %v1786 = vld [vmem:[#allocation5 + $0x2f88] sm:$0xff]
    %v1787 = vld [vmem:[#allocation5 + $0x2f90] sm:$0xff]
    %v1788 = vld [vmem:[#allocation5 + $0x2f98] sm:$0xff]
    %v1789 = vld [vmem:[#allocation5 + $0x2fa0] sm:$0xff]
    %v1790 = vld [vmem:[#allocation5 + $0x2fa8] sm:$0xff]
    %v1791 = vld [vmem:[#allocation5 + $0x2fb0] sm:$0xff]
    %v1792 = vld [vmem:[#allocation5 + $0x2fb8] sm:$0xff]
    %v1793 = vld [vmem:[#allocation5 + $0x2fc0] sm:$0xff]
    %v1794 = vld [vmem:[#allocation5 + $0x2fc8] sm:$0xff]
    %v1795 = vld [vmem:[#allocation5 + $0x2fd0] sm:$0xff]
    %v1796 = vld [vmem:[#allocation5 + $0x2fd8] sm:$0xff]
    %v1797 = vld [vmem:[#allocation5 + $0x2fe0] sm:$0xff]
    %v1798 = vld [vmem:[#allocation5 + $0x2fe8] sm:$0xff]
    %v1799 = vld [vmem:[#allocation5 + $0x2ff0] sm:$0xff]
    %v1800 = vld [vmem:[#allocation5 + $0x2ff8] sm:$0xff]
    %v1801 = vld [vmem:[#allocation7] sm:$0xff]
    %v1803 = vlaneseq
    %v1804 = vshrl.u32 %v1803, 7
    %v1805 = vsub.s32 0, %v1804
    %v1806 = vrot.slane %v1801, %v1805
    %v1807 = vlaneseq
    %v1808 = vshrl.u32 %v1807, 7
    %v1809 = vsub.s32 1, %v1808
    %v1810 = vrot.slane %v1801, %v1809
    %v1811 = vlaneseq
    %v1812 = vshrl.u32 %v1811, 7
    %v1813 = vsub.s32 2, %v1812
    %v1814 = vrot.slane %v1801, %v1813
    %v1815 = vlaneseq
    %v1816 = vshrl.u32 %v1815, 7
    %v1817 = vsub.s32 3, %v1816
    %v1818 = vrot.slane %v1801, %v1817
    %v1819 = vlaneseq
    %v1820 = vshrl.u32 %v1819, 7
    %v1821 = vsub.s32 4, %v1820
    %v1822 = vrot.slane %v1801, %v1821
    %v1823 = vlaneseq
    %v1824 = vshrl.u32 %v1823, 7
    %v1825 = vsub.s32 5, %v1824
    %v1826 = vrot.slane %v1801, %v1825
    %v1827 = vlaneseq
    %v1828 = vshrl.u32 %v1827, 7
    %v1829 = vsub.s32 6, %v1828
    %v1830 = vrot.slane %v1801, %v1829
    %v1831 = vlaneseq
    %v1832 = vshrl.u32 %v1831, 7
    %v1833 = vsub.s32 7, %v1832
    %v1834 = vrot.slane %v1801, %v1833
    %v1867 = vunpack.c.l.b16 %v241
    %v1868 = vunpack.c.h.b16 %v241
    %v1869 = vunpack.c.l.b16 %v242
    %v1870 = vunpack.c.h.b16 %v242
    %v1871 = vunpack.c.l.b16 %v243
    %v1872 = vunpack.c.h.b16 %v243
    %v1873 = vunpack.c.l.b16 %v244
    %v1874 = vunpack.c.h.b16 %v244
    %v1875 = vunpack.c.l.b16 %v245
    %v1876 = vunpack.c.h.b16 %v245
    %v1877 = vunpack.c.l.b16 %v246
    %v1878 = vunpack.c.h.b16 %v246
    %v1879 = vunpack.c.l.b16 %v247
    %v1880 = vunpack.c.h.b16 %v247
    %v1881 = vunpack.c.l.b16 %v248
    %v1882 = vunpack.c.h.b16 %v248
    %v1883 = vunpack.c.l.b16 %v249
    %v1884 = vunpack.c.h.b16 %v249
    %v1885 = vunpack.c.l.b16 %v250
    %v1886 = vunpack.c.h.b16 %v250
    %v1887 = vunpack.c.l.b16 %v251
    %v1888 = vunpack.c.h.b16 %v251
    %v1889 = vunpack.c.l.b16 %v252
    %v1890 = vunpack.c.h.b16 %v252
    %v1891 = vunpack.c.l.b16 %v253
    %v1892 = vunpack.c.h.b16 %v253
    %v1893 = vunpack.c.l.b16 %v254
    %v1894 = vunpack.c.h.b16 %v254
    %v1895 = vunpack.c.l.b16 %v255
    %v1896 = vunpack.c.h.b16 %v255
    %v1897 = vunpack.c.l.b16 %v256
    %v1898 = vunpack.c.h.b16 %v256
    %v1899 = vunpack.c.l.b16 %v257
    %v1900 = vunpack.c.h.b16 %v257
    %v1901 = vunpack.c.l.b16 %v258
    %v1902 = vunpack.c.h.b16 %v258
    %v1903 = vunpack.c.l.b16 %v259
    %v1904 = vunpack.c.h.b16 %v259
    %v1905 = vunpack.c.l.b16 %v260
    %v1906 = vunpack.c.h.b16 %v260
    %v1907 = vunpack.c.l.b16 %v261
    %v1908 = vunpack.c.h.b16 %v261
    %v1909 = vunpack.c.l.b16 %v262
    %v1910 = vunpack.c.h.b16 %v262
    %v1911 = vunpack.c.l.b16 %v263
    %v1912 = vunpack.c.h.b16 %v263
    %v1913 = vunpack.c.l.b16 %v264
    %v1914 = vunpack.c.h.b16 %v264
    %v1915 = vpack.c.b16 %v1891, %v1867
    %v1916 = vpack.c.b16 %v1892, %v1868
    %v1917 = vpack.c.b16 %v1893, %v1869
    %v1918 = vpack.c.b16 %v1894, %v1870
    %v1919 = vpack.c.b16 %v1895, %v1871
    %v1920 = vpack.c.b16 %v1896, %v1872
    %v1921 = vpack.c.b16 %v1897, %v1873
    %v1922 = vpack.c.b16 %v1898, %v1874
    %v1923 = vpack.c.b16 %v1899, %v1875
    %v1924 = vpack.c.b16 %v1900, %v1876
    %v1925 = vpack.c.b16 %v1901, %v1877
    %v1926 = vpack.c.b16 %v1902, %v1878
    %v1927 = vpack.c.b16 %v1903, %v1879
    %v1928 = vpack.c.b16 %v1904, %v1880
    %v1929 = vpack.c.b16 %v1905, %v1881
    %v1930 = vpack.c.b16 %v1906, %v1882
    %v1931 = vpack.c.b16 %v1907, %v1883
    %v1932 = vpack.c.b16 %v1908, %v1884
    %v1933 = vpack.c.b16 %v1909, %v1885
    %v1934 = vpack.c.b16 %v1910, %v1886
    %v1935 = vpack.c.b16 %v1911, %v1887
    %v1936 = vpack.c.b16 %v1912, %v1888
    %v1937 = vpack.c.b16 %v1913, %v1889
    %v1938 = vpack.c.b16 %v1914, %v1890
    %v3499 = vunpack.c.l.b16 %v265
    %v3500 = vunpack.c.h.b16 %v265
    %v3501 = vunpack.c.l.b16 %v266
    %v3502 = vunpack.c.h.b16 %v266
    %v3503 = vunpack.c.l.b16 %v267
    %v3504 = vunpack.c.h.b16 %v267
    %v3505 = vunpack.c.l.b16 %v268
    %v3506 = vunpack.c.h.b16 %v268
    %v3507 = vunpack.c.l.b16 %v269
    %v3508 = vunpack.c.h.b16 %v269
    %v3509 = vunpack.c.l.b16 %v270
    %v3510 = vunpack.c.h.b16 %v270
    %v3511 = vunpack.c.l.b16 %v271
    %v3512 = vunpack.c.h.b16 %v271
    %v3513 = vunpack.c.l.b16 %v272
    %v3514 = vunpack.c.h.b16 %v272
    %v3515 = vunpack.c.l.b16 %v273
    %v3516 = vunpack.c.h.b16 %v273
    %v3517 = vunpack.c.l.b16 %v274
    %v3518 = vunpack.c.h.b16 %v274
    %v3519 = vunpack.c.l.b16 %v275
    %v3520 = vunpack.c.h.b16 %v275
    %v3521 = vunpack.c.l.b16 %v276
    %v3522 = vunpack.c.h.b16 %v276
    %v3523 = vunpack.c.l.b16 %v277
    %v3524 = vunpack.c.h.b16 %v277
    %v3525 = vunpack.c.l.b16 %v278
    %v3526 = vunpack.c.h.b16 %v278
    %v3527 = vunpack.c.l.b16 %v279
    %v3528 = vunpack.c.h.b16 %v279
    %v3529 = vunpack.c.l.b16 %v280
    %v3530 = vunpack.c.h.b16 %v280
    %v3531 = vunpack.c.l.b16 %v281
    %v3532 = vunpack.c.h.b16 %v281
    %v3533 = vunpack.c.l.b16 %v282
    %v3534 = vunpack.c.h.b16 %v282
    %v3535 = vunpack.c.l.b16 %v283
    %v3536 = vunpack.c.h.b16 %v283
    %v3537 = vunpack.c.l.b16 %v284
    %v3538 = vunpack.c.h.b16 %v284
    %v3539 = vunpack.c.l.b16 %v285
    %v3540 = vunpack.c.h.b16 %v285
    %v3541 = vunpack.c.l.b16 %v286
    %v3542 = vunpack.c.h.b16 %v286
    %v3543 = vunpack.c.l.b16 %v287
    %v3544 = vunpack.c.h.b16 %v287
    %v3545 = vunpack.c.l.b16 %v288
    %v3546 = vunpack.c.h.b16 %v288
    %v3547 = vunpack.c.l.b16 %v289
    %v3548 = vunpack.c.h.b16 %v289
    %v3549 = vunpack.c.l.b16 %v290
    %v3550 = vunpack.c.h.b16 %v290
    %v3551 = vunpack.c.l.b16 %v291
    %v3552 = vunpack.c.h.b16 %v291
    %v3553 = vunpack.c.l.b16 %v292
    %v3554 = vunpack.c.h.b16 %v292
    %v3555 = vunpack.c.l.b16 %v293
    %v3556 = vunpack.c.h.b16 %v293
    %v3557 = vunpack.c.l.b16 %v294
    %v3558 = vunpack.c.h.b16 %v294
    %v3559 = vunpack.c.l.b16 %v295
    %v3560 = vunpack.c.h.b16 %v295
    %v3561 = vunpack.c.l.b16 %v296
    %v3562 = vunpack.c.h.b16 %v296
    %v3563 = vunpack.c.l.b16 %v297
    %v3564 = vunpack.c.h.b16 %v297
    %v3565 = vunpack.c.l.b16 %v298
    %v3566 = vunpack.c.h.b16 %v298
    %v3567 = vunpack.c.l.b16 %v299
    %v3568 = vunpack.c.h.b16 %v299
    %v3569 = vunpack.c.l.b16 %v300
    %v3570 = vunpack.c.h.b16 %v300
    %v3571 = vunpack.c.l.b16 %v301
    %v3572 = vunpack.c.h.b16 %v301
    %v3573 = vunpack.c.l.b16 %v302
    %v3574 = vunpack.c.h.b16 %v302
    %v3575 = vunpack.c.l.b16 %v303
    %v3576 = vunpack.c.h.b16 %v303
    %v3577 = vunpack.c.l.b16 %v304
    %v3578 = vunpack.c.h.b16 %v304
    %v3579 = vunpack.c.l.b16 %v305
    %v3580 = vunpack.c.h.b16 %v305
    %v3581 = vunpack.c.l.b16 %v306
    %v3582 = vunpack.c.h.b16 %v306
    %v3583 = vunpack.c.l.b16 %v307
    %v3584 = vunpack.c.h.b16 %v307
    %v3585 = vunpack.c.l.b16 %v308
    %v3586 = vunpack.c.h.b16 %v308
    %v3587 = vunpack.c.l.b16 %v309
    %v3588 = vunpack.c.h.b16 %v309
    %v3589 = vunpack.c.l.b16 %v310
    %v3590 = vunpack.c.h.b16 %v310
    %v3591 = vunpack.c.l.b16 %v311
    %v3592 = vunpack.c.h.b16 %v311
    %v3593 = vunpack.c.l.b16 %v312
    %v3594 = vunpack.c.h.b16 %v312
    %v3595 = vunpack.c.l.b16 %v313
    %v3596 = vunpack.c.h.b16 %v313
    %v3597 = vunpack.c.l.b16 %v314
    %v3598 = vunpack.c.h.b16 %v314
    %v3599 = vunpack.c.l.b16 %v315
    %v3600 = vunpack.c.h.b16 %v315
    %v3601 = vunpack.c.l.b16 %v316
    %v3602 = vunpack.c.h.b16 %v316
    %v3603 = vunpack.c.l.b16 %v317
    %v3604 = vunpack.c.h.b16 %v317
    %v3605 = vunpack.c.l.b16 %v318
    %v3606 = vunpack.c.h.b16 %v318
    %v3607 = vunpack.c.l.b16 %v319
    %v3608 = vunpack.c.h.b16 %v319
    %v3609 = vunpack.c.l.b16 %v320
    %v3610 = vunpack.c.h.b16 %v320
    %v3611 = vunpack.c.l.b16 %v321
    %v3612 = vunpack.c.h.b16 %v321
    %v3613 = vunpack.c.l.b16 %v322
    %v3614 = vunpack.c.h.b16 %v322
    %v3615 = vunpack.c.l.b16 %v323
    %v3616 = vunpack.c.h.b16 %v323
    %v3617 = vunpack.c.l.b16 %v324
    %v3618 = vunpack.c.h.b16 %v324
    %v3619 = vunpack.c.l.b16 %v325
    %v3620 = vunpack.c.h.b16 %v325
    %v3621 = vunpack.c.l.b16 %v326
    %v3622 = vunpack.c.h.b16 %v326
    %v3623 = vunpack.c.l.b16 %v327
    %v3624 = vunpack.c.h.b16 %v327
    %v3625 = vunpack.c.l.b16 %v328
    %v3626 = vunpack.c.h.b16 %v328
    %v3627 = vunpack.c.l.b16 %v329
    %v3628 = vunpack.c.h.b16 %v329
    %v3629 = vunpack.c.l.b16 %v330
    %v3630 = vunpack.c.h.b16 %v330
    %v3631 = vunpack.c.l.b16 %v331
    %v3632 = vunpack.c.h.b16 %v331
    %v3633 = vunpack.c.l.b16 %v332
    %v3634 = vunpack.c.h.b16 %v332
    %v3635 = vunpack.c.l.b16 %v333
    %v3636 = vunpack.c.h.b16 %v333
    %v3637 = vunpack.c.l.b16 %v334
    %v3638 = vunpack.c.h.b16 %v334
    %v3639 = vunpack.c.l.b16 %v335
    %v3640 = vunpack.c.h.b16 %v335
    %v3641 = vunpack.c.l.b16 %v336
    %v3642 = vunpack.c.h.b16 %v336
    %v3643 = vunpack.c.l.b16 %v337
    %v3644 = vunpack.c.h.b16 %v337
    %v3645 = vunpack.c.l.b16 %v338
    %v3646 = vunpack.c.h.b16 %v338
    %v3647 = vunpack.c.l.b16 %v339
    %v3648 = vunpack.c.h.b16 %v339
    %v3649 = vunpack.c.l.b16 %v340
    %v3650 = vunpack.c.h.b16 %v340
    %v3651 = vunpack.c.l.b16 %v341
    %v3652 = vunpack.c.h.b16 %v341
    %v3653 = vunpack.c.l.b16 %v342
    %v3654 = vunpack.c.h.b16 %v342
    %v3655 = vunpack.c.l.b16 %v343
    %v3656 = vunpack.c.h.b16 %v343
    %v3657 = vunpack.c.l.b16 %v344
    %v3658 = vunpack.c.h.b16 %v344
    %v3659 = vunpack.c.l.b16 %v345
    %v3660 = vunpack.c.h.b16 %v345
    %v3661 = vunpack.c.l.b16 %v346
    %v3662 = vunpack.c.h.b16 %v346
    %v3663 = vunpack.c.l.b16 %v347
    %v3664 = vunpack.c.h.b16 %v347
    %v3665 = vunpack.c.l.b16 %v348
    %v3666 = vunpack.c.h.b16 %v348
    %v3667 = vunpack.c.l.b16 %v349
    %v3668 = vunpack.c.h.b16 %v349
    %v3669 = vunpack.c.l.b16 %v350
    %v3670 = vunpack.c.h.b16 %v350
    %v3671 = vunpack.c.l.b16 %v351
    %v3672 = vunpack.c.h.b16 %v351
    %v3673 = vunpack.c.l.b16 %v352
    %v3674 = vunpack.c.h.b16 %v352
    %v3675 = vunpack.c.l.b16 %v353
    %v3676 = vunpack.c.h.b16 %v353
    %v3677 = vunpack.c.l.b16 %v354
    %v3678 = vunpack.c.h.b16 %v354
    %v3679 = vunpack.c.l.b16 %v355
    %v3680 = vunpack.c.h.b16 %v355
    %v3681 = vunpack.c.l.b16 %v356
    %v3682 = vunpack.c.h.b16 %v356
    %v3683 = vunpack.c.l.b16 %v357
    %v3684 = vunpack.c.h.b16 %v357
    %v3685 = vunpack.c.l.b16 %v358
    %v3686 = vunpack.c.h.b16 %v358
    %v3687 = vunpack.c.l.b16 %v359
    %v3688 = vunpack.c.h.b16 %v359
    %v3689 = vunpack.c.l.b16 %v360
    %v3690 = vunpack.c.h.b16 %v360
    %v3691 = vunpack.c.l.b16 %v361
    %v3692 = vunpack.c.h.b16 %v361
    %v3693 = vunpack.c.l.b16 %v362
    %v3694 = vunpack.c.h.b16 %v362
    %v3695 = vunpack.c.l.b16 %v363
    %v3696 = vunpack.c.h.b16 %v363
    %v3697 = vunpack.c.l.b16 %v364
    %v3698 = vunpack.c.h.b16 %v364
    %v3699 = vunpack.c.l.b16 %v365
    %v3700 = vunpack.c.h.b16 %v365
    %v3701 = vunpack.c.l.b16 %v366
    %v3702 = vunpack.c.h.b16 %v366
    %v3703 = vunpack.c.l.b16 %v367
    %v3704 = vunpack.c.h.b16 %v367
    %v3705 = vunpack.c.l.b16 %v368
    %v3706 = vunpack.c.h.b16 %v368
    %v3707 = vunpack.c.l.b16 %v369
    %v3708 = vunpack.c.h.b16 %v369
    %v3709 = vunpack.c.l.b16 %v370
    %v3710 = vunpack.c.h.b16 %v370
    %v3711 = vunpack.c.l.b16 %v371
    %v3712 = vunpack.c.h.b16 %v371
    %v3713 = vunpack.c.l.b16 %v372
    %v3714 = vunpack.c.h.b16 %v372
    %v3715 = vunpack.c.l.b16 %v373
    %v3716 = vunpack.c.h.b16 %v373
    %v3717 = vunpack.c.l.b16 %v374
    %v3718 = vunpack.c.h.b16 %v374
    %v3719 = vunpack.c.l.b16 %v375
    %v3720 = vunpack.c.h.b16 %v375
    %v3721 = vunpack.c.l.b16 %v376
    %v3722 = vunpack.c.h.b16 %v376
    %v3723 = vunpack.c.l.b16 %v377
    %v3724 = vunpack.c.h.b16 %v377
    %v3725 = vunpack.c.l.b16 %v378
    %v3726 = vunpack.c.h.b16 %v378
    %v3727 = vunpack.c.l.b16 %v379
    %v3728 = vunpack.c.h.b16 %v379
    %v3729 = vunpack.c.l.b16 %v380
    %v3730 = vunpack.c.h.b16 %v380
    %v3731 = vunpack.c.l.b16 %v381
    %v3732 = vunpack.c.h.b16 %v381
    %v3733 = vunpack.c.l.b16 %v382
    %v3734 = vunpack.c.h.b16 %v382
    %v3735 = vunpack.c.l.b16 %v383
    %v3736 = vunpack.c.h.b16 %v383
    %v3737 = vunpack.c.l.b16 %v384
    %v3738 = vunpack.c.h.b16 %v384
    %v3739 = vunpack.c.l.b16 %v385
    %v3740 = vunpack.c.h.b16 %v385
    %v3741 = vunpack.c.l.b16 %v386
    %v3742 = vunpack.c.h.b16 %v386
    %v3743 = vunpack.c.l.b16 %v387
    %v3744 = vunpack.c.h.b16 %v387
    %v3745 = vunpack.c.l.b16 %v388
    %v3746 = vunpack.c.h.b16 %v388
    %v3747 = vunpack.c.l.b16 %v389
    %v3748 = vunpack.c.h.b16 %v389
    %v3749 = vunpack.c.l.b16 %v390
    %v3750 = vunpack.c.h.b16 %v390
    %v3751 = vunpack.c.l.b16 %v391
    %v3752 = vunpack.c.h.b16 %v391
    %v3753 = vunpack.c.l.b16 %v392
    %v3754 = vunpack.c.h.b16 %v392
    %v3755 = vunpack.c.l.b16 %v393
    %v3756 = vunpack.c.h.b16 %v393
    %v3757 = vunpack.c.l.b16 %v394
    %v3758 = vunpack.c.h.b16 %v394
    %v3759 = vunpack.c.l.b16 %v395
    %v3760 = vunpack.c.h.b16 %v395
    %v3761 = vunpack.c.l.b16 %v396
    %v3762 = vunpack.c.h.b16 %v396
    %v3763 = vunpack.c.l.b16 %v397
    %v3764 = vunpack.c.h.b16 %v397
    %v3765 = vunpack.c.l.b16 %v398
    %v3766 = vunpack.c.h.b16 %v398
    %v3767 = vunpack.c.l.b16 %v399
    %v3768 = vunpack.c.h.b16 %v399
    %v3769 = vunpack.c.l.b16 %v400
    %v3770 = vunpack.c.h.b16 %v400
    %v3771 = vunpack.c.l.b16 %v401
    %v3772 = vunpack.c.h.b16 %v401
    %v3773 = vunpack.c.l.b16 %v402
    %v3774 = vunpack.c.h.b16 %v402
    %v3775 = vunpack.c.l.b16 %v403
    %v3776 = vunpack.c.h.b16 %v403
    %v3777 = vunpack.c.l.b16 %v404
    %v3778 = vunpack.c.h.b16 %v404
    %v3779 = vunpack.c.l.b16 %v405
    %v3780 = vunpack.c.h.b16 %v405
    %v3781 = vunpack.c.l.b16 %v406
    %v3782 = vunpack.c.h.b16 %v406
    %v3783 = vunpack.c.l.b16 %v407
    %v3784 = vunpack.c.h.b16 %v407
    %v3785 = vunpack.c.l.b16 %v408
    %v3786 = vunpack.c.h.b16 %v408
    %v3787 = vunpack.c.l.b16 %v409
    %v3788 = vunpack.c.h.b16 %v409
    %v3789 = vunpack.c.l.b16 %v410
    %v3790 = vunpack.c.h.b16 %v410
    %v3791 = vunpack.c.l.b16 %v411
    %v3792 = vunpack.c.h.b16 %v411
    %v3793 = vunpack.c.l.b16 %v412
    %v3794 = vunpack.c.h.b16 %v412
    %v3795 = vunpack.c.l.b16 %v413
    %v3796 = vunpack.c.h.b16 %v413
    %v3797 = vunpack.c.l.b16 %v414
    %v3798 = vunpack.c.h.b16 %v414
    %v3799 = vunpack.c.l.b16 %v415
    %v3800 = vunpack.c.h.b16 %v415
    %v3801 = vunpack.c.l.b16 %v416
    %v3802 = vunpack.c.h.b16 %v416
    %v3803 = vunpack.c.l.b16 %v417
    %v3804 = vunpack.c.h.b16 %v417
    %v3805 = vunpack.c.l.b16 %v418
    %v3806 = vunpack.c.h.b16 %v418
    %v3807 = vunpack.c.l.b16 %v419
    %v3808 = vunpack.c.h.b16 %v419
    %v3809 = vunpack.c.l.b16 %v420
    %v3810 = vunpack.c.h.b16 %v420
    %v3811 = vunpack.c.l.b16 %v421
    %v3812 = vunpack.c.h.b16 %v421
    %v3813 = vunpack.c.l.b16 %v422
    %v3814 = vunpack.c.h.b16 %v422
    %v3815 = vunpack.c.l.b16 %v423
    %v3816 = vunpack.c.h.b16 %v423
    %v3817 = vunpack.c.l.b16 %v424
    %v3818 = vunpack.c.h.b16 %v424
    %v3819 = vunpack.c.l.b16 %v425
    %v3820 = vunpack.c.h.b16 %v425
    %v3821 = vunpack.c.l.b16 %v426
    %v3822 = vunpack.c.h.b16 %v426
    %v3823 = vunpack.c.l.b16 %v427
    %v3824 = vunpack.c.h.b16 %v427
    %v3825 = vunpack.c.l.b16 %v428
    %v3826 = vunpack.c.h.b16 %v428
    %v3827 = vunpack.c.l.b16 %v429
    %v3828 = vunpack.c.h.b16 %v429
    %v3829 = vunpack.c.l.b16 %v430
    %v3830 = vunpack.c.h.b16 %v430
    %v3831 = vunpack.c.l.b16 %v431
    %v3832 = vunpack.c.h.b16 %v431
    %v3833 = vunpack.c.l.b16 %v432
    %v3834 = vunpack.c.h.b16 %v432
    %v3835 = vunpack.c.l.b16 %v433
    %v3836 = vunpack.c.h.b16 %v433
    %v3837 = vunpack.c.l.b16 %v434
    %v3838 = vunpack.c.h.b16 %v434
    %v3839 = vunpack.c.l.b16 %v435
    %v3840 = vunpack.c.h.b16 %v435
    %v3841 = vunpack.c.l.b16 %v436
    %v3842 = vunpack.c.h.b16 %v436
    %v3843 = vunpack.c.l.b16 %v437
    %v3844 = vunpack.c.h.b16 %v437
    %v3845 = vunpack.c.l.b16 %v438
    %v3846 = vunpack.c.h.b16 %v438
    %v3847 = vunpack.c.l.b16 %v439
    %v3848 = vunpack.c.h.b16 %v439
    %v3849 = vunpack.c.l.b16 %v440
    %v3850 = vunpack.c.h.b16 %v440
    %v3851 = vunpack.c.l.b16 %v441
    %v3852 = vunpack.c.h.b16 %v441
    %v3853 = vunpack.c.l.b16 %v442
    %v3854 = vunpack.c.h.b16 %v442
    %v3855 = vunpack.c.l.b16 %v443
    %v3856 = vunpack.c.h.b16 %v443
    %v3857 = vunpack.c.l.b16 %v444
    %v3858 = vunpack.c.h.b16 %v444
    %v3859 = vunpack.c.l.b16 %v445
    %v3860 = vunpack.c.h.b16 %v445
    %v3861 = vunpack.c.l.b16 %v446
    %v3862 = vunpack.c.h.b16 %v446
    %v3863 = vunpack.c.l.b16 %v447
    %v3864 = vunpack.c.h.b16 %v447
    %v3865 = vunpack.c.l.b16 %v448
    %v3866 = vunpack.c.h.b16 %v448
    %v3867 = vunpack.c.l.b16 %v449
    %v3868 = vunpack.c.h.b16 %v449
    %v3869 = vunpack.c.l.b16 %v450
    %v3870 = vunpack.c.h.b16 %v450
    %v3871 = vunpack.c.l.b16 %v451
    %v3872 = vunpack.c.h.b16 %v451
    %v3873 = vunpack.c.l.b16 %v452
    %v3874 = vunpack.c.h.b16 %v452
    %v3875 = vunpack.c.l.b16 %v453
    %v3876 = vunpack.c.h.b16 %v453
    %v3877 = vunpack.c.l.b16 %v454
    %v3878 = vunpack.c.h.b16 %v454
    %v3879 = vunpack.c.l.b16 %v455
    %v3880 = vunpack.c.h.b16 %v455
    %v3881 = vunpack.c.l.b16 %v456
    %v3882 = vunpack.c.h.b16 %v456
    %v3883 = vunpack.c.l.b16 %v457
    %v3884 = vunpack.c.h.b16 %v457
    %v3885 = vunpack.c.l.b16 %v458
    %v3886 = vunpack.c.h.b16 %v458
    %v3887 = vunpack.c.l.b16 %v459
    %v3888 = vunpack.c.h.b16 %v459
    %v3889 = vunpack.c.l.b16 %v460
    %v3890 = vunpack.c.h.b16 %v460
    %v3891 = vunpack.c.l.b16 %v461
    %v3892 = vunpack.c.h.b16 %v461
    %v3893 = vunpack.c.l.b16 %v462
    %v3894 = vunpack.c.h.b16 %v462
    %v3895 = vunpack.c.l.b16 %v463
    %v3896 = vunpack.c.h.b16 %v463
    %v3897 = vunpack.c.l.b16 %v464
    %v3898 = vunpack.c.h.b16 %v464
    %v3899 = vunpack.c.l.b16 %v465
    %v3900 = vunpack.c.h.b16 %v465
    %v3901 = vunpack.c.l.b16 %v466
    %v3902 = vunpack.c.h.b16 %v466
    %v3903 = vunpack.c.l.b16 %v467
    %v3904 = vunpack.c.h.b16 %v467
    %v3905 = vunpack.c.l.b16 %v468
    %v3906 = vunpack.c.h.b16 %v468
    %v3907 = vunpack.c.l.b16 %v469
    %v3908 = vunpack.c.h.b16 %v469
    %v3909 = vunpack.c.l.b16 %v470
    %v3910 = vunpack.c.h.b16 %v470
    %v3911 = vunpack.c.l.b16 %v471
    %v3912 = vunpack.c.h.b16 %v471
    %v3913 = vunpack.c.l.b16 %v472
    %v3914 = vunpack.c.h.b16 %v472
    %v3915 = vunpack.c.l.b16 %v473
    %v3916 = vunpack.c.h.b16 %v473
    %v3917 = vunpack.c.l.b16 %v474
    %v3918 = vunpack.c.h.b16 %v474
    %v3919 = vunpack.c.l.b16 %v475
    %v3920 = vunpack.c.h.b16 %v475
    %v3921 = vunpack.c.l.b16 %v476
    %v3922 = vunpack.c.h.b16 %v476
    %v3923 = vunpack.c.l.b16 %v477
    %v3924 = vunpack.c.h.b16 %v477
    %v3925 = vunpack.c.l.b16 %v478
    %v3926 = vunpack.c.h.b16 %v478
    %v3927 = vunpack.c.l.b16 %v479
    %v3928 = vunpack.c.h.b16 %v479
    %v3929 = vunpack.c.l.b16 %v480
    %v3930 = vunpack.c.h.b16 %v480
    %v3931 = vunpack.c.l.b16 %v481
    %v3932 = vunpack.c.h.b16 %v481
    %v3933 = vunpack.c.l.b16 %v482
    %v3934 = vunpack.c.h.b16 %v482
    %v3935 = vunpack.c.l.b16 %v483
    %v3936 = vunpack.c.h.b16 %v483
    %v3937 = vunpack.c.l.b16 %v484
    %v3938 = vunpack.c.h.b16 %v484
    %v3939 = vunpack.c.l.b16 %v485
    %v3940 = vunpack.c.h.b16 %v485
    %v3941 = vunpack.c.l.b16 %v486
    %v3942 = vunpack.c.h.b16 %v486
    %v3943 = vunpack.c.l.b16 %v487
    %v3944 = vunpack.c.h.b16 %v487
    %v3945 = vunpack.c.l.b16 %v488
    %v3946 = vunpack.c.h.b16 %v488
    %v3947 = vunpack.c.l.b16 %v489
    %v3948 = vunpack.c.h.b16 %v489
    %v3949 = vunpack.c.l.b16 %v490
    %v3950 = vunpack.c.h.b16 %v490
    %v3951 = vunpack.c.l.b16 %v491
    %v3952 = vunpack.c.h.b16 %v491
    %v3953 = vunpack.c.l.b16 %v492
    %v3954 = vunpack.c.h.b16 %v492
    %v3955 = vunpack.c.l.b16 %v493
    %v3956 = vunpack.c.h.b16 %v493
    %v3957 = vunpack.c.l.b16 %v494
    %v3958 = vunpack.c.h.b16 %v494
    %v3959 = vunpack.c.l.b16 %v495
    %v3960 = vunpack.c.h.b16 %v495
    %v3961 = vunpack.c.l.b16 %v496
    %v3962 = vunpack.c.h.b16 %v496
    %v3963 = vunpack.c.l.b16 %v497
    %v3964 = vunpack.c.h.b16 %v497
    %v3965 = vunpack.c.l.b16 %v498
    %v3966 = vunpack.c.h.b16 %v498
    %v3967 = vunpack.c.l.b16 %v499
    %v3968 = vunpack.c.h.b16 %v499
    %v3969 = vunpack.c.l.b16 %v500
    %v3970 = vunpack.c.h.b16 %v500
    %v3971 = vunpack.c.l.b16 %v501
    %v3972 = vunpack.c.h.b16 %v501
    %v3973 = vunpack.c.l.b16 %v502
    %v3974 = vunpack.c.h.b16 %v502
    %v3975 = vunpack.c.l.b16 %v503
    %v3976 = vunpack.c.h.b16 %v503
    %v3977 = vunpack.c.l.b16 %v504
    %v3978 = vunpack.c.h.b16 %v504
    %v3979 = vunpack.c.l.b16 %v505
    %v3980 = vunpack.c.h.b16 %v505
    %v3981 = vunpack.c.l.b16 %v506
    %v3982 = vunpack.c.h.b16 %v506
    %v3983 = vunpack.c.l.b16 %v507
    %v3984 = vunpack.c.h.b16 %v507
    %v3985 = vunpack.c.l.b16 %v508
    %v3986 = vunpack.c.h.b16 %v508
    %v3987 = vunpack.c.l.b16 %v509
    %v3988 = vunpack.c.h.b16 %v509
    %v3989 = vunpack.c.l.b16 %v510
    %v3990 = vunpack.c.h.b16 %v510
    %v3991 = vunpack.c.l.b16 %v511
    %v3992 = vunpack.c.h.b16 %v511
    %v3993 = vunpack.c.l.b16 %v512
    %v3994 = vunpack.c.h.b16 %v512
    %v3995 = vunpack.c.l.b16 %v513
    %v3996 = vunpack.c.h.b16 %v513
    %v3997 = vunpack.c.l.b16 %v514
    %v3998 = vunpack.c.h.b16 %v514
    %v3999 = vunpack.c.l.b16 %v515
    %v4000 = vunpack.c.h.b16 %v515
    %v4001 = vunpack.c.l.b16 %v516
    %v4002 = vunpack.c.h.b16 %v516
    %v4003 = vunpack.c.l.b16 %v517
    %v4004 = vunpack.c.h.b16 %v517
    %v4005 = vunpack.c.l.b16 %v518
    %v4006 = vunpack.c.h.b16 %v518
    %v4007 = vunpack.c.l.b16 %v519
    %v4008 = vunpack.c.h.b16 %v519
    %v4009 = vunpack.c.l.b16 %v520
    %v4010 = vunpack.c.h.b16 %v520
    %v4011 = vunpack.c.l.b16 %v521
    %v4012 = vunpack.c.h.b16 %v521
    %v4013 = vunpack.c.l.b16 %v522
    %v4014 = vunpack.c.h.b16 %v522
    %v4015 = vunpack.c.l.b16 %v523
    %v4016 = vunpack.c.h.b16 %v523
    %v4017 = vunpack.c.l.b16 %v524
    %v4018 = vunpack.c.h.b16 %v524
    %v4019 = vunpack.c.l.b16 %v525
    %v4020 = vunpack.c.h.b16 %v525
    %v4021 = vunpack.c.l.b16 %v526
    %v4022 = vunpack.c.h.b16 %v526
    %v4023 = vunpack.c.l.b16 %v527
    %v4024 = vunpack.c.h.b16 %v527
    %v4025 = vunpack.c.l.b16 %v528
    %v4026 = vunpack.c.h.b16 %v528
    %v4027 = vunpack.c.l.b16 %v529
    %v4028 = vunpack.c.h.b16 %v529
    %v4029 = vunpack.c.l.b16 %v530
    %v4030 = vunpack.c.h.b16 %v530
    %v4031 = vunpack.c.l.b16 %v531
    %v4032 = vunpack.c.h.b16 %v531
    %v4033 = vunpack.c.l.b16 %v532
    %v4034 = vunpack.c.h.b16 %v532
    %v4035 = vunpack.c.l.b16 %v533
    %v4036 = vunpack.c.h.b16 %v533
    %v4037 = vunpack.c.l.b16 %v534
    %v4038 = vunpack.c.h.b16 %v534
    %v4039 = vunpack.c.l.b16 %v535
    %v4040 = vunpack.c.h.b16 %v535
    %v4041 = vunpack.c.l.b16 %v536
    %v4042 = vunpack.c.h.b16 %v536
    %v4043 = vunpack.c.l.b16 %v537
    %v4044 = vunpack.c.h.b16 %v537
    %v4045 = vunpack.c.l.b16 %v538
    %v4046 = vunpack.c.h.b16 %v538
    %v4047 = vunpack.c.l.b16 %v539
    %v4048 = vunpack.c.h.b16 %v539
    %v4049 = vunpack.c.l.b16 %v540
    %v4050 = vunpack.c.h.b16 %v540
    %v4051 = vunpack.c.l.b16 %v541
    %v4052 = vunpack.c.h.b16 %v541
    %v4053 = vunpack.c.l.b16 %v542
    %v4054 = vunpack.c.h.b16 %v542
    %v4055 = vunpack.c.l.b16 %v543
    %v4056 = vunpack.c.h.b16 %v543
    %v4057 = vunpack.c.l.b16 %v544
    %v4058 = vunpack.c.h.b16 %v544
    %v4059 = vunpack.c.l.b16 %v545
    %v4060 = vunpack.c.h.b16 %v545
    %v4061 = vunpack.c.l.b16 %v546
    %v4062 = vunpack.c.h.b16 %v546
    %v4063 = vunpack.c.l.b16 %v547
    %v4064 = vunpack.c.h.b16 %v547
    %v4065 = vunpack.c.l.b16 %v548
    %v4066 = vunpack.c.h.b16 %v548
    %v4067 = vunpack.c.l.b16 %v549
    %v4068 = vunpack.c.h.b16 %v549
    %v4069 = vunpack.c.l.b16 %v550
    %v4070 = vunpack.c.h.b16 %v550
    %v4071 = vunpack.c.l.b16 %v551
    %v4072 = vunpack.c.h.b16 %v551
    %v4073 = vunpack.c.l.b16 %v552
    %v4074 = vunpack.c.h.b16 %v552
    %v4075 = vunpack.c.l.b16 %v553
    %v4076 = vunpack.c.h.b16 %v553
    %v4077 = vunpack.c.l.b16 %v554
    %v4078 = vunpack.c.h.b16 %v554
    %v4079 = vunpack.c.l.b16 %v555
    %v4080 = vunpack.c.h.b16 %v555
    %v4081 = vunpack.c.l.b16 %v556
    %v4082 = vunpack.c.h.b16 %v556
    %v4083 = vunpack.c.l.b16 %v557
    %v4084 = vunpack.c.h.b16 %v557
    %v4085 = vunpack.c.l.b16 %v558
    %v4086 = vunpack.c.h.b16 %v558
    %v4087 = vunpack.c.l.b16 %v559
    %v4088 = vunpack.c.h.b16 %v559
    %v4089 = vunpack.c.l.b16 %v560
    %v4090 = vunpack.c.h.b16 %v560
    %v4091 = vunpack.c.l.b16 %v561
    %v4092 = vunpack.c.h.b16 %v561
    %v4093 = vunpack.c.l.b16 %v562
    %v4094 = vunpack.c.h.b16 %v562
    %v4095 = vunpack.c.l.b16 %v563
    %v4096 = vunpack.c.h.b16 %v563
    %v4097 = vunpack.c.l.b16 %v564
    %v4098 = vunpack.c.h.b16 %v564
    %v4099 = vunpack.c.l.b16 %v565
    %v4100 = vunpack.c.h.b16 %v565
    %v4101 = vunpack.c.l.b16 %v566
    %v4102 = vunpack.c.h.b16 %v566
    %v4103 = vunpack.c.l.b16 %v567
    %v4104 = vunpack.c.h.b16 %v567
    %v4105 = vunpack.c.l.b16 %v568
    %v4106 = vunpack.c.h.b16 %v568
    %v4107 = vunpack.c.l.b16 %v569
    %v4108 = vunpack.c.h.b16 %v569
    %v4109 = vunpack.c.l.b16 %v570
    %v4110 = vunpack.c.h.b16 %v570
    %v4111 = vunpack.c.l.b16 %v571
    %v4112 = vunpack.c.h.b16 %v571
    %v4113 = vunpack.c.l.b16 %v572
    %v4114 = vunpack.c.h.b16 %v572
    %v4115 = vunpack.c.l.b16 %v573
    %v4116 = vunpack.c.h.b16 %v573
    %v4117 = vunpack.c.l.b16 %v574
    %v4118 = vunpack.c.h.b16 %v574
    %v4119 = vunpack.c.l.b16 %v575
    %v4120 = vunpack.c.h.b16 %v575
    %v4121 = vunpack.c.l.b16 %v576
    %v4122 = vunpack.c.h.b16 %v576
    %v4123 = vunpack.c.l.b16 %v577
    %v4124 = vunpack.c.h.b16 %v577
    %v4125 = vunpack.c.l.b16 %v578
    %v4126 = vunpack.c.h.b16 %v578
    %v4127 = vunpack.c.l.b16 %v579
    %v4128 = vunpack.c.h.b16 %v579
    %v4129 = vunpack.c.l.b16 %v580
    %v4130 = vunpack.c.h.b16 %v580
    %v4131 = vunpack.c.l.b16 %v581
    %v4132 = vunpack.c.h.b16 %v581
    %v4133 = vunpack.c.l.b16 %v582
    %v4134 = vunpack.c.h.b16 %v582
    %v4135 = vunpack.c.l.b16 %v583
    %v4136 = vunpack.c.h.b16 %v583
    %v4137 = vunpack.c.l.b16 %v584
    %v4138 = vunpack.c.h.b16 %v584
    %v4139 = vunpack.c.l.b16 %v585
    %v4140 = vunpack.c.h.b16 %v585
    %v4141 = vunpack.c.l.b16 %v586
    %v4142 = vunpack.c.h.b16 %v586
    %v4143 = vunpack.c.l.b16 %v587
    %v4144 = vunpack.c.h.b16 %v587
    %v4145 = vunpack.c.l.b16 %v588
    %v4146 = vunpack.c.h.b16 %v588
    %v4147 = vunpack.c.l.b16 %v589
    %v4148 = vunpack.c.h.b16 %v589
    %v4149 = vunpack.c.l.b16 %v590
    %v4150 = vunpack.c.h.b16 %v590
    %v4151 = vunpack.c.l.b16 %v591
    %v4152 = vunpack.c.h.b16 %v591
    %v4153 = vunpack.c.l.b16 %v592
    %v4154 = vunpack.c.h.b16 %v592
    %v4155 = vunpack.c.l.b16 %v593
    %v4156 = vunpack.c.h.b16 %v593
    %v4157 = vunpack.c.l.b16 %v594
    %v4158 = vunpack.c.h.b16 %v594
    %v4159 = vunpack.c.l.b16 %v595
    %v4160 = vunpack.c.h.b16 %v595
    %v4161 = vunpack.c.l.b16 %v596
    %v4162 = vunpack.c.h.b16 %v596
    %v4163 = vunpack.c.l.b16 %v597
    %v4164 = vunpack.c.h.b16 %v597
    %v4165 = vunpack.c.l.b16 %v598
    %v4166 = vunpack.c.h.b16 %v598
    %v4167 = vunpack.c.l.b16 %v599
    %v4168 = vunpack.c.h.b16 %v599
    %v4169 = vunpack.c.l.b16 %v600
    %v4170 = vunpack.c.h.b16 %v600
    %v4171 = vunpack.c.l.b16 %v601
    %v4172 = vunpack.c.h.b16 %v601
    %v4173 = vunpack.c.l.b16 %v602
    %v4174 = vunpack.c.h.b16 %v602
    %v4175 = vunpack.c.l.b16 %v603
    %v4176 = vunpack.c.h.b16 %v603
    %v4177 = vunpack.c.l.b16 %v604
    %v4178 = vunpack.c.h.b16 %v604
    %v4179 = vunpack.c.l.b16 %v605
    %v4180 = vunpack.c.h.b16 %v605
    %v4181 = vunpack.c.l.b16 %v606
    %v4182 = vunpack.c.h.b16 %v606
    %v4183 = vunpack.c.l.b16 %v607
    %v4184 = vunpack.c.h.b16 %v607
    %v4185 = vunpack.c.l.b16 %v608
    %v4186 = vunpack.c.h.b16 %v608
    %v4187 = vunpack.c.l.b16 %v609
    %v4188 = vunpack.c.h.b16 %v609
    %v4189 = vunpack.c.l.b16 %v610
    %v4190 = vunpack.c.h.b16 %v610
    %v4191 = vunpack.c.l.b16 %v611
    %v4192 = vunpack.c.h.b16 %v611
    %v4193 = vunpack.c.l.b16 %v612
    %v4194 = vunpack.c.h.b16 %v612
    %v4195 = vunpack.c.l.b16 %v613
    %v4196 = vunpack.c.h.b16 %v613
    %v4197 = vunpack.c.l.b16 %v614
    %v4198 = vunpack.c.h.b16 %v614
    %v4199 = vunpack.c.l.b16 %v615
    %v4200 = vunpack.c.h.b16 %v615
    %v4201 = vunpack.c.l.b16 %v616
    %v4202 = vunpack.c.h.b16 %v616
    %v4203 = vunpack.c.l.b16 %v617
    %v4204 = vunpack.c.h.b16 %v617
    %v4205 = vunpack.c.l.b16 %v618
    %v4206 = vunpack.c.h.b16 %v618
    %v4207 = vunpack.c.l.b16 %v619
    %v4208 = vunpack.c.h.b16 %v619
    %v4209 = vunpack.c.l.b16 %v620
    %v4210 = vunpack.c.h.b16 %v620
    %v4211 = vunpack.c.l.b16 %v621
    %v4212 = vunpack.c.h.b16 %v621
    %v4213 = vunpack.c.l.b16 %v622
    %v4214 = vunpack.c.h.b16 %v622
    %v4215 = vunpack.c.l.b16 %v623
    %v4216 = vunpack.c.h.b16 %v623
    %v4217 = vunpack.c.l.b16 %v624
    %v4218 = vunpack.c.h.b16 %v624
    %v4219 = vunpack.c.l.b16 %v625
    %v4220 = vunpack.c.h.b16 %v625
    %v4221 = vunpack.c.l.b16 %v626
    %v4222 = vunpack.c.h.b16 %v626
    %v4223 = vunpack.c.l.b16 %v627
    %v4224 = vunpack.c.h.b16 %v627
    %v4225 = vunpack.c.l.b16 %v628
    %v4226 = vunpack.c.h.b16 %v628
    %v4227 = vunpack.c.l.b16 %v629
    %v4228 = vunpack.c.h.b16 %v629
    %v4229 = vunpack.c.l.b16 %v630
    %v4230 = vunpack.c.h.b16 %v630
    %v4231 = vunpack.c.l.b16 %v631
    %v4232 = vunpack.c.h.b16 %v631
    %v4233 = vunpack.c.l.b16 %v632
    %v4234 = vunpack.c.h.b16 %v632
    %v4235 = vunpack.c.l.b16 %v633
    %v4236 = vunpack.c.h.b16 %v633
    %v4237 = vunpack.c.l.b16 %v634
    %v4238 = vunpack.c.h.b16 %v634
    %v4239 = vunpack.c.l.b16 %v635
    %v4240 = vunpack.c.h.b16 %v635
    %v4241 = vunpack.c.l.b16 %v636
    %v4242 = vunpack.c.h.b16 %v636
    %v4243 = vunpack.c.l.b16 %v637
    %v4244 = vunpack.c.h.b16 %v637
    %v4245 = vunpack.c.l.b16 %v638
    %v4246 = vunpack.c.h.b16 %v638
    %v4247 = vunpack.c.l.b16 %v639
    %v4248 = vunpack.c.h.b16 %v639
    %v4249 = vunpack.c.l.b16 %v640
    %v4250 = vunpack.c.h.b16 %v640
    %v4251 = vunpack.c.l.b16 %v641
    %v4252 = vunpack.c.h.b16 %v641
    %v4253 = vunpack.c.l.b16 %v642
    %v4254 = vunpack.c.h.b16 %v642
    %v4255 = vunpack.c.l.b16 %v643
    %v4256 = vunpack.c.h.b16 %v643
    %v4257 = vunpack.c.l.b16 %v644
    %v4258 = vunpack.c.h.b16 %v644
    %v4259 = vunpack.c.l.b16 %v645
    %v4260 = vunpack.c.h.b16 %v645
    %v4261 = vunpack.c.l.b16 %v646
    %v4262 = vunpack.c.h.b16 %v646
    %v4263 = vunpack.c.l.b16 %v647
    %v4264 = vunpack.c.h.b16 %v647
    %v4265 = vunpack.c.l.b16 %v648
    %v4266 = vunpack.c.h.b16 %v648
    %v4267 = vunpack.c.l.b16 %v649
    %v4268 = vunpack.c.h.b16 %v649
    %v4269 = vunpack.c.l.b16 %v650
    %v4270 = vunpack.c.h.b16 %v650
    %v4271 = vunpack.c.l.b16 %v651
    %v4272 = vunpack.c.h.b16 %v651
    %v4273 = vunpack.c.l.b16 %v652
    %v4274 = vunpack.c.h.b16 %v652
    %v4275 = vunpack.c.l.b16 %v653
    %v4276 = vunpack.c.h.b16 %v653
    %v4277 = vunpack.c.l.b16 %v654
    %v4278 = vunpack.c.h.b16 %v654
    %v4279 = vunpack.c.l.b16 %v655
    %v4280 = vunpack.c.h.b16 %v655
    %v4281 = vunpack.c.l.b16 %v656
    %v4282 = vunpack.c.h.b16 %v656
    %v4283 = vunpack.c.l.b16 %v657
    %v4284 = vunpack.c.h.b16 %v657
    %v4285 = vunpack.c.l.b16 %v658
    %v4286 = vunpack.c.h.b16 %v658
    %v4287 = vunpack.c.l.b16 %v659
    %v4288 = vunpack.c.h.b16 %v659
    %v4289 = vunpack.c.l.b16 %v660
    %v4290 = vunpack.c.h.b16 %v660
    %v4291 = vunpack.c.l.b16 %v661
    %v4292 = vunpack.c.h.b16 %v661
    %v4293 = vunpack.c.l.b16 %v662
    %v4294 = vunpack.c.h.b16 %v662
    %v4295 = vunpack.c.l.b16 %v663
    %v4296 = vunpack.c.h.b16 %v663
    %v4297 = vunpack.c.l.b16 %v664
    %v4298 = vunpack.c.h.b16 %v664
    %v4299 = vunpack.c.l.b16 %v665
    %v4300 = vunpack.c.h.b16 %v665
    %v4301 = vunpack.c.l.b16 %v666
    %v4302 = vunpack.c.h.b16 %v666
    %v4303 = vunpack.c.l.b16 %v667
    %v4304 = vunpack.c.h.b16 %v667
    %v4305 = vunpack.c.l.b16 %v668
    %v4306 = vunpack.c.h.b16 %v668
    %v4307 = vunpack.c.l.b16 %v669
    %v4308 = vunpack.c.h.b16 %v669
    %v4309 = vunpack.c.l.b16 %v670
    %v4310 = vunpack.c.h.b16 %v670
    %v4311 = vunpack.c.l.b16 %v671
    %v4312 = vunpack.c.h.b16 %v671
    %v4313 = vunpack.c.l.b16 %v672
    %v4314 = vunpack.c.h.b16 %v672
    %v4315 = vunpack.c.l.b16 %v673
    %v4316 = vunpack.c.h.b16 %v673
    %v4317 = vunpack.c.l.b16 %v674
    %v4318 = vunpack.c.h.b16 %v674
    %v4319 = vunpack.c.l.b16 %v675
    %v4320 = vunpack.c.h.b16 %v675
    %v4321 = vunpack.c.l.b16 %v676
    %v4322 = vunpack.c.h.b16 %v676
    %v4323 = vunpack.c.l.b16 %v677
    %v4324 = vunpack.c.h.b16 %v677
    %v4325 = vunpack.c.l.b16 %v678
    %v4326 = vunpack.c.h.b16 %v678
    %v4327 = vunpack.c.l.b16 %v679
    %v4328 = vunpack.c.h.b16 %v679
    %v4329 = vunpack.c.l.b16 %v680
    %v4330 = vunpack.c.h.b16 %v680
    %v4331 = vunpack.c.l.b16 %v681
    %v4332 = vunpack.c.h.b16 %v681
    %v4333 = vunpack.c.l.b16 %v682
    %v4334 = vunpack.c.h.b16 %v682
    %v4335 = vunpack.c.l.b16 %v683
    %v4336 = vunpack.c.h.b16 %v683
    %v4337 = vunpack.c.l.b16 %v684
    %v4338 = vunpack.c.h.b16 %v684
    %v4339 = vunpack.c.l.b16 %v685
    %v4340 = vunpack.c.h.b16 %v685
    %v4341 = vunpack.c.l.b16 %v686
    %v4342 = vunpack.c.h.b16 %v686
    %v4343 = vunpack.c.l.b16 %v687
    %v4344 = vunpack.c.h.b16 %v687
    %v4345 = vunpack.c.l.b16 %v688
    %v4346 = vunpack.c.h.b16 %v688
    %v4347 = vunpack.c.l.b16 %v689
    %v4348 = vunpack.c.h.b16 %v689
    %v4349 = vunpack.c.l.b16 %v690
    %v4350 = vunpack.c.h.b16 %v690
    %v4351 = vunpack.c.l.b16 %v691
    %v4352 = vunpack.c.h.b16 %v691
    %v4353 = vunpack.c.l.b16 %v692
    %v4354 = vunpack.c.h.b16 %v692
    %v4355 = vunpack.c.l.b16 %v693
    %v4356 = vunpack.c.h.b16 %v693
    %v4357 = vunpack.c.l.b16 %v694
    %v4358 = vunpack.c.h.b16 %v694
    %v4359 = vunpack.c.l.b16 %v695
    %v4360 = vunpack.c.h.b16 %v695
    %v4361 = vunpack.c.l.b16 %v696
    %v4362 = vunpack.c.h.b16 %v696
    %v4363 = vunpack.c.l.b16 %v697
    %v4364 = vunpack.c.h.b16 %v697
    %v4365 = vunpack.c.l.b16 %v698
    %v4366 = vunpack.c.h.b16 %v698
    %v4367 = vunpack.c.l.b16 %v699
    %v4368 = vunpack.c.h.b16 %v699
    %v4369 = vunpack.c.l.b16 %v700
    %v4370 = vunpack.c.h.b16 %v700
    %v4371 = vunpack.c.l.b16 %v701
    %v4372 = vunpack.c.h.b16 %v701
    %v4373 = vunpack.c.l.b16 %v702
    %v4374 = vunpack.c.h.b16 %v702
    %v4375 = vunpack.c.l.b16 %v703
    %v4376 = vunpack.c.h.b16 %v703
    %v4377 = vunpack.c.l.b16 %v704
    %v4378 = vunpack.c.h.b16 %v704
    %v4379 = vunpack.c.l.b16 %v705
    %v4380 = vunpack.c.h.b16 %v705
    %v4381 = vunpack.c.l.b16 %v706
    %v4382 = vunpack.c.h.b16 %v706
    %v4383 = vunpack.c.l.b16 %v707
    %v4384 = vunpack.c.h.b16 %v707
    %v4385 = vunpack.c.l.b16 %v708
    %v4386 = vunpack.c.h.b16 %v708
    %v4387 = vunpack.c.l.b16 %v709
    %v4388 = vunpack.c.h.b16 %v709
    %v4389 = vunpack.c.l.b16 %v710
    %v4390 = vunpack.c.h.b16 %v710
    %v4391 = vunpack.c.l.b16 %v711
    %v4392 = vunpack.c.h.b16 %v711
    %v4393 = vunpack.c.l.b16 %v712
    %v4394 = vunpack.c.h.b16 %v712
    %v4395 = vunpack.c.l.b16 %v713
    %v4396 = vunpack.c.h.b16 %v713
    %v4397 = vunpack.c.l.b16 %v714
    %v4398 = vunpack.c.h.b16 %v714
    %v4399 = vunpack.c.l.b16 %v715
    %v4400 = vunpack.c.h.b16 %v715
    %v4401 = vunpack.c.l.b16 %v716
    %v4402 = vunpack.c.h.b16 %v716
    %v4403 = vunpack.c.l.b16 %v717
    %v4404 = vunpack.c.h.b16 %v717
    %v4405 = vunpack.c.l.b16 %v718
    %v4406 = vunpack.c.h.b16 %v718
    %v4407 = vunpack.c.l.b16 %v719
    %v4408 = vunpack.c.h.b16 %v719
    %v4409 = vunpack.c.l.b16 %v720
    %v4410 = vunpack.c.h.b16 %v720
    %v4411 = vunpack.c.l.b16 %v721
    %v4412 = vunpack.c.h.b16 %v721
    %v4413 = vunpack.c.l.b16 %v722
    %v4414 = vunpack.c.h.b16 %v722
    %v4415 = vunpack.c.l.b16 %v723
    %v4416 = vunpack.c.h.b16 %v723
    %v4417 = vunpack.c.l.b16 %v724
    %v4418 = vunpack.c.h.b16 %v724
    %v4419 = vunpack.c.l.b16 %v725
    %v4420 = vunpack.c.h.b16 %v725
    %v4421 = vunpack.c.l.b16 %v726
    %v4422 = vunpack.c.h.b16 %v726
    %v4423 = vunpack.c.l.b16 %v727
    %v4424 = vunpack.c.h.b16 %v727
    %v4425 = vunpack.c.l.b16 %v728
    %v4426 = vunpack.c.h.b16 %v728
    %v4427 = vunpack.c.l.b16 %v729
    %v4428 = vunpack.c.h.b16 %v729
    %v4429 = vunpack.c.l.b16 %v730
    %v4430 = vunpack.c.h.b16 %v730
    %v4431 = vunpack.c.l.b16 %v731
    %v4432 = vunpack.c.h.b16 %v731
    %v4433 = vunpack.c.l.b16 %v732
    %v4434 = vunpack.c.h.b16 %v732
    %v4435 = vunpack.c.l.b16 %v733
    %v4436 = vunpack.c.h.b16 %v733
    %v4437 = vunpack.c.l.b16 %v734
    %v4438 = vunpack.c.h.b16 %v734
    %v4439 = vunpack.c.l.b16 %v735
    %v4440 = vunpack.c.h.b16 %v735
    %v4441 = vunpack.c.l.b16 %v736
    %v4442 = vunpack.c.h.b16 %v736
    %v4443 = vunpack.c.l.b16 %v737
    %v4444 = vunpack.c.h.b16 %v737
    %v4445 = vunpack.c.l.b16 %v738
    %v4446 = vunpack.c.h.b16 %v738
    %v4447 = vunpack.c.l.b16 %v739
    %v4448 = vunpack.c.h.b16 %v739
    %v4449 = vunpack.c.l.b16 %v740
    %v4450 = vunpack.c.h.b16 %v740
    %v4451 = vunpack.c.l.b16 %v741
    %v4452 = vunpack.c.h.b16 %v741
    %v4453 = vunpack.c.l.b16 %v742
    %v4454 = vunpack.c.h.b16 %v742
    %v4455 = vunpack.c.l.b16 %v743
    %v4456 = vunpack.c.h.b16 %v743
    %v4457 = vunpack.c.l.b16 %v744
    %v4458 = vunpack.c.h.b16 %v744
    %v4459 = vunpack.c.l.b16 %v745
    %v4460 = vunpack.c.h.b16 %v745
    %v4461 = vunpack.c.l.b16 %v746
    %v4462 = vunpack.c.h.b16 %v746
    %v4463 = vunpack.c.l.b16 %v747
    %v4464 = vunpack.c.h.b16 %v747
    %v4465 = vunpack.c.l.b16 %v748
    %v4466 = vunpack.c.h.b16 %v748
    %v4467 = vunpack.c.l.b16 %v749
    %v4468 = vunpack.c.h.b16 %v749
    %v4469 = vunpack.c.l.b16 %v750
    %v4470 = vunpack.c.h.b16 %v750
    %v4471 = vunpack.c.l.b16 %v751
    %v4472 = vunpack.c.h.b16 %v751
    %v4473 = vunpack.c.l.b16 %v752
    %v4474 = vunpack.c.h.b16 %v752
    %v4475 = vunpack.c.l.b16 %v753
    %v4476 = vunpack.c.h.b16 %v753
    %v4477 = vunpack.c.l.b16 %v754
    %v4478 = vunpack.c.h.b16 %v754
    %v4479 = vunpack.c.l.b16 %v755
    %v4480 = vunpack.c.h.b16 %v755
    %v4481 = vunpack.c.l.b16 %v756
    %v4482 = vunpack.c.h.b16 %v756
    %v4483 = vunpack.c.l.b16 %v757
    %v4484 = vunpack.c.h.b16 %v757
    %v4485 = vunpack.c.l.b16 %v758
    %v4486 = vunpack.c.h.b16 %v758
    %v4487 = vunpack.c.l.b16 %v759
    %v4488 = vunpack.c.h.b16 %v759
    %v4489 = vunpack.c.l.b16 %v760
    %v4490 = vunpack.c.h.b16 %v760
    %v4491 = vunpack.c.l.b16 %v761
    %v4492 = vunpack.c.h.b16 %v761
    %v4493 = vunpack.c.l.b16 %v762
    %v4494 = vunpack.c.h.b16 %v762
    %v4495 = vunpack.c.l.b16 %v763
    %v4496 = vunpack.c.h.b16 %v763
    %v4497 = vunpack.c.l.b16 %v764
    %v4498 = vunpack.c.h.b16 %v764
    %v4499 = vunpack.c.l.b16 %v765
    %v4500 = vunpack.c.h.b16 %v765
    %v4501 = vunpack.c.l.b16 %v766
    %v4502 = vunpack.c.h.b16 %v766
    %v4503 = vunpack.c.l.b16 %v767
    %v4504 = vunpack.c.h.b16 %v767
    %v4505 = vunpack.c.l.b16 %v768
    %v4506 = vunpack.c.h.b16 %v768
    %v4507 = vunpack.c.l.b16 %v769
    %v4508 = vunpack.c.h.b16 %v769
    %v4509 = vunpack.c.l.b16 %v770
    %v4510 = vunpack.c.h.b16 %v770
    %v4511 = vunpack.c.l.b16 %v771
    %v4512 = vunpack.c.h.b16 %v771
    %v4513 = vunpack.c.l.b16 %v772
    %v4514 = vunpack.c.h.b16 %v772
    %v4515 = vunpack.c.l.b16 %v773
    %v4516 = vunpack.c.h.b16 %v773
    %v4517 = vunpack.c.l.b16 %v774
    %v4518 = vunpack.c.h.b16 %v774
    %v4519 = vunpack.c.l.b16 %v775
    %v4520 = vunpack.c.h.b16 %v775
    %v4521 = vunpack.c.l.b16 %v776
    %v4522 = vunpack.c.h.b16 %v776
    %v4523 = vunpack.c.l.b16 %v777
    %v4524 = vunpack.c.h.b16 %v777
    %v4525 = vunpack.c.l.b16 %v778
    %v4526 = vunpack.c.h.b16 %v778
    %v4527 = vunpack.c.l.b16 %v779
    %v4528 = vunpack.c.h.b16 %v779
    %v4529 = vunpack.c.l.b16 %v780
    %v4530 = vunpack.c.h.b16 %v780
    %v4531 = vunpack.c.l.b16 %v781
    %v4532 = vunpack.c.h.b16 %v781
    %v4533 = vunpack.c.l.b16 %v782
    %v4534 = vunpack.c.h.b16 %v782
    %v4535 = vunpack.c.l.b16 %v783
    %v4536 = vunpack.c.h.b16 %v783
    %v4537 = vunpack.c.l.b16 %v784
    %v4538 = vunpack.c.h.b16 %v784
    %v4539 = vunpack.c.l.b16 %v785
    %v4540 = vunpack.c.h.b16 %v785
    %v4541 = vunpack.c.l.b16 %v786
    %v4542 = vunpack.c.h.b16 %v786
    %v4543 = vunpack.c.l.b16 %v787
    %v4544 = vunpack.c.h.b16 %v787
    %v4545 = vunpack.c.l.b16 %v788
    %v4546 = vunpack.c.h.b16 %v788
    %v4547 = vunpack.c.l.b16 %v789
    %v4548 = vunpack.c.h.b16 %v789
    %v4549 = vunpack.c.l.b16 %v790
    %v4550 = vunpack.c.h.b16 %v790
    %v4551 = vunpack.c.l.b16 %v791
    %v4552 = vunpack.c.h.b16 %v791
    %v4553 = vunpack.c.l.b16 %v792
    %v4554 = vunpack.c.h.b16 %v792
    %v4555 = vunpack.c.l.b16 %v793
    %v4556 = vunpack.c.h.b16 %v793
    %v4557 = vunpack.c.l.b16 %v794
    %v4558 = vunpack.c.h.b16 %v794
    %v4559 = vunpack.c.l.b16 %v795
    %v4560 = vunpack.c.h.b16 %v795
    %v4561 = vunpack.c.l.b16 %v796
    %v4562 = vunpack.c.h.b16 %v796
    %v4563 = vunpack.c.l.b16 %v797
    %v4564 = vunpack.c.h.b16 %v797
    %v4565 = vunpack.c.l.b16 %v798
    %v4566 = vunpack.c.h.b16 %v798
    %v4567 = vunpack.c.l.b16 %v799
    %v4568 = vunpack.c.h.b16 %v799
    %v4569 = vunpack.c.l.b16 %v800
    %v4570 = vunpack.c.h.b16 %v800
    %v4571 = vunpack.c.l.b16 %v801
    %v4572 = vunpack.c.h.b16 %v801
    %v4573 = vunpack.c.l.b16 %v802
    %v4574 = vunpack.c.h.b16 %v802
    %v4575 = vunpack.c.l.b16 %v803
    %v4576 = vunpack.c.h.b16 %v803
    %v4577 = vunpack.c.l.b16 %v804
    %v4578 = vunpack.c.h.b16 %v804
    %v4579 = vunpack.c.l.b16 %v805
    %v4580 = vunpack.c.h.b16 %v805
    %v4581 = vunpack.c.l.b16 %v806
    %v4582 = vunpack.c.h.b16 %v806
    %v4583 = vunpack.c.l.b16 %v807
    %v4584 = vunpack.c.h.b16 %v807
    %v4585 = vunpack.c.l.b16 %v808
    %v4586 = vunpack.c.h.b16 %v808
    %v4587 = vunpack.c.l.b16 %v809
    %v4588 = vunpack.c.h.b16 %v809
    %v4589 = vunpack.c.l.b16 %v810
    %v4590 = vunpack.c.h.b16 %v810
    %v4591 = vunpack.c.l.b16 %v811
    %v4592 = vunpack.c.h.b16 %v811
    %v4593 = vunpack.c.l.b16 %v812
    %v4594 = vunpack.c.h.b16 %v812
    %v4595 = vunpack.c.l.b16 %v813
    %v4596 = vunpack.c.h.b16 %v813
    %v4597 = vunpack.c.l.b16 %v814
    %v4598 = vunpack.c.h.b16 %v814
    %v4599 = vunpack.c.l.b16 %v815
    %v4600 = vunpack.c.h.b16 %v815
    %v4601 = vunpack.c.l.b16 %v816
    %v4602 = vunpack.c.h.b16 %v816
    %v4603 = vunpack.c.l.b16 %v817
    %v4604 = vunpack.c.h.b16 %v817
    %v4605 = vunpack.c.l.b16 %v818
    %v4606 = vunpack.c.h.b16 %v818
    %v4607 = vunpack.c.l.b16 %v819
    %v4608 = vunpack.c.h.b16 %v819
    %v4609 = vunpack.c.l.b16 %v820
    %v4610 = vunpack.c.h.b16 %v820
    %v4611 = vunpack.c.l.b16 %v821
    %v4612 = vunpack.c.h.b16 %v821
    %v4613 = vunpack.c.l.b16 %v822
    %v4614 = vunpack.c.h.b16 %v822
    %v4615 = vunpack.c.l.b16 %v823
    %v4616 = vunpack.c.h.b16 %v823
    %v4617 = vunpack.c.l.b16 %v824
    %v4618 = vunpack.c.h.b16 %v824
    %v4619 = vunpack.c.l.b16 %v825
    %v4620 = vunpack.c.h.b16 %v825
    %v4621 = vunpack.c.l.b16 %v826
    %v4622 = vunpack.c.h.b16 %v826
    %v4623 = vunpack.c.l.b16 %v827
    %v4624 = vunpack.c.h.b16 %v827
    %v4625 = vunpack.c.l.b16 %v828
    %v4626 = vunpack.c.h.b16 %v828
    %v4627 = vunpack.c.l.b16 %v829
    %v4628 = vunpack.c.h.b16 %v829
    %v4629 = vunpack.c.l.b16 %v830
    %v4630 = vunpack.c.h.b16 %v830
    %v4631 = vunpack.c.l.b16 %v831
    %v4632 = vunpack.c.h.b16 %v831
    %v4633 = vunpack.c.l.b16 %v832
    %v4634 = vunpack.c.h.b16 %v832
    %v4635 = vunpack.c.l.b16 %v833
    %v4636 = vunpack.c.h.b16 %v833
    %v4637 = vunpack.c.l.b16 %v834
    %v4638 = vunpack.c.h.b16 %v834
    %v4639 = vunpack.c.l.b16 %v835
    %v4640 = vunpack.c.h.b16 %v835
    %v4641 = vunpack.c.l.b16 %v836
    %v4642 = vunpack.c.h.b16 %v836
    %v4643 = vunpack.c.l.b16 %v837
    %v4644 = vunpack.c.h.b16 %v837
    %v4645 = vunpack.c.l.b16 %v838
    %v4646 = vunpack.c.h.b16 %v838
    %v4647 = vunpack.c.l.b16 %v839
    %v4648 = vunpack.c.h.b16 %v839
    %v4649 = vunpack.c.l.b16 %v840
    %v4650 = vunpack.c.h.b16 %v840
    %v4651 = vunpack.c.l.b16 %v841
    %v4652 = vunpack.c.h.b16 %v841
    %v4653 = vunpack.c.l.b16 %v842
    %v4654 = vunpack.c.h.b16 %v842
    %v4655 = vunpack.c.l.b16 %v843
    %v4656 = vunpack.c.h.b16 %v843
    %v4657 = vunpack.c.l.b16 %v844
    %v4658 = vunpack.c.h.b16 %v844
    %v4659 = vunpack.c.l.b16 %v845
    %v4660 = vunpack.c.h.b16 %v845
    %v4661 = vunpack.c.l.b16 %v846
    %v4662 = vunpack.c.h.b16 %v846
    %v4663 = vunpack.c.l.b16 %v847
    %v4664 = vunpack.c.h.b16 %v847
    %v4665 = vunpack.c.l.b16 %v848
    %v4666 = vunpack.c.h.b16 %v848
    %v4667 = vunpack.c.l.b16 %v849
    %v4668 = vunpack.c.h.b16 %v849
    %v4669 = vunpack.c.l.b16 %v850
    %v4670 = vunpack.c.h.b16 %v850
    %v4671 = vunpack.c.l.b16 %v851
    %v4672 = vunpack.c.h.b16 %v851
    %v4673 = vunpack.c.l.b16 %v852
    %v4674 = vunpack.c.h.b16 %v852
    %v4675 = vunpack.c.l.b16 %v853
    %v4676 = vunpack.c.h.b16 %v853
    %v4677 = vunpack.c.l.b16 %v854
    %v4678 = vunpack.c.h.b16 %v854
    %v4679 = vunpack.c.l.b16 %v855
    %v4680 = vunpack.c.h.b16 %v855
    %v4681 = vunpack.c.l.b16 %v856
    %v4682 = vunpack.c.h.b16 %v856
    %v4683 = vunpack.c.l.b16 %v857
    %v4684 = vunpack.c.h.b16 %v857
    %v4685 = vunpack.c.l.b16 %v858
    %v4686 = vunpack.c.h.b16 %v858
    %v4687 = vunpack.c.l.b16 %v859
    %v4688 = vunpack.c.h.b16 %v859
    %v4689 = vunpack.c.l.b16 %v860
    %v4690 = vunpack.c.h.b16 %v860
    %v4691 = vunpack.c.l.b16 %v861
    %v4692 = vunpack.c.h.b16 %v861
    %v4693 = vunpack.c.l.b16 %v862
    %v4694 = vunpack.c.h.b16 %v862
    %v4695 = vunpack.c.l.b16 %v863
    %v4696 = vunpack.c.h.b16 %v863
    %v4697 = vunpack.c.l.b16 %v864
    %v4698 = vunpack.c.h.b16 %v864
    %v4699 = vunpack.c.l.b16 %v865
    %v4700 = vunpack.c.h.b16 %v865
    %v4701 = vunpack.c.l.b16 %v866
    %v4702 = vunpack.c.h.b16 %v866
    %v4703 = vunpack.c.l.b16 %v867
    %v4704 = vunpack.c.h.b16 %v867
    %v4705 = vunpack.c.l.b16 %v868
    %v4706 = vunpack.c.h.b16 %v868
    %v4707 = vunpack.c.l.b16 %v869
    %v4708 = vunpack.c.h.b16 %v869
    %v4709 = vunpack.c.l.b16 %v870
    %v4710 = vunpack.c.h.b16 %v870
    %v4711 = vunpack.c.l.b16 %v871
    %v4712 = vunpack.c.h.b16 %v871
    %v4713 = vunpack.c.l.b16 %v872
    %v4714 = vunpack.c.h.b16 %v872
    %v4715 = vunpack.c.l.b16 %v873
    %v4716 = vunpack.c.h.b16 %v873
    %v4717 = vunpack.c.l.b16 %v874
    %v4718 = vunpack.c.h.b16 %v874
    %v4719 = vunpack.c.l.b16 %v875
    %v4720 = vunpack.c.h.b16 %v875
    %v4721 = vunpack.c.l.b16 %v876
    %v4722 = vunpack.c.h.b16 %v876
    %v4723 = vunpack.c.l.b16 %v877
    %v4724 = vunpack.c.h.b16 %v877
    %v4725 = vunpack.c.l.b16 %v878
    %v4726 = vunpack.c.h.b16 %v878
    %v4727 = vunpack.c.l.b16 %v879
    %v4728 = vunpack.c.h.b16 %v879
    %v4729 = vunpack.c.l.b16 %v880
    %v4730 = vunpack.c.h.b16 %v880
    %v4731 = vunpack.c.l.b16 %v881
    %v4732 = vunpack.c.h.b16 %v881
    %v4733 = vunpack.c.l.b16 %v882
    %v4734 = vunpack.c.h.b16 %v882
    %v4735 = vunpack.c.l.b16 %v883
    %v4736 = vunpack.c.h.b16 %v883
    %v4737 = vunpack.c.l.b16 %v884
    %v4738 = vunpack.c.h.b16 %v884
    %v4739 = vunpack.c.l.b16 %v885
    %v4740 = vunpack.c.h.b16 %v885
    %v4741 = vunpack.c.l.b16 %v886
    %v4742 = vunpack.c.h.b16 %v886
    %v4743 = vunpack.c.l.b16 %v887
    %v4744 = vunpack.c.h.b16 %v887
    %v4745 = vunpack.c.l.b16 %v888
    %v4746 = vunpack.c.h.b16 %v888
    %v4747 = vunpack.c.l.b16 %v889
    %v4748 = vunpack.c.h.b16 %v889
    %v4749 = vunpack.c.l.b16 %v890
    %v4750 = vunpack.c.h.b16 %v890
    %v4751 = vunpack.c.l.b16 %v891
    %v4752 = vunpack.c.h.b16 %v891
    %v4753 = vunpack.c.l.b16 %v892
    %v4754 = vunpack.c.h.b16 %v892
    %v4755 = vunpack.c.l.b16 %v893
    %v4756 = vunpack.c.h.b16 %v893
    %v4757 = vunpack.c.l.b16 %v894
    %v4758 = vunpack.c.h.b16 %v894
    %v4759 = vunpack.c.l.b16 %v895
    %v4760 = vunpack.c.h.b16 %v895
    %v4761 = vunpack.c.l.b16 %v896
    %v4762 = vunpack.c.h.b16 %v896
    %v4763 = vunpack.c.l.b16 %v897
    %v4764 = vunpack.c.h.b16 %v897
    %v4765 = vunpack.c.l.b16 %v898
    %v4766 = vunpack.c.h.b16 %v898
    %v4767 = vunpack.c.l.b16 %v899
    %v4768 = vunpack.c.h.b16 %v899
    %v4769 = vunpack.c.l.b16 %v900
    %v4770 = vunpack.c.h.b16 %v900
    %v4771 = vunpack.c.l.b16 %v901
    %v4772 = vunpack.c.h.b16 %v901
    %v4773 = vunpack.c.l.b16 %v902
    %v4774 = vunpack.c.h.b16 %v902
    %v4775 = vunpack.c.l.b16 %v903
    %v4776 = vunpack.c.h.b16 %v903
    %v4777 = vunpack.c.l.b16 %v904
    %v4778 = vunpack.c.h.b16 %v904
    %v4779 = vunpack.c.l.b16 %v905
    %v4780 = vunpack.c.h.b16 %v905
    %v4781 = vunpack.c.l.b16 %v906
    %v4782 = vunpack.c.h.b16 %v906
    %v4783 = vunpack.c.l.b16 %v907
    %v4784 = vunpack.c.h.b16 %v907
    %v4785 = vunpack.c.l.b16 %v908
    %v4786 = vunpack.c.h.b16 %v908
    %v4787 = vunpack.c.l.b16 %v909
    %v4788 = vunpack.c.h.b16 %v909
    %v4789 = vunpack.c.l.b16 %v910
    %v4790 = vunpack.c.h.b16 %v910
    %v4791 = vunpack.c.l.b16 %v911
    %v4792 = vunpack.c.h.b16 %v911
    %v4793 = vunpack.c.l.b16 %v912
    %v4794 = vunpack.c.h.b16 %v912
    %v4795 = vunpack.c.l.b16 %v913
    %v4796 = vunpack.c.h.b16 %v913
    %v4797 = vunpack.c.l.b16 %v914
    %v4798 = vunpack.c.h.b16 %v914
    %v4799 = vunpack.c.l.b16 %v915
    %v4800 = vunpack.c.h.b16 %v915
    %v4801 = vunpack.c.l.b16 %v916
    %v4802 = vunpack.c.h.b16 %v916
    %v4803 = vunpack.c.l.b16 %v917
    %v4804 = vunpack.c.h.b16 %v917
    %v4805 = vunpack.c.l.b16 %v918
    %v4806 = vunpack.c.h.b16 %v918
    %v4807 = vunpack.c.l.b16 %v919
    %v4808 = vunpack.c.h.b16 %v919
    %v4809 = vunpack.c.l.b16 %v920
    %v4810 = vunpack.c.h.b16 %v920
    %v4811 = vunpack.c.l.b16 %v921
    %v4812 = vunpack.c.h.b16 %v921
    %v4813 = vunpack.c.l.b16 %v922
    %v4814 = vunpack.c.h.b16 %v922
    %v4815 = vunpack.c.l.b16 %v923
    %v4816 = vunpack.c.h.b16 %v923
    %v4817 = vunpack.c.l.b16 %v924
    %v4818 = vunpack.c.h.b16 %v924
    %v4819 = vunpack.c.l.b16 %v925
    %v4820 = vunpack.c.h.b16 %v925
    %v4821 = vunpack.c.l.b16 %v926
    %v4822 = vunpack.c.h.b16 %v926
    %v4823 = vunpack.c.l.b16 %v927
    %v4824 = vunpack.c.h.b16 %v927
    %v4825 = vunpack.c.l.b16 %v928
    %v4826 = vunpack.c.h.b16 %v928
    %v4827 = vunpack.c.l.b16 %v929
    %v4828 = vunpack.c.h.b16 %v929
    %v4829 = vunpack.c.l.b16 %v930
    %v4830 = vunpack.c.h.b16 %v930
    %v4831 = vunpack.c.l.b16 %v931
    %v4832 = vunpack.c.h.b16 %v931
    %v4833 = vunpack.c.l.b16 %v932
    %v4834 = vunpack.c.h.b16 %v932
    %v4835 = vunpack.c.l.b16 %v933
    %v4836 = vunpack.c.h.b16 %v933
    %v4837 = vunpack.c.l.b16 %v934
    %v4838 = vunpack.c.h.b16 %v934
    %v4839 = vunpack.c.l.b16 %v935
    %v4840 = vunpack.c.h.b16 %v935
    %v4841 = vunpack.c.l.b16 %v936
    %v4842 = vunpack.c.h.b16 %v936
    %v4843 = vunpack.c.l.b16 %v937
    %v4844 = vunpack.c.h.b16 %v937
    %v4845 = vunpack.c.l.b16 %v938
    %v4846 = vunpack.c.h.b16 %v938
    %v4847 = vunpack.c.l.b16 %v939
    %v4848 = vunpack.c.h.b16 %v939
    %v4849 = vunpack.c.l.b16 %v940
    %v4850 = vunpack.c.h.b16 %v940
    %v4851 = vunpack.c.l.b16 %v941
    %v4852 = vunpack.c.h.b16 %v941
    %v4853 = vunpack.c.l.b16 %v942
    %v4854 = vunpack.c.h.b16 %v942
    %v4855 = vunpack.c.l.b16 %v943
    %v4856 = vunpack.c.h.b16 %v943
    %v4857 = vunpack.c.l.b16 %v944
    %v4858 = vunpack.c.h.b16 %v944
    %v4859 = vunpack.c.l.b16 %v945
    %v4860 = vunpack.c.h.b16 %v945
    %v4861 = vunpack.c.l.b16 %v946
    %v4862 = vunpack.c.h.b16 %v946
    %v4863 = vunpack.c.l.b16 %v947
    %v4864 = vunpack.c.h.b16 %v947
    %v4865 = vunpack.c.l.b16 %v948
    %v4866 = vunpack.c.h.b16 %v948
    %v4867 = vunpack.c.l.b16 %v949
    %v4868 = vunpack.c.h.b16 %v949
    %v4869 = vunpack.c.l.b16 %v950
    %v4870 = vunpack.c.h.b16 %v950
    %v4871 = vunpack.c.l.b16 %v951
    %v4872 = vunpack.c.h.b16 %v951
    %v4873 = vunpack.c.l.b16 %v952
    %v4874 = vunpack.c.h.b16 %v952
    %v4875 = vunpack.c.l.b16 %v953
    %v4876 = vunpack.c.h.b16 %v953
    %v4877 = vunpack.c.l.b16 %v954
    %v4878 = vunpack.c.h.b16 %v954
    %v4879 = vunpack.c.l.b16 %v955
    %v4880 = vunpack.c.h.b16 %v955
    %v4881 = vunpack.c.l.b16 %v956
    %v4882 = vunpack.c.h.b16 %v956
    %v4883 = vunpack.c.l.b16 %v957
    %v4884 = vunpack.c.h.b16 %v957
    %v4885 = vunpack.c.l.b16 %v958
    %v4886 = vunpack.c.h.b16 %v958
    %v4887 = vunpack.c.l.b16 %v959
    %v4888 = vunpack.c.h.b16 %v959
    %v4889 = vunpack.c.l.b16 %v960
    %v4890 = vunpack.c.h.b16 %v960
    %v4891 = vunpack.c.l.b16 %v961
    %v4892 = vunpack.c.h.b16 %v961
    %v4893 = vunpack.c.l.b16 %v962
    %v4894 = vunpack.c.h.b16 %v962
    %v4895 = vunpack.c.l.b16 %v963
    %v4896 = vunpack.c.h.b16 %v963
    %v4897 = vunpack.c.l.b16 %v964
    %v4898 = vunpack.c.h.b16 %v964
    %v4899 = vunpack.c.l.b16 %v965
    %v4900 = vunpack.c.h.b16 %v965
    %v4901 = vunpack.c.l.b16 %v966
    %v4902 = vunpack.c.h.b16 %v966
    %v4903 = vunpack.c.l.b16 %v967
    %v4904 = vunpack.c.h.b16 %v967
    %v4905 = vunpack.c.l.b16 %v968
    %v4906 = vunpack.c.h.b16 %v968
    %v4907 = vunpack.c.l.b16 %v969
    %v4908 = vunpack.c.h.b16 %v969
    %v4909 = vunpack.c.l.b16 %v970
    %v4910 = vunpack.c.h.b16 %v970
    %v4911 = vunpack.c.l.b16 %v971
    %v4912 = vunpack.c.h.b16 %v971
    %v4913 = vunpack.c.l.b16 %v972
    %v4914 = vunpack.c.h.b16 %v972
    %v4915 = vunpack.c.l.b16 %v973
    %v4916 = vunpack.c.h.b16 %v973
    %v4917 = vunpack.c.l.b16 %v974
    %v4918 = vunpack.c.h.b16 %v974
    %v4919 = vunpack.c.l.b16 %v975
    %v4920 = vunpack.c.h.b16 %v975
    %v4921 = vunpack.c.l.b16 %v976
    %v4922 = vunpack.c.h.b16 %v976
    %v4923 = vunpack.c.l.b16 %v977
    %v4924 = vunpack.c.h.b16 %v977
    %v4925 = vunpack.c.l.b16 %v978
    %v4926 = vunpack.c.h.b16 %v978
    %v4927 = vunpack.c.l.b16 %v979
    %v4928 = vunpack.c.h.b16 %v979
    %v4929 = vunpack.c.l.b16 %v980
    %v4930 = vunpack.c.h.b16 %v980
    %v4931 = vunpack.c.l.b16 %v981
    %v4932 = vunpack.c.h.b16 %v981
    %v4933 = vunpack.c.l.b16 %v982
    %v4934 = vunpack.c.h.b16 %v982
    %v4935 = vunpack.c.l.b16 %v983
    %v4936 = vunpack.c.h.b16 %v983
    %v4937 = vunpack.c.l.b16 %v984
    %v4938 = vunpack.c.h.b16 %v984
    %v4939 = vunpack.c.l.b16 %v985
    %v4940 = vunpack.c.h.b16 %v985
    %v4941 = vunpack.c.l.b16 %v986
    %v4942 = vunpack.c.h.b16 %v986
    %v4943 = vunpack.c.l.b16 %v987
    %v4944 = vunpack.c.h.b16 %v987
    %v4945 = vunpack.c.l.b16 %v988
    %v4946 = vunpack.c.h.b16 %v988
    %v4947 = vunpack.c.l.b16 %v989
    %v4948 = vunpack.c.h.b16 %v989
    %v4949 = vunpack.c.l.b16 %v990
    %v4950 = vunpack.c.h.b16 %v990
    %v4951 = vunpack.c.l.b16 %v991
    %v4952 = vunpack.c.h.b16 %v991
    %v4953 = vunpack.c.l.b16 %v992
    %v4954 = vunpack.c.h.b16 %v992
    %v4955 = vunpack.c.l.b16 %v993
    %v4956 = vunpack.c.h.b16 %v993
    %v4957 = vunpack.c.l.b16 %v994
    %v4958 = vunpack.c.h.b16 %v994
    %v4959 = vunpack.c.l.b16 %v995
    %v4960 = vunpack.c.h.b16 %v995
    %v4961 = vunpack.c.l.b16 %v996
    %v4962 = vunpack.c.h.b16 %v996
    %v4963 = vunpack.c.l.b16 %v997
    %v4964 = vunpack.c.h.b16 %v997
    %v4965 = vunpack.c.l.b16 %v998
    %v4966 = vunpack.c.h.b16 %v998
    %v4967 = vunpack.c.l.b16 %v999
    %v4968 = vunpack.c.h.b16 %v999
    %v4969 = vunpack.c.l.b16 %v1000
    %v4970 = vunpack.c.h.b16 %v1000
    %v4971 = vunpack.c.l.b16 %v1001
    %v4972 = vunpack.c.h.b16 %v1001
    %v4973 = vunpack.c.l.b16 %v1002
    %v4974 = vunpack.c.h.b16 %v1002
    %v4975 = vunpack.c.l.b16 %v1003
    %v4976 = vunpack.c.h.b16 %v1003
    %v4977 = vunpack.c.l.b16 %v1004
    %v4978 = vunpack.c.h.b16 %v1004
    %v4979 = vunpack.c.l.b16 %v1005
    %v4980 = vunpack.c.h.b16 %v1005
    %v4981 = vunpack.c.l.b16 %v1006
    %v4982 = vunpack.c.h.b16 %v1006
    %v4983 = vunpack.c.l.b16 %v1007
    %v4984 = vunpack.c.h.b16 %v1007
    %v4985 = vunpack.c.l.b16 %v1008
    %v4986 = vunpack.c.h.b16 %v1008
    %v4987 = vunpack.c.l.b16 %v1009
    %v4988 = vunpack.c.h.b16 %v1009
    %v4989 = vunpack.c.l.b16 %v1010
    %v4990 = vunpack.c.h.b16 %v1010
    %v4991 = vunpack.c.l.b16 %v1011
    %v4992 = vunpack.c.h.b16 %v1011
    %v4993 = vunpack.c.l.b16 %v1012
    %v4994 = vunpack.c.h.b16 %v1012
    %v4995 = vunpack.c.l.b16 %v1013
    %v4996 = vunpack.c.h.b16 %v1013
    %v4997 = vunpack.c.l.b16 %v1014
    %v4998 = vunpack.c.h.b16 %v1014
    %v4999 = vunpack.c.l.b16 %v1015
    %v5000 = vunpack.c.h.b16 %v1015
    %v5001 = vunpack.c.l.b16 %v1016
    %v5002 = vunpack.c.h.b16 %v1016
    %v5003 = vunpack.c.l.b16 %v1017
    %v5004 = vunpack.c.h.b16 %v1017
    %v5005 = vunpack.c.l.b16 %v1018
    %v5006 = vunpack.c.h.b16 %v1018
    %v5007 = vunpack.c.l.b16 %v1019
    %v5008 = vunpack.c.h.b16 %v1019
    %v5009 = vunpack.c.l.b16 %v1020
    %v5010 = vunpack.c.h.b16 %v1020
    %v5011 = vunpack.c.l.b16 %v1021
    %v5012 = vunpack.c.h.b16 %v1021
    %v5013 = vunpack.c.l.b16 %v1022
    %v5014 = vunpack.c.h.b16 %v1022
    %v5015 = vunpack.c.l.b16 %v1023
    %v5016 = vunpack.c.h.b16 %v1023
    %v5017 = vunpack.c.l.b16 %v1024
    %v5018 = vunpack.c.h.b16 %v1024
    %v5019 = vunpack.c.l.b16 %v1025
    %v5020 = vunpack.c.h.b16 %v1025
    %v5021 = vunpack.c.l.b16 %v1026
    %v5022 = vunpack.c.h.b16 %v1026
    %v5023 = vunpack.c.l.b16 %v1027
    %v5024 = vunpack.c.h.b16 %v1027
    %v5025 = vunpack.c.l.b16 %v1028
    %v5026 = vunpack.c.h.b16 %v1028
    %v5027 = vunpack.c.l.b16 %v1029
    %v5028 = vunpack.c.h.b16 %v1029
    %v5029 = vunpack.c.l.b16 %v1030
    %v5030 = vunpack.c.h.b16 %v1030
    %v5031 = vunpack.c.l.b16 %v1031
    %v5032 = vunpack.c.h.b16 %v1031
    %v5033 = vunpack.c.l.b16 %v1032
    %v5034 = vunpack.c.h.b16 %v1032
    %v5035 = vunpack.c.l.b16 %v1033
    %v5036 = vunpack.c.h.b16 %v1033
    %v5037 = vunpack.c.l.b16 %v1034
    %v5038 = vunpack.c.h.b16 %v1034
    %v5039 = vunpack.c.l.b16 %v1035
    %v5040 = vunpack.c.h.b16 %v1035
    %v5041 = vunpack.c.l.b16 %v1036
    %v5042 = vunpack.c.h.b16 %v1036
    %v5043 = vunpack.c.l.b16 %v1037
    %v5044 = vunpack.c.h.b16 %v1037
    %v5045 = vunpack.c.l.b16 %v1038
    %v5046 = vunpack.c.h.b16 %v1038
    %v5047 = vunpack.c.l.b16 %v1039
    %v5048 = vunpack.c.h.b16 %v1039
    %v5049 = vunpack.c.l.b16 %v1040
    %v5050 = vunpack.c.h.b16 %v1040
    %v5051 = vunpack.c.l.b16 %v1041
    %v5052 = vunpack.c.h.b16 %v1041
    %v5053 = vunpack.c.l.b16 %v1042
    %v5054 = vunpack.c.h.b16 %v1042
    %v5055 = vunpack.c.l.b16 %v1043
    %v5056 = vunpack.c.h.b16 %v1043
    %v5057 = vunpack.c.l.b16 %v1044
    %v5058 = vunpack.c.h.b16 %v1044
    %v5059 = vunpack.c.l.b16 %v1045
    %v5060 = vunpack.c.h.b16 %v1045
    %v5061 = vunpack.c.l.b16 %v1046
    %v5062 = vunpack.c.h.b16 %v1046
    %v5063 = vunpack.c.l.b16 %v1047
    %v5064 = vunpack.c.h.b16 %v1047
    %v5065 = vunpack.c.l.b16 %v1048
    %v5066 = vunpack.c.h.b16 %v1048
    %v5067 = vunpack.c.l.b16 %v1049
    %v5068 = vunpack.c.h.b16 %v1049
    %v5069 = vunpack.c.l.b16 %v1050
    %v5070 = vunpack.c.h.b16 %v1050
    %v5071 = vunpack.c.l.b16 %v1051
    %v5072 = vunpack.c.h.b16 %v1051
    %v5073 = vunpack.c.l.b16 %v1052
    %v5074 = vunpack.c.h.b16 %v1052
    %v5075 = vunpack.c.l.b16 %v1053
    %v5076 = vunpack.c.h.b16 %v1053
    %v5077 = vunpack.c.l.b16 %v1054
    %v5078 = vunpack.c.h.b16 %v1054
    %v5079 = vunpack.c.l.b16 %v1055
    %v5080 = vunpack.c.h.b16 %v1055
    %v5081 = vunpack.c.l.b16 %v1056
    %v5082 = vunpack.c.h.b16 %v1056
    %v5083 = vunpack.c.l.b16 %v1057
    %v5084 = vunpack.c.h.b16 %v1057
    %v5085 = vunpack.c.l.b16 %v1058
    %v5086 = vunpack.c.h.b16 %v1058
    %v5087 = vunpack.c.l.b16 %v1059
    %v5088 = vunpack.c.h.b16 %v1059
    %v5089 = vunpack.c.l.b16 %v1060
    %v5090 = vunpack.c.h.b16 %v1060
    %v5091 = vunpack.c.l.b16 %v1061
    %v5092 = vunpack.c.h.b16 %v1061
    %v5093 = vunpack.c.l.b16 %v1062
    %v5094 = vunpack.c.h.b16 %v1062
    %v5095 = vunpack.c.l.b16 %v1063
    %v5096 = vunpack.c.h.b16 %v1063
    %v5097 = vunpack.c.l.b16 %v1064
    %v5098 = vunpack.c.h.b16 %v1064
    %v5099 = vunpack.c.l.b16 %v1065
    %v5100 = vunpack.c.h.b16 %v1065
    %v5101 = vunpack.c.l.b16 %v1066
    %v5102 = vunpack.c.h.b16 %v1066
    %v5103 = vunpack.c.l.b16 %v1067
    %v5104 = vunpack.c.h.b16 %v1067
    %v5105 = vunpack.c.l.b16 %v1068
    %v5106 = vunpack.c.h.b16 %v1068
    %v5107 = vunpack.c.l.b16 %v1069
    %v5108 = vunpack.c.h.b16 %v1069
    %v5109 = vunpack.c.l.b16 %v1070
    %v5110 = vunpack.c.h.b16 %v1070
    %v5111 = vunpack.c.l.b16 %v1071
    %v5112 = vunpack.c.h.b16 %v1071
    %v5113 = vunpack.c.l.b16 %v1072
    %v5114 = vunpack.c.h.b16 %v1072
    %v5115 = vunpack.c.l.b16 %v1073
    %v5116 = vunpack.c.h.b16 %v1073
    %v5117 = vunpack.c.l.b16 %v1074
    %v5118 = vunpack.c.h.b16 %v1074
    %v5119 = vunpack.c.l.b16 %v1075
    %v5120 = vunpack.c.h.b16 %v1075
    %v5121 = vunpack.c.l.b16 %v1076
    %v5122 = vunpack.c.h.b16 %v1076
    %v5123 = vunpack.c.l.b16 %v1077
    %v5124 = vunpack.c.h.b16 %v1077
    %v5125 = vunpack.c.l.b16 %v1078
    %v5126 = vunpack.c.h.b16 %v1078
    %v5127 = vunpack.c.l.b16 %v1079
    %v5128 = vunpack.c.h.b16 %v1079
    %v5129 = vunpack.c.l.b16 %v1080
    %v5130 = vunpack.c.h.b16 %v1080
    %v5131 = vunpack.c.l.b16 %v1081
    %v5132 = vunpack.c.h.b16 %v1081
    %v5133 = vunpack.c.l.b16 %v1082
    %v5134 = vunpack.c.h.b16 %v1082
    %v5135 = vunpack.c.l.b16 %v1083
    %v5136 = vunpack.c.h.b16 %v1083
    %v5137 = vunpack.c.l.b16 %v1084
    %v5138 = vunpack.c.h.b16 %v1084
    %v5139 = vunpack.c.l.b16 %v1085
    %v5140 = vunpack.c.h.b16 %v1085
    %v5141 = vunpack.c.l.b16 %v1086
    %v5142 = vunpack.c.h.b16 %v1086
    %v5143 = vunpack.c.l.b16 %v1087
    %v5144 = vunpack.c.h.b16 %v1087
    %v5145 = vunpack.c.l.b16 %v1088
    %v5146 = vunpack.c.h.b16 %v1088
    %v5147 = vunpack.c.l.b16 %v1089
    %v5148 = vunpack.c.h.b16 %v1089
    %v5149 = vunpack.c.l.b16 %v1090
    %v5150 = vunpack.c.h.b16 %v1090
    %v5151 = vunpack.c.l.b16 %v1091
    %v5152 = vunpack.c.h.b16 %v1091
    %v5153 = vunpack.c.l.b16 %v1092
    %v5154 = vunpack.c.h.b16 %v1092
    %v5155 = vunpack.c.l.b16 %v1093
    %v5156 = vunpack.c.h.b16 %v1093
    %v5157 = vunpack.c.l.b16 %v1094
    %v5158 = vunpack.c.h.b16 %v1094
    %v5159 = vunpack.c.l.b16 %v1095
    %v5160 = vunpack.c.h.b16 %v1095
    %v5161 = vunpack.c.l.b16 %v1096
    %v5162 = vunpack.c.h.b16 %v1096
    %v5163 = vunpack.c.l.b16 %v1097
    %v5164 = vunpack.c.h.b16 %v1097
    %v5165 = vunpack.c.l.b16 %v1098
    %v5166 = vunpack.c.h.b16 %v1098
    %v5167 = vunpack.c.l.b16 %v1099
    %v5168 = vunpack.c.h.b16 %v1099
    %v5169 = vunpack.c.l.b16 %v1100
    %v5170 = vunpack.c.h.b16 %v1100
    %v5171 = vunpack.c.l.b16 %v1101
    %v5172 = vunpack.c.h.b16 %v1101
    %v5173 = vunpack.c.l.b16 %v1102
    %v5174 = vunpack.c.h.b16 %v1102
    %v5175 = vunpack.c.l.b16 %v1103
    %v5176 = vunpack.c.h.b16 %v1103
    %v5177 = vunpack.c.l.b16 %v1104
    %v5178 = vunpack.c.h.b16 %v1104
    %v5179 = vunpack.c.l.b16 %v1105
    %v5180 = vunpack.c.h.b16 %v1105
    %v5181 = vunpack.c.l.b16 %v1106
    %v5182 = vunpack.c.h.b16 %v1106
    %v5183 = vunpack.c.l.b16 %v1107
    %v5184 = vunpack.c.h.b16 %v1107
    %v5185 = vunpack.c.l.b16 %v1108
    %v5186 = vunpack.c.h.b16 %v1108
    %v5187 = vunpack.c.l.b16 %v1109
    %v5188 = vunpack.c.h.b16 %v1109
    %v5189 = vunpack.c.l.b16 %v1110
    %v5190 = vunpack.c.h.b16 %v1110
    %v5191 = vunpack.c.l.b16 %v1111
    %v5192 = vunpack.c.h.b16 %v1111
    %v5193 = vunpack.c.l.b16 %v1112
    %v5194 = vunpack.c.h.b16 %v1112
    %v5195 = vunpack.c.l.b16 %v1113
    %v5196 = vunpack.c.h.b16 %v1113
    %v5197 = vunpack.c.l.b16 %v1114
    %v5198 = vunpack.c.h.b16 %v1114
    %v5199 = vunpack.c.l.b16 %v1115
    %v5200 = vunpack.c.h.b16 %v1115
    %v5201 = vunpack.c.l.b16 %v1116
    %v5202 = vunpack.c.h.b16 %v1116
    %v5203 = vunpack.c.l.b16 %v1117
    %v5204 = vunpack.c.h.b16 %v1117
    %v5205 = vunpack.c.l.b16 %v1118
    %v5206 = vunpack.c.h.b16 %v1118
    %v5207 = vunpack.c.l.b16 %v1119
    %v5208 = vunpack.c.h.b16 %v1119
    %v5209 = vunpack.c.l.b16 %v1120
    %v5210 = vunpack.c.h.b16 %v1120
    %v5211 = vunpack.c.l.b16 %v1121
    %v5212 = vunpack.c.h.b16 %v1121
    %v5213 = vunpack.c.l.b16 %v1122
    %v5214 = vunpack.c.h.b16 %v1122
    %v5215 = vunpack.c.l.b16 %v1123
    %v5216 = vunpack.c.h.b16 %v1123
    %v5217 = vunpack.c.l.b16 %v1124
    %v5218 = vunpack.c.h.b16 %v1124
    %v5219 = vunpack.c.l.b16 %v1125
    %v5220 = vunpack.c.h.b16 %v1125
    %v5221 = vunpack.c.l.b16 %v1126
    %v5222 = vunpack.c.h.b16 %v1126
    %v5223 = vunpack.c.l.b16 %v1127
    %v5224 = vunpack.c.h.b16 %v1127
    %v5225 = vunpack.c.l.b16 %v1128
    %v5226 = vunpack.c.h.b16 %v1128
    %v5227 = vunpack.c.l.b16 %v1129
    %v5228 = vunpack.c.h.b16 %v1129
    %v5229 = vunpack.c.l.b16 %v1130
    %v5230 = vunpack.c.h.b16 %v1130
    %v5231 = vunpack.c.l.b16 %v1131
    %v5232 = vunpack.c.h.b16 %v1131
    %v5233 = vunpack.c.l.b16 %v1132
    %v5234 = vunpack.c.h.b16 %v1132
    %v5235 = vunpack.c.l.b16 %v1133
    %v5236 = vunpack.c.h.b16 %v1133
    %v5237 = vunpack.c.l.b16 %v1134
    %v5238 = vunpack.c.h.b16 %v1134
    %v5239 = vunpack.c.l.b16 %v1135
    %v5240 = vunpack.c.h.b16 %v1135
    %v5241 = vunpack.c.l.b16 %v1136
    %v5242 = vunpack.c.h.b16 %v1136
    %v5243 = vunpack.c.l.b16 %v1137
    %v5244 = vunpack.c.h.b16 %v1137
    %v5245 = vunpack.c.l.b16 %v1138
    %v5246 = vunpack.c.h.b16 %v1138
    %v5247 = vunpack.c.l.b16 %v1139
    %v5248 = vunpack.c.h.b16 %v1139
    %v5249 = vunpack.c.l.b16 %v1140
    %v5250 = vunpack.c.h.b16 %v1140
    %v5251 = vunpack.c.l.b16 %v1141
    %v5252 = vunpack.c.h.b16 %v1141
    %v5253 = vunpack.c.l.b16 %v1142
    %v5254 = vunpack.c.h.b16 %v1142
    %v5255 = vunpack.c.l.b16 %v1143
    %v5256 = vunpack.c.h.b16 %v1143
    %v5257 = vunpack.c.l.b16 %v1144
    %v5258 = vunpack.c.h.b16 %v1144
    %v5259 = vunpack.c.l.b16 %v1145
    %v5260 = vunpack.c.h.b16 %v1145
    %v5261 = vunpack.c.l.b16 %v1146
    %v5262 = vunpack.c.h.b16 %v1146
    %v5263 = vunpack.c.l.b16 %v1147
    %v5264 = vunpack.c.h.b16 %v1147
    %v5265 = vunpack.c.l.b16 %v1148
    %v5266 = vunpack.c.h.b16 %v1148
    %v5267 = vunpack.c.l.b16 %v1149
    %v5268 = vunpack.c.h.b16 %v1149
    %v5269 = vunpack.c.l.b16 %v1150
    %v5270 = vunpack.c.h.b16 %v1150
    %v5271 = vunpack.c.l.b16 %v1151
    %v5272 = vunpack.c.h.b16 %v1151
    %v5273 = vunpack.c.l.b16 %v1152
    %v5274 = vunpack.c.h.b16 %v1152
    %v5275 = vunpack.c.l.b16 %v1153
    %v5276 = vunpack.c.h.b16 %v1153
    %v5277 = vunpack.c.l.b16 %v1154
    %v5278 = vunpack.c.h.b16 %v1154
    %v5279 = vunpack.c.l.b16 %v1155
    %v5280 = vunpack.c.h.b16 %v1155
    %v5281 = vunpack.c.l.b16 %v1156
    %v5282 = vunpack.c.h.b16 %v1156
    %v5283 = vunpack.c.l.b16 %v1157
    %v5284 = vunpack.c.h.b16 %v1157
    %v5285 = vunpack.c.l.b16 %v1158
    %v5286 = vunpack.c.h.b16 %v1158
    %v5287 = vunpack.c.l.b16 %v1159
    %v5288 = vunpack.c.h.b16 %v1159
    %v5289 = vunpack.c.l.b16 %v1160
    %v5290 = vunpack.c.h.b16 %v1160
    %v5291 = vunpack.c.l.b16 %v1161
    %v5292 = vunpack.c.h.b16 %v1161
    %v5293 = vunpack.c.l.b16 %v1162
    %v5294 = vunpack.c.h.b16 %v1162
    %v5295 = vunpack.c.l.b16 %v1163
    %v5296 = vunpack.c.h.b16 %v1163
    %v5297 = vunpack.c.l.b16 %v1164
    %v5298 = vunpack.c.h.b16 %v1164
    %v5299 = vunpack.c.l.b16 %v1165
    %v5300 = vunpack.c.h.b16 %v1165
    %v5301 = vunpack.c.l.b16 %v1166
    %v5302 = vunpack.c.h.b16 %v1166
    %v5303 = vunpack.c.l.b16 %v1167
    %v5304 = vunpack.c.h.b16 %v1167
    %v5305 = vunpack.c.l.b16 %v1168
    %v5306 = vunpack.c.h.b16 %v1168
    %v5307 = vunpack.c.l.b16 %v1169
    %v5308 = vunpack.c.h.b16 %v1169
    %v5309 = vunpack.c.l.b16 %v1170
    %v5310 = vunpack.c.h.b16 %v1170
    %v5311 = vunpack.c.l.b16 %v1171
    %v5312 = vunpack.c.h.b16 %v1171
    %v5313 = vunpack.c.l.b16 %v1172
    %v5314 = vunpack.c.h.b16 %v1172
    %v5315 = vunpack.c.l.b16 %v1173
    %v5316 = vunpack.c.h.b16 %v1173
    %v5317 = vunpack.c.l.b16 %v1174
    %v5318 = vunpack.c.h.b16 %v1174
    %v5319 = vunpack.c.l.b16 %v1175
    %v5320 = vunpack.c.h.b16 %v1175
    %v5321 = vunpack.c.l.b16 %v1176
    %v5322 = vunpack.c.h.b16 %v1176
    %v5323 = vunpack.c.l.b16 %v1177
    %v5324 = vunpack.c.h.b16 %v1177
    %v5325 = vunpack.c.l.b16 %v1178
    %v5326 = vunpack.c.h.b16 %v1178
    %v5327 = vunpack.c.l.b16 %v1179
    %v5328 = vunpack.c.h.b16 %v1179
    %v5329 = vunpack.c.l.b16 %v1180
    %v5330 = vunpack.c.h.b16 %v1180
    %v5331 = vunpack.c.l.b16 %v1181
    %v5332 = vunpack.c.h.b16 %v1181
    %v5333 = vunpack.c.l.b16 %v1182
    %v5334 = vunpack.c.h.b16 %v1182
    %v5335 = vunpack.c.l.b16 %v1183
    %v5336 = vunpack.c.h.b16 %v1183
    %v5337 = vunpack.c.l.b16 %v1184
    %v5338 = vunpack.c.h.b16 %v1184
    %v5339 = vunpack.c.l.b16 %v1185
    %v5340 = vunpack.c.h.b16 %v1185
    %v5341 = vunpack.c.l.b16 %v1186
    %v5342 = vunpack.c.h.b16 %v1186
    %v5343 = vunpack.c.l.b16 %v1187
    %v5344 = vunpack.c.h.b16 %v1187
    %v5345 = vunpack.c.l.b16 %v1188
    %v5346 = vunpack.c.h.b16 %v1188
    %v5347 = vunpack.c.l.b16 %v1189
    %v5348 = vunpack.c.h.b16 %v1189
    %v5349 = vunpack.c.l.b16 %v1190
    %v5350 = vunpack.c.h.b16 %v1190
    %v5351 = vunpack.c.l.b16 %v1191
    %v5352 = vunpack.c.h.b16 %v1191
    %v5353 = vunpack.c.l.b16 %v1192
    %v5354 = vunpack.c.h.b16 %v1192
    %v5355 = vunpack.c.l.b16 %v1193
    %v5356 = vunpack.c.h.b16 %v1193
    %v5357 = vunpack.c.l.b16 %v1194
    %v5358 = vunpack.c.h.b16 %v1194
    %v5359 = vunpack.c.l.b16 %v1195
    %v5360 = vunpack.c.h.b16 %v1195
    %v5361 = vunpack.c.l.b16 %v1196
    %v5362 = vunpack.c.h.b16 %v1196
    %v5363 = vunpack.c.l.b16 %v1197
    %v5364 = vunpack.c.h.b16 %v1197
    %v5365 = vunpack.c.l.b16 %v1198
    %v5366 = vunpack.c.h.b16 %v1198
    %v5367 = vunpack.c.l.b16 %v1199
    %v5368 = vunpack.c.h.b16 %v1199
    %v5369 = vunpack.c.l.b16 %v1200
    %v5370 = vunpack.c.h.b16 %v1200
    %v5371 = vunpack.c.l.b16 %v1201
    %v5372 = vunpack.c.h.b16 %v1201
    %v5373 = vunpack.c.l.b16 %v1202
    %v5374 = vunpack.c.h.b16 %v1202
    %v5375 = vunpack.c.l.b16 %v1203
    %v5376 = vunpack.c.h.b16 %v1203
    %v5377 = vunpack.c.l.b16 %v1204
    %v5378 = vunpack.c.h.b16 %v1204
    %v5379 = vunpack.c.l.b16 %v1205
    %v5380 = vunpack.c.h.b16 %v1205
    %v5381 = vunpack.c.l.b16 %v1206
    %v5382 = vunpack.c.h.b16 %v1206
    %v5383 = vunpack.c.l.b16 %v1207
    %v5384 = vunpack.c.h.b16 %v1207
    %v5385 = vunpack.c.l.b16 %v1208
    %v5386 = vunpack.c.h.b16 %v1208
    %v5387 = vunpack.c.l.b16 %v1209
    %v5388 = vunpack.c.h.b16 %v1209
    %v5389 = vunpack.c.l.b16 %v1210
    %v5390 = vunpack.c.h.b16 %v1210
    %v5391 = vunpack.c.l.b16 %v1211
    %v5392 = vunpack.c.h.b16 %v1211
    %v5393 = vunpack.c.l.b16 %v1212
    %v5394 = vunpack.c.h.b16 %v1212
    %v5395 = vunpack.c.l.b16 %v1213
    %v5396 = vunpack.c.h.b16 %v1213
    %v5397 = vunpack.c.l.b16 %v1214
    %v5398 = vunpack.c.h.b16 %v1214
    %v5399 = vunpack.c.l.b16 %v1215
    %v5400 = vunpack.c.h.b16 %v1215
    %v5401 = vunpack.c.l.b16 %v1216
    %v5402 = vunpack.c.h.b16 %v1216
    %v5403 = vunpack.c.l.b16 %v1217
    %v5404 = vunpack.c.h.b16 %v1217
    %v5405 = vunpack.c.l.b16 %v1218
    %v5406 = vunpack.c.h.b16 %v1218
    %v5407 = vunpack.c.l.b16 %v1219
    %v5408 = vunpack.c.h.b16 %v1219
    %v5409 = vunpack.c.l.b16 %v1220
    %v5410 = vunpack.c.h.b16 %v1220
    %v5411 = vunpack.c.l.b16 %v1221
    %v5412 = vunpack.c.h.b16 %v1221
    %v5413 = vunpack.c.l.b16 %v1222
    %v5414 = vunpack.c.h.b16 %v1222
    %v5415 = vunpack.c.l.b16 %v1223
    %v5416 = vunpack.c.h.b16 %v1223
    %v5417 = vunpack.c.l.b16 %v1224
    %v5418 = vunpack.c.h.b16 %v1224
    %v5419 = vunpack.c.l.b16 %v1225
    %v5420 = vunpack.c.h.b16 %v1225
    %v5421 = vunpack.c.l.b16 %v1226
    %v5422 = vunpack.c.h.b16 %v1226
    %v5423 = vunpack.c.l.b16 %v1227
    %v5424 = vunpack.c.h.b16 %v1227
    %v5425 = vunpack.c.l.b16 %v1228
    %v5426 = vunpack.c.h.b16 %v1228
    %v5427 = vunpack.c.l.b16 %v1229
    %v5428 = vunpack.c.h.b16 %v1229
    %v5429 = vunpack.c.l.b16 %v1230
    %v5430 = vunpack.c.h.b16 %v1230
    %v5431 = vunpack.c.l.b16 %v1231
    %v5432 = vunpack.c.h.b16 %v1231
    %v5433 = vunpack.c.l.b16 %v1232
    %v5434 = vunpack.c.h.b16 %v1232
    %v5435 = vunpack.c.l.b16 %v1233
    %v5436 = vunpack.c.h.b16 %v1233
    %v5437 = vunpack.c.l.b16 %v1234
    %v5438 = vunpack.c.h.b16 %v1234
    %v5439 = vunpack.c.l.b16 %v1235
    %v5440 = vunpack.c.h.b16 %v1235
    %v5441 = vunpack.c.l.b16 %v1236
    %v5442 = vunpack.c.h.b16 %v1236
    %v5443 = vunpack.c.l.b16 %v1237
    %v5444 = vunpack.c.h.b16 %v1237
    %v5445 = vunpack.c.l.b16 %v1238
    %v5446 = vunpack.c.h.b16 %v1238
    %v5447 = vunpack.c.l.b16 %v1239
    %v5448 = vunpack.c.h.b16 %v1239
    %v5449 = vunpack.c.l.b16 %v1240
    %v5450 = vunpack.c.h.b16 %v1240
    %v5451 = vunpack.c.l.b16 %v1241
    %v5452 = vunpack.c.h.b16 %v1241
    %v5453 = vunpack.c.l.b16 %v1242
    %v5454 = vunpack.c.h.b16 %v1242
    %v5455 = vunpack.c.l.b16 %v1243
    %v5456 = vunpack.c.h.b16 %v1243
    %v5457 = vunpack.c.l.b16 %v1244
    %v5458 = vunpack.c.h.b16 %v1244
    %v5459 = vunpack.c.l.b16 %v1245
    %v5460 = vunpack.c.h.b16 %v1245
    %v5461 = vunpack.c.l.b16 %v1246
    %v5462 = vunpack.c.h.b16 %v1246
    %v5463 = vunpack.c.l.b16 %v1247
    %v5464 = vunpack.c.h.b16 %v1247
    %v5465 = vunpack.c.l.b16 %v1248
    %v5466 = vunpack.c.h.b16 %v1248
    %v5467 = vunpack.c.l.b16 %v1249
    %v5468 = vunpack.c.h.b16 %v1249
    %v5469 = vunpack.c.l.b16 %v1250
    %v5470 = vunpack.c.h.b16 %v1250
    %v5471 = vunpack.c.l.b16 %v1251
    %v5472 = vunpack.c.h.b16 %v1251
    %v5473 = vunpack.c.l.b16 %v1252
    %v5474 = vunpack.c.h.b16 %v1252
    %v5475 = vunpack.c.l.b16 %v1253
    %v5476 = vunpack.c.h.b16 %v1253
    %v5477 = vunpack.c.l.b16 %v1254
    %v5478 = vunpack.c.h.b16 %v1254
    %v5479 = vunpack.c.l.b16 %v1255
    %v5480 = vunpack.c.h.b16 %v1255
    %v5481 = vunpack.c.l.b16 %v1256
    %v5482 = vunpack.c.h.b16 %v1256
    %v5483 = vunpack.c.l.b16 %v1257
    %v5484 = vunpack.c.h.b16 %v1257
    %v5485 = vunpack.c.l.b16 %v1258
    %v5486 = vunpack.c.h.b16 %v1258
    %v5487 = vunpack.c.l.b16 %v1259
    %v5488 = vunpack.c.h.b16 %v1259
    %v5489 = vunpack.c.l.b16 %v1260
    %v5490 = vunpack.c.h.b16 %v1260
    %v5491 = vunpack.c.l.b16 %v1261
    %v5492 = vunpack.c.h.b16 %v1261
    %v5493 = vunpack.c.l.b16 %v1262
    %v5494 = vunpack.c.h.b16 %v1262
    %v5495 = vunpack.c.l.b16 %v1263
    %v5496 = vunpack.c.h.b16 %v1263
    %v5497 = vunpack.c.l.b16 %v1264
    %v5498 = vunpack.c.h.b16 %v1264
    %v5499 = vunpack.c.l.b16 %v1265
    %v5500 = vunpack.c.h.b16 %v1265
    %v5501 = vunpack.c.l.b16 %v1266
    %v5502 = vunpack.c.h.b16 %v1266
    %v5503 = vunpack.c.l.b16 %v1267
    %v5504 = vunpack.c.h.b16 %v1267
    %v5505 = vunpack.c.l.b16 %v1268
    %v5506 = vunpack.c.h.b16 %v1268
    %v5507 = vunpack.c.l.b16 %v1269
    %v5508 = vunpack.c.h.b16 %v1269
    %v5509 = vunpack.c.l.b16 %v1270
    %v5510 = vunpack.c.h.b16 %v1270
    %v5511 = vunpack.c.l.b16 %v1271
    %v5512 = vunpack.c.h.b16 %v1271
    %v5513 = vunpack.c.l.b16 %v1272
    %v5514 = vunpack.c.h.b16 %v1272
    %v5515 = vunpack.c.l.b16 %v1273
    %v5516 = vunpack.c.h.b16 %v1273
    %v5517 = vunpack.c.l.b16 %v1274
    %v5518 = vunpack.c.h.b16 %v1274
    %v5519 = vunpack.c.l.b16 %v1275
    %v5520 = vunpack.c.h.b16 %v1275
    %v5521 = vunpack.c.l.b16 %v1276
    %v5522 = vunpack.c.h.b16 %v1276
    %v5523 = vunpack.c.l.b16 %v1277
    %v5524 = vunpack.c.h.b16 %v1277
    %v5525 = vunpack.c.l.b16 %v1278
    %v5526 = vunpack.c.h.b16 %v1278
    %v5527 = vunpack.c.l.b16 %v1279
    %v5528 = vunpack.c.h.b16 %v1279
    %v5529 = vunpack.c.l.b16 %v1280
    %v5530 = vunpack.c.h.b16 %v1280
    %v5531 = vunpack.c.l.b16 %v1281
    %v5532 = vunpack.c.h.b16 %v1281
    %v5533 = vunpack.c.l.b16 %v1282
    %v5534 = vunpack.c.h.b16 %v1282
    %v5535 = vunpack.c.l.b16 %v1283
    %v5536 = vunpack.c.h.b16 %v1283
    %v5537 = vunpack.c.l.b16 %v1284
    %v5538 = vunpack.c.h.b16 %v1284
    %v5539 = vunpack.c.l.b16 %v1285
    %v5540 = vunpack.c.h.b16 %v1285
    %v5541 = vunpack.c.l.b16 %v1286
    %v5542 = vunpack.c.h.b16 %v1286
    %v5543 = vunpack.c.l.b16 %v1287
    %v5544 = vunpack.c.h.b16 %v1287
    %v5545 = vunpack.c.l.b16 %v1288
    %v5546 = vunpack.c.h.b16 %v1288
    %v5547 = vunpack.c.l.b16 %v1289
    %v5548 = vunpack.c.h.b16 %v1289
    %v5549 = vunpack.c.l.b16 %v1290
    %v5550 = vunpack.c.h.b16 %v1290
    %v5551 = vunpack.c.l.b16 %v1291
    %v5552 = vunpack.c.h.b16 %v1291
    %v5553 = vunpack.c.l.b16 %v1292
    %v5554 = vunpack.c.h.b16 %v1292
    %v5555 = vunpack.c.l.b16 %v1293
    %v5556 = vunpack.c.h.b16 %v1293
    %v5557 = vunpack.c.l.b16 %v1294
    %v5558 = vunpack.c.h.b16 %v1294
    %v5559 = vunpack.c.l.b16 %v1295
    %v5560 = vunpack.c.h.b16 %v1295
    %v5561 = vunpack.c.l.b16 %v1296
    %v5562 = vunpack.c.h.b16 %v1296
    %v5563 = vunpack.c.l.b16 %v1297
    %v5564 = vunpack.c.h.b16 %v1297
    %v5565 = vunpack.c.l.b16 %v1298
    %v5566 = vunpack.c.h.b16 %v1298
    %v5567 = vunpack.c.l.b16 %v1299
    %v5568 = vunpack.c.h.b16 %v1299
    %v5569 = vunpack.c.l.b16 %v1300
    %v5570 = vunpack.c.h.b16 %v1300
    %v5571 = vunpack.c.l.b16 %v1301
    %v5572 = vunpack.c.h.b16 %v1301
    %v5573 = vunpack.c.l.b16 %v1302
    %v5574 = vunpack.c.h.b16 %v1302
    %v5575 = vunpack.c.l.b16 %v1303
    %v5576 = vunpack.c.h.b16 %v1303
    %v5577 = vunpack.c.l.b16 %v1304
    %v5578 = vunpack.c.h.b16 %v1304
    %v5579 = vunpack.c.l.b16 %v1305
    %v5580 = vunpack.c.h.b16 %v1305
    %v5581 = vunpack.c.l.b16 %v1306
    %v5582 = vunpack.c.h.b16 %v1306
    %v5583 = vunpack.c.l.b16 %v1307
    %v5584 = vunpack.c.h.b16 %v1307
    %v5585 = vunpack.c.l.b16 %v1308
    %v5586 = vunpack.c.h.b16 %v1308
    %v5587 = vunpack.c.l.b16 %v1309
    %v5588 = vunpack.c.h.b16 %v1309
    %v5589 = vunpack.c.l.b16 %v1310
    %v5590 = vunpack.c.h.b16 %v1310
    %v5591 = vunpack.c.l.b16 %v1311
    %v5592 = vunpack.c.h.b16 %v1311
    %v5593 = vunpack.c.l.b16 %v1312
    %v5594 = vunpack.c.h.b16 %v1312
    %v5595 = vunpack.c.l.b16 %v1313
    %v5596 = vunpack.c.h.b16 %v1313
    %v5597 = vunpack.c.l.b16 %v1314
    %v5598 = vunpack.c.h.b16 %v1314
    %v5599 = vunpack.c.l.b16 %v1315
    %v5600 = vunpack.c.h.b16 %v1315
    %v5601 = vunpack.c.l.b16 %v1316
    %v5602 = vunpack.c.h.b16 %v1316
    %v5603 = vunpack.c.l.b16 %v1317
    %v5604 = vunpack.c.h.b16 %v1317
    %v5605 = vunpack.c.l.b16 %v1318
    %v5606 = vunpack.c.h.b16 %v1318
    %v5607 = vunpack.c.l.b16 %v1319
    %v5608 = vunpack.c.h.b16 %v1319
    %v5609 = vunpack.c.l.b16 %v1320
    %v5610 = vunpack.c.h.b16 %v1320
    %v5611 = vunpack.c.l.b16 %v1321
    %v5612 = vunpack.c.h.b16 %v1321
    %v5613 = vunpack.c.l.b16 %v1322
    %v5614 = vunpack.c.h.b16 %v1322
    %v5615 = vunpack.c.l.b16 %v1323
    %v5616 = vunpack.c.h.b16 %v1323
    %v5617 = vunpack.c.l.b16 %v1324
    %v5618 = vunpack.c.h.b16 %v1324
    %v5619 = vunpack.c.l.b16 %v1325
    %v5620 = vunpack.c.h.b16 %v1325
    %v5621 = vunpack.c.l.b16 %v1326
    %v5622 = vunpack.c.h.b16 %v1326
    %v5623 = vunpack.c.l.b16 %v1327
    %v5624 = vunpack.c.h.b16 %v1327
    %v5625 = vunpack.c.l.b16 %v1328
    %v5626 = vunpack.c.h.b16 %v1328
    %v5627 = vunpack.c.l.b16 %v1329
    %v5628 = vunpack.c.h.b16 %v1329
    %v5629 = vunpack.c.l.b16 %v1330
    %v5630 = vunpack.c.h.b16 %v1330
    %v5631 = vunpack.c.l.b16 %v1331
    %v5632 = vunpack.c.h.b16 %v1331
    %v5633 = vunpack.c.l.b16 %v1332
    %v5634 = vunpack.c.h.b16 %v1332
    %v5635 = vunpack.c.l.b16 %v1333
    %v5636 = vunpack.c.h.b16 %v1333
    %v5637 = vunpack.c.l.b16 %v1334
    %v5638 = vunpack.c.h.b16 %v1334
    %v5639 = vunpack.c.l.b16 %v1335
    %v5640 = vunpack.c.h.b16 %v1335
    %v5641 = vunpack.c.l.b16 %v1336
    %v5642 = vunpack.c.h.b16 %v1336
    %v5643 = vunpack.c.l.b16 %v1337
    %v5644 = vunpack.c.h.b16 %v1337
    %v5645 = vunpack.c.l.b16 %v1338
    %v5646 = vunpack.c.h.b16 %v1338
    %v5647 = vunpack.c.l.b16 %v1339
    %v5648 = vunpack.c.h.b16 %v1339
    %v5649 = vunpack.c.l.b16 %v1340
    %v5650 = vunpack.c.h.b16 %v1340
    %v5651 = vunpack.c.l.b16 %v1341
    %v5652 = vunpack.c.h.b16 %v1341
    %v5653 = vunpack.c.l.b16 %v1342
    %v5654 = vunpack.c.h.b16 %v1342
    %v5655 = vunpack.c.l.b16 %v1343
    %v5656 = vunpack.c.h.b16 %v1343
    %v5657 = vunpack.c.l.b16 %v1344
    %v5658 = vunpack.c.h.b16 %v1344
    %v5659 = vunpack.c.l.b16 %v1345
    %v5660 = vunpack.c.h.b16 %v1345
    %v5661 = vunpack.c.l.b16 %v1346
    %v5662 = vunpack.c.h.b16 %v1346
    %v5663 = vunpack.c.l.b16 %v1347
    %v5664 = vunpack.c.h.b16 %v1347
    %v5665 = vunpack.c.l.b16 %v1348
    %v5666 = vunpack.c.h.b16 %v1348
    %v5667 = vunpack.c.l.b16 %v1349
    %v5668 = vunpack.c.h.b16 %v1349
    %v5669 = vunpack.c.l.b16 %v1350
    %v5670 = vunpack.c.h.b16 %v1350
    %v5671 = vunpack.c.l.b16 %v1351
    %v5672 = vunpack.c.h.b16 %v1351
    %v5673 = vunpack.c.l.b16 %v1352
    %v5674 = vunpack.c.h.b16 %v1352
    %v5675 = vunpack.c.l.b16 %v1353
    %v5676 = vunpack.c.h.b16 %v1353
    %v5677 = vunpack.c.l.b16 %v1354
    %v5678 = vunpack.c.h.b16 %v1354
    %v5679 = vunpack.c.l.b16 %v1355
    %v5680 = vunpack.c.h.b16 %v1355
    %v5681 = vunpack.c.l.b16 %v1356
    %v5682 = vunpack.c.h.b16 %v1356
    %v5683 = vunpack.c.l.b16 %v1357
    %v5684 = vunpack.c.h.b16 %v1357
    %v5685 = vunpack.c.l.b16 %v1358
    %v5686 = vunpack.c.h.b16 %v1358
    %v5687 = vunpack.c.l.b16 %v1359
    %v5688 = vunpack.c.h.b16 %v1359
    %v5689 = vunpack.c.l.b16 %v1360
    %v5690 = vunpack.c.h.b16 %v1360
    %v5691 = vunpack.c.l.b16 %v1361
    %v5692 = vunpack.c.h.b16 %v1361
    %v5693 = vunpack.c.l.b16 %v1362
    %v5694 = vunpack.c.h.b16 %v1362
    %v5695 = vunpack.c.l.b16 %v1363
    %v5696 = vunpack.c.h.b16 %v1363
    %v5697 = vunpack.c.l.b16 %v1364
    %v5698 = vunpack.c.h.b16 %v1364
    %v5699 = vunpack.c.l.b16 %v1365
    %v5700 = vunpack.c.h.b16 %v1365
    %v5701 = vunpack.c.l.b16 %v1366
    %v5702 = vunpack.c.h.b16 %v1366
    %v5703 = vunpack.c.l.b16 %v1367
    %v5704 = vunpack.c.h.b16 %v1367
    %v5705 = vunpack.c.l.b16 %v1368
    %v5706 = vunpack.c.h.b16 %v1368
    %v5707 = vunpack.c.l.b16 %v1369
    %v5708 = vunpack.c.h.b16 %v1369
    %v5709 = vunpack.c.l.b16 %v1370
    %v5710 = vunpack.c.h.b16 %v1370
    %v5711 = vunpack.c.l.b16 %v1371
    %v5712 = vunpack.c.h.b16 %v1371
    %v5713 = vunpack.c.l.b16 %v1372
    %v5714 = vunpack.c.h.b16 %v1372
    %v5715 = vunpack.c.l.b16 %v1373
    %v5716 = vunpack.c.h.b16 %v1373
    %v5717 = vunpack.c.l.b16 %v1374
    %v5718 = vunpack.c.h.b16 %v1374
    %v5719 = vunpack.c.l.b16 %v1375
    %v5720 = vunpack.c.h.b16 %v1375
    %v5721 = vunpack.c.l.b16 %v1376
    %v5722 = vunpack.c.h.b16 %v1376
    %v5723 = vunpack.c.l.b16 %v1377
    %v5724 = vunpack.c.h.b16 %v1377
    %v5725 = vunpack.c.l.b16 %v1378
    %v5726 = vunpack.c.h.b16 %v1378
    %v5727 = vunpack.c.l.b16 %v1379
    %v5728 = vunpack.c.h.b16 %v1379
    %v5729 = vunpack.c.l.b16 %v1380
    %v5730 = vunpack.c.h.b16 %v1380
    %v5731 = vunpack.c.l.b16 %v1381
    %v5732 = vunpack.c.h.b16 %v1381
    %v5733 = vunpack.c.l.b16 %v1382
    %v5734 = vunpack.c.h.b16 %v1382
    %v5735 = vunpack.c.l.b16 %v1383
    %v5736 = vunpack.c.h.b16 %v1383
    %v5737 = vunpack.c.l.b16 %v1384
    %v5738 = vunpack.c.h.b16 %v1384
    %v5739 = vunpack.c.l.b16 %v1385
    %v5740 = vunpack.c.h.b16 %v1385
    %v5741 = vunpack.c.l.b16 %v1386
    %v5742 = vunpack.c.h.b16 %v1386
    %v5743 = vunpack.c.l.b16 %v1387
    %v5744 = vunpack.c.h.b16 %v1387
    %v5745 = vunpack.c.l.b16 %v1388
    %v5746 = vunpack.c.h.b16 %v1388
    %v5747 = vunpack.c.l.b16 %v1389
    %v5748 = vunpack.c.h.b16 %v1389
    %v5749 = vunpack.c.l.b16 %v1390
    %v5750 = vunpack.c.h.b16 %v1390
    %v5751 = vunpack.c.l.b16 %v1391
    %v5752 = vunpack.c.h.b16 %v1391
    %v5753 = vunpack.c.l.b16 %v1392
    %v5754 = vunpack.c.h.b16 %v1392
    %v5755 = vunpack.c.l.b16 %v1393
    %v5756 = vunpack.c.h.b16 %v1393
    %v5757 = vunpack.c.l.b16 %v1394
    %v5758 = vunpack.c.h.b16 %v1394
    %v5759 = vunpack.c.l.b16 %v1395
    %v5760 = vunpack.c.h.b16 %v1395
    %v5761 = vunpack.c.l.b16 %v1396
    %v5762 = vunpack.c.h.b16 %v1396
    %v5763 = vunpack.c.l.b16 %v1397
    %v5764 = vunpack.c.h.b16 %v1397
    %v5765 = vunpack.c.l.b16 %v1398
    %v5766 = vunpack.c.h.b16 %v1398
    %v5767 = vunpack.c.l.b16 %v1399
    %v5768 = vunpack.c.h.b16 %v1399
    %v5769 = vunpack.c.l.b16 %v1400
    %v5770 = vunpack.c.h.b16 %v1400
    %v5771 = vunpack.c.l.b16 %v1401
    %v5772 = vunpack.c.h.b16 %v1401
    %v5773 = vunpack.c.l.b16 %v1402
    %v5774 = vunpack.c.h.b16 %v1402
    %v5775 = vunpack.c.l.b16 %v1403
    %v5776 = vunpack.c.h.b16 %v1403
    %v5777 = vunpack.c.l.b16 %v1404
    %v5778 = vunpack.c.h.b16 %v1404
    %v5779 = vunpack.c.l.b16 %v1405
    %v5780 = vunpack.c.h.b16 %v1405
    %v5781 = vunpack.c.l.b16 %v1406
    %v5782 = vunpack.c.h.b16 %v1406
    %v5783 = vunpack.c.l.b16 %v1407
    %v5784 = vunpack.c.h.b16 %v1407
    %v5785 = vunpack.c.l.b16 %v1408
    %v5786 = vunpack.c.h.b16 %v1408
    %v5787 = vunpack.c.l.b16 %v1409
    %v5788 = vunpack.c.h.b16 %v1409
    %v5789 = vunpack.c.l.b16 %v1410
    %v5790 = vunpack.c.h.b16 %v1410
    %v5791 = vunpack.c.l.b16 %v1411
    %v5792 = vunpack.c.h.b16 %v1411
    %v5793 = vunpack.c.l.b16 %v1412
    %v5794 = vunpack.c.h.b16 %v1412
    %v5795 = vunpack.c.l.b16 %v1413
    %v5796 = vunpack.c.h.b16 %v1413
    %v5797 = vunpack.c.l.b16 %v1414
    %v5798 = vunpack.c.h.b16 %v1414
    %v5799 = vunpack.c.l.b16 %v1415
    %v5800 = vunpack.c.h.b16 %v1415
    %v5801 = vunpack.c.l.b16 %v1416
    %v5802 = vunpack.c.h.b16 %v1416
    %v5803 = vunpack.c.l.b16 %v1417
    %v5804 = vunpack.c.h.b16 %v1417
    %v5805 = vunpack.c.l.b16 %v1418
    %v5806 = vunpack.c.h.b16 %v1418
    %v5807 = vunpack.c.l.b16 %v1419
    %v5808 = vunpack.c.h.b16 %v1419
    %v5809 = vunpack.c.l.b16 %v1420
    %v5810 = vunpack.c.h.b16 %v1420
    %v5811 = vunpack.c.l.b16 %v1421
    %v5812 = vunpack.c.h.b16 %v1421
    %v5813 = vunpack.c.l.b16 %v1422
    %v5814 = vunpack.c.h.b16 %v1422
    %v5815 = vunpack.c.l.b16 %v1423
    %v5816 = vunpack.c.h.b16 %v1423
    %v5817 = vunpack.c.l.b16 %v1424
    %v5818 = vunpack.c.h.b16 %v1424
    %v5819 = vunpack.c.l.b16 %v1425
    %v5820 = vunpack.c.h.b16 %v1425
    %v5821 = vunpack.c.l.b16 %v1426
    %v5822 = vunpack.c.h.b16 %v1426
    %v5823 = vunpack.c.l.b16 %v1427
    %v5824 = vunpack.c.h.b16 %v1427
    %v5825 = vunpack.c.l.b16 %v1428
    %v5826 = vunpack.c.h.b16 %v1428
    %v5827 = vunpack.c.l.b16 %v1429
    %v5828 = vunpack.c.h.b16 %v1429
    %v5829 = vunpack.c.l.b16 %v1430
    %v5830 = vunpack.c.h.b16 %v1430
    %v5831 = vunpack.c.l.b16 %v1431
    %v5832 = vunpack.c.h.b16 %v1431
    %v5833 = vunpack.c.l.b16 %v1432
    %v5834 = vunpack.c.h.b16 %v1432
    %v5835 = vunpack.c.l.b16 %v1433
    %v5836 = vunpack.c.h.b16 %v1433
    %v5837 = vunpack.c.l.b16 %v1434
    %v5838 = vunpack.c.h.b16 %v1434
    %v5839 = vunpack.c.l.b16 %v1435
    %v5840 = vunpack.c.h.b16 %v1435
    %v5841 = vunpack.c.l.b16 %v1436
    %v5842 = vunpack.c.h.b16 %v1436
    %v5843 = vunpack.c.l.b16 %v1437
    %v5844 = vunpack.c.h.b16 %v1437
    %v5845 = vunpack.c.l.b16 %v1438
    %v5846 = vunpack.c.h.b16 %v1438
    %v5847 = vunpack.c.l.b16 %v1439
    %v5848 = vunpack.c.h.b16 %v1439
    %v5849 = vunpack.c.l.b16 %v1440
    %v5850 = vunpack.c.h.b16 %v1440
    %v5851 = vunpack.c.l.b16 %v1441
    %v5852 = vunpack.c.h.b16 %v1441
    %v5853 = vunpack.c.l.b16 %v1442
    %v5854 = vunpack.c.h.b16 %v1442
    %v5855 = vunpack.c.l.b16 %v1443
    %v5856 = vunpack.c.h.b16 %v1443
    %v5857 = vunpack.c.l.b16 %v1444
    %v5858 = vunpack.c.h.b16 %v1444
    %v5859 = vunpack.c.l.b16 %v1445
    %v5860 = vunpack.c.h.b16 %v1445
    %v5861 = vunpack.c.l.b16 %v1446
    %v5862 = vunpack.c.h.b16 %v1446
    %v5863 = vunpack.c.l.b16 %v1447
    %v5864 = vunpack.c.h.b16 %v1447
    %v5865 = vunpack.c.l.b16 %v1448
    %v5866 = vunpack.c.h.b16 %v1448
    %v5867 = vunpack.c.l.b16 %v1449
    %v5868 = vunpack.c.h.b16 %v1449
    %v5869 = vunpack.c.l.b16 %v1450
    %v5870 = vunpack.c.h.b16 %v1450
    %v5871 = vunpack.c.l.b16 %v1451
    %v5872 = vunpack.c.h.b16 %v1451
    %v5873 = vunpack.c.l.b16 %v1452
    %v5874 = vunpack.c.h.b16 %v1452
    %v5875 = vunpack.c.l.b16 %v1453
    %v5876 = vunpack.c.h.b16 %v1453
    %v5877 = vunpack.c.l.b16 %v1454
    %v5878 = vunpack.c.h.b16 %v1454
    %v5879 = vunpack.c.l.b16 %v1455
    %v5880 = vunpack.c.h.b16 %v1455
    %v5881 = vunpack.c.l.b16 %v1456
    %v5882 = vunpack.c.h.b16 %v1456
    %v5883 = vunpack.c.l.b16 %v1457
    %v5884 = vunpack.c.h.b16 %v1457
    %v5885 = vunpack.c.l.b16 %v1458
    %v5886 = vunpack.c.h.b16 %v1458
    %v5887 = vunpack.c.l.b16 %v1459
    %v5888 = vunpack.c.h.b16 %v1459
    %v5889 = vunpack.c.l.b16 %v1460
    %v5890 = vunpack.c.h.b16 %v1460
    %v5891 = vunpack.c.l.b16 %v1461
    %v5892 = vunpack.c.h.b16 %v1461
    %v5893 = vunpack.c.l.b16 %v1462
    %v5894 = vunpack.c.h.b16 %v1462
    %v5895 = vunpack.c.l.b16 %v1463
    %v5896 = vunpack.c.h.b16 %v1463
    %v5897 = vunpack.c.l.b16 %v1464
    %v5898 = vunpack.c.h.b16 %v1464
    %v5899 = vunpack.c.l.b16 %v1465
    %v5900 = vunpack.c.h.b16 %v1465
    %v5901 = vunpack.c.l.b16 %v1466
    %v5902 = vunpack.c.h.b16 %v1466
    %v5903 = vunpack.c.l.b16 %v1467
    %v5904 = vunpack.c.h.b16 %v1467
    %v5905 = vunpack.c.l.b16 %v1468
    %v5906 = vunpack.c.h.b16 %v1468
    %v5907 = vunpack.c.l.b16 %v1469
    %v5908 = vunpack.c.h.b16 %v1469
    %v5909 = vunpack.c.l.b16 %v1470
    %v5910 = vunpack.c.h.b16 %v1470
    %v5911 = vunpack.c.l.b16 %v1471
    %v5912 = vunpack.c.h.b16 %v1471
    %v5913 = vunpack.c.l.b16 %v1472
    %v5914 = vunpack.c.h.b16 %v1472
    %v5915 = vunpack.c.l.b16 %v1473
    %v5916 = vunpack.c.h.b16 %v1473
    %v5917 = vunpack.c.l.b16 %v1474
    %v5918 = vunpack.c.h.b16 %v1474
    %v5919 = vunpack.c.l.b16 %v1475
    %v5920 = vunpack.c.h.b16 %v1475
    %v5921 = vunpack.c.l.b16 %v1476
    %v5922 = vunpack.c.h.b16 %v1476
    %v5923 = vunpack.c.l.b16 %v1477
    %v5924 = vunpack.c.h.b16 %v1477
    %v5925 = vunpack.c.l.b16 %v1478
    %v5926 = vunpack.c.h.b16 %v1478
    %v5927 = vunpack.c.l.b16 %v1479
    %v5928 = vunpack.c.h.b16 %v1479
    %v5929 = vunpack.c.l.b16 %v1480
    %v5930 = vunpack.c.h.b16 %v1480
    %v5931 = vunpack.c.l.b16 %v1481
    %v5932 = vunpack.c.h.b16 %v1481
    %v5933 = vunpack.c.l.b16 %v1482
    %v5934 = vunpack.c.h.b16 %v1482
    %v5935 = vunpack.c.l.b16 %v1483
    %v5936 = vunpack.c.h.b16 %v1483
    %v5937 = vunpack.c.l.b16 %v1484
    %v5938 = vunpack.c.h.b16 %v1484
    %v5939 = vunpack.c.l.b16 %v1485
    %v5940 = vunpack.c.h.b16 %v1485
    %v5941 = vunpack.c.l.b16 %v1486
    %v5942 = vunpack.c.h.b16 %v1486
    %v5943 = vunpack.c.l.b16 %v1487
    %v5944 = vunpack.c.h.b16 %v1487
    %v5945 = vunpack.c.l.b16 %v1488
    %v5946 = vunpack.c.h.b16 %v1488
    %v5947 = vunpack.c.l.b16 %v1489
    %v5948 = vunpack.c.h.b16 %v1489
    %v5949 = vunpack.c.l.b16 %v1490
    %v5950 = vunpack.c.h.b16 %v1490
    %v5951 = vunpack.c.l.b16 %v1491
    %v5952 = vunpack.c.h.b16 %v1491
    %v5953 = vunpack.c.l.b16 %v1492
    %v5954 = vunpack.c.h.b16 %v1492
    %v5955 = vunpack.c.l.b16 %v1493
    %v5956 = vunpack.c.h.b16 %v1493
    %v5957 = vunpack.c.l.b16 %v1494
    %v5958 = vunpack.c.h.b16 %v1494
    %v5959 = vunpack.c.l.b16 %v1495
    %v5960 = vunpack.c.h.b16 %v1495
    %v5961 = vunpack.c.l.b16 %v1496
    %v5962 = vunpack.c.h.b16 %v1496
    %v5963 = vunpack.c.l.b16 %v1497
    %v5964 = vunpack.c.h.b16 %v1497
    %v5965 = vunpack.c.l.b16 %v1498
    %v5966 = vunpack.c.h.b16 %v1498
    %v5967 = vunpack.c.l.b16 %v1499
    %v5968 = vunpack.c.h.b16 %v1499
    %v5969 = vunpack.c.l.b16 %v1500
    %v5970 = vunpack.c.h.b16 %v1500
    %v5971 = vunpack.c.l.b16 %v1501
    %v5972 = vunpack.c.h.b16 %v1501
    %v5973 = vunpack.c.l.b16 %v1502
    %v5974 = vunpack.c.h.b16 %v1502
    %v5975 = vunpack.c.l.b16 %v1503
    %v5976 = vunpack.c.h.b16 %v1503
    %v5977 = vunpack.c.l.b16 %v1504
    %v5978 = vunpack.c.h.b16 %v1504
    %v5979 = vunpack.c.l.b16 %v1505
    %v5980 = vunpack.c.h.b16 %v1505
    %v5981 = vunpack.c.l.b16 %v1506
    %v5982 = vunpack.c.h.b16 %v1506
    %v5983 = vunpack.c.l.b16 %v1507
    %v5984 = vunpack.c.h.b16 %v1507
    %v5985 = vunpack.c.l.b16 %v1508
    %v5986 = vunpack.c.h.b16 %v1508
    %v5987 = vunpack.c.l.b16 %v1509
    %v5988 = vunpack.c.h.b16 %v1509
    %v5989 = vunpack.c.l.b16 %v1510
    %v5990 = vunpack.c.h.b16 %v1510
    %v5991 = vunpack.c.l.b16 %v1511
    %v5992 = vunpack.c.h.b16 %v1511
    %v5993 = vunpack.c.l.b16 %v1512
    %v5994 = vunpack.c.h.b16 %v1512
    %v5995 = vunpack.c.l.b16 %v1513
    %v5996 = vunpack.c.h.b16 %v1513
    %v5997 = vunpack.c.l.b16 %v1514
    %v5998 = vunpack.c.h.b16 %v1514
    %v5999 = vunpack.c.l.b16 %v1515
    %v6000 = vunpack.c.h.b16 %v1515
    %v6001 = vunpack.c.l.b16 %v1516
    %v6002 = vunpack.c.h.b16 %v1516
    %v6003 = vunpack.c.l.b16 %v1517
    %v6004 = vunpack.c.h.b16 %v1517
    %v6005 = vunpack.c.l.b16 %v1518
    %v6006 = vunpack.c.h.b16 %v1518
    %v6007 = vunpack.c.l.b16 %v1519
    %v6008 = vunpack.c.h.b16 %v1519
    %v6009 = vunpack.c.l.b16 %v1520
    %v6010 = vunpack.c.h.b16 %v1520
    %v6011 = vunpack.c.l.b16 %v1521
    %v6012 = vunpack.c.h.b16 %v1521
    %v6013 = vunpack.c.l.b16 %v1522
    %v6014 = vunpack.c.h.b16 %v1522
    %v6015 = vunpack.c.l.b16 %v1523
    %v6016 = vunpack.c.h.b16 %v1523
    %v6017 = vunpack.c.l.b16 %v1524
    %v6018 = vunpack.c.h.b16 %v1524
    %v6019 = vunpack.c.l.b16 %v1525
    %v6020 = vunpack.c.h.b16 %v1525
    %v6021 = vunpack.c.l.b16 %v1526
    %v6022 = vunpack.c.h.b16 %v1526
    %v6023 = vunpack.c.l.b16 %v1527
    %v6024 = vunpack.c.h.b16 %v1527
    %v6025 = vunpack.c.l.b16 %v1528
    %v6026 = vunpack.c.h.b16 %v1528
    %v6027 = vunpack.c.l.b16 %v1529
    %v6028 = vunpack.c.h.b16 %v1529
    %v6029 = vunpack.c.l.b16 %v1530
    %v6030 = vunpack.c.h.b16 %v1530
    %v6031 = vunpack.c.l.b16 %v1531
    %v6032 = vunpack.c.h.b16 %v1531
    %v6033 = vunpack.c.l.b16 %v1532
    %v6034 = vunpack.c.h.b16 %v1532
    %v6035 = vunpack.c.l.b16 %v1533
    %v6036 = vunpack.c.h.b16 %v1533
    %v6037 = vunpack.c.l.b16 %v1534
    %v6038 = vunpack.c.h.b16 %v1534
    %v6039 = vunpack.c.l.b16 %v1535
    %v6040 = vunpack.c.h.b16 %v1535
    %v6041 = vunpack.c.l.b16 %v1536
    %v6042 = vunpack.c.h.b16 %v1536
    %v6043 = vunpack.c.l.b16 %v1537
    %v6044 = vunpack.c.h.b16 %v1537
    %v6045 = vunpack.c.l.b16 %v1538
    %v6046 = vunpack.c.h.b16 %v1538
    %v6047 = vunpack.c.l.b16 %v1539
    %v6048 = vunpack.c.h.b16 %v1539
    %v6049 = vunpack.c.l.b16 %v1540
    %v6050 = vunpack.c.h.b16 %v1540
    %v6051 = vunpack.c.l.b16 %v1541
    %v6052 = vunpack.c.h.b16 %v1541
    %v6053 = vunpack.c.l.b16 %v1542
    %v6054 = vunpack.c.h.b16 %v1542
    %v6055 = vunpack.c.l.b16 %v1543
    %v6056 = vunpack.c.h.b16 %v1543
    %v6057 = vunpack.c.l.b16 %v1544
    %v6058 = vunpack.c.h.b16 %v1544
    %v6059 = vunpack.c.l.b16 %v1545
    %v6060 = vunpack.c.h.b16 %v1545
    %v6061 = vunpack.c.l.b16 %v1546
    %v6062 = vunpack.c.h.b16 %v1546
    %v6063 = vunpack.c.l.b16 %v1547
    %v6064 = vunpack.c.h.b16 %v1547
    %v6065 = vunpack.c.l.b16 %v1548
    %v6066 = vunpack.c.h.b16 %v1548
    %v6067 = vunpack.c.l.b16 %v1549
    %v6068 = vunpack.c.h.b16 %v1549
    %v6069 = vunpack.c.l.b16 %v1550
    %v6070 = vunpack.c.h.b16 %v1550
    %v6071 = vunpack.c.l.b16 %v1551
    %v6072 = vunpack.c.h.b16 %v1551
    %v6073 = vunpack.c.l.b16 %v1552
    %v6074 = vunpack.c.h.b16 %v1552
    %v6075 = vunpack.c.l.b16 %v1553
    %v6076 = vunpack.c.h.b16 %v1553
    %v6077 = vunpack.c.l.b16 %v1554
    %v6078 = vunpack.c.h.b16 %v1554
    %v6079 = vunpack.c.l.b16 %v1555
    %v6080 = vunpack.c.h.b16 %v1555
    %v6081 = vunpack.c.l.b16 %v1556
    %v6082 = vunpack.c.h.b16 %v1556
    %v6083 = vunpack.c.l.b16 %v1557
    %v6084 = vunpack.c.h.b16 %v1557
    %v6085 = vunpack.c.l.b16 %v1558
    %v6086 = vunpack.c.h.b16 %v1558
    %v6087 = vunpack.c.l.b16 %v1559
    %v6088 = vunpack.c.h.b16 %v1559
    %v6089 = vunpack.c.l.b16 %v1560
    %v6090 = vunpack.c.h.b16 %v1560
    %v6091 = vunpack.c.l.b16 %v1561
    %v6092 = vunpack.c.h.b16 %v1561
    %v6093 = vunpack.c.l.b16 %v1562
    %v6094 = vunpack.c.h.b16 %v1562
    %v6095 = vunpack.c.l.b16 %v1563
    %v6096 = vunpack.c.h.b16 %v1563
    %v6097 = vunpack.c.l.b16 %v1564
    %v6098 = vunpack.c.h.b16 %v1564
    %v6099 = vunpack.c.l.b16 %v1565
    %v6100 = vunpack.c.h.b16 %v1565
    %v6101 = vunpack.c.l.b16 %v1566
    %v6102 = vunpack.c.h.b16 %v1566
    %v6103 = vunpack.c.l.b16 %v1567
    %v6104 = vunpack.c.h.b16 %v1567
    %v6105 = vunpack.c.l.b16 %v1568
    %v6106 = vunpack.c.h.b16 %v1568
    %v6107 = vunpack.c.l.b16 %v1569
    %v6108 = vunpack.c.h.b16 %v1569
    %v6109 = vunpack.c.l.b16 %v1570
    %v6110 = vunpack.c.h.b16 %v1570
    %v6111 = vunpack.c.l.b16 %v1571
    %v6112 = vunpack.c.h.b16 %v1571
    %v6113 = vunpack.c.l.b16 %v1572
    %v6114 = vunpack.c.h.b16 %v1572
    %v6115 = vunpack.c.l.b16 %v1573
    %v6116 = vunpack.c.h.b16 %v1573
    %v6117 = vunpack.c.l.b16 %v1574
    %v6118 = vunpack.c.h.b16 %v1574
    %v6119 = vunpack.c.l.b16 %v1575
    %v6120 = vunpack.c.h.b16 %v1575
    %v6121 = vunpack.c.l.b16 %v1576
    %v6122 = vunpack.c.h.b16 %v1576
    %v6123 = vunpack.c.l.b16 %v1577
    %v6124 = vunpack.c.h.b16 %v1577
    %v6125 = vunpack.c.l.b16 %v1578
    %v6126 = vunpack.c.h.b16 %v1578
    %v6127 = vunpack.c.l.b16 %v1579
    %v6128 = vunpack.c.h.b16 %v1579
    %v6129 = vunpack.c.l.b16 %v1580
    %v6130 = vunpack.c.h.b16 %v1580
    %v6131 = vunpack.c.l.b16 %v1581
    %v6132 = vunpack.c.h.b16 %v1581
    %v6133 = vunpack.c.l.b16 %v1582
    %v6134 = vunpack.c.h.b16 %v1582
    %v6135 = vunpack.c.l.b16 %v1583
    %v6136 = vunpack.c.h.b16 %v1583
    %v6137 = vunpack.c.l.b16 %v1584
    %v6138 = vunpack.c.h.b16 %v1584
    %v6139 = vunpack.c.l.b16 %v1585
    %v6140 = vunpack.c.h.b16 %v1585
    %v6141 = vunpack.c.l.b16 %v1586
    %v6142 = vunpack.c.h.b16 %v1586
    %v6143 = vunpack.c.l.b16 %v1587
    %v6144 = vunpack.c.h.b16 %v1587
    %v6145 = vunpack.c.l.b16 %v1588
    %v6146 = vunpack.c.h.b16 %v1588
    %v6147 = vunpack.c.l.b16 %v1589
    %v6148 = vunpack.c.h.b16 %v1589
    %v6149 = vunpack.c.l.b16 %v1590
    %v6150 = vunpack.c.h.b16 %v1590
    %v6151 = vunpack.c.l.b16 %v1591
    %v6152 = vunpack.c.h.b16 %v1591
    %v6153 = vunpack.c.l.b16 %v1592
    %v6154 = vunpack.c.h.b16 %v1592
    %v6155 = vunpack.c.l.b16 %v1593
    %v6156 = vunpack.c.h.b16 %v1593
    %v6157 = vunpack.c.l.b16 %v1594
    %v6158 = vunpack.c.h.b16 %v1594
    %v6159 = vunpack.c.l.b16 %v1595
    %v6160 = vunpack.c.h.b16 %v1595
    %v6161 = vunpack.c.l.b16 %v1596
    %v6162 = vunpack.c.h.b16 %v1596
    %v6163 = vunpack.c.l.b16 %v1597
    %v6164 = vunpack.c.h.b16 %v1597
    %v6165 = vunpack.c.l.b16 %v1598
    %v6166 = vunpack.c.h.b16 %v1598
    %v6167 = vunpack.c.l.b16 %v1599
    %v6168 = vunpack.c.h.b16 %v1599
    %v6169 = vunpack.c.l.b16 %v1600
    %v6170 = vunpack.c.h.b16 %v1600
    %v6171 = vunpack.c.l.b16 %v1601
    %v6172 = vunpack.c.h.b16 %v1601
    %v6173 = vunpack.c.l.b16 %v1602
    %v6174 = vunpack.c.h.b16 %v1602
    %v6175 = vunpack.c.l.b16 %v1603
    %v6176 = vunpack.c.h.b16 %v1603
    %v6177 = vunpack.c.l.b16 %v1604
    %v6178 = vunpack.c.h.b16 %v1604
    %v6179 = vunpack.c.l.b16 %v1605
    %v6180 = vunpack.c.h.b16 %v1605
    %v6181 = vunpack.c.l.b16 %v1606
    %v6182 = vunpack.c.h.b16 %v1606
    %v6183 = vunpack.c.l.b16 %v1607
    %v6184 = vunpack.c.h.b16 %v1607
    %v6185 = vunpack.c.l.b16 %v1608
    %v6186 = vunpack.c.h.b16 %v1608
    %v6187 = vunpack.c.l.b16 %v1609
    %v6188 = vunpack.c.h.b16 %v1609
    %v6189 = vunpack.c.l.b16 %v1610
    %v6190 = vunpack.c.h.b16 %v1610
    %v6191 = vunpack.c.l.b16 %v1611
    %v6192 = vunpack.c.h.b16 %v1611
    %v6193 = vunpack.c.l.b16 %v1612
    %v6194 = vunpack.c.h.b16 %v1612
    %v6195 = vunpack.c.l.b16 %v1613
    %v6196 = vunpack.c.h.b16 %v1613
    %v6197 = vunpack.c.l.b16 %v1614
    %v6198 = vunpack.c.h.b16 %v1614
    %v6199 = vunpack.c.l.b16 %v1615
    %v6200 = vunpack.c.h.b16 %v1615
    %v6201 = vunpack.c.l.b16 %v1616
    %v6202 = vunpack.c.h.b16 %v1616
    %v6203 = vunpack.c.l.b16 %v1617
    %v6204 = vunpack.c.h.b16 %v1617
    %v6205 = vunpack.c.l.b16 %v1618
    %v6206 = vunpack.c.h.b16 %v1618
    %v6207 = vunpack.c.l.b16 %v1619
    %v6208 = vunpack.c.h.b16 %v1619
    %v6209 = vunpack.c.l.b16 %v1620
    %v6210 = vunpack.c.h.b16 %v1620
    %v6211 = vunpack.c.l.b16 %v1621
    %v6212 = vunpack.c.h.b16 %v1621
    %v6213 = vunpack.c.l.b16 %v1622
    %v6214 = vunpack.c.h.b16 %v1622
    %v6215 = vunpack.c.l.b16 %v1623
    %v6216 = vunpack.c.h.b16 %v1623
    %v6217 = vunpack.c.l.b16 %v1624
    %v6218 = vunpack.c.h.b16 %v1624
    %v6219 = vunpack.c.l.b16 %v1625
    %v6220 = vunpack.c.h.b16 %v1625
    %v6221 = vunpack.c.l.b16 %v1626
    %v6222 = vunpack.c.h.b16 %v1626
    %v6223 = vunpack.c.l.b16 %v1627
    %v6224 = vunpack.c.h.b16 %v1627
    %v6225 = vunpack.c.l.b16 %v1628
    %v6226 = vunpack.c.h.b16 %v1628
    %v6227 = vunpack.c.l.b16 %v1629
    %v6228 = vunpack.c.h.b16 %v1629
    %v6229 = vunpack.c.l.b16 %v1630
    %v6230 = vunpack.c.h.b16 %v1630
    %v6231 = vunpack.c.l.b16 %v1631
    %v6232 = vunpack.c.h.b16 %v1631
    %v6233 = vunpack.c.l.b16 %v1632
    %v6234 = vunpack.c.h.b16 %v1632
    %v6235 = vunpack.c.l.b16 %v1633
    %v6236 = vunpack.c.h.b16 %v1633
    %v6237 = vunpack.c.l.b16 %v1634
    %v6238 = vunpack.c.h.b16 %v1634
    %v6239 = vunpack.c.l.b16 %v1635
    %v6240 = vunpack.c.h.b16 %v1635
    %v6241 = vunpack.c.l.b16 %v1636
    %v6242 = vunpack.c.h.b16 %v1636
    %v6243 = vunpack.c.l.b16 %v1637
    %v6244 = vunpack.c.h.b16 %v1637
    %v6245 = vunpack.c.l.b16 %v1638
    %v6246 = vunpack.c.h.b16 %v1638
    %v6247 = vunpack.c.l.b16 %v1639
    %v6248 = vunpack.c.h.b16 %v1639
    %v6249 = vunpack.c.l.b16 %v1640
    %v6250 = vunpack.c.h.b16 %v1640
    %v6251 = vunpack.c.l.b16 %v1641
    %v6252 = vunpack.c.h.b16 %v1641
    %v6253 = vunpack.c.l.b16 %v1642
    %v6254 = vunpack.c.h.b16 %v1642
    %v6255 = vunpack.c.l.b16 %v1643
    %v6256 = vunpack.c.h.b16 %v1643
    %v6257 = vunpack.c.l.b16 %v1644
    %v6258 = vunpack.c.h.b16 %v1644
    %v6259 = vunpack.c.l.b16 %v1645
    %v6260 = vunpack.c.h.b16 %v1645
    %v6261 = vunpack.c.l.b16 %v1646
    %v6262 = vunpack.c.h.b16 %v1646
    %v6263 = vunpack.c.l.b16 %v1647
    %v6264 = vunpack.c.h.b16 %v1647
    %v6265 = vunpack.c.l.b16 %v1648
    %v6266 = vunpack.c.h.b16 %v1648
    %v6267 = vunpack.c.l.b16 %v1649
    %v6268 = vunpack.c.h.b16 %v1649
    %v6269 = vunpack.c.l.b16 %v1650
    %v6270 = vunpack.c.h.b16 %v1650
    %v6271 = vunpack.c.l.b16 %v1651
    %v6272 = vunpack.c.h.b16 %v1651
    %v6273 = vunpack.c.l.b16 %v1652
    %v6274 = vunpack.c.h.b16 %v1652
    %v6275 = vunpack.c.l.b16 %v1653
    %v6276 = vunpack.c.h.b16 %v1653
    %v6277 = vunpack.c.l.b16 %v1654
    %v6278 = vunpack.c.h.b16 %v1654
    %v6279 = vunpack.c.l.b16 %v1655
    %v6280 = vunpack.c.h.b16 %v1655
    %v6281 = vunpack.c.l.b16 %v1656
    %v6282 = vunpack.c.h.b16 %v1656
    %v6283 = vunpack.c.l.b16 %v1657
    %v6284 = vunpack.c.h.b16 %v1657
    %v6285 = vunpack.c.l.b16 %v1658
    %v6286 = vunpack.c.h.b16 %v1658
    %v6287 = vunpack.c.l.b16 %v1659
    %v6288 = vunpack.c.h.b16 %v1659
    %v6289 = vunpack.c.l.b16 %v1660
    %v6290 = vunpack.c.h.b16 %v1660
    %v6291 = vunpack.c.l.b16 %v1661
    %v6292 = vunpack.c.h.b16 %v1661
    %v6293 = vunpack.c.l.b16 %v1662
    %v6294 = vunpack.c.h.b16 %v1662
    %v6295 = vunpack.c.l.b16 %v1663
    %v6296 = vunpack.c.h.b16 %v1663
    %v6297 = vunpack.c.l.b16 %v1664
    %v6298 = vunpack.c.h.b16 %v1664
    %v6299 = vunpack.c.l.b16 %v1665
    %v6300 = vunpack.c.h.b16 %v1665
    %v6301 = vunpack.c.l.b16 %v1666
    %v6302 = vunpack.c.h.b16 %v1666
    %v6303 = vunpack.c.l.b16 %v1667
    %v6304 = vunpack.c.h.b16 %v1667
    %v6305 = vunpack.c.l.b16 %v1668
    %v6306 = vunpack.c.h.b16 %v1668
    %v6307 = vunpack.c.l.b16 %v1669
    %v6308 = vunpack.c.h.b16 %v1669
    %v6309 = vunpack.c.l.b16 %v1670
    %v6310 = vunpack.c.h.b16 %v1670
    %v6311 = vunpack.c.l.b16 %v1671
    %v6312 = vunpack.c.h.b16 %v1671
    %v6313 = vunpack.c.l.b16 %v1672
    %v6314 = vunpack.c.h.b16 %v1672
    %v6315 = vunpack.c.l.b16 %v1673
    %v6316 = vunpack.c.h.b16 %v1673
    %v6317 = vunpack.c.l.b16 %v1674
    %v6318 = vunpack.c.h.b16 %v1674
    %v6319 = vunpack.c.l.b16 %v1675
    %v6320 = vunpack.c.h.b16 %v1675
    %v6321 = vunpack.c.l.b16 %v1676
    %v6322 = vunpack.c.h.b16 %v1676
    %v6323 = vunpack.c.l.b16 %v1677
    %v6324 = vunpack.c.h.b16 %v1677
    %v6325 = vunpack.c.l.b16 %v1678
    %v6326 = vunpack.c.h.b16 %v1678
    %v6327 = vunpack.c.l.b16 %v1679
    %v6328 = vunpack.c.h.b16 %v1679
    %v6329 = vunpack.c.l.b16 %v1680
    %v6330 = vunpack.c.h.b16 %v1680
    %v6331 = vunpack.c.l.b16 %v1681
    %v6332 = vunpack.c.h.b16 %v1681
    %v6333 = vunpack.c.l.b16 %v1682
    %v6334 = vunpack.c.h.b16 %v1682
    %v6335 = vunpack.c.l.b16 %v1683
    %v6336 = vunpack.c.h.b16 %v1683
    %v6337 = vunpack.c.l.b16 %v1684
    %v6338 = vunpack.c.h.b16 %v1684
    %v6339 = vunpack.c.l.b16 %v1685
    %v6340 = vunpack.c.h.b16 %v1685
    %v6341 = vunpack.c.l.b16 %v1686
    %v6342 = vunpack.c.h.b16 %v1686
    %v6343 = vunpack.c.l.b16 %v1687
    %v6344 = vunpack.c.h.b16 %v1687
    %v6345 = vunpack.c.l.b16 %v1688
    %v6346 = vunpack.c.h.b16 %v1688
    %v6347 = vunpack.c.l.b16 %v1689
    %v6348 = vunpack.c.h.b16 %v1689
    %v6349 = vunpack.c.l.b16 %v1690
    %v6350 = vunpack.c.h.b16 %v1690
    %v6351 = vunpack.c.l.b16 %v1691
    %v6352 = vunpack.c.h.b16 %v1691
    %v6353 = vunpack.c.l.b16 %v1692
    %v6354 = vunpack.c.h.b16 %v1692
    %v6355 = vunpack.c.l.b16 %v1693
    %v6356 = vunpack.c.h.b16 %v1693
    %v6357 = vunpack.c.l.b16 %v1694
    %v6358 = vunpack.c.h.b16 %v1694
    %v6359 = vunpack.c.l.b16 %v1695
    %v6360 = vunpack.c.h.b16 %v1695
    %v6361 = vunpack.c.l.b16 %v1696
    %v6362 = vunpack.c.h.b16 %v1696
    %v6363 = vunpack.c.l.b16 %v1697
    %v6364 = vunpack.c.h.b16 %v1697
    %v6365 = vunpack.c.l.b16 %v1698
    %v6366 = vunpack.c.h.b16 %v1698
    %v6367 = vunpack.c.l.b16 %v1699
    %v6368 = vunpack.c.h.b16 %v1699
    %v6369 = vunpack.c.l.b16 %v1700
    %v6370 = vunpack.c.h.b16 %v1700
    %v6371 = vunpack.c.l.b16 %v1701
    %v6372 = vunpack.c.h.b16 %v1701
    %v6373 = vunpack.c.l.b16 %v1702
    %v6374 = vunpack.c.h.b16 %v1702
    %v6375 = vunpack.c.l.b16 %v1703
    %v6376 = vunpack.c.h.b16 %v1703
    %v6377 = vunpack.c.l.b16 %v1704
    %v6378 = vunpack.c.h.b16 %v1704
    %v6379 = vunpack.c.l.b16 %v1705
    %v6380 = vunpack.c.h.b16 %v1705
    %v6381 = vunpack.c.l.b16 %v1706
    %v6382 = vunpack.c.h.b16 %v1706
    %v6383 = vunpack.c.l.b16 %v1707
    %v6384 = vunpack.c.h.b16 %v1707
    %v6385 = vunpack.c.l.b16 %v1708
    %v6386 = vunpack.c.h.b16 %v1708
    %v6387 = vunpack.c.l.b16 %v1709
    %v6388 = vunpack.c.h.b16 %v1709
    %v6389 = vunpack.c.l.b16 %v1710
    %v6390 = vunpack.c.h.b16 %v1710
    %v6391 = vunpack.c.l.b16 %v1711
    %v6392 = vunpack.c.h.b16 %v1711
    %v6393 = vunpack.c.l.b16 %v1712
    %v6394 = vunpack.c.h.b16 %v1712
    %v6395 = vunpack.c.l.b16 %v1713
    %v6396 = vunpack.c.h.b16 %v1713
    %v6397 = vunpack.c.l.b16 %v1714
    %v6398 = vunpack.c.h.b16 %v1714
    %v6399 = vunpack.c.l.b16 %v1715
    %v6400 = vunpack.c.h.b16 %v1715
    %v6401 = vunpack.c.l.b16 %v1716
    %v6402 = vunpack.c.h.b16 %v1716
    %v6403 = vunpack.c.l.b16 %v1717
    %v6404 = vunpack.c.h.b16 %v1717
    %v6405 = vunpack.c.l.b16 %v1718
    %v6406 = vunpack.c.h.b16 %v1718
    %v6407 = vunpack.c.l.b16 %v1719
    %v6408 = vunpack.c.h.b16 %v1719
    %v6409 = vunpack.c.l.b16 %v1720
    %v6410 = vunpack.c.h.b16 %v1720
    %v6411 = vunpack.c.l.b16 %v1721
    %v6412 = vunpack.c.h.b16 %v1721
    %v6413 = vunpack.c.l.b16 %v1722
    %v6414 = vunpack.c.h.b16 %v1722
    %v6415 = vunpack.c.l.b16 %v1723
    %v6416 = vunpack.c.h.b16 %v1723
    %v6417 = vunpack.c.l.b16 %v1724
    %v6418 = vunpack.c.h.b16 %v1724
    %v6419 = vunpack.c.l.b16 %v1725
    %v6420 = vunpack.c.h.b16 %v1725
    %v6421 = vunpack.c.l.b16 %v1726
    %v6422 = vunpack.c.h.b16 %v1726
    %v6423 = vunpack.c.l.b16 %v1727
    %v6424 = vunpack.c.h.b16 %v1727
    %v6425 = vunpack.c.l.b16 %v1728
    %v6426 = vunpack.c.h.b16 %v1728
    %v6427 = vunpack.c.l.b16 %v1729
    %v6428 = vunpack.c.h.b16 %v1729
    %v6429 = vunpack.c.l.b16 %v1730
    %v6430 = vunpack.c.h.b16 %v1730
    %v6431 = vunpack.c.l.b16 %v1731
    %v6432 = vunpack.c.h.b16 %v1731
    %v6433 = vunpack.c.l.b16 %v1732
    %v6434 = vunpack.c.h.b16 %v1732
    %v6435 = vunpack.c.l.b16 %v1733
    %v6436 = vunpack.c.h.b16 %v1733
    %v6437 = vunpack.c.l.b16 %v1734
    %v6438 = vunpack.c.h.b16 %v1734
    %v6439 = vunpack.c.l.b16 %v1735
    %v6440 = vunpack.c.h.b16 %v1735
    %v6441 = vunpack.c.l.b16 %v1736
    %v6442 = vunpack.c.h.b16 %v1736
    %v6443 = vunpack.c.l.b16 %v1737
    %v6444 = vunpack.c.h.b16 %v1737
    %v6445 = vunpack.c.l.b16 %v1738
    %v6446 = vunpack.c.h.b16 %v1738
    %v6447 = vunpack.c.l.b16 %v1739
    %v6448 = vunpack.c.h.b16 %v1739
    %v6449 = vunpack.c.l.b16 %v1740
    %v6450 = vunpack.c.h.b16 %v1740
    %v6451 = vunpack.c.l.b16 %v1741
    %v6452 = vunpack.c.h.b16 %v1741
    %v6453 = vunpack.c.l.b16 %v1742
    %v6454 = vunpack.c.h.b16 %v1742
    %v6455 = vunpack.c.l.b16 %v1743
    %v6456 = vunpack.c.h.b16 %v1743
    %v6457 = vunpack.c.l.b16 %v1744
    %v6458 = vunpack.c.h.b16 %v1744
    %v6459 = vunpack.c.l.b16 %v1745
    %v6460 = vunpack.c.h.b16 %v1745
    %v6461 = vunpack.c.l.b16 %v1746
    %v6462 = vunpack.c.h.b16 %v1746
    %v6463 = vunpack.c.l.b16 %v1747
    %v6464 = vunpack.c.h.b16 %v1747
    %v6465 = vunpack.c.l.b16 %v1748
    %v6466 = vunpack.c.h.b16 %v1748
    %v6467 = vunpack.c.l.b16 %v1749
    %v6468 = vunpack.c.h.b16 %v1749
    %v6469 = vunpack.c.l.b16 %v1750
    %v6470 = vunpack.c.h.b16 %v1750
    %v6471 = vunpack.c.l.b16 %v1751
    %v6472 = vunpack.c.h.b16 %v1751
    %v6473 = vunpack.c.l.b16 %v1752
    %v6474 = vunpack.c.h.b16 %v1752
    %v6475 = vunpack.c.l.b16 %v1753
    %v6476 = vunpack.c.h.b16 %v1753
    %v6477 = vunpack.c.l.b16 %v1754
    %v6478 = vunpack.c.h.b16 %v1754
    %v6479 = vunpack.c.l.b16 %v1755
    %v6480 = vunpack.c.h.b16 %v1755
    %v6481 = vunpack.c.l.b16 %v1756
    %v6482 = vunpack.c.h.b16 %v1756
    %v6483 = vunpack.c.l.b16 %v1757
    %v6484 = vunpack.c.h.b16 %v1757
    %v6485 = vunpack.c.l.b16 %v1758
    %v6486 = vunpack.c.h.b16 %v1758
    %v6487 = vunpack.c.l.b16 %v1759
    %v6488 = vunpack.c.h.b16 %v1759
    %v6489 = vunpack.c.l.b16 %v1760
    %v6490 = vunpack.c.h.b16 %v1760
    %v6491 = vunpack.c.l.b16 %v1761
    %v6492 = vunpack.c.h.b16 %v1761
    %v6493 = vunpack.c.l.b16 %v1762
    %v6494 = vunpack.c.h.b16 %v1762
    %v6495 = vunpack.c.l.b16 %v1763
    %v6496 = vunpack.c.h.b16 %v1763
    %v6497 = vunpack.c.l.b16 %v1764
    %v6498 = vunpack.c.h.b16 %v1764
    %v6499 = vunpack.c.l.b16 %v1765
    %v6500 = vunpack.c.h.b16 %v1765
    %v6501 = vunpack.c.l.b16 %v1766
    %v6502 = vunpack.c.h.b16 %v1766
    %v6503 = vunpack.c.l.b16 %v1767
    %v6504 = vunpack.c.h.b16 %v1767
    %v6505 = vunpack.c.l.b16 %v1768
    %v6506 = vunpack.c.h.b16 %v1768
    %v6507 = vunpack.c.l.b16 %v1769
    %v6508 = vunpack.c.h.b16 %v1769
    %v6509 = vunpack.c.l.b16 %v1770
    %v6510 = vunpack.c.h.b16 %v1770
    %v6511 = vunpack.c.l.b16 %v1771
    %v6512 = vunpack.c.h.b16 %v1771
    %v6513 = vunpack.c.l.b16 %v1772
    %v6514 = vunpack.c.h.b16 %v1772
    %v6515 = vunpack.c.l.b16 %v1773
    %v6516 = vunpack.c.h.b16 %v1773
    %v6517 = vunpack.c.l.b16 %v1774
    %v6518 = vunpack.c.h.b16 %v1774
    %v6519 = vunpack.c.l.b16 %v1775
    %v6520 = vunpack.c.h.b16 %v1775
    %v6521 = vunpack.c.l.b16 %v1776
    %v6522 = vunpack.c.h.b16 %v1776
    %v6523 = vunpack.c.l.b16 %v1777
    %v6524 = vunpack.c.h.b16 %v1777
    %v6525 = vunpack.c.l.b16 %v1778
    %v6526 = vunpack.c.h.b16 %v1778
    %v6527 = vunpack.c.l.b16 %v1779
    %v6528 = vunpack.c.h.b16 %v1779
    %v6529 = vunpack.c.l.b16 %v1780
    %v6530 = vunpack.c.h.b16 %v1780
    %v6531 = vunpack.c.l.b16 %v1781
    %v6532 = vunpack.c.h.b16 %v1781
    %v6533 = vunpack.c.l.b16 %v1782
    %v6534 = vunpack.c.h.b16 %v1782
    %v6535 = vunpack.c.l.b16 %v1783
    %v6536 = vunpack.c.h.b16 %v1783
    %v6537 = vunpack.c.l.b16 %v1784
    %v6538 = vunpack.c.h.b16 %v1784
    %v6539 = vunpack.c.l.b16 %v1785
    %v6540 = vunpack.c.h.b16 %v1785
    %v6541 = vunpack.c.l.b16 %v1786
    %v6542 = vunpack.c.h.b16 %v1786
    %v6543 = vunpack.c.l.b16 %v1787
    %v6544 = vunpack.c.h.b16 %v1787
    %v6545 = vunpack.c.l.b16 %v1788
    %v6546 = vunpack.c.h.b16 %v1788
    %v6547 = vunpack.c.l.b16 %v1789
    %v6548 = vunpack.c.h.b16 %v1789
    %v6549 = vunpack.c.l.b16 %v1790
    %v6550 = vunpack.c.h.b16 %v1790
    %v6551 = vunpack.c.l.b16 %v1791
    %v6552 = vunpack.c.h.b16 %v1791
    %v6553 = vunpack.c.l.b16 %v1792
    %v6554 = vunpack.c.h.b16 %v1792
    %v6555 = vunpack.c.l.b16 %v1793
    %v6556 = vunpack.c.h.b16 %v1793
    %v6557 = vunpack.c.l.b16 %v1794
    %v6558 = vunpack.c.h.b16 %v1794
    %v6559 = vunpack.c.l.b16 %v1795
    %v6560 = vunpack.c.h.b16 %v1795
    %v6561 = vunpack.c.l.b16 %v1796
    %v6562 = vunpack.c.h.b16 %v1796
    %v6563 = vunpack.c.l.b16 %v1797
    %v6564 = vunpack.c.h.b16 %v1797
    %v6565 = vunpack.c.l.b16 %v1798
    %v6566 = vunpack.c.h.b16 %v1798
    %v6567 = vunpack.c.l.b16 %v1799
    %v6568 = vunpack.c.h.b16 %v1799
    %v6569 = vunpack.c.l.b16 %v1800
    %v6570 = vunpack.c.h.b16 %v1800
    %v6571 = vpack.c.b16 %v3507, %v3499
    %v6572 = vpack.c.b16 %v3508, %v3500
    %v6573 = vpack.c.b16 %v3509, %v3501
    %v6574 = vpack.c.b16 %v3510, %v3502
    %v6575 = vpack.c.b16 %v3511, %v3503
    %v6576 = vpack.c.b16 %v3512, %v3504
    %v6577 = vpack.c.b16 %v3513, %v3505
    %v6578 = vpack.c.b16 %v3514, %v3506
    %v6579 = vpack.c.b16 %v3523, %v3515
    %v6580 = vpack.c.b16 %v3524, %v3516
    %v6581 = vpack.c.b16 %v3525, %v3517
    %v6582 = vpack.c.b16 %v3526, %v3518
    %v6583 = vpack.c.b16 %v3527, %v3519
    %v6584 = vpack.c.b16 %v3528, %v3520
    %v6585 = vpack.c.b16 %v3529, %v3521
    %v6586 = vpack.c.b16 %v3530, %v3522
    %v6587 = vpack.c.b16 %v3539, %v3531
    %v6588 = vpack.c.b16 %v3540, %v3532
    %v6589 = vpack.c.b16 %v3541, %v3533
    %v6590 = vpack.c.b16 %v3542, %v3534
    %v6591 = vpack.c.b16 %v3543, %v3535
    %v6592 = vpack.c.b16 %v3544, %v3536
    %v6593 = vpack.c.b16 %v3545, %v3537
    %v6594 = vpack.c.b16 %v3546, %v3538
    %v6595 = vpack.c.b16 %v3555, %v3547
    %v6596 = vpack.c.b16 %v3556, %v3548
    %v6597 = vpack.c.b16 %v3557, %v3549
    %v6598 = vpack.c.b16 %v3558, %v3550
    %v6599 = vpack.c.b16 %v3559, %v3551
    %v6600 = vpack.c.b16 %v3560, %v3552
    %v6601 = vpack.c.b16 %v3561, %v3553
    %v6602 = vpack.c.b16 %v3562, %v3554
    %v6603 = vpack.c.b16 %v3571, %v3563
    %v6604 = vpack.c.b16 %v3572, %v3564
    %v6605 = vpack.c.b16 %v3573, %v3565
    %v6606 = vpack.c.b16 %v3574, %v3566
    %v6607 = vpack.c.b16 %v3575, %v3567
    %v6608 = vpack.c.b16 %v3576, %v3568
    %v6609 = vpack.c.b16 %v3577, %v3569
    %v6610 = vpack.c.b16 %v3578, %v3570
    %v6611 = vpack.c.b16 %v3587, %v3579
    %v6612 = vpack.c.b16 %v3588, %v3580
    %v6613 = vpack.c.b16 %v3589, %v3581
    %v6614 = vpack.c.b16 %v3590, %v3582
    %v6615 = vpack.c.b16 %v3591, %v3583
    %v6616 = vpack.c.b16 %v3592, %v3584
    %v6617 = vpack.c.b16 %v3593, %v3585
    %v6618 = vpack.c.b16 %v3594, %v3586
    %v6619 = vpack.c.b16 %v3603, %v3595
    %v6620 = vpack.c.b16 %v3604, %v3596
    %v6621 = vpack.c.b16 %v3605, %v3597
    %v6622 = vpack.c.b16 %v3606, %v3598
    %v6623 = vpack.c.b16 %v3607, %v3599
    %v6624 = vpack.c.b16 %v3608, %v3600
    %v6625 = vpack.c.b16 %v3609, %v3601
    %v6626 = vpack.c.b16 %v3610, %v3602
    %v6627 = vpack.c.b16 %v3619, %v3611
    %v6628 = vpack.c.b16 %v3620, %v3612
    %v6629 = vpack.c.b16 %v3621, %v3613
    %v6630 = vpack.c.b16 %v3622, %v3614
    %v6631 = vpack.c.b16 %v3623, %v3615
    %v6632 = vpack.c.b16 %v3624, %v3616
    %v6633 = vpack.c.b16 %v3625, %v3617
    %v6634 = vpack.c.b16 %v3626, %v3618
    %v6635 = vpack.c.b16 %v3635, %v3627
    %v6636 = vpack.c.b16 %v3636, %v3628
    %v6637 = vpack.c.b16 %v3637, %v3629
    %v6638 = vpack.c.b16 %v3638, %v3630
    %v6639 = vpack.c.b16 %v3639, %v3631
    %v6640 = vpack.c.b16 %v3640, %v3632
    %v6641 = vpack.c.b16 %v3641, %v3633
    %v6642 = vpack.c.b16 %v3642, %v3634
    %v6643 = vpack.c.b16 %v3651, %v3643
    %v6644 = vpack.c.b16 %v3652, %v3644
    %v6645 = vpack.c.b16 %v3653, %v3645
    %v6646 = vpack.c.b16 %v3654, %v3646
    %v6647 = vpack.c.b16 %v3655, %v3647
    %v6648 = vpack.c.b16 %v3656, %v3648
    %v6649 = vpack.c.b16 %v3657, %v3649
    %v6650 = vpack.c.b16 %v3658, %v3650
    %v6651 = vpack.c.b16 %v3667, %v3659
    %v6652 = vpack.c.b16 %v3668, %v3660
    %v6653 = vpack.c.b16 %v3669, %v3661
    %v6654 = vpack.c.b16 %v3670, %v3662
    %v6655 = vpack.c.b16 %v3671, %v3663
    %v6656 = vpack.c.b16 %v3672, %v3664
    %v6657 = vpack.c.b16 %v3673, %v3665
    %v6658 = vpack.c.b16 %v3674, %v3666
    %v6659 = vpack.c.b16 %v3683, %v3675
    %v6660 = vpack.c.b16 %v3684, %v3676
    %v6661 = vpack.c.b16 %v3685, %v3677
    %v6662 = vpack.c.b16 %v3686, %v3678
    %v6663 = vpack.c.b16 %v3687, %v3679
    %v6664 = vpack.c.b16 %v3688, %v3680
    %v6665 = vpack.c.b16 %v3689, %v3681
    %v6666 = vpack.c.b16 %v3690, %v3682
    %v6667 = vpack.c.b16 %v3699, %v3691
    %v6668 = vpack.c.b16 %v3700, %v3692
    %v6669 = vpack.c.b16 %v3701, %v3693
    %v6670 = vpack.c.b16 %v3702, %v3694
    %v6671 = vpack.c.b16 %v3703, %v3695
    %v6672 = vpack.c.b16 %v3704, %v3696
    %v6673 = vpack.c.b16 %v3705, %v3697
    %v6674 = vpack.c.b16 %v3706, %v3698
    %v6675 = vpack.c.b16 %v3715, %v3707
    %v6676 = vpack.c.b16 %v3716, %v3708
    %v6677 = vpack.c.b16 %v3717, %v3709
    %v6678 = vpack.c.b16 %v3718, %v3710
    %v6679 = vpack.c.b16 %v3719, %v3711
    %v6680 = vpack.c.b16 %v3720, %v3712
    %v6681 = vpack.c.b16 %v3721, %v3713
    %v6682 = vpack.c.b16 %v3722, %v3714
    %v6683 = vpack.c.b16 %v3731, %v3723
    %v6684 = vpack.c.b16 %v3732, %v3724
    %v6685 = vpack.c.b16 %v3733, %v3725
    %v6686 = vpack.c.b16 %v3734, %v3726
    %v6687 = vpack.c.b16 %v3735, %v3727
    %v6688 = vpack.c.b16 %v3736, %v3728
    %v6689 = vpack.c.b16 %v3737, %v3729
    %v6690 = vpack.c.b16 %v3738, %v3730
    %v6691 = vpack.c.b16 %v3747, %v3739
    %v6692 = vpack.c.b16 %v3748, %v3740
    %v6693 = vpack.c.b16 %v3749, %v3741
    %v6694 = vpack.c.b16 %v3750, %v3742
    %v6695 = vpack.c.b16 %v3751, %v3743
    %v6696 = vpack.c.b16 %v3752, %v3744
    %v6697 = vpack.c.b16 %v3753, %v3745
    %v6698 = vpack.c.b16 %v3754, %v3746
    %v6699 = vpack.c.b16 %v3763, %v3755
    %v6700 = vpack.c.b16 %v3764, %v3756
    %v6701 = vpack.c.b16 %v3765, %v3757
    %v6702 = vpack.c.b16 %v3766, %v3758
    %v6703 = vpack.c.b16 %v3767, %v3759
    %v6704 = vpack.c.b16 %v3768, %v3760
    %v6705 = vpack.c.b16 %v3769, %v3761
    %v6706 = vpack.c.b16 %v3770, %v3762
    %v6707 = vpack.c.b16 %v3779, %v3771
    %v6708 = vpack.c.b16 %v3780, %v3772
    %v6709 = vpack.c.b16 %v3781, %v3773
    %v6710 = vpack.c.b16 %v3782, %v3774
    %v6711 = vpack.c.b16 %v3783, %v3775
    %v6712 = vpack.c.b16 %v3784, %v3776
    %v6713 = vpack.c.b16 %v3785, %v3777
    %v6714 = vpack.c.b16 %v3786, %v3778
    %v6715 = vpack.c.b16 %v3795, %v3787
    %v6716 = vpack.c.b16 %v3796, %v3788
    %v6717 = vpack.c.b16 %v3797, %v3789
    %v6718 = vpack.c.b16 %v3798, %v3790
    %v6719 = vpack.c.b16 %v3799, %v3791
    %v6720 = vpack.c.b16 %v3800, %v3792
    %v6721 = vpack.c.b16 %v3801, %v3793
    %v6722 = vpack.c.b16 %v3802, %v3794
    %v6723 = vpack.c.b16 %v3811, %v3803
    %v6724 = vpack.c.b16 %v3812, %v3804
    %v6725 = vpack.c.b16 %v3813, %v3805
    %v6726 = vpack.c.b16 %v3814, %v3806
    %v6727 = vpack.c.b16 %v3815, %v3807
    %v6728 = vpack.c.b16 %v3816, %v3808
    %v6729 = vpack.c.b16 %v3817, %v3809
    %v6730 = vpack.c.b16 %v3818, %v3810
    %v6731 = vpack.c.b16 %v3827, %v3819
    %v6732 = vpack.c.b16 %v3828, %v3820
    %v6733 = vpack.c.b16 %v3829, %v3821
    %v6734 = vpack.c.b16 %v3830, %v3822
    %v6735 = vpack.c.b16 %v3831, %v3823
    %v6736 = vpack.c.b16 %v3832, %v3824
    %v6737 = vpack.c.b16 %v3833, %v3825
    %v6738 = vpack.c.b16 %v3834, %v3826
    %v6739 = vpack.c.b16 %v3843, %v3835
    %v6740 = vpack.c.b16 %v3844, %v3836
    %v6741 = vpack.c.b16 %v3845, %v3837
    %v6742 = vpack.c.b16 %v3846, %v3838
    %v6743 = vpack.c.b16 %v3847, %v3839
    %v6744 = vpack.c.b16 %v3848, %v3840
    %v6745 = vpack.c.b16 %v3849, %v3841
    %v6746 = vpack.c.b16 %v3850, %v3842
    %v6747 = vpack.c.b16 %v3859, %v3851
    %v6748 = vpack.c.b16 %v3860, %v3852
    %v6749 = vpack.c.b16 %v3861, %v3853
    %v6750 = vpack.c.b16 %v3862, %v3854
    %v6751 = vpack.c.b16 %v3863, %v3855
    %v6752 = vpack.c.b16 %v3864, %v3856
    %v6753 = vpack.c.b16 %v3865, %v3857
    %v6754 = vpack.c.b16 %v3866, %v3858
    %v6755 = vpack.c.b16 %v3875, %v3867
    %v6756 = vpack.c.b16 %v3876, %v3868
    %v6757 = vpack.c.b16 %v3877, %v3869
    %v6758 = vpack.c.b16 %v3878, %v3870
    %v6759 = vpack.c.b16 %v3879, %v3871
    %v6760 = vpack.c.b16 %v3880, %v3872
    %v6761 = vpack.c.b16 %v3881, %v3873
    %v6762 = vpack.c.b16 %v3882, %v3874
    %v6763 = vpack.c.b16 %v3891, %v3883
    %v6764 = vpack.c.b16 %v3892, %v3884
    %v6765 = vpack.c.b16 %v3893, %v3885
    %v6766 = vpack.c.b16 %v3894, %v3886
    %v6767 = vpack.c.b16 %v3895, %v3887
    %v6768 = vpack.c.b16 %v3896, %v3888
    %v6769 = vpack.c.b16 %v3897, %v3889
    %v6770 = vpack.c.b16 %v3898, %v3890
    %v6771 = vpack.c.b16 %v3907, %v3899
    %v6772 = vpack.c.b16 %v3908, %v3900
    %v6773 = vpack.c.b16 %v3909, %v3901
    %v6774 = vpack.c.b16 %v3910, %v3902
    %v6775 = vpack.c.b16 %v3911, %v3903
    %v6776 = vpack.c.b16 %v3912, %v3904
    %v6777 = vpack.c.b16 %v3913, %v3905
    %v6778 = vpack.c.b16 %v3914, %v3906
    %v6779 = vpack.c.b16 %v3923, %v3915
    %v6780 = vpack.c.b16 %v3924, %v3916
    %v6781 = vpack.c.b16 %v3925, %v3917
    %v6782 = vpack.c.b16 %v3926, %v3918
    %v6783 = vpack.c.b16 %v3927, %v3919
    %v6784 = vpack.c.b16 %v3928, %v3920
    %v6785 = vpack.c.b16 %v3929, %v3921
    %v6786 = vpack.c.b16 %v3930, %v3922
    %v6787 = vpack.c.b16 %v3939, %v3931
    %v6788 = vpack.c.b16 %v3940, %v3932
    %v6789 = vpack.c.b16 %v3941, %v3933
    %v6790 = vpack.c.b16 %v3942, %v3934
    %v6791 = vpack.c.b16 %v3943, %v3935
    %v6792 = vpack.c.b16 %v3944, %v3936
    %v6793 = vpack.c.b16 %v3945, %v3937
    %v6794 = vpack.c.b16 %v3946, %v3938
    %v6795 = vpack.c.b16 %v3955, %v3947
    %v6796 = vpack.c.b16 %v3956, %v3948
    %v6797 = vpack.c.b16 %v3957, %v3949
    %v6798 = vpack.c.b16 %v3958, %v3950
    %v6799 = vpack.c.b16 %v3959, %v3951
    %v6800 = vpack.c.b16 %v3960, %v3952
    %v6801 = vpack.c.b16 %v3961, %v3953
    %v6802 = vpack.c.b16 %v3962, %v3954
    %v6803 = vpack.c.b16 %v3971, %v3963
    %v6804 = vpack.c.b16 %v3972, %v3964
    %v6805 = vpack.c.b16 %v3973, %v3965
    %v6806 = vpack.c.b16 %v3974, %v3966
    %v6807 = vpack.c.b16 %v3975, %v3967
    %v6808 = vpack.c.b16 %v3976, %v3968
    %v6809 = vpack.c.b16 %v3977, %v3969
    %v6810 = vpack.c.b16 %v3978, %v3970
    %v6811 = vpack.c.b16 %v3987, %v3979
    %v6812 = vpack.c.b16 %v3988, %v3980
    %v6813 = vpack.c.b16 %v3989, %v3981
    %v6814 = vpack.c.b16 %v3990, %v3982
    %v6815 = vpack.c.b16 %v3991, %v3983
    %v6816 = vpack.c.b16 %v3992, %v3984
    %v6817 = vpack.c.b16 %v3993, %v3985
    %v6818 = vpack.c.b16 %v3994, %v3986
    %v6819 = vpack.c.b16 %v4003, %v3995
    %v6820 = vpack.c.b16 %v4004, %v3996
    %v6821 = vpack.c.b16 %v4005, %v3997
    %v6822 = vpack.c.b16 %v4006, %v3998
    %v6823 = vpack.c.b16 %v4007, %v3999
    %v6824 = vpack.c.b16 %v4008, %v4000
    %v6825 = vpack.c.b16 %v4009, %v4001
    %v6826 = vpack.c.b16 %v4010, %v4002
    %v6827 = vpack.c.b16 %v4019, %v4011
    %v6828 = vpack.c.b16 %v4020, %v4012
    %v6829 = vpack.c.b16 %v4021, %v4013
    %v6830 = vpack.c.b16 %v4022, %v4014
    %v6831 = vpack.c.b16 %v4023, %v4015
    %v6832 = vpack.c.b16 %v4024, %v4016
    %v6833 = vpack.c.b16 %v4025, %v4017
    %v6834 = vpack.c.b16 %v4026, %v4018
    %v6835 = vpack.c.b16 %v4035, %v4027
    %v6836 = vpack.c.b16 %v4036, %v4028
    %v6837 = vpack.c.b16 %v4037, %v4029
    %v6838 = vpack.c.b16 %v4038, %v4030
    %v6839 = vpack.c.b16 %v4039, %v4031
    %v6840 = vpack.c.b16 %v4040, %v4032
    %v6841 = vpack.c.b16 %v4041, %v4033
    %v6842 = vpack.c.b16 %v4042, %v4034
    %v6843 = vpack.c.b16 %v4051, %v4043
    %v6844 = vpack.c.b16 %v4052, %v4044
    %v6845 = vpack.c.b16 %v4053, %v4045
    %v6846 = vpack.c.b16 %v4054, %v4046
    %v6847 = vpack.c.b16 %v4055, %v4047
    %v6848 = vpack.c.b16 %v4056, %v4048
    %v6849 = vpack.c.b16 %v4057, %v4049
    %v6850 = vpack.c.b16 %v4058, %v4050
    %v6851 = vpack.c.b16 %v4067, %v4059
    %v6852 = vpack.c.b16 %v4068, %v4060
    %v6853 = vpack.c.b16 %v4069, %v4061
    %v6854 = vpack.c.b16 %v4070, %v4062
    %v6855 = vpack.c.b16 %v4071, %v4063
    %v6856 = vpack.c.b16 %v4072, %v4064
    %v6857 = vpack.c.b16 %v4073, %v4065
    %v6858 = vpack.c.b16 %v4074, %v4066
    %v6859 = vpack.c.b16 %v4083, %v4075
    %v6860 = vpack.c.b16 %v4084, %v4076
    %v6861 = vpack.c.b16 %v4085, %v4077
    %v6862 = vpack.c.b16 %v4086, %v4078
    %v6863 = vpack.c.b16 %v4087, %v4079
    %v6864 = vpack.c.b16 %v4088, %v4080
    %v6865 = vpack.c.b16 %v4089, %v4081
    %v6866 = vpack.c.b16 %v4090, %v4082
    %v6867 = vpack.c.b16 %v4099, %v4091
    %v6868 = vpack.c.b16 %v4100, %v4092
    %v6869 = vpack.c.b16 %v4101, %v4093
    %v6870 = vpack.c.b16 %v4102, %v4094
    %v6871 = vpack.c.b16 %v4103, %v4095
    %v6872 = vpack.c.b16 %v4104, %v4096
    %v6873 = vpack.c.b16 %v4105, %v4097
    %v6874 = vpack.c.b16 %v4106, %v4098
    %v6875 = vpack.c.b16 %v4115, %v4107
    %v6876 = vpack.c.b16 %v4116, %v4108
    %v6877 = vpack.c.b16 %v4117, %v4109
    %v6878 = vpack.c.b16 %v4118, %v4110
    %v6879 = vpack.c.b16 %v4119, %v4111
    %v6880 = vpack.c.b16 %v4120, %v4112
    %v6881 = vpack.c.b16 %v4121, %v4113
    %v6882 = vpack.c.b16 %v4122, %v4114
    %v6883 = vpack.c.b16 %v4131, %v4123
    %v6884 = vpack.c.b16 %v4132, %v4124
    %v6885 = vpack.c.b16 %v4133, %v4125
    %v6886 = vpack.c.b16 %v4134, %v4126
    %v6887 = vpack.c.b16 %v4135, %v4127
    %v6888 = vpack.c.b16 %v4136, %v4128
    %v6889 = vpack.c.b16 %v4137, %v4129
    %v6890 = vpack.c.b16 %v4138, %v4130
    %v6891 = vpack.c.b16 %v4147, %v4139
    %v6892 = vpack.c.b16 %v4148, %v4140
    %v6893 = vpack.c.b16 %v4149, %v4141
    %v6894 = vpack.c.b16 %v4150, %v4142
    %v6895 = vpack.c.b16 %v4151, %v4143
    %v6896 = vpack.c.b16 %v4152, %v4144
    %v6897 = vpack.c.b16 %v4153, %v4145
    %v6898 = vpack.c.b16 %v4154, %v4146
    %v6899 = vpack.c.b16 %v4163, %v4155
    %v6900 = vpack.c.b16 %v4164, %v4156
    %v6901 = vpack.c.b16 %v4165, %v4157
    %v6902 = vpack.c.b16 %v4166, %v4158
    %v6903 = vpack.c.b16 %v4167, %v4159
    %v6904 = vpack.c.b16 %v4168, %v4160
    %v6905 = vpack.c.b16 %v4169, %v4161
    %v6906 = vpack.c.b16 %v4170, %v4162
    %v6907 = vpack.c.b16 %v4179, %v4171
    %v6908 = vpack.c.b16 %v4180, %v4172
    %v6909 = vpack.c.b16 %v4181, %v4173
    %v6910 = vpack.c.b16 %v4182, %v4174
    %v6911 = vpack.c.b16 %v4183, %v4175
    %v6912 = vpack.c.b16 %v4184, %v4176
    %v6913 = vpack.c.b16 %v4185, %v4177
    %v6914 = vpack.c.b16 %v4186, %v4178
    %v6915 = vpack.c.b16 %v4195, %v4187
    %v6916 = vpack.c.b16 %v4196, %v4188
    %v6917 = vpack.c.b16 %v4197, %v4189
    %v6918 = vpack.c.b16 %v4198, %v4190
    %v6919 = vpack.c.b16 %v4199, %v4191
    %v6920 = vpack.c.b16 %v4200, %v4192
    %v6921 = vpack.c.b16 %v4201, %v4193
    %v6922 = vpack.c.b16 %v4202, %v4194
    %v6923 = vpack.c.b16 %v4211, %v4203
    %v6924 = vpack.c.b16 %v4212, %v4204
    %v6925 = vpack.c.b16 %v4213, %v4205
    %v6926 = vpack.c.b16 %v4214, %v4206
    %v6927 = vpack.c.b16 %v4215, %v4207
    %v6928 = vpack.c.b16 %v4216, %v4208
    %v6929 = vpack.c.b16 %v4217, %v4209
    %v6930 = vpack.c.b16 %v4218, %v4210
    %v6931 = vpack.c.b16 %v4227, %v4219
    %v6932 = vpack.c.b16 %v4228, %v4220
    %v6933 = vpack.c.b16 %v4229, %v4221
    %v6934 = vpack.c.b16 %v4230, %v4222
    %v6935 = vpack.c.b16 %v4231, %v4223
    %v6936 = vpack.c.b16 %v4232, %v4224
    %v6937 = vpack.c.b16 %v4233, %v4225
    %v6938 = vpack.c.b16 %v4234, %v4226
    %v6939 = vpack.c.b16 %v4243, %v4235
    %v6940 = vpack.c.b16 %v4244, %v4236
    %v6941 = vpack.c.b16 %v4245, %v4237
    %v6942 = vpack.c.b16 %v4246, %v4238
    %v6943 = vpack.c.b16 %v4247, %v4239
    %v6944 = vpack.c.b16 %v4248, %v4240
    %v6945 = vpack.c.b16 %v4249, %v4241
    %v6946 = vpack.c.b16 %v4250, %v4242
    %v6947 = vpack.c.b16 %v4259, %v4251
    %v6948 = vpack.c.b16 %v4260, %v4252
    %v6949 = vpack.c.b16 %v4261, %v4253
    %v6950 = vpack.c.b16 %v4262, %v4254
    %v6951 = vpack.c.b16 %v4263, %v4255
    %v6952 = vpack.c.b16 %v4264, %v4256
    %v6953 = vpack.c.b16 %v4265, %v4257
    %v6954 = vpack.c.b16 %v4266, %v4258
    %v6955 = vpack.c.b16 %v4275, %v4267
    %v6956 = vpack.c.b16 %v4276, %v4268
    %v6957 = vpack.c.b16 %v4277, %v4269
    %v6958 = vpack.c.b16 %v4278, %v4270
    %v6959 = vpack.c.b16 %v4279, %v4271
    %v6960 = vpack.c.b16 %v4280, %v4272
    %v6961 = vpack.c.b16 %v4281, %v4273
    %v6962 = vpack.c.b16 %v4282, %v4274
    %v6963 = vpack.c.b16 %v4291, %v4283
    %v6964 = vpack.c.b16 %v4292, %v4284
    %v6965 = vpack.c.b16 %v4293, %v4285
    %v6966 = vpack.c.b16 %v4294, %v4286
    %v6967 = vpack.c.b16 %v4295, %v4287
    %v6968 = vpack.c.b16 %v4296, %v4288
    %v6969 = vpack.c.b16 %v4297, %v4289
    %v6970 = vpack.c.b16 %v4298, %v4290
    %v6971 = vpack.c.b16 %v4307, %v4299
    %v6972 = vpack.c.b16 %v4308, %v4300
    %v6973 = vpack.c.b16 %v4309, %v4301
    %v6974 = vpack.c.b16 %v4310, %v4302
    %v6975 = vpack.c.b16 %v4311, %v4303
    %v6976 = vpack.c.b16 %v4312, %v4304
    %v6977 = vpack.c.b16 %v4313, %v4305
    %v6978 = vpack.c.b16 %v4314, %v4306
    %v6979 = vpack.c.b16 %v4323, %v4315
    %v6980 = vpack.c.b16 %v4324, %v4316
    %v6981 = vpack.c.b16 %v4325, %v4317
    %v6982 = vpack.c.b16 %v4326, %v4318
    %v6983 = vpack.c.b16 %v4327, %v4319
    %v6984 = vpack.c.b16 %v4328, %v4320
    %v6985 = vpack.c.b16 %v4329, %v4321
    %v6986 = vpack.c.b16 %v4330, %v4322
    %v6987 = vpack.c.b16 %v4339, %v4331
    %v6988 = vpack.c.b16 %v4340, %v4332
    %v6989 = vpack.c.b16 %v4341, %v4333
    %v6990 = vpack.c.b16 %v4342, %v4334
    %v6991 = vpack.c.b16 %v4343, %v4335
    %v6992 = vpack.c.b16 %v4344, %v4336
    %v6993 = vpack.c.b16 %v4345, %v4337
    %v6994 = vpack.c.b16 %v4346, %v4338
    %v6995 = vpack.c.b16 %v4355, %v4347
    %v6996 = vpack.c.b16 %v4356, %v4348
    %v6997 = vpack.c.b16 %v4357, %v4349
    %v6998 = vpack.c.b16 %v4358, %v4350
    %v6999 = vpack.c.b16 %v4359, %v4351
    %v7000 = vpack.c.b16 %v4360, %v4352
    %v7001 = vpack.c.b16 %v4361, %v4353
    %v7002 = vpack.c.b16 %v4362, %v4354
    %v7003 = vpack.c.b16 %v4371, %v4363
    %v7004 = vpack.c.b16 %v4372, %v4364
    %v7005 = vpack.c.b16 %v4373, %v4365
    %v7006 = vpack.c.b16 %v4374, %v4366
    %v7007 = vpack.c.b16 %v4375, %v4367
    %v7008 = vpack.c.b16 %v4376, %v4368
    %v7009 = vpack.c.b16 %v4377, %v4369
    %v7010 = vpack.c.b16 %v4378, %v4370
    %v7011 = vpack.c.b16 %v4387, %v4379
    %v7012 = vpack.c.b16 %v4388, %v4380
    %v7013 = vpack.c.b16 %v4389, %v4381
    %v7014 = vpack.c.b16 %v4390, %v4382
    %v7015 = vpack.c.b16 %v4391, %v4383
    %v7016 = vpack.c.b16 %v4392, %v4384
    %v7017 = vpack.c.b16 %v4393, %v4385
    %v7018 = vpack.c.b16 %v4394, %v4386
    %v7019 = vpack.c.b16 %v4403, %v4395
    %v7020 = vpack.c.b16 %v4404, %v4396
    %v7021 = vpack.c.b16 %v4405, %v4397
    %v7022 = vpack.c.b16 %v4406, %v4398
    %v7023 = vpack.c.b16 %v4407, %v4399
    %v7024 = vpack.c.b16 %v4408, %v4400
    %v7025 = vpack.c.b16 %v4409, %v4401
    %v7026 = vpack.c.b16 %v4410, %v4402
    %v7027 = vpack.c.b16 %v4419, %v4411
    %v7028 = vpack.c.b16 %v4420, %v4412
    %v7029 = vpack.c.b16 %v4421, %v4413
    %v7030 = vpack.c.b16 %v4422, %v4414
    %v7031 = vpack.c.b16 %v4423, %v4415
    %v7032 = vpack.c.b16 %v4424, %v4416
    %v7033 = vpack.c.b16 %v4425, %v4417
    %v7034 = vpack.c.b16 %v4426, %v4418
    %v7035 = vpack.c.b16 %v4435, %v4427
    %v7036 = vpack.c.b16 %v4436, %v4428
    %v7037 = vpack.c.b16 %v4437, %v4429
    %v7038 = vpack.c.b16 %v4438, %v4430
    %v7039 = vpack.c.b16 %v4439, %v4431
    %v7040 = vpack.c.b16 %v4440, %v4432
    %v7041 = vpack.c.b16 %v4441, %v4433
    %v7042 = vpack.c.b16 %v4442, %v4434
    %v7043 = vpack.c.b16 %v4451, %v4443
    %v7044 = vpack.c.b16 %v4452, %v4444
    %v7045 = vpack.c.b16 %v4453, %v4445
    %v7046 = vpack.c.b16 %v4454, %v4446
    %v7047 = vpack.c.b16 %v4455, %v4447
    %v7048 = vpack.c.b16 %v4456, %v4448
    %v7049 = vpack.c.b16 %v4457, %v4449
    %v7050 = vpack.c.b16 %v4458, %v4450
    %v7051 = vpack.c.b16 %v4467, %v4459
    %v7052 = vpack.c.b16 %v4468, %v4460
    %v7053 = vpack.c.b16 %v4469, %v4461
    %v7054 = vpack.c.b16 %v4470, %v4462
    %v7055 = vpack.c.b16 %v4471, %v4463
    %v7056 = vpack.c.b16 %v4472, %v4464
    %v7057 = vpack.c.b16 %v4473, %v4465
    %v7058 = vpack.c.b16 %v4474, %v4466
    %v7059 = vpack.c.b16 %v4483, %v4475
    %v7060 = vpack.c.b16 %v4484, %v4476
    %v7061 = vpack.c.b16 %v4485, %v4477
    %v7062 = vpack.c.b16 %v4486, %v4478
    %v7063 = vpack.c.b16 %v4487, %v4479
    %v7064 = vpack.c.b16 %v4488, %v4480
    %v7065 = vpack.c.b16 %v4489, %v4481
    %v7066 = vpack.c.b16 %v4490, %v4482
    %v7067 = vpack.c.b16 %v4499, %v4491
    %v7068 = vpack.c.b16 %v4500, %v4492
    %v7069 = vpack.c.b16 %v4501, %v4493
    %v7070 = vpack.c.b16 %v4502, %v4494
    %v7071 = vpack.c.b16 %v4503, %v4495
    %v7072 = vpack.c.b16 %v4504, %v4496
    %v7073 = vpack.c.b16 %v4505, %v4497
    %v7074 = vpack.c.b16 %v4506, %v4498
    %v7075 = vpack.c.b16 %v4515, %v4507
    %v7076 = vpack.c.b16 %v4516, %v4508
    %v7077 = vpack.c.b16 %v4517, %v4509
    %v7078 = vpack.c.b16 %v4518, %v4510
    %v7079 = vpack.c.b16 %v4519, %v4511
    %v7080 = vpack.c.b16 %v4520, %v4512
    %v7081 = vpack.c.b16 %v4521, %v4513
    %v7082 = vpack.c.b16 %v4522, %v4514
    %v7083 = vpack.c.b16 %v4531, %v4523
    %v7084 = vpack.c.b16 %v4532, %v4524
    %v7085 = vpack.c.b16 %v4533, %v4525
    %v7086 = vpack.c.b16 %v4534, %v4526
    %v7087 = vpack.c.b16 %v4535, %v4527
    %v7088 = vpack.c.b16 %v4536, %v4528
    %v7089 = vpack.c.b16 %v4537, %v4529
    %v7090 = vpack.c.b16 %v4538, %v4530
    %v7091 = vpack.c.b16 %v4547, %v4539
    %v7092 = vpack.c.b16 %v4548, %v4540
    %v7093 = vpack.c.b16 %v4549, %v4541
    %v7094 = vpack.c.b16 %v4550, %v4542
    %v7095 = vpack.c.b16 %v4551, %v4543
    %v7096 = vpack.c.b16 %v4552, %v4544
    %v7097 = vpack.c.b16 %v4553, %v4545
    %v7098 = vpack.c.b16 %v4554, %v4546
    %v7099 = vpack.c.b16 %v4563, %v4555
    %v7100 = vpack.c.b16 %v4564, %v4556
    %v7101 = vpack.c.b16 %v4565, %v4557
    %v7102 = vpack.c.b16 %v4566, %v4558
    %v7103 = vpack.c.b16 %v4567, %v4559
    %v7104 = vpack.c.b16 %v4568, %v4560
    %v7105 = vpack.c.b16 %v4569, %v4561
    %v7106 = vpack.c.b16 %v4570, %v4562
    %v7107 = vpack.c.b16 %v4579, %v4571
    %v7108 = vpack.c.b16 %v4580, %v4572
    %v7109 = vpack.c.b16 %v4581, %v4573
    %v7110 = vpack.c.b16 %v4582, %v4574
    %v7111 = vpack.c.b16 %v4583, %v4575
    %v7112 = vpack.c.b16 %v4584, %v4576
    %v7113 = vpack.c.b16 %v4585, %v4577
    %v7114 = vpack.c.b16 %v4586, %v4578
    %v7115 = vpack.c.b16 %v4595, %v4587
    %v7116 = vpack.c.b16 %v4596, %v4588
    %v7117 = vpack.c.b16 %v4597, %v4589
    %v7118 = vpack.c.b16 %v4598, %v4590
    %v7119 = vpack.c.b16 %v4599, %v4591
    %v7120 = vpack.c.b16 %v4600, %v4592
    %v7121 = vpack.c.b16 %v4601, %v4593
    %v7122 = vpack.c.b16 %v4602, %v4594
    %v7123 = vpack.c.b16 %v4611, %v4603
    %v7124 = vpack.c.b16 %v4612, %v4604
    %v7125 = vpack.c.b16 %v4613, %v4605
    %v7126 = vpack.c.b16 %v4614, %v4606
    %v7127 = vpack.c.b16 %v4615, %v4607
    %v7128 = vpack.c.b16 %v4616, %v4608
    %v7129 = vpack.c.b16 %v4617, %v4609
    %v7130 = vpack.c.b16 %v4618, %v4610
    %v7131 = vpack.c.b16 %v4627, %v4619
    %v7132 = vpack.c.b16 %v4628, %v4620
    %v7133 = vpack.c.b16 %v4629, %v4621
    %v7134 = vpack.c.b16 %v4630, %v4622
    %v7135 = vpack.c.b16 %v4631, %v4623
    %v7136 = vpack.c.b16 %v4632, %v4624
    %v7137 = vpack.c.b16 %v4633, %v4625
    %v7138 = vpack.c.b16 %v4634, %v4626
    %v7139 = vpack.c.b16 %v4643, %v4635
    %v7140 = vpack.c.b16 %v4644, %v4636
    %v7141 = vpack.c.b16 %v4645, %v4637
    %v7142 = vpack.c.b16 %v4646, %v4638
    %v7143 = vpack.c.b16 %v4647, %v4639
    %v7144 = vpack.c.b16 %v4648, %v4640
    %v7145 = vpack.c.b16 %v4649, %v4641
    %v7146 = vpack.c.b16 %v4650, %v4642
    %v7147 = vpack.c.b16 %v4659, %v4651
    %v7148 = vpack.c.b16 %v4660, %v4652
    %v7149 = vpack.c.b16 %v4661, %v4653
    %v7150 = vpack.c.b16 %v4662, %v4654
    %v7151 = vpack.c.b16 %v4663, %v4655
    %v7152 = vpack.c.b16 %v4664, %v4656
    %v7153 = vpack.c.b16 %v4665, %v4657
    %v7154 = vpack.c.b16 %v4666, %v4658
    %v7155 = vpack.c.b16 %v4675, %v4667
    %v7156 = vpack.c.b16 %v4676, %v4668
    %v7157 = vpack.c.b16 %v4677, %v4669
    %v7158 = vpack.c.b16 %v4678, %v4670
    %v7159 = vpack.c.b16 %v4679, %v4671
    %v7160 = vpack.c.b16 %v4680, %v4672
    %v7161 = vpack.c.b16 %v4681, %v4673
    %v7162 = vpack.c.b16 %v4682, %v4674
    %v7163 = vpack.c.b16 %v4691, %v4683
    %v7164 = vpack.c.b16 %v4692, %v4684
    %v7165 = vpack.c.b16 %v4693, %v4685
    %v7166 = vpack.c.b16 %v4694, %v4686
    %v7167 = vpack.c.b16 %v4695, %v4687
    %v7168 = vpack.c.b16 %v4696, %v4688
    %v7169 = vpack.c.b16 %v4697, %v4689
    %v7170 = vpack.c.b16 %v4698, %v4690
    %v7171 = vpack.c.b16 %v4707, %v4699
    %v7172 = vpack.c.b16 %v4708, %v4700
    %v7173 = vpack.c.b16 %v4709, %v4701
    %v7174 = vpack.c.b16 %v4710, %v4702
    %v7175 = vpack.c.b16 %v4711, %v4703
    %v7176 = vpack.c.b16 %v4712, %v4704
    %v7177 = vpack.c.b16 %v4713, %v4705
    %v7178 = vpack.c.b16 %v4714, %v4706
    %v7179 = vpack.c.b16 %v4723, %v4715
    %v7180 = vpack.c.b16 %v4724, %v4716
    %v7181 = vpack.c.b16 %v4725, %v4717
    %v7182 = vpack.c.b16 %v4726, %v4718
    %v7183 = vpack.c.b16 %v4727, %v4719
    %v7184 = vpack.c.b16 %v4728, %v4720
    %v7185 = vpack.c.b16 %v4729, %v4721
    %v7186 = vpack.c.b16 %v4730, %v4722
    %v7187 = vpack.c.b16 %v4739, %v4731
    %v7188 = vpack.c.b16 %v4740, %v4732
    %v7189 = vpack.c.b16 %v4741, %v4733
    %v7190 = vpack.c.b16 %v4742, %v4734
    %v7191 = vpack.c.b16 %v4743, %v4735
    %v7192 = vpack.c.b16 %v4744, %v4736
    %v7193 = vpack.c.b16 %v4745, %v4737
    %v7194 = vpack.c.b16 %v4746, %v4738
    %v7195 = vpack.c.b16 %v4755, %v4747
    %v7196 = vpack.c.b16 %v4756, %v4748
    %v7197 = vpack.c.b16 %v4757, %v4749
    %v7198 = vpack.c.b16 %v4758, %v4750
    %v7199 = vpack.c.b16 %v4759, %v4751
    %v7200 = vpack.c.b16 %v4760, %v4752
    %v7201 = vpack.c.b16 %v4761, %v4753
    %v7202 = vpack.c.b16 %v4762, %v4754
    %v7203 = vpack.c.b16 %v4771, %v4763
    %v7204 = vpack.c.b16 %v4772, %v4764
    %v7205 = vpack.c.b16 %v4773, %v4765
    %v7206 = vpack.c.b16 %v4774, %v4766
    %v7207 = vpack.c.b16 %v4775, %v4767
    %v7208 = vpack.c.b16 %v4776, %v4768
    %v7209 = vpack.c.b16 %v4777, %v4769
    %v7210 = vpack.c.b16 %v4778, %v4770
    %v7211 = vpack.c.b16 %v4787, %v4779
    %v7212 = vpack.c.b16 %v4788, %v4780
    %v7213 = vpack.c.b16 %v4789, %v4781
    %v7214 = vpack.c.b16 %v4790, %v4782
    %v7215 = vpack.c.b16 %v4791, %v4783
    %v7216 = vpack.c.b16 %v4792, %v4784
    %v7217 = vpack.c.b16 %v4793, %v4785
    %v7218 = vpack.c.b16 %v4794, %v4786
    %v7219 = vpack.c.b16 %v4803, %v4795
    %v7220 = vpack.c.b16 %v4804, %v4796
    %v7221 = vpack.c.b16 %v4805, %v4797
    %v7222 = vpack.c.b16 %v4806, %v4798
    %v7223 = vpack.c.b16 %v4807, %v4799
    %v7224 = vpack.c.b16 %v4808, %v4800
    %v7225 = vpack.c.b16 %v4809, %v4801
    %v7226 = vpack.c.b16 %v4810, %v4802
    %v7227 = vpack.c.b16 %v4819, %v4811
    %v7228 = vpack.c.b16 %v4820, %v4812
    %v7229 = vpack.c.b16 %v4821, %v4813
    %v7230 = vpack.c.b16 %v4822, %v4814
    %v7231 = vpack.c.b16 %v4823, %v4815
    %v7232 = vpack.c.b16 %v4824, %v4816
    %v7233 = vpack.c.b16 %v4825, %v4817
    %v7234 = vpack.c.b16 %v4826, %v4818
    %v7235 = vpack.c.b16 %v4835, %v4827
    %v7236 = vpack.c.b16 %v4836, %v4828
    %v7237 = vpack.c.b16 %v4837, %v4829
    %v7238 = vpack.c.b16 %v4838, %v4830
    %v7239 = vpack.c.b16 %v4839, %v4831
    %v7240 = vpack.c.b16 %v4840, %v4832
    %v7241 = vpack.c.b16 %v4841, %v4833
    %v7242 = vpack.c.b16 %v4842, %v4834
    %v7243 = vpack.c.b16 %v4851, %v4843
    %v7244 = vpack.c.b16 %v4852, %v4844
    %v7245 = vpack.c.b16 %v4853, %v4845
    %v7246 = vpack.c.b16 %v4854, %v4846
    %v7247 = vpack.c.b16 %v4855, %v4847
    %v7248 = vpack.c.b16 %v4856, %v4848
    %v7249 = vpack.c.b16 %v4857, %v4849
    %v7250 = vpack.c.b16 %v4858, %v4850
    %v7251 = vpack.c.b16 %v4867, %v4859
    %v7252 = vpack.c.b16 %v4868, %v4860
    %v7253 = vpack.c.b16 %v4869, %v4861
    %v7254 = vpack.c.b16 %v4870, %v4862
    %v7255 = vpack.c.b16 %v4871, %v4863
    %v7256 = vpack.c.b16 %v4872, %v4864
    %v7257 = vpack.c.b16 %v4873, %v4865
    %v7258 = vpack.c.b16 %v4874, %v4866
    %v7259 = vpack.c.b16 %v4883, %v4875
    %v7260 = vpack.c.b16 %v4884, %v4876
    %v7261 = vpack.c.b16 %v4885, %v4877
    %v7262 = vpack.c.b16 %v4886, %v4878
    %v7263 = vpack.c.b16 %v4887, %v4879
    %v7264 = vpack.c.b16 %v4888, %v4880
    %v7265 = vpack.c.b16 %v4889, %v4881
    %v7266 = vpack.c.b16 %v4890, %v4882
    %v7267 = vpack.c.b16 %v4899, %v4891
    %v7268 = vpack.c.b16 %v4900, %v4892
    %v7269 = vpack.c.b16 %v4901, %v4893
    %v7270 = vpack.c.b16 %v4902, %v4894
    %v7271 = vpack.c.b16 %v4903, %v4895
    %v7272 = vpack.c.b16 %v4904, %v4896
    %v7273 = vpack.c.b16 %v4905, %v4897
    %v7274 = vpack.c.b16 %v4906, %v4898
    %v7275 = vpack.c.b16 %v4915, %v4907
    %v7276 = vpack.c.b16 %v4916, %v4908
    %v7277 = vpack.c.b16 %v4917, %v4909
    %v7278 = vpack.c.b16 %v4918, %v4910
    %v7279 = vpack.c.b16 %v4919, %v4911
    %v7280 = vpack.c.b16 %v4920, %v4912
    %v7281 = vpack.c.b16 %v4921, %v4913
    %v7282 = vpack.c.b16 %v4922, %v4914
    %v7283 = vpack.c.b16 %v4931, %v4923
    %v7284 = vpack.c.b16 %v4932, %v4924
    %v7285 = vpack.c.b16 %v4933, %v4925
    %v7286 = vpack.c.b16 %v4934, %v4926
    %v7287 = vpack.c.b16 %v4935, %v4927
    %v7288 = vpack.c.b16 %v4936, %v4928
    %v7289 = vpack.c.b16 %v4937, %v4929
    %v7290 = vpack.c.b16 %v4938, %v4930
    %v7291 = vpack.c.b16 %v4947, %v4939
    %v7292 = vpack.c.b16 %v4948, %v4940
    %v7293 = vpack.c.b16 %v4949, %v4941
    %v7294 = vpack.c.b16 %v4950, %v4942
    %v7295 = vpack.c.b16 %v4951, %v4943
    %v7296 = vpack.c.b16 %v4952, %v4944
    %v7297 = vpack.c.b16 %v4953, %v4945
    %v7298 = vpack.c.b16 %v4954, %v4946
    %v7299 = vpack.c.b16 %v4963, %v4955
    %v7300 = vpack.c.b16 %v4964, %v4956
    %v7301 = vpack.c.b16 %v4965, %v4957
    %v7302 = vpack.c.b16 %v4966, %v4958
    %v7303 = vpack.c.b16 %v4967, %v4959
    %v7304 = vpack.c.b16 %v4968, %v4960
    %v7305 = vpack.c.b16 %v4969, %v4961
    %v7306 = vpack.c.b16 %v4970, %v4962
    %v7307 = vpack.c.b16 %v4979, %v4971
    %v7308 = vpack.c.b16 %v4980, %v4972
    %v7309 = vpack.c.b16 %v4981, %v4973
    %v7310 = vpack.c.b16 %v4982, %v4974
    %v7311 = vpack.c.b16 %v4983, %v4975
    %v7312 = vpack.c.b16 %v4984, %v4976
    %v7313 = vpack.c.b16 %v4985, %v4977
    %v7314 = vpack.c.b16 %v4986, %v4978
    %v7315 = vpack.c.b16 %v4995, %v4987
    %v7316 = vpack.c.b16 %v4996, %v4988
    %v7317 = vpack.c.b16 %v4997, %v4989
    %v7318 = vpack.c.b16 %v4998, %v4990
    %v7319 = vpack.c.b16 %v4999, %v4991
    %v7320 = vpack.c.b16 %v5000, %v4992
    %v7321 = vpack.c.b16 %v5001, %v4993
    %v7322 = vpack.c.b16 %v5002, %v4994
    %v7323 = vpack.c.b16 %v5011, %v5003
    %v7324 = vpack.c.b16 %v5012, %v5004
    %v7325 = vpack.c.b16 %v5013, %v5005
    %v7326 = vpack.c.b16 %v5014, %v5006
    %v7327 = vpack.c.b16 %v5015, %v5007
    %v7328 = vpack.c.b16 %v5016, %v5008
    %v7329 = vpack.c.b16 %v5017, %v5009
    %v7330 = vpack.c.b16 %v5018, %v5010
    %v7331 = vpack.c.b16 %v5027, %v5019
    %v7332 = vpack.c.b16 %v5028, %v5020
    %v7333 = vpack.c.b16 %v5029, %v5021
    %v7334 = vpack.c.b16 %v5030, %v5022
    %v7335 = vpack.c.b16 %v5031, %v5023
    %v7336 = vpack.c.b16 %v5032, %v5024
    %v7337 = vpack.c.b16 %v5033, %v5025
    %v7338 = vpack.c.b16 %v5034, %v5026
    %v7339 = vpack.c.b16 %v5043, %v5035
    %v7340 = vpack.c.b16 %v5044, %v5036
    %v7341 = vpack.c.b16 %v5045, %v5037
    %v7342 = vpack.c.b16 %v5046, %v5038
    %v7343 = vpack.c.b16 %v5047, %v5039
    %v7344 = vpack.c.b16 %v5048, %v5040
    %v7345 = vpack.c.b16 %v5049, %v5041
    %v7346 = vpack.c.b16 %v5050, %v5042
    %v7347 = vpack.c.b16 %v5059, %v5051
    %v7348 = vpack.c.b16 %v5060, %v5052
    %v7349 = vpack.c.b16 %v5061, %v5053
    %v7350 = vpack.c.b16 %v5062, %v5054
    %v7351 = vpack.c.b16 %v5063, %v5055
    %v7352 = vpack.c.b16 %v5064, %v5056
    %v7353 = vpack.c.b16 %v5065, %v5057
    %v7354 = vpack.c.b16 %v5066, %v5058
    %v7355 = vpack.c.b16 %v5075, %v5067
    %v7356 = vpack.c.b16 %v5076, %v5068
    %v7357 = vpack.c.b16 %v5077, %v5069
    %v7358 = vpack.c.b16 %v5078, %v5070
    %v7359 = vpack.c.b16 %v5079, %v5071
    %v7360 = vpack.c.b16 %v5080, %v5072
    %v7361 = vpack.c.b16 %v5081, %v5073
    %v7362 = vpack.c.b16 %v5082, %v5074
    %v7363 = vpack.c.b16 %v5091, %v5083
    %v7364 = vpack.c.b16 %v5092, %v5084
    %v7365 = vpack.c.b16 %v5093, %v5085
    %v7366 = vpack.c.b16 %v5094, %v5086
    %v7367 = vpack.c.b16 %v5095, %v5087
    %v7368 = vpack.c.b16 %v5096, %v5088
    %v7369 = vpack.c.b16 %v5097, %v5089
    %v7370 = vpack.c.b16 %v5098, %v5090
    %v7371 = vpack.c.b16 %v5107, %v5099
    %v7372 = vpack.c.b16 %v5108, %v5100
    %v7373 = vpack.c.b16 %v5109, %v5101
    %v7374 = vpack.c.b16 %v5110, %v5102
    %v7375 = vpack.c.b16 %v5111, %v5103
    %v7376 = vpack.c.b16 %v5112, %v5104
    %v7377 = vpack.c.b16 %v5113, %v5105
    %v7378 = vpack.c.b16 %v5114, %v5106
    %v7379 = vpack.c.b16 %v5123, %v5115
    %v7380 = vpack.c.b16 %v5124, %v5116
    %v7381 = vpack.c.b16 %v5125, %v5117
    %v7382 = vpack.c.b16 %v5126, %v5118
    %v7383 = vpack.c.b16 %v5127, %v5119
    %v7384 = vpack.c.b16 %v5128, %v5120
    %v7385 = vpack.c.b16 %v5129, %v5121
    %v7386 = vpack.c.b16 %v5130, %v5122
    %v7387 = vpack.c.b16 %v5139, %v5131
    %v7388 = vpack.c.b16 %v5140, %v5132
    %v7389 = vpack.c.b16 %v5141, %v5133
    %v7390 = vpack.c.b16 %v5142, %v5134
    %v7391 = vpack.c.b16 %v5143, %v5135
    %v7392 = vpack.c.b16 %v5144, %v5136
    %v7393 = vpack.c.b16 %v5145, %v5137
    %v7394 = vpack.c.b16 %v5146, %v5138
    %v7395 = vpack.c.b16 %v5155, %v5147
    %v7396 = vpack.c.b16 %v5156, %v5148
    %v7397 = vpack.c.b16 %v5157, %v5149
    %v7398 = vpack.c.b16 %v5158, %v5150
    %v7399 = vpack.c.b16 %v5159, %v5151
    %v7400 = vpack.c.b16 %v5160, %v5152
    %v7401 = vpack.c.b16 %v5161, %v5153
    %v7402 = vpack.c.b16 %v5162, %v5154
    %v7403 = vpack.c.b16 %v5171, %v5163
    %v7404 = vpack.c.b16 %v5172, %v5164
    %v7405 = vpack.c.b16 %v5173, %v5165
    %v7406 = vpack.c.b16 %v5174, %v5166
    %v7407 = vpack.c.b16 %v5175, %v5167
    %v7408 = vpack.c.b16 %v5176, %v5168
    %v7409 = vpack.c.b16 %v5177, %v5169
    %v7410 = vpack.c.b16 %v5178, %v5170
    %v7411 = vpack.c.b16 %v5187, %v5179
    %v7412 = vpack.c.b16 %v5188, %v5180
    %v7413 = vpack.c.b16 %v5189, %v5181
    %v7414 = vpack.c.b16 %v5190, %v5182
    %v7415 = vpack.c.b16 %v5191, %v5183
    %v7416 = vpack.c.b16 %v5192, %v5184
    %v7417 = vpack.c.b16 %v5193, %v5185
    %v7418 = vpack.c.b16 %v5194, %v5186
    %v7419 = vpack.c.b16 %v5203, %v5195
    %v7420 = vpack.c.b16 %v5204, %v5196
    %v7421 = vpack.c.b16 %v5205, %v5197
    %v7422 = vpack.c.b16 %v5206, %v5198
    %v7423 = vpack.c.b16 %v5207, %v5199
    %v7424 = vpack.c.b16 %v5208, %v5200
    %v7425 = vpack.c.b16 %v5209, %v5201
    %v7426 = vpack.c.b16 %v5210, %v5202
    %v7427 = vpack.c.b16 %v5219, %v5211
    %v7428 = vpack.c.b16 %v5220, %v5212
    %v7429 = vpack.c.b16 %v5221, %v5213
    %v7430 = vpack.c.b16 %v5222, %v5214
    %v7431 = vpack.c.b16 %v5223, %v5215
    %v7432 = vpack.c.b16 %v5224, %v5216
    %v7433 = vpack.c.b16 %v5225, %v5217
    %v7434 = vpack.c.b16 %v5226, %v5218
    %v7435 = vpack.c.b16 %v5235, %v5227
    %v7436 = vpack.c.b16 %v5236, %v5228
    %v7437 = vpack.c.b16 %v5237, %v5229
    %v7438 = vpack.c.b16 %v5238, %v5230
    %v7439 = vpack.c.b16 %v5239, %v5231
    %v7440 = vpack.c.b16 %v5240, %v5232
    %v7441 = vpack.c.b16 %v5241, %v5233
    %v7442 = vpack.c.b16 %v5242, %v5234
    %v7443 = vpack.c.b16 %v5251, %v5243
    %v7444 = vpack.c.b16 %v5252, %v5244
    %v7445 = vpack.c.b16 %v5253, %v5245
    %v7446 = vpack.c.b16 %v5254, %v5246
    %v7447 = vpack.c.b16 %v5255, %v5247
    %v7448 = vpack.c.b16 %v5256, %v5248
    %v7449 = vpack.c.b16 %v5257, %v5249
    %v7450 = vpack.c.b16 %v5258, %v5250
    %v7451 = vpack.c.b16 %v5267, %v5259
    %v7452 = vpack.c.b16 %v5268, %v5260
    %v7453 = vpack.c.b16 %v5269, %v5261
    %v7454 = vpack.c.b16 %v5270, %v5262
    %v7455 = vpack.c.b16 %v5271, %v5263
    %v7456 = vpack.c.b16 %v5272, %v5264
    %v7457 = vpack.c.b16 %v5273, %v5265
    %v7458 = vpack.c.b16 %v5274, %v5266
    %v7459 = vpack.c.b16 %v5283, %v5275
    %v7460 = vpack.c.b16 %v5284, %v5276
    %v7461 = vpack.c.b16 %v5285, %v5277
    %v7462 = vpack.c.b16 %v5286, %v5278
    %v7463 = vpack.c.b16 %v5287, %v5279
    %v7464 = vpack.c.b16 %v5288, %v5280
    %v7465 = vpack.c.b16 %v5289, %v5281
    %v7466 = vpack.c.b16 %v5290, %v5282
    %v7467 = vpack.c.b16 %v5299, %v5291
    %v7468 = vpack.c.b16 %v5300, %v5292
    %v7469 = vpack.c.b16 %v5301, %v5293
    %v7470 = vpack.c.b16 %v5302, %v5294
    %v7471 = vpack.c.b16 %v5303, %v5295
    %v7472 = vpack.c.b16 %v5304, %v5296
    %v7473 = vpack.c.b16 %v5305, %v5297
    %v7474 = vpack.c.b16 %v5306, %v5298
    %v7475 = vpack.c.b16 %v5315, %v5307
    %v7476 = vpack.c.b16 %v5316, %v5308
    %v7477 = vpack.c.b16 %v5317, %v5309
    %v7478 = vpack.c.b16 %v5318, %v5310
    %v7479 = vpack.c.b16 %v5319, %v5311
    %v7480 = vpack.c.b16 %v5320, %v5312
    %v7481 = vpack.c.b16 %v5321, %v5313
    %v7482 = vpack.c.b16 %v5322, %v5314
    %v7483 = vpack.c.b16 %v5331, %v5323
    %v7484 = vpack.c.b16 %v5332, %v5324
    %v7485 = vpack.c.b16 %v5333, %v5325
    %v7486 = vpack.c.b16 %v5334, %v5326
    %v7487 = vpack.c.b16 %v5335, %v5327
    %v7488 = vpack.c.b16 %v5336, %v5328
    %v7489 = vpack.c.b16 %v5337, %v5329
    %v7490 = vpack.c.b16 %v5338, %v5330
    %v7491 = vpack.c.b16 %v5347, %v5339
    %v7492 = vpack.c.b16 %v5348, %v5340
    %v7493 = vpack.c.b16 %v5349, %v5341
    %v7494 = vpack.c.b16 %v5350, %v5342
    %v7495 = vpack.c.b16 %v5351, %v5343
    %v7496 = vpack.c.b16 %v5352, %v5344
    %v7497 = vpack.c.b16 %v5353, %v5345
    %v7498 = vpack.c.b16 %v5354, %v5346
    %v7499 = vpack.c.b16 %v5363, %v5355
    %v7500 = vpack.c.b16 %v5364, %v5356
    %v7501 = vpack.c.b16 %v5365, %v5357
    %v7502 = vpack.c.b16 %v5366, %v5358
    %v7503 = vpack.c.b16 %v5367, %v5359
    %v7504 = vpack.c.b16 %v5368, %v5360
    %v7505 = vpack.c.b16 %v5369, %v5361
    %v7506 = vpack.c.b16 %v5370, %v5362
    %v7507 = vpack.c.b16 %v5379, %v5371
    %v7508 = vpack.c.b16 %v5380, %v5372
    %v7509 = vpack.c.b16 %v5381, %v5373
    %v7510 = vpack.c.b16 %v5382, %v5374
    %v7511 = vpack.c.b16 %v5383, %v5375
    %v7512 = vpack.c.b16 %v5384, %v5376
    %v7513 = vpack.c.b16 %v5385, %v5377
    %v7514 = vpack.c.b16 %v5386, %v5378
    %v7515 = vpack.c.b16 %v5395, %v5387
    %v7516 = vpack.c.b16 %v5396, %v5388
    %v7517 = vpack.c.b16 %v5397, %v5389
    %v7518 = vpack.c.b16 %v5398, %v5390
    %v7519 = vpack.c.b16 %v5399, %v5391
    %v7520 = vpack.c.b16 %v5400, %v5392
    %v7521 = vpack.c.b16 %v5401, %v5393
    %v7522 = vpack.c.b16 %v5402, %v5394
    %v7523 = vpack.c.b16 %v5411, %v5403
    %v7524 = vpack.c.b16 %v5412, %v5404
    %v7525 = vpack.c.b16 %v5413, %v5405
    %v7526 = vpack.c.b16 %v5414, %v5406
    %v7527 = vpack.c.b16 %v5415, %v5407
    %v7528 = vpack.c.b16 %v5416, %v5408
    %v7529 = vpack.c.b16 %v5417, %v5409
    %v7530 = vpack.c.b16 %v5418, %v5410
    %v7531 = vpack.c.b16 %v5427, %v5419
    %v7532 = vpack.c.b16 %v5428, %v5420
    %v7533 = vpack.c.b16 %v5429, %v5421
    %v7534 = vpack.c.b16 %v5430, %v5422
    %v7535 = vpack.c.b16 %v5431, %v5423
    %v7536 = vpack.c.b16 %v5432, %v5424
    %v7537 = vpack.c.b16 %v5433, %v5425
    %v7538 = vpack.c.b16 %v5434, %v5426
    %v7539 = vpack.c.b16 %v5443, %v5435
    %v7540 = vpack.c.b16 %v5444, %v5436
    %v7541 = vpack.c.b16 %v5445, %v5437
    %v7542 = vpack.c.b16 %v5446, %v5438
    %v7543 = vpack.c.b16 %v5447, %v5439
    %v7544 = vpack.c.b16 %v5448, %v5440
    %v7545 = vpack.c.b16 %v5449, %v5441
    %v7546 = vpack.c.b16 %v5450, %v5442
    %v7547 = vpack.c.b16 %v5459, %v5451
    %v7548 = vpack.c.b16 %v5460, %v5452
    %v7549 = vpack.c.b16 %v5461, %v5453
    %v7550 = vpack.c.b16 %v5462, %v5454
    %v7551 = vpack.c.b16 %v5463, %v5455
    %v7552 = vpack.c.b16 %v5464, %v5456
    %v7553 = vpack.c.b16 %v5465, %v5457
    %v7554 = vpack.c.b16 %v5466, %v5458
    %v7555 = vpack.c.b16 %v5475, %v5467
    %v7556 = vpack.c.b16 %v5476, %v5468
    %v7557 = vpack.c.b16 %v5477, %v5469
    %v7558 = vpack.c.b16 %v5478, %v5470
    %v7559 = vpack.c.b16 %v5479, %v5471
    %v7560 = vpack.c.b16 %v5480, %v5472
    %v7561 = vpack.c.b16 %v5481, %v5473
    %v7562 = vpack.c.b16 %v5482, %v5474
    %v7563 = vpack.c.b16 %v5491, %v5483
    %v7564 = vpack.c.b16 %v5492, %v5484
    %v7565 = vpack.c.b16 %v5493, %v5485
    %v7566 = vpack.c.b16 %v5494, %v5486
    %v7567 = vpack.c.b16 %v5495, %v5487
    %v7568 = vpack.c.b16 %v5496, %v5488
    %v7569 = vpack.c.b16 %v5497, %v5489
    %v7570 = vpack.c.b16 %v5498, %v5490
    %v7571 = vpack.c.b16 %v5507, %v5499
    %v7572 = vpack.c.b16 %v5508, %v5500
    %v7573 = vpack.c.b16 %v5509, %v5501
    %v7574 = vpack.c.b16 %v5510, %v5502
    %v7575 = vpack.c.b16 %v5511, %v5503
    %v7576 = vpack.c.b16 %v5512, %v5504
    %v7577 = vpack.c.b16 %v5513, %v5505
    %v7578 = vpack.c.b16 %v5514, %v5506
    %v7579 = vpack.c.b16 %v5523, %v5515
    %v7580 = vpack.c.b16 %v5524, %v5516
    %v7581 = vpack.c.b16 %v5525, %v5517
    %v7582 = vpack.c.b16 %v5526, %v5518
    %v7583 = vpack.c.b16 %v5527, %v5519
    %v7584 = vpack.c.b16 %v5528, %v5520
    %v7585 = vpack.c.b16 %v5529, %v5521
    %v7586 = vpack.c.b16 %v5530, %v5522
    %v7587 = vpack.c.b16 %v5539, %v5531
    %v7588 = vpack.c.b16 %v5540, %v5532
    %v7589 = vpack.c.b16 %v5541, %v5533
    %v7590 = vpack.c.b16 %v5542, %v5534
    %v7591 = vpack.c.b16 %v5543, %v5535
    %v7592 = vpack.c.b16 %v5544, %v5536
    %v7593 = vpack.c.b16 %v5545, %v5537
    %v7594 = vpack.c.b16 %v5546, %v5538
    %v7595 = vpack.c.b16 %v5555, %v5547
    %v7596 = vpack.c.b16 %v5556, %v5548
    %v7597 = vpack.c.b16 %v5557, %v5549
    %v7598 = vpack.c.b16 %v5558, %v5550
    %v7599 = vpack.c.b16 %v5559, %v5551
    %v7600 = vpack.c.b16 %v5560, %v5552
    %v7601 = vpack.c.b16 %v5561, %v5553
    %v7602 = vpack.c.b16 %v5562, %v5554
    %v7603 = vpack.c.b16 %v5571, %v5563
    %v7604 = vpack.c.b16 %v5572, %v5564
    %v7605 = vpack.c.b16 %v5573, %v5565
    %v7606 = vpack.c.b16 %v5574, %v5566
    %v7607 = vpack.c.b16 %v5575, %v5567
    %v7608 = vpack.c.b16 %v5576, %v5568
    %v7609 = vpack.c.b16 %v5577, %v5569
    %v7610 = vpack.c.b16 %v5578, %v5570
    %v7611 = vpack.c.b16 %v5587, %v5579
    %v7612 = vpack.c.b16 %v5588, %v5580
    %v7613 = vpack.c.b16 %v5589, %v5581
    %v7614 = vpack.c.b16 %v5590, %v5582
    %v7615 = vpack.c.b16 %v5591, %v5583
    %v7616 = vpack.c.b16 %v5592, %v5584
    %v7617 = vpack.c.b16 %v5593, %v5585
    %v7618 = vpack.c.b16 %v5594, %v5586
    %v7619 = vpack.c.b16 %v5603, %v5595
    %v7620 = vpack.c.b16 %v5604, %v5596
    %v7621 = vpack.c.b16 %v5605, %v5597
    %v7622 = vpack.c.b16 %v5606, %v5598
    %v7623 = vpack.c.b16 %v5607, %v5599
    %v7624 = vpack.c.b16 %v5608, %v5600
    %v7625 = vpack.c.b16 %v5609, %v5601
    %v7626 = vpack.c.b16 %v5610, %v5602
    %v7627 = vpack.c.b16 %v5619, %v5611
    %v7628 = vpack.c.b16 %v5620, %v5612
    %v7629 = vpack.c.b16 %v5621, %v5613
    %v7630 = vpack.c.b16 %v5622, %v5614
    %v7631 = vpack.c.b16 %v5623, %v5615
    %v7632 = vpack.c.b16 %v5624, %v5616
    %v7633 = vpack.c.b16 %v5625, %v5617
    %v7634 = vpack.c.b16 %v5626, %v5618
    %v7635 = vpack.c.b16 %v5635, %v5627
    %v7636 = vpack.c.b16 %v5636, %v5628
    %v7637 = vpack.c.b16 %v5637, %v5629
    %v7638 = vpack.c.b16 %v5638, %v5630
    %v7639 = vpack.c.b16 %v5639, %v5631
    %v7640 = vpack.c.b16 %v5640, %v5632
    %v7641 = vpack.c.b16 %v5641, %v5633
    %v7642 = vpack.c.b16 %v5642, %v5634
    %v7643 = vpack.c.b16 %v5651, %v5643
    %v7644 = vpack.c.b16 %v5652, %v5644
    %v7645 = vpack.c.b16 %v5653, %v5645
    %v7646 = vpack.c.b16 %v5654, %v5646
    %v7647 = vpack.c.b16 %v5655, %v5647
    %v7648 = vpack.c.b16 %v5656, %v5648
    %v7649 = vpack.c.b16 %v5657, %v5649
    %v7650 = vpack.c.b16 %v5658, %v5650
    %v7651 = vpack.c.b16 %v5667, %v5659
    %v7652 = vpack.c.b16 %v5668, %v5660
    %v7653 = vpack.c.b16 %v5669, %v5661
    %v7654 = vpack.c.b16 %v5670, %v5662
    %v7655 = vpack.c.b16 %v5671, %v5663
    %v7656 = vpack.c.b16 %v5672, %v5664
    %v7657 = vpack.c.b16 %v5673, %v5665
    %v7658 = vpack.c.b16 %v5674, %v5666
    %v7659 = vpack.c.b16 %v5683, %v5675
    %v7660 = vpack.c.b16 %v5684, %v5676
    %v7661 = vpack.c.b16 %v5685, %v5677
    %v7662 = vpack.c.b16 %v5686, %v5678
    %v7663 = vpack.c.b16 %v5687, %v5679
    %v7664 = vpack.c.b16 %v5688, %v5680
    %v7665 = vpack.c.b16 %v5689, %v5681
    %v7666 = vpack.c.b16 %v5690, %v5682
    %v7667 = vpack.c.b16 %v5699, %v5691
    %v7668 = vpack.c.b16 %v5700, %v5692
    %v7669 = vpack.c.b16 %v5701, %v5693
    %v7670 = vpack.c.b16 %v5702, %v5694
    %v7671 = vpack.c.b16 %v5703, %v5695
    %v7672 = vpack.c.b16 %v5704, %v5696
    %v7673 = vpack.c.b16 %v5705, %v5697
    %v7674 = vpack.c.b16 %v5706, %v5698
    %v7675 = vpack.c.b16 %v5715, %v5707
    %v7676 = vpack.c.b16 %v5716, %v5708
    %v7677 = vpack.c.b16 %v5717, %v5709
    %v7678 = vpack.c.b16 %v5718, %v5710
    %v7679 = vpack.c.b16 %v5719, %v5711
    %v7680 = vpack.c.b16 %v5720, %v5712
    %v7681 = vpack.c.b16 %v5721, %v5713
    %v7682 = vpack.c.b16 %v5722, %v5714
    %v7683 = vpack.c.b16 %v5731, %v5723
    %v7684 = vpack.c.b16 %v5732, %v5724
    %v7685 = vpack.c.b16 %v5733, %v5725
    %v7686 = vpack.c.b16 %v5734, %v5726
    %v7687 = vpack.c.b16 %v5735, %v5727
    %v7688 = vpack.c.b16 %v5736, %v5728
    %v7689 = vpack.c.b16 %v5737, %v5729
    %v7690 = vpack.c.b16 %v5738, %v5730
    %v7691 = vpack.c.b16 %v5747, %v5739
    %v7692 = vpack.c.b16 %v5748, %v5740
    %v7693 = vpack.c.b16 %v5749, %v5741
    %v7694 = vpack.c.b16 %v5750, %v5742
    %v7695 = vpack.c.b16 %v5751, %v5743
    %v7696 = vpack.c.b16 %v5752, %v5744
    %v7697 = vpack.c.b16 %v5753, %v5745
    %v7698 = vpack.c.b16 %v5754, %v5746
    %v7699 = vpack.c.b16 %v5763, %v5755
    %v7700 = vpack.c.b16 %v5764, %v5756
    %v7701 = vpack.c.b16 %v5765, %v5757
    %v7702 = vpack.c.b16 %v5766, %v5758
    %v7703 = vpack.c.b16 %v5767, %v5759
    %v7704 = vpack.c.b16 %v5768, %v5760
    %v7705 = vpack.c.b16 %v5769, %v5761
    %v7706 = vpack.c.b16 %v5770, %v5762
    %v7707 = vpack.c.b16 %v5779, %v5771
    %v7708 = vpack.c.b16 %v5780, %v5772
    %v7709 = vpack.c.b16 %v5781, %v5773
    %v7710 = vpack.c.b16 %v5782, %v5774
    %v7711 = vpack.c.b16 %v5783, %v5775
    %v7712 = vpack.c.b16 %v5784, %v5776
    %v7713 = vpack.c.b16 %v5785, %v5777
    %v7714 = vpack.c.b16 %v5786, %v5778
    %v7715 = vpack.c.b16 %v5795, %v5787
    %v7716 = vpack.c.b16 %v5796, %v5788
    %v7717 = vpack.c.b16 %v5797, %v5789
    %v7718 = vpack.c.b16 %v5798, %v5790
    %v7719 = vpack.c.b16 %v5799, %v5791
    %v7720 = vpack.c.b16 %v5800, %v5792
    %v7721 = vpack.c.b16 %v5801, %v5793
    %v7722 = vpack.c.b16 %v5802, %v5794
    %v7723 = vpack.c.b16 %v5811, %v5803
    %v7724 = vpack.c.b16 %v5812, %v5804
    %v7725 = vpack.c.b16 %v5813, %v5805
    %v7726 = vpack.c.b16 %v5814, %v5806
    %v7727 = vpack.c.b16 %v5815, %v5807
    %v7728 = vpack.c.b16 %v5816, %v5808
    %v7729 = vpack.c.b16 %v5817, %v5809
    %v7730 = vpack.c.b16 %v5818, %v5810
    %v7731 = vpack.c.b16 %v5827, %v5819
    %v7732 = vpack.c.b16 %v5828, %v5820
    %v7733 = vpack.c.b16 %v5829, %v5821
    %v7734 = vpack.c.b16 %v5830, %v5822
    %v7735 = vpack.c.b16 %v5831, %v5823
    %v7736 = vpack.c.b16 %v5832, %v5824
    %v7737 = vpack.c.b16 %v5833, %v5825
    %v7738 = vpack.c.b16 %v5834, %v5826
    %v7739 = vpack.c.b16 %v5843, %v5835
    %v7740 = vpack.c.b16 %v5844, %v5836
    %v7741 = vpack.c.b16 %v5845, %v5837
    %v7742 = vpack.c.b16 %v5846, %v5838
    %v7743 = vpack.c.b16 %v5847, %v5839
    %v7744 = vpack.c.b16 %v5848, %v5840
    %v7745 = vpack.c.b16 %v5849, %v5841
    %v7746 = vpack.c.b16 %v5850, %v5842
    %v7747 = vpack.c.b16 %v5859, %v5851
    %v7748 = vpack.c.b16 %v5860, %v5852
    %v7749 = vpack.c.b16 %v5861, %v5853
    %v7750 = vpack.c.b16 %v5862, %v5854
    %v7751 = vpack.c.b16 %v5863, %v5855
    %v7752 = vpack.c.b16 %v5864, %v5856
    %v7753 = vpack.c.b16 %v5865, %v5857
    %v7754 = vpack.c.b16 %v5866, %v5858
    %v7755 = vpack.c.b16 %v5875, %v5867
    %v7756 = vpack.c.b16 %v5876, %v5868
    %v7757 = vpack.c.b16 %v5877, %v5869
    %v7758 = vpack.c.b16 %v5878, %v5870
    %v7759 = vpack.c.b16 %v5879, %v5871
    %v7760 = vpack.c.b16 %v5880, %v5872
    %v7761 = vpack.c.b16 %v5881, %v5873
    %v7762 = vpack.c.b16 %v5882, %v5874
    %v7763 = vpack.c.b16 %v5891, %v5883
    %v7764 = vpack.c.b16 %v5892, %v5884
    %v7765 = vpack.c.b16 %v5893, %v5885
    %v7766 = vpack.c.b16 %v5894, %v5886
    %v7767 = vpack.c.b16 %v5895, %v5887
    %v7768 = vpack.c.b16 %v5896, %v5888
    %v7769 = vpack.c.b16 %v5897, %v5889
    %v7770 = vpack.c.b16 %v5898, %v5890
    %v7771 = vpack.c.b16 %v5907, %v5899
    %v7772 = vpack.c.b16 %v5908, %v5900
    %v7773 = vpack.c.b16 %v5909, %v5901
    %v7774 = vpack.c.b16 %v5910, %v5902
    %v7775 = vpack.c.b16 %v5911, %v5903
    %v7776 = vpack.c.b16 %v5912, %v5904
    %v7777 = vpack.c.b16 %v5913, %v5905
    %v7778 = vpack.c.b16 %v5914, %v5906
    %v7779 = vpack.c.b16 %v5923, %v5915
    %v7780 = vpack.c.b16 %v5924, %v5916
    %v7781 = vpack.c.b16 %v5925, %v5917
    %v7782 = vpack.c.b16 %v5926, %v5918
    %v7783 = vpack.c.b16 %v5927, %v5919
    %v7784 = vpack.c.b16 %v5928, %v5920
    %v7785 = vpack.c.b16 %v5929, %v5921
    %v7786 = vpack.c.b16 %v5930, %v5922
    %v7787 = vpack.c.b16 %v5939, %v5931
    %v7788 = vpack.c.b16 %v5940, %v5932
    %v7789 = vpack.c.b16 %v5941, %v5933
    %v7790 = vpack.c.b16 %v5942, %v5934
    %v7791 = vpack.c.b16 %v5943, %v5935
    %v7792 = vpack.c.b16 %v5944, %v5936
    %v7793 = vpack.c.b16 %v5945, %v5937
    %v7794 = vpack.c.b16 %v5946, %v5938
    %v7795 = vpack.c.b16 %v5955, %v5947
    %v7796 = vpack.c.b16 %v5956, %v5948
    %v7797 = vpack.c.b16 %v5957, %v5949
    %v7798 = vpack.c.b16 %v5958, %v5950
    %v7799 = vpack.c.b16 %v5959, %v5951
    %v7800 = vpack.c.b16 %v5960, %v5952
    %v7801 = vpack.c.b16 %v5961, %v5953
    %v7802 = vpack.c.b16 %v5962, %v5954
    %v7803 = vpack.c.b16 %v5971, %v5963
    %v7804 = vpack.c.b16 %v5972, %v5964
    %v7805 = vpack.c.b16 %v5973, %v5965
    %v7806 = vpack.c.b16 %v5974, %v5966
    %v7807 = vpack.c.b16 %v5975, %v5967
    %v7808 = vpack.c.b16 %v5976, %v5968
    %v7809 = vpack.c.b16 %v5977, %v5969
    %v7810 = vpack.c.b16 %v5978, %v5970
    %v7811 = vpack.c.b16 %v5987, %v5979
    %v7812 = vpack.c.b16 %v5988, %v5980
    %v7813 = vpack.c.b16 %v5989, %v5981
    %v7814 = vpack.c.b16 %v5990, %v5982
    %v7815 = vpack.c.b16 %v5991, %v5983
    %v7816 = vpack.c.b16 %v5992, %v5984
    %v7817 = vpack.c.b16 %v5993, %v5985
    %v7818 = vpack.c.b16 %v5994, %v5986
    %v7819 = vpack.c.b16 %v6003, %v5995
    %v7820 = vpack.c.b16 %v6004, %v5996
    %v7821 = vpack.c.b16 %v6005, %v5997
    %v7822 = vpack.c.b16 %v6006, %v5998
    %v7823 = vpack.c.b16 %v6007, %v5999
    %v7824 = vpack.c.b16 %v6008, %v6000
    %v7825 = vpack.c.b16 %v6009, %v6001
    %v7826 = vpack.c.b16 %v6010, %v6002
    %v7827 = vpack.c.b16 %v6019, %v6011
    %v7828 = vpack.c.b16 %v6020, %v6012
    %v7829 = vpack.c.b16 %v6021, %v6013
    %v7830 = vpack.c.b16 %v6022, %v6014
    %v7831 = vpack.c.b16 %v6023, %v6015
    %v7832 = vpack.c.b16 %v6024, %v6016
    %v7833 = vpack.c.b16 %v6025, %v6017
    %v7834 = vpack.c.b16 %v6026, %v6018
    %v7835 = vpack.c.b16 %v6035, %v6027
    %v7836 = vpack.c.b16 %v6036, %v6028
    %v7837 = vpack.c.b16 %v6037, %v6029
    %v7838 = vpack.c.b16 %v6038, %v6030
    %v7839 = vpack.c.b16 %v6039, %v6031
    %v7840 = vpack.c.b16 %v6040, %v6032
    %v7841 = vpack.c.b16 %v6041, %v6033
    %v7842 = vpack.c.b16 %v6042, %v6034
    %v7843 = vpack.c.b16 %v6051, %v6043
    %v7844 = vpack.c.b16 %v6052, %v6044
    %v7845 = vpack.c.b16 %v6053, %v6045
    %v7846 = vpack.c.b16 %v6054, %v6046
    %v7847 = vpack.c.b16 %v6055, %v6047
    %v7848 = vpack.c.b16 %v6056, %v6048
    %v7849 = vpack.c.b16 %v6057, %v6049
    %v7850 = vpack.c.b16 %v6058, %v6050
    %v7851 = vpack.c.b16 %v6067, %v6059
    %v7852 = vpack.c.b16 %v6068, %v6060
    %v7853 = vpack.c.b16 %v6069, %v6061
    %v7854 = vpack.c.b16 %v6070, %v6062
    %v7855 = vpack.c.b16 %v6071, %v6063
    %v7856 = vpack.c.b16 %v6072, %v6064
    %v7857 = vpack.c.b16 %v6073, %v6065
    %v7858 = vpack.c.b16 %v6074, %v6066
    %v7859 = vpack.c.b16 %v6083, %v6075
    %v7860 = vpack.c.b16 %v6084, %v6076
    %v7861 = vpack.c.b16 %v6085, %v6077
    %v7862 = vpack.c.b16 %v6086, %v6078
    %v7863 = vpack.c.b16 %v6087, %v6079
    %v7864 = vpack.c.b16 %v6088, %v6080
    %v7865 = vpack.c.b16 %v6089, %v6081
    %v7866 = vpack.c.b16 %v6090, %v6082
    %v7867 = vpack.c.b16 %v6099, %v6091
    %v7868 = vpack.c.b16 %v6100, %v6092
    %v7869 = vpack.c.b16 %v6101, %v6093
    %v7870 = vpack.c.b16 %v6102, %v6094
    %v7871 = vpack.c.b16 %v6103, %v6095
    %v7872 = vpack.c.b16 %v6104, %v6096
    %v7873 = vpack.c.b16 %v6105, %v6097
    %v7874 = vpack.c.b16 %v6106, %v6098
    %v7875 = vpack.c.b16 %v6115, %v6107
    %v7876 = vpack.c.b16 %v6116, %v6108
    %v7877 = vpack.c.b16 %v6117, %v6109
    %v7878 = vpack.c.b16 %v6118, %v6110
    %v7879 = vpack.c.b16 %v6119, %v6111
    %v7880 = vpack.c.b16 %v6120, %v6112
    %v7881 = vpack.c.b16 %v6121, %v6113
    %v7882 = vpack.c.b16 %v6122, %v6114
    %v7883 = vpack.c.b16 %v6131, %v6123
    %v7884 = vpack.c.b16 %v6132, %v6124
    %v7885 = vpack.c.b16 %v6133, %v6125
    %v7886 = vpack.c.b16 %v6134, %v6126
    %v7887 = vpack.c.b16 %v6135, %v6127
    %v7888 = vpack.c.b16 %v6136, %v6128
    %v7889 = vpack.c.b16 %v6137, %v6129
    %v7890 = vpack.c.b16 %v6138, %v6130
    %v7891 = vpack.c.b16 %v6147, %v6139
    %v7892 = vpack.c.b16 %v6148, %v6140
    %v7893 = vpack.c.b16 %v6149, %v6141
    %v7894 = vpack.c.b16 %v6150, %v6142
    %v7895 = vpack.c.b16 %v6151, %v6143
    %v7896 = vpack.c.b16 %v6152, %v6144
    %v7897 = vpack.c.b16 %v6153, %v6145
    %v7898 = vpack.c.b16 %v6154, %v6146
    %v7899 = vpack.c.b16 %v6163, %v6155
    %v7900 = vpack.c.b16 %v6164, %v6156
    %v7901 = vpack.c.b16 %v6165, %v6157
    %v7902 = vpack.c.b16 %v6166, %v6158
    %v7903 = vpack.c.b16 %v6167, %v6159
    %v7904 = vpack.c.b16 %v6168, %v6160
    %v7905 = vpack.c.b16 %v6169, %v6161
    %v7906 = vpack.c.b16 %v6170, %v6162
    %v7907 = vpack.c.b16 %v6179, %v6171
    %v7908 = vpack.c.b16 %v6180, %v6172
    %v7909 = vpack.c.b16 %v6181, %v6173
    %v7910 = vpack.c.b16 %v6182, %v6174
    %v7911 = vpack.c.b16 %v6183, %v6175
    %v7912 = vpack.c.b16 %v6184, %v6176
    %v7913 = vpack.c.b16 %v6185, %v6177
    %v7914 = vpack.c.b16 %v6186, %v6178
    %v7915 = vpack.c.b16 %v6195, %v6187
    %v7916 = vpack.c.b16 %v6196, %v6188
    %v7917 = vpack.c.b16 %v6197, %v6189
    %v7918 = vpack.c.b16 %v6198, %v6190
    %v7919 = vpack.c.b16 %v6199, %v6191
    %v7920 = vpack.c.b16 %v6200, %v6192
    %v7921 = vpack.c.b16 %v6201, %v6193
    %v7922 = vpack.c.b16 %v6202, %v6194
    %v7923 = vpack.c.b16 %v6211, %v6203
    %v7924 = vpack.c.b16 %v6212, %v6204
    %v7925 = vpack.c.b16 %v6213, %v6205
    %v7926 = vpack.c.b16 %v6214, %v6206
    %v7927 = vpack.c.b16 %v6215, %v6207
    %v7928 = vpack.c.b16 %v6216, %v6208
    %v7929 = vpack.c.b16 %v6217, %v6209
    %v7930 = vpack.c.b16 %v6218, %v6210
    %v7931 = vpack.c.b16 %v6227, %v6219
    %v7932 = vpack.c.b16 %v6228, %v6220
    %v7933 = vpack.c.b16 %v6229, %v6221
    %v7934 = vpack.c.b16 %v6230, %v6222
    %v7935 = vpack.c.b16 %v6231, %v6223
    %v7936 = vpack.c.b16 %v6232, %v6224
    %v7937 = vpack.c.b16 %v6233, %v6225
    %v7938 = vpack.c.b16 %v6234, %v6226
    %v7939 = vpack.c.b16 %v6243, %v6235
    %v7940 = vpack.c.b16 %v6244, %v6236
    %v7941 = vpack.c.b16 %v6245, %v6237
    %v7942 = vpack.c.b16 %v6246, %v6238
    %v7943 = vpack.c.b16 %v6247, %v6239
    %v7944 = vpack.c.b16 %v6248, %v6240
    %v7945 = vpack.c.b16 %v6249, %v6241
    %v7946 = vpack.c.b16 %v6250, %v6242
    %v7947 = vpack.c.b16 %v6259, %v6251
    %v7948 = vpack.c.b16 %v6260, %v6252
    %v7949 = vpack.c.b16 %v6261, %v6253
    %v7950 = vpack.c.b16 %v6262, %v6254
    %v7951 = vpack.c.b16 %v6263, %v6255
    %v7952 = vpack.c.b16 %v6264, %v6256
    %v7953 = vpack.c.b16 %v6265, %v6257
    %v7954 = vpack.c.b16 %v6266, %v6258
    %v7955 = vpack.c.b16 %v6275, %v6267
    %v7956 = vpack.c.b16 %v6276, %v6268
    %v7957 = vpack.c.b16 %v6277, %v6269
    %v7958 = vpack.c.b16 %v6278, %v6270
    %v7959 = vpack.c.b16 %v6279, %v6271
    %v7960 = vpack.c.b16 %v6280, %v6272
    %v7961 = vpack.c.b16 %v6281, %v6273
    %v7962 = vpack.c.b16 %v6282, %v6274
    %v7963 = vpack.c.b16 %v6291, %v6283
    %v7964 = vpack.c.b16 %v6292, %v6284
    %v7965 = vpack.c.b16 %v6293, %v6285
    %v7966 = vpack.c.b16 %v6294, %v6286
    %v7967 = vpack.c.b16 %v6295, %v6287
    %v7968 = vpack.c.b16 %v6296, %v6288
    %v7969 = vpack.c.b16 %v6297, %v6289
    %v7970 = vpack.c.b16 %v6298, %v6290
    %v7971 = vpack.c.b16 %v6307, %v6299
    %v7972 = vpack.c.b16 %v6308, %v6300
    %v7973 = vpack.c.b16 %v6309, %v6301
    %v7974 = vpack.c.b16 %v6310, %v6302
    %v7975 = vpack.c.b16 %v6311, %v6303
    %v7976 = vpack.c.b16 %v6312, %v6304
    %v7977 = vpack.c.b16 %v6313, %v6305
    %v7978 = vpack.c.b16 %v6314, %v6306
    %v7979 = vpack.c.b16 %v6323, %v6315
    %v7980 = vpack.c.b16 %v6324, %v6316
    %v7981 = vpack.c.b16 %v6325, %v6317
    %v7982 = vpack.c.b16 %v6326, %v6318
    %v7983 = vpack.c.b16 %v6327, %v6319
    %v7984 = vpack.c.b16 %v6328, %v6320
    %v7985 = vpack.c.b16 %v6329, %v6321
    %v7986 = vpack.c.b16 %v6330, %v6322
    %v7987 = vpack.c.b16 %v6339, %v6331
    %v7988 = vpack.c.b16 %v6340, %v6332
    %v7989 = vpack.c.b16 %v6341, %v6333
    %v7990 = vpack.c.b16 %v6342, %v6334
    %v7991 = vpack.c.b16 %v6343, %v6335
    %v7992 = vpack.c.b16 %v6344, %v6336
    %v7993 = vpack.c.b16 %v6345, %v6337
    %v7994 = vpack.c.b16 %v6346, %v6338
    %v7995 = vpack.c.b16 %v6355, %v6347
    %v7996 = vpack.c.b16 %v6356, %v6348
    %v7997 = vpack.c.b16 %v6357, %v6349
    %v7998 = vpack.c.b16 %v6358, %v6350
    %v7999 = vpack.c.b16 %v6359, %v6351
    %v8000 = vpack.c.b16 %v6360, %v6352
    %v8001 = vpack.c.b16 %v6361, %v6353
    %v8002 = vpack.c.b16 %v6362, %v6354
    %v8003 = vpack.c.b16 %v6371, %v6363
    %v8004 = vpack.c.b16 %v6372, %v6364
    %v8005 = vpack.c.b16 %v6373, %v6365
    %v8006 = vpack.c.b16 %v6374, %v6366
    %v8007 = vpack.c.b16 %v6375, %v6367
    %v8008 = vpack.c.b16 %v6376, %v6368
    %v8009 = vpack.c.b16 %v6377, %v6369
    %v8010 = vpack.c.b16 %v6378, %v6370
    %v8011 = vpack.c.b16 %v6387, %v6379
    %v8012 = vpack.c.b16 %v6388, %v6380
    %v8013 = vpack.c.b16 %v6389, %v6381
    %v8014 = vpack.c.b16 %v6390, %v6382
    %v8015 = vpack.c.b16 %v6391, %v6383
    %v8016 = vpack.c.b16 %v6392, %v6384
    %v8017 = vpack.c.b16 %v6393, %v6385
    %v8018 = vpack.c.b16 %v6394, %v6386
    %v8019 = vpack.c.b16 %v6403, %v6395
    %v8020 = vpack.c.b16 %v6404, %v6396
    %v8021 = vpack.c.b16 %v6405, %v6397
    %v8022 = vpack.c.b16 %v6406, %v6398
    %v8023 = vpack.c.b16 %v6407, %v6399
    %v8024 = vpack.c.b16 %v6408, %v6400
    %v8025 = vpack.c.b16 %v6409, %v6401
    %v8026 = vpack.c.b16 %v6410, %v6402
    %v8027 = vpack.c.b16 %v6419, %v6411
    %v8028 = vpack.c.b16 %v6420, %v6412
    %v8029 = vpack.c.b16 %v6421, %v6413
    %v8030 = vpack.c.b16 %v6422, %v6414
    %v8031 = vpack.c.b16 %v6423, %v6415
    %v8032 = vpack.c.b16 %v6424, %v6416
    %v8033 = vpack.c.b16 %v6425, %v6417
    %v8034 = vpack.c.b16 %v6426, %v6418
    %v8035 = vpack.c.b16 %v6435, %v6427
    %v8036 = vpack.c.b16 %v6436, %v6428
    %v8037 = vpack.c.b16 %v6437, %v6429
    %v8038 = vpack.c.b16 %v6438, %v6430
    %v8039 = vpack.c.b16 %v6439, %v6431
    %v8040 = vpack.c.b16 %v6440, %v6432
    %v8041 = vpack.c.b16 %v6441, %v6433
    %v8042 = vpack.c.b16 %v6442, %v6434
    %v8043 = vpack.c.b16 %v6451, %v6443
    %v8044 = vpack.c.b16 %v6452, %v6444
    %v8045 = vpack.c.b16 %v6453, %v6445
    %v8046 = vpack.c.b16 %v6454, %v6446
    %v8047 = vpack.c.b16 %v6455, %v6447
    %v8048 = vpack.c.b16 %v6456, %v6448
    %v8049 = vpack.c.b16 %v6457, %v6449
    %v8050 = vpack.c.b16 %v6458, %v6450
    %v8051 = vpack.c.b16 %v6467, %v6459
    %v8052 = vpack.c.b16 %v6468, %v6460
    %v8053 = vpack.c.b16 %v6469, %v6461
    %v8054 = vpack.c.b16 %v6470, %v6462
    %v8055 = vpack.c.b16 %v6471, %v6463
    %v8056 = vpack.c.b16 %v6472, %v6464
    %v8057 = vpack.c.b16 %v6473, %v6465
    %v8058 = vpack.c.b16 %v6474, %v6466
    %v8059 = vpack.c.b16 %v6483, %v6475
    %v8060 = vpack.c.b16 %v6484, %v6476
    %v8061 = vpack.c.b16 %v6485, %v6477
    %v8062 = vpack.c.b16 %v6486, %v6478
    %v8063 = vpack.c.b16 %v6487, %v6479
    %v8064 = vpack.c.b16 %v6488, %v6480
    %v8065 = vpack.c.b16 %v6489, %v6481
    %v8066 = vpack.c.b16 %v6490, %v6482
    %v8067 = vpack.c.b16 %v6499, %v6491
    %v8068 = vpack.c.b16 %v6500, %v6492
    %v8069 = vpack.c.b16 %v6501, %v6493
    %v8070 = vpack.c.b16 %v6502, %v6494
    %v8071 = vpack.c.b16 %v6503, %v6495
    %v8072 = vpack.c.b16 %v6504, %v6496
    %v8073 = vpack.c.b16 %v6505, %v6497
    %v8074 = vpack.c.b16 %v6506, %v6498
    %v8075 = vpack.c.b16 %v6515, %v6507
    %v8076 = vpack.c.b16 %v6516, %v6508
    %v8077 = vpack.c.b16 %v6517, %v6509
    %v8078 = vpack.c.b16 %v6518, %v6510
    %v8079 = vpack.c.b16 %v6519, %v6511
    %v8080 = vpack.c.b16 %v6520, %v6512
    %v8081 = vpack.c.b16 %v6521, %v6513
    %v8082 = vpack.c.b16 %v6522, %v6514
    %v8083 = vpack.c.b16 %v6531, %v6523
    %v8084 = vpack.c.b16 %v6532, %v6524
    %v8085 = vpack.c.b16 %v6533, %v6525
    %v8086 = vpack.c.b16 %v6534, %v6526
    %v8087 = vpack.c.b16 %v6535, %v6527
    %v8088 = vpack.c.b16 %v6536, %v6528
    %v8089 = vpack.c.b16 %v6537, %v6529
    %v8090 = vpack.c.b16 %v6538, %v6530
    %v8091 = vpack.c.b16 %v6547, %v6539
    %v8092 = vpack.c.b16 %v6548, %v6540
    %v8093 = vpack.c.b16 %v6549, %v6541
    %v8094 = vpack.c.b16 %v6550, %v6542
    %v8095 = vpack.c.b16 %v6551, %v6543
    %v8096 = vpack.c.b16 %v6552, %v6544
    %v8097 = vpack.c.b16 %v6553, %v6545
    %v8098 = vpack.c.b16 %v6554, %v6546
    %v8099 = vpack.c.b16 %v6563, %v6555
    %v8100 = vpack.c.b16 %v6564, %v6556
    %v8101 = vpack.c.b16 %v6565, %v6557
    %v8102 = vpack.c.b16 %v6566, %v6558
    %v8103 = vpack.c.b16 %v6567, %v6559
    %v8104 = vpack.c.b16 %v6568, %v6560
    %v8105 = vpack.c.b16 %v6569, %v6561
    %v8106 = vpack.c.b16 %v6570, %v6562
    %9643 = vmatprep.subr.bf16.mxu0 %v6572
    %9644 = vmatpush1.bf16.msra.mxu0 %v6571
    %9645 = vmatprep.subr.bf16.mxu0 %v6580
    %9646 = vmatpush1.bf16.msra.mxu0 %v6579
    %9647 = vmatprep.subr.bf16.mxu0 %v6588
    %9648 = vmatpush1.bf16.msra.mxu0 %v6587
    %9649 = vmatprep.subr.bf16.mxu0 %v6596
    %9650 = vmatpush1.bf16.msra.mxu0 %v6595
    %9651 = vmatprep.subr.bf16.mxu0 %v6604
    %9652 = vmatpush1.bf16.msra.mxu0 %v6603
    %9653 = vmatprep.subr.bf16.mxu0 %v6612
    %9654 = vmatpush1.bf16.msra.mxu0 %v6611
    %9655 = vmatprep.subr.bf16.mxu0 %v6620
    %9656 = vmatpush1.bf16.msra.mxu0 %v6619
    %9657 = vmatprep.subr.bf16.mxu0 %v6628
    %9658 = vmatpush1.bf16.msra.mxu0 %v6627
    %9659 = vmatprep.subr.bf16.mxu0 %v6636
    %9660 = vmatpush1.bf16.msra.mxu0 %v6635
    %9661 = vmatprep.subr.bf16.mxu0 %v6644
    %9662 = vmatpush1.bf16.msra.mxu0 %v6643
    %9663 = vmatprep.subr.bf16.mxu0 %v6652
    %9664 = vmatpush1.bf16.msra.mxu0 %v6651
    %9665 = vmatprep.subr.bf16.mxu0 %v6660
    %9666 = vmatpush1.bf16.msra.mxu0 %v6659
    %9667 = vmatprep.subr.bf16.mxu0 %v6668
    %9668 = vmatpush1.bf16.msra.mxu0 %v6667
    %9669 = vmatprep.subr.bf16.mxu0 %v6676
    %9670 = vmatpush1.bf16.msra.mxu0 %v6675
    %9671 = vmatprep.subr.bf16.mxu0 %v6684
    %9672 = vmatpush1.bf16.msra.mxu0 %v6683
    %9673 = vmatprep.subr.bf16.mxu0 %v6692
    %9674 = vmatpush1.bf16.msra.mxu0 %v6691
    %9675 = vmatprep.mubr.bf16.mxu0 %v1916
    %9676 = vmatmul.mubr.bf16.gmra.mrb[0].mxu0 %v1915
    %v9677 = vpop.f32.mrb[0].mxu0
    %v9678 = vadd.f32 %v1806, %v9677
    %v9679 = vpop.f32.mrb[0].mxu0
    %v9680 = vadd.f32 %v1810, %v9679
    %v9681 = vpop.f32.mrb[0].mxu0
    %v9682 = vadd.f32 %v1806, %v9681
    %v9683 = vpop.f32.mrb[0].mxu0
    %v9684 = vadd.f32 %v1810, %v9683
    %9685 = vdwg.mxu0
    %9686 = vmatprep.subr.bf16.mxu0 %v6700
    %9687 = vmatpush1.bf16.msra.mxu0 %v6699
    %9688 = vmatprep.subr.bf16.mxu0 %v6708
    %9689 = vmatpush1.bf16.msra.mxu0 %v6707
    %9690 = vmatprep.subr.bf16.mxu0 %v6716
    %9691 = vmatpush1.bf16.msra.mxu0 %v6715
    %9692 = vmatprep.subr.bf16.mxu0 %v6724
    %9693 = vmatpush1.bf16.msra.mxu0 %v6723
    %9694 = vmatprep.subr.bf16.mxu0 %v6732
    %9695 = vmatpush1.bf16.msra.mxu0 %v6731
    %9696 = vmatprep.subr.bf16.mxu0 %v6740
    %9697 = vmatpush1.bf16.msra.mxu0 %v6739
    %9698 = vmatprep.subr.bf16.mxu0 %v6748
    %9699 = vmatpush1.bf16.msra.mxu0 %v6747
    %9700 = vmatprep.subr.bf16.mxu0 %v6756
    %9701 = vmatpush1.bf16.msra.mxu0 %v6755
    %9702 = vmatprep.subr.bf16.mxu0 %v6764
    %9703 = vmatpush1.bf16.msra.mxu0 %v6763
    %9704 = vmatprep.subr.bf16.mxu0 %v6772
    %9705 = vmatpush1.bf16.msra.mxu0 %v6771
    %9706 = vmatprep.subr.bf16.mxu0 %v6780
    %9707 = vmatpush1.bf16.msra.mxu0 %v6779
    %9708 = vmatprep.subr.bf16.mxu0 %v6788
    %9709 = vmatpush1.bf16.msra.mxu0 %v6787
    %9710 = vmatprep.subr.bf16.mxu0 %v6796
    %9711 = vmatpush1.bf16.msra.mxu0 %v6795
    %9712 = vmatprep.subr.bf16.mxu0 %v6804
    %9713 = vmatpush1.bf16.msra.mxu0 %v6803
    %9714 = vmatprep.subr.bf16.mxu0 %v6812
    %9715 = vmatpush1.bf16.msra.mxu0 %v6811
    %9716 = vmatprep.subr.bf16.mxu0 %v6820
    %9717 = vmatpush1.bf16.msra.mxu0 %v6819
    %9718 = vmatprep.mubr.bf16.mxu0 %v1918
    %9719 = vmatmul.mubr.bf16.gmra.mrb[0].mxu0 %v1917
    %v9720 = vpop.f32.mrb[0].mxu0
    %v9721 = vadd.f32 %v9678, %v9720
    %v9722 = vpop.f32.mrb[0].mxu0
    %v9723 = vadd.f32 %v9680, %v9722
    %v9724 = vpop.f32.mrb[0].mxu0
    %v9725 = vadd.f32 %v9682, %v9724
    %v9726 = vpop.f32.mrb[0].mxu0
    %v9727 = vadd.f32 %v9684, %v9726
    %9728 = vdwg.mxu0
    %9729 = vmatprep.subr.bf16.mxu0 %v6828
    %9730 = vmatpush1.bf16.msra.mxu0 %v6827
    %9731 = vmatprep.subr.bf16.mxu0 %v6836
    %9732 = vmatpush1.bf16.msra.mxu0 %v6835
    %9733 = vmatprep.subr.bf16.mxu0 %v6844
    %9734 = vmatpush1.bf16.msra.mxu0 %v6843
    %9735 = vmatprep.subr.bf16.mxu0 %v6852
    %9736 = vmatpush1.bf16.msra.mxu0 %v6851
    %9737 = vmatprep.subr.bf16.mxu0 %v6860
    %9738 = vmatpush1.bf16.msra.mxu0 %v6859
    %9739 = vmatprep.subr.bf16.mxu0 %v6868
    %9740 = vmatpush1.bf16.msra.mxu0 %v6867
    %9741 = vmatprep.subr.bf16.mxu0 %v6876
    %9742 = vmatpush1.bf16.msra.mxu0 %v6875
    %9743 = vmatprep.subr.bf16.mxu0 %v6884
    %9744 = vmatpush1.bf16.msra.mxu0 %v6883
    %9745 = vmatprep.subr.bf16.mxu0 %v6892
    %9746 = vmatpush1.bf16.msra.mxu0 %v6891
    %9747 = vmatprep.subr.bf16.mxu0 %v6900
    %9748 = vmatpush1.bf16.msra.mxu0 %v6899
    %9749 = vmatprep.subr.bf16.mxu0 %v6908
    %9750 = vmatpush1.bf16.msra.mxu0 %v6907
    %9751 = vmatprep.subr.bf16.mxu0 %v6916
    %9752 = vmatpush1.bf16.msra.mxu0 %v6915
    %9753 = vmatprep.subr.bf16.mxu0 %v6924
    %9754 = vmatpush1.bf16.msra.mxu0 %v6923
    %9755 = vmatprep.subr.bf16.mxu0 %v6932
    %9756 = vmatpush1.bf16.msra.mxu0 %v6931
    %9757 = vmatprep.subr.bf16.mxu0 %v6940
    %9758 = vmatpush1.bf16.msra.mxu0 %v6939
    %9759 = vmatprep.subr.bf16.mxu0 %v6948
    %9760 = vmatpush1.bf16.msra.mxu0 %v6947
    %9761 = vmatprep.mubr.bf16.mxu0 %v1920
    %9762 = vmatmul.mubr.bf16.gmra.mrb[0].mxu0 %v1919
    %v9763 = vpop.f32.mrb[0].mxu0
    %v9764 = vadd.f32 %v9721, %v9763
    %v9765 = vpop.f32.mrb[0].mxu0
    %v9766 = vadd.f32 %v9723, %v9765
    %v9767 = vpop.f32.mrb[0].mxu0
    %v9768 = vadd.f32 %v9725, %v9767
    %v9769 = vpop.f32.mrb[0].mxu0
    %v9770 = vadd.f32 %v9727, %v9769
    %9771 = vdwg.mxu0
    %9772 = vmatprep.subr.bf16.mxu0 %v6956
    %9773 = vmatpush1.bf16.msra.mxu0 %v6955
    %9774 = vmatprep.subr.bf16.mxu0 %v6964
    %9775 = vmatpush1.bf16.msra.mxu0 %v6963
    %9776 = vmatprep.subr.bf16.mxu0 %v6972
    %9777 = vmatpush1.bf16.msra.mxu0 %v6971
    %9778 = vmatprep.subr.bf16.mxu0 %v6980
    %9779 = vmatpush1.bf16.msra.mxu0 %v6979
    %9780 = vmatprep.subr.bf16.mxu0 %v6988
    %9781 = vmatpush1.bf16.msra.mxu0 %v6987
    %9782 = vmatprep.subr.bf16.mxu0 %v6996
    %9783 = vmatpush1.bf16.msra.mxu0 %v6995
    %9784 = vmatprep.subr.bf16.mxu0 %v7004
    %9785 = vmatpush1.bf16.msra.mxu0 %v7003
    %9786 = vmatprep.subr.bf16.mxu0 %v7012
    %9787 = vmatpush1.bf16.msra.mxu0 %v7011
    %9788 = vmatprep.subr.bf16.mxu0 %v7020
    %9789 = vmatpush1.bf16.msra.mxu0 %v7019
    %9790 = vmatprep.subr.bf16.mxu0 %v7028
    %9791 = vmatpush1.bf16.msra.mxu0 %v7027
    %9792 = vmatprep.subr.bf16.mxu0 %v7036
    %9793 = vmatpush1.bf16.msra.mxu0 %v7035
    %9794 = vmatprep.subr.bf16.mxu0 %v7044
    %9795 = vmatpush1.bf16.msra.mxu0 %v7043
    %9796 = vmatprep.subr.bf16.mxu0 %v7052
    %9797 = vmatpush1.bf16.msra.mxu0 %v7051
    %9798 = vmatprep.subr.bf16.mxu0 %v7060
    %9799 = vmatpush1.bf16.msra.mxu0 %v7059
    %9800 = vmatprep.subr.bf16.mxu0 %v7068
    %9801 = vmatpush1.bf16.msra.mxu0 %v7067
    %9802 = vmatprep.subr.bf16.mxu0 %v7076
    %9803 = vmatpush1.bf16.msra.mxu0 %v7075
    %9804 = vmatprep.mubr.bf16.mxu0 %v1922
    %9805 = vmatmul.mubr.bf16.gmra.mrb[0].mxu0 %v1921
    %v9806 = vpop.f32.mrb[0].mxu0
    %v9807 = vadd.f32 %v9764, %v9806
    %v9808 = vpop.f32.mrb[0].mxu0
    %v9809 = vadd.f32 %v9766, %v9808
    %v9810 = vpop.f32.mrb[0].mxu0
    %v9811 = vadd.f32 %v9768, %v9810
    %v9812 = vpop.f32.mrb[0].mxu0
    %v9813 = vadd.f32 %v9770, %v9812
    %9814 = vdwg.mxu0
    %9815 = vmatprep.subr.bf16.mxu0 %v7084
    %9816 = vmatpush1.bf16.msra.mxu0 %v7083
    %9817 = vmatprep.subr.bf16.mxu0 %v7092
    %9818 = vmatpush1.bf16.msra.mxu0 %v7091
    %9819 = vmatprep.subr.bf16.mxu0 %v7100
    %9820 = vmatpush1.bf16.msra.mxu0 %v7099
    %9821 = vmatprep.subr.bf16.mxu0 %v7108
    %9822 = vmatpush1.bf16.msra.mxu0 %v7107
    %9823 = vmatprep.subr.bf16.mxu0 %v7116
    %9824 = vmatpush1.bf16.msra.mxu0 %v7115
    %9825 = vmatprep.subr.bf16.mxu0 %v7124
    %9826 = vmatpush1.bf16.msra.mxu0 %v7123
    %9827 = vmatprep.subr.bf16.mxu0 %v7132
    %9828 = vmatpush1.bf16.msra.mxu0 %v7131
    %9829 = vmatprep.subr.bf16.mxu0 %v7140
    %9830 = vmatpush1.bf16.msra.mxu0 %v7139
    %9831 = vmatprep.subr.bf16.mxu0 %v7148
    %9832 = vmatpush1.bf16.msra.mxu0 %v7147
    %9833 = vmatprep.subr.bf16.mxu0 %v7156
    %9834 = vmatpush1.bf16.msra.mxu0 %v7155
    %9835 = vmatprep.subr.bf16.mxu0 %v7164
    %9836 = vmatpush1.bf16.msra.mxu0 %v7163
    %9837 = vmatprep.subr.bf16.mxu0 %v7172
    %9838 = vmatpush1.bf16.msra.mxu0 %v7171
    %9839 = vmatprep.subr.bf16.mxu0 %v7180
    %9840 = vmatpush1.bf16.msra.mxu0 %v7179
    %9841 = vmatprep.subr.bf16.mxu0 %v7188
    %9842 = vmatpush1.bf16.msra.mxu0 %v7187
    %9843 = vmatprep.subr.bf16.mxu0 %v7196
    %9844 = vmatpush1.bf16.msra.mxu0 %v7195
    %9845 = vmatprep.subr.bf16.mxu0 %v7204
    %9846 = vmatpush1.bf16.msra.mxu0 %v7203
    %9847 = vmatprep.mubr.bf16.mxu0 %v1924
    %9848 = vmatmul.mubr.bf16.gmra.mrb[0].mxu0 %v1923
    %v9849 = vpop.f32.mrb[0].mxu0
    %v9850 = vadd.f32 %v9807, %v9849
    %v9851 = vpop.f32.mrb[0].mxu0
    %v9852 = vadd.f32 %v9809, %v9851
    %v9853 = vpop.f32.mrb[0].mxu0
    %v9854 = vadd.f32 %v9811, %v9853
    %v9855 = vpop.f32.mrb[0].mxu0
    %v9856 = vadd.f32 %v9813, %v9855
    %9857 = vdwg.mxu0
    %9858 = vmatprep.subr.bf16.mxu0 %v7212
    %9859 = vmatpush1.bf16.msra.mxu0 %v7211
    %9860 = vmatprep.subr.bf16.mxu0 %v7220
    %9861 = vmatpush1.bf16.msra.mxu0 %v7219
    %9862 = vmatprep.subr.bf16.mxu0 %v7228
    %9863 = vmatpush1.bf16.msra.mxu0 %v7227
    %9864 = vmatprep.subr.bf16.mxu0 %v7236
    %9865 = vmatpush1.bf16.msra.mxu0 %v7235
    %9866 = vmatprep.subr.bf16.mxu0 %v7244
    %9867 = vmatpush1.bf16.msra.mxu0 %v7243
    %9868 = vmatprep.subr.bf16.mxu0 %v7252
    %9869 = vmatpush1.bf16.msra.mxu0 %v7251
    %9870 = vmatprep.subr.bf16.mxu0 %v7260
    %9871 = vmatpush1.bf16.msra.mxu0 %v7259
    %9872 = vmatprep.subr.bf16.mxu0 %v7268
    %9873 = vmatpush1.bf16.msra.mxu0 %v7267
    %9874 = vmatprep.subr.bf16.mxu0 %v7276
    %9875 = vmatpush1.bf16.msra.mxu0 %v7275
    %9876 = vmatprep.subr.bf16.mxu0 %v7284
    %9877 = vmatpush1.bf16.msra.mxu0 %v7283
    %9878 = vmatprep.subr.bf16.mxu0 %v7292
    %9879 = vmatpush1.bf16.msra.mxu0 %v7291
    %9880 = vmatprep.subr.bf16.mxu0 %v7300
    %9881 = vmatpush1.bf16.msra.mxu0 %v7299
    %9882 = vmatprep.subr.bf16.mxu0 %v7308
    %9883 = vmatpush1.bf16.msra.mxu0 %v7307
    %9884 = vmatprep.subr.bf16.mxu0 %v7316
    %9885 = vmatpush1.bf16.msra.mxu0 %v7315
    %9886 = vmatprep.subr.bf16.mxu0 %v7324
    %9887 = vmatpush1.bf16.msra.mxu0 %v7323
    %9888 = vmatprep.subr.bf16.mxu0 %v7332
    %9889 = vmatpush1.bf16.msra.mxu0 %v7331
    %9890 = vmatprep.mubr.bf16.mxu0 %v1926
    %9891 = vmatmul.mubr.bf16.gmra.mrb[0].mxu0 %v1925
    %v9892 = vpop.f32.mrb[0].mxu0
    %v9893 = vadd.f32 %v9850, %v9892
    %v9894 = vpop.f32.mrb[0].mxu0
    %v9895 = vadd.f32 %v9852, %v9894
    %v9896 = vpop.f32.mrb[0].mxu0
    %v9897 = vadd.f32 %v9854, %v9896
    %v9898 = vpop.f32.mrb[0].mxu0
    %v9899 = vadd.f32 %v9856, %v9898
    %9900 = vdwg.mxu0
    %9901 = vmatprep.subr.bf16.mxu0 %v7340
    %9902 = vmatpush1.bf16.msra.mxu0 %v7339
    %9903 = vmatprep.subr.bf16.mxu0 %v7348
    %9904 = vmatpush1.bf16.msra.mxu0 %v7347
    %9905 = vmatprep.subr.bf16.mxu0 %v7356
    %9906 = vmatpush1.bf16.msra.mxu0 %v7355
    %9907 = vmatprep.subr.bf16.mxu0 %v7364
    %9908 = vmatpush1.bf16.msra.mxu0 %v7363
    %9909 = vmatprep.subr.bf16.mxu0 %v7372
    %9910 = vmatpush1.bf16.msra.mxu0 %v7371
    %9911 = vmatprep.subr.bf16.mxu0 %v7380
    %9912 = vmatpush1.bf16.msra.mxu0 %v7379
    %9913 = vmatprep.subr.bf16.mxu0 %v7388
    %9914 = vmatpush1.bf16.msra.mxu0 %v7387
    %9915 = vmatprep.subr.bf16.mxu0 %v7396
    %9916 = vmatpush1.bf16.msra.mxu0 %v7395
    %9917 = vmatprep.subr.bf16.mxu0 %v7404
    %9918 = vmatpush1.bf16.msra.mxu0 %v7403
    %9919 = vmatprep.subr.bf16.mxu0 %v7412
    %9920 = vmatpush1.bf16.msra.mxu0 %v7411
    %9921 = vmatprep.subr.bf16.mxu0 %v7420
    %9922 = vmatpush1.bf16.msra.mxu0 %v7419
    %9923 = vmatprep.subr.bf16.mxu0 %v7428
    %9924 = vmatpush1.bf16.msra.mxu0 %v7427
    %9925 = vmatprep.subr.bf16.mxu0 %v7436
    %9926 = vmatpush1.bf16.msra.mxu0 %v7435
    %9927 = vmatprep.subr.bf16.mxu0 %v7444
    %9928 = vmatpush1.bf16.msra.mxu0 %v7443
    %9929 = vmatprep.subr.bf16.mxu0 %v7452
    %9930 = vmatpush1.bf16.msra.mxu0 %v7451
    %9931 = vmatprep.subr.bf16.mxu0 %v7460
    %9932 = vmatpush1.bf16.msra.mxu0 %v7459
    %9933 = vmatprep.mubr.bf16.mxu0 %v1928
    %9934 = vmatmul.mubr.bf16.gmra.mrb[0].mxu0 %v1927
    %v9935 = vpop.f32.mrb[0].mxu0
    %v9936 = vadd.f32 %v9893, %v9935
    %v9937 = vpop.f32.mrb[0].mxu0
    %v9938 = vadd.f32 %v9895, %v9937
    %v9939 = vpop.f32.mrb[0].mxu0
    %v9940 = vadd.f32 %v9897, %v9939
    %v9941 = vpop.f32.mrb[0].mxu0
    %v9942 = vadd.f32 %v9899, %v9941
    %9943 = vdwg.mxu0
    %9944 = vmatprep.subr.bf16.mxu0 %v7468
    %9945 = vmatpush1.bf16.msra.mxu0 %v7467
    %9946 = vmatprep.subr.bf16.mxu0 %v7476
    %9947 = vmatpush1.bf16.msra.mxu0 %v7475
    %9948 = vmatprep.subr.bf16.mxu0 %v7484
    %9949 = vmatpush1.bf16.msra.mxu0 %v7483
    %9950 = vmatprep.subr.bf16.mxu0 %v7492
    %9951 = vmatpush1.bf16.msra.mxu0 %v7491
    %9952 = vmatprep.subr.bf16.mxu0 %v7500
    %9953 = vmatpush1.bf16.msra.mxu0 %v7499
    %9954 = vmatprep.subr.bf16.mxu0 %v7508
    %9955 = vmatpush1.bf16.msra.mxu0 %v7507
    %9956 = vmatprep.subr.bf16.mxu0 %v7516
    %9957 = vmatpush1.bf16.msra.mxu0 %v7515
    %9958 = vmatprep.subr.bf16.mxu0 %v7524
    %9959 = vmatpush1.bf16.msra.mxu0 %v7523
    %9960 = vmatprep.subr.bf16.mxu0 %v7532
    %9961 = vmatpush1.bf16.msra.mxu0 %v7531
    %9962 = vmatprep.subr.bf16.mxu0 %v7540
    %9963 = vmatpush1.bf16.msra.mxu0 %v7539
    %9964 = vmatprep.subr.bf16.mxu0 %v7548
    %9965 = vmatpush1.bf16.msra.mxu0 %v7547
    %9966 = vmatprep.subr.bf16.mxu0 %v7556
    %9967 = vmatpush1.bf16.msra.mxu0 %v7555
    %9968 = vmatprep.subr.bf16.mxu0 %v7564
    %9969 = vmatpush1.bf16.msra.mxu0 %v7563
    %9970 = vmatprep.subr.bf16.mxu0 %v7572
    %9971 = vmatpush1.bf16.msra.mxu0 %v7571
    %9972 = vmatprep.subr.bf16.mxu0 %v7580
    %9973 = vmatpush1.bf16.msra.mxu0 %v7579
    %9974 = vmatprep.subr.bf16.mxu0 %v7588
    %9975 = vmatpush1.bf16.msra.mxu0 %v7587
    %9976 = vmatprep.mubr.bf16.mxu0 %v1930
    %9977 = vmatmul.mubr.bf16.gmra.mrb[0].mxu0 %v1929
    %v9978 = vpop.f32.mrb[0].mxu0
    %v9979 = vadd.f32 %v9936, %v9978
    %v9980 = vpop.f32.mrb[0].mxu0
    %v9981 = vadd.f32 %v9938, %v9980
    %v9982 = vpop.f32.mrb[0].mxu0
    %v9983 = vadd.f32 %v9940, %v9982
    %v9984 = vpop.f32.mrb[0].mxu0
    %v9985 = vadd.f32 %v9942, %v9984
    %9986 = vdwg.mxu0
    %9987 = vmatprep.subr.bf16.mxu0 %v7596
    %9988 = vmatpush1.bf16.msra.mxu0 %v7595
    %9989 = vmatprep.subr.bf16.mxu0 %v7604
    %9990 = vmatpush1.bf16.msra.mxu0 %v7603
    %9991 = vmatprep.subr.bf16.mxu0 %v7612
    %9992 = vmatpush1.bf16.msra.mxu0 %v7611
    %9993 = vmatprep.subr.bf16.mxu0 %v7620
    %9994 = vmatpush1.bf16.msra.mxu0 %v7619
    %9995 = vmatprep.subr.bf16.mxu0 %v7628
    %9996 = vmatpush1.bf16.msra.mxu0 %v7627
    %9997 = vmatprep.subr.bf16.mxu0 %v7636
    %9998 = vmatpush1.bf16.msra.mxu0 %v7635
    %9999 = vmatprep.subr.bf16.mxu0 %v7644
    %10000 = vmatpush1.bf16.msra.mxu0 %v7643
    %10001 = vmatprep.subr.bf16.mxu0 %v7652
    %10002 = vmatpush1.bf16.msra.mxu0 %v7651
    %10003 = vmatprep.subr.bf16.mxu0 %v7660
    %10004 = vmatpush1.bf16.msra.mxu0 %v7659
    %10005 = vmatprep.subr.bf16.mxu0 %v7668
    %10006 = vmatpush1.bf16.msra.mxu0 %v7667
    %10007 = vmatprep.subr.bf16.mxu0 %v7676
    %10008 = vmatpush1.bf16.msra.mxu0 %v7675
    %10009 = vmatprep.subr.bf16.mxu0 %v7684
    %10010 = vmatpush1.bf16.msra.mxu0 %v7683
    %10011 = vmatprep.subr.bf16.mxu0 %v7692
    %10012 = vmatpush1.bf16.msra.mxu0 %v7691
    %10013 = vmatprep.subr.bf16.mxu0 %v7700
    %10014 = vmatpush1.bf16.msra.mxu0 %v7699
    %10015 = vmatprep.subr.bf16.mxu0 %v7708
    %10016 = vmatpush1.bf16.msra.mxu0 %v7707
    %10017 = vmatprep.subr.bf16.mxu0 %v7716
    %10018 = vmatpush1.bf16.msra.mxu0 %v7715
    %10019 = vmatprep.mubr.bf16.mxu0 %v1932
    %10020 = vmatmul.mubr.bf16.gmra.mrb[0].mxu0 %v1931
    %v10021 = vpop.f32.mrb[0].mxu0
    %v10022 = vadd.f32 %v9979, %v10021
    %v10023 = vpop.f32.mrb[0].mxu0
    %v10024 = vadd.f32 %v9981, %v10023
    %v10025 = vpop.f32.mrb[0].mxu0
    %v10026 = vadd.f32 %v9983, %v10025
    %v10027 = vpop.f32.mrb[0].mxu0
    %v10028 = vadd.f32 %v9985, %v10027
    %10029 = vdwg.mxu0
    %10030 = vmatprep.subr.bf16.mxu0 %v7724
    %10031 = vmatpush1.bf16.msra.mxu0 %v7723
    %10032 = vmatprep.subr.bf16.mxu0 %v7732
    %10033 = vmatpush1.bf16.msra.mxu0 %v7731
    %10034 = vmatprep.subr.bf16.mxu0 %v7740
    %10035 = vmatpush1.bf16.msra.mxu0 %v7739
    %10036 = vmatprep.subr.bf16.mxu0 %v7748
    %10037 = vmatpush1.bf16.msra.mxu0 %v7747
    %10038 = vmatprep.subr.bf16.mxu0 %v7756
    %10039 = vmatpush1.bf16.msra.mxu0 %v7755
    %10040 = vmatprep.subr.bf16.mxu0 %v7764
    %10041 = vmatpush1.bf16.msra.mxu0 %v7763
    %10042 = vmatprep.subr.bf16.mxu0 %v7772
    %10043 = vmatpush1.bf16.msra.mxu0 %v7771
    %10044 = vmatprep.subr.bf16.mxu0 %v7780
    %10045 = vmatpush1.bf16.msra.mxu0 %v7779
    %10046 = vmatprep.subr.bf16.mxu0 %v7788
    %10047 = vmatpush1.bf16.msra.mxu0 %v7787
    %10048 = vmatprep.subr.bf16.mxu0 %v7796
    %10049 = vmatpush1.bf16.msra.mxu0 %v7795
    %10050 = vmatprep.subr.bf16.mxu0 %v7804
    %10051 = vmatpush1.bf16.msra.mxu0 %v7803
    %10052 = vmatprep.subr.bf16.mxu0 %v7812
    %10053 = vmatpush1.bf16.msra.mxu0 %v7811
    %10054 = vmatprep.subr.bf16.mxu0 %v7820
    %10055 = vmatpush1.bf16.msra.mxu0 %v7819
    %10056 = vmatprep.subr.bf16.mxu0 %v7828
    %10057 = vmatpush1.bf16.msra.mxu0 %v7827
    %10058 = vmatprep.subr.bf16.mxu0 %v7836
    %10059 = vmatpush1.bf16.msra.mxu0 %v7835
    %10060 = vmatprep.subr.bf16.mxu0 %v7844
    %10061 = vmatpush1.bf16.msra.mxu0 %v7843
    %10062 = vmatprep.mubr.bf16.mxu0 %v1934
    %10063 = vmatmul.mubr.bf16.gmra.mrb[0].mxu0 %v1933
    %v10064 = vpop.f32.mrb[0].mxu0
    %v10065 = vadd.f32 %v10022, %v10064
    %v10066 = vpop.f32.mrb[0].mxu0
    %v10067 = vadd.f32 %v10024, %v10066
    %v10068 = vpop.f32.mrb[0].mxu0
    %v10069 = vadd.f32 %v10026, %v10068
    %v10070 = vpop.f32.mrb[0].mxu0
    %v10071 = vadd.f32 %v10028, %v10070
    %10072 = vdwg.mxu0
    %10073 = vmatprep.subr.bf16.mxu0 %v7852
    %10074 = vmatpush1.bf16.msra.mxu0 %v7851
    %10075 = vmatprep.subr.bf16.mxu0 %v7860
    %10076 = vmatpush1.bf16.msra.mxu0 %v7859
    %10077 = vmatprep.subr.bf16.mxu0 %v7868
    %10078 = vmatpush1.bf16.msra.mxu0 %v7867
    %10079 = vmatprep.subr.bf16.mxu0 %v7876
    %10080 = vmatpush1.bf16.msra.mxu0 %v7875
    %10081 = vmatprep.subr.bf16.mxu0 %v7884
    %10082 = vmatpush1.bf16.msra.mxu0 %v7883
    %10083 = vmatprep.subr.bf16.mxu0 %v7892
    %10084 = vmatpush1.bf16.msra.mxu0 %v7891
    %10085 = vmatprep.subr.bf16.mxu0 %v7900
    %10086 = vmatpush1.bf16.msra.mxu0 %v7899
    %10087 = vmatprep.subr.bf16.mxu0 %v7908
    %10088 = vmatpush1.bf16.msra.mxu0 %v7907
    %10089 = vmatprep.subr.bf16.mxu0 %v7916
    %10090 = vmatpush1.bf16.msra.mxu0 %v7915
    %10091 = vmatprep.subr.bf16.mxu0 %v7924
    %10092 = vmatpush1.bf16.msra.mxu0 %v7923
    %10093 = vmatprep.subr.bf16.mxu0 %v7932
    %10094 = vmatpush1.bf16.msra.mxu0 %v7931
    %10095 = vmatprep.subr.bf16.mxu0 %v7940
    %10096 = vmatpush1.bf16.msra.mxu0 %v7939
    %10097 = vmatprep.subr.bf16.mxu0 %v7948
    %10098 = vmatpush1.bf16.msra.mxu0 %v7947
    %10099 = vmatprep.subr.bf16.mxu0 %v7956
    %10100 = vmatpush1.bf16.msra.mxu0 %v7955
    %10101 = vmatprep.subr.bf16.mxu0 %v7964
    %10102 = vmatpush1.bf16.msra.mxu0 %v7963
    %10103 = vmatprep.subr.bf16.mxu0 %v7972
    %10104 = vmatpush1.bf16.msra.mxu0 %v7971
    %10105 = vmatprep.mubr.bf16.mxu0 %v1936
    %10106 = vmatmul.mubr.bf16.gmra.mrb[0].mxu0 %v1935
    %v10107 = vpop.f32.mrb[0].mxu0
    %v10108 = vadd.f32 %v10065, %v10107
    %v10109 = vpop.f32.mrb[0].mxu0
    %v10110 = vadd.f32 %v10067, %v10109
    %v10111 = vpop.f32.mrb[0].mxu0
    %v10112 = vadd.f32 %v10069, %v10111
    %v10113 = vpop.f32.mrb[0].mxu0
    %v10114 = vadd.f32 %v10071, %v10113
    %10115 = vdwg.mxu0
    %10116 = vmatprep.subr.bf16.mxu0 %v7980
    %10117 = vmatpush1.bf16.msra.mxu0 %v7979
    %10118 = vmatprep.subr.bf16.mxu0 %v7988
    %10119 = vmatpush1.bf16.msra.mxu0 %v7987
    %10120 = vmatprep.subr.bf16.mxu0 %v7996
    %10121 = vmatpush1.bf16.msra.mxu0 %v7995
    %10122 = vmatprep.subr.bf16.mxu0 %v8004
    %10123 = vmatpush1.bf16.msra.mxu0 %v8003
    %10124 = vmatprep.subr.bf16.mxu0 %v8012
    %10125 = vmatpush1.bf16.msra.mxu0 %v8011
    %10126 = vmatprep.subr.bf16.mxu0 %v8020
    %10127 = vmatpush1.bf16.msra.mxu0 %v8019
    %10128 = vmatprep.subr.bf16.mxu0 %v8028
    %10129 = vmatpush1.bf16.msra.mxu0 %v8027
    %10130 = vmatprep.subr.bf16.mxu0 %v8036
    %10131 = vmatpush1.bf16.msra.mxu0 %v8035
    %10132 = vmatprep.subr.bf16.mxu0 %v8044
    %10133 = vmatpush1.bf16.msra.mxu0 %v8043
    %10134 = vmatprep.subr.bf16.mxu0 %v8052
    %10135 = vmatpush1.bf16.msra.mxu0 %v8051
    %10136 = vmatprep.subr.bf16.mxu0 %v8060
    %10137 = vmatpush1.bf16.msra.mxu0 %v8059
    %10138 = vmatprep.subr.bf16.mxu0 %v8068
    %10139 = vmatpush1.bf16.msra.mxu0 %v8067
    %10140 = vmatprep.subr.bf16.mxu0 %v8076
    %10141 = vmatpush1.bf16.msra.mxu0 %v8075
    %10142 = vmatprep.subr.bf16.mxu0 %v8084
    %10143 = vmatpush1.bf16.msra.mxu0 %v8083
    %10144 = vmatprep.subr.bf16.mxu0 %v8092
    %10145 = vmatpush1.bf16.msra.mxu0 %v8091
    %10146 = vmatprep.subr.bf16.mxu0 %v8100
    %10147 = vmatpush1.bf16.msra.mxu0 %v8099
    %10148 = vmatprep.mubr.bf16.mxu0 %v1938
    %10149 = vmatmul.mubr.bf16.gmra.mrb[0].mxu0 %v1937
    %v10150 = vpop.f32.mrb[0].mxu0
    %v10151 = vadd.f32 %v10108, %v10150
    %v10152 = vpop.f32.mrb[0].mxu0
    %v10153 = vadd.f32 %v10110, %v10152
    %v10154 = vpop.f32.mrb[0].mxu0
    %v10155 = vadd.f32 %v10112, %v10154
    %v10156 = vpop.f32.mrb[0].mxu0
    %v10157 = vadd.f32 %v10114, %v10156
    %10158 = vdwg.mxu0
    %10159 = vmatprep.subr.bf16.mxu0 %v6574
    %10160 = vmatpush1.bf16.msra.mxu0 %v6573
    %10161 = vmatprep.subr.bf16.mxu0 %v6582
    %10162 = vmatpush1.bf16.msra.mxu0 %v6581
    %10163 = vmatprep.subr.bf16.mxu0 %v6590
    %10164 = vmatpush1.bf16.msra.mxu0 %v6589
    %10165 = vmatprep.subr.bf16.mxu0 %v6598
    %10166 = vmatpush1.bf16.msra.mxu0 %v6597
    %10167 = vmatprep.subr.bf16.mxu0 %v6606
    %10168 = vmatpush1.bf16.msra.mxu0 %v6605
    %10169 = vmatprep.subr.bf16.mxu0 %v6614
    %10170 = vmatpush1.bf16.msra.mxu0 %v6613
    %10171 = vmatprep.subr.bf16.mxu0 %v6622
    %10172 = vmatpush1.bf16.msra.mxu0 %v6621
    %10173 = vmatprep.subr.bf16.mxu0 %v6630
    %10174 = vmatpush1.bf16.msra.mxu0 %v6629
    %10175 = vmatprep.subr.bf16.mxu0 %v6638
    %10176 = vmatpush1.bf16.msra.mxu0 %v6637
    %10177 = vmatprep.subr.bf16.mxu0 %v6646
    %10178 = vmatpush1.bf16.msra.mxu0 %v6645
    %10179 = vmatprep.subr.bf16.mxu0 %v6654
    %10180 = vmatpush1.bf16.msra.mxu0 %v6653
    %10181 = vmatprep.subr.bf16.mxu0 %v6662
    %10182 = vmatpush1.bf16.msra.mxu0 %v6661
    %10183 = vmatprep.subr.bf16.mxu0 %v6670
    %10184 = vmatpush1.bf16.msra.mxu0 %v6669
    %10185 = vmatprep.subr.bf16.mxu0 %v6678
    %10186 = vmatpush1.bf16.msra.mxu0 %v6677
    %10187 = vmatprep.subr.bf16.mxu0 %v6686
    %10188 = vmatpush1.bf16.msra.mxu0 %v6685
    %10189 = vmatprep.subr.bf16.mxu0 %v6694
    %10190 = vmatpush1.bf16.msra.mxu0 %v6693
    %10191 = vmatprep.mubr.bf16.mxu0 %v1916
    %10192 = vmatmul.mubr.bf16.gmra.mrb[0].mxu0 %v1915
    %v10193 = vpop.f32.mrb[0].mxu0
    %v10194 = vadd.f32 %v1814, %v10193
    %v10195 = vpop.f32.mrb[0].mxu0
    %v10196 = vadd.f32 %v1818, %v10195
    %v10197 = vpop.f32.mrb[0].mxu0
    %v10198 = vadd.f32 %v1814, %v10197
    %v10199 = vpop.f32.mrb[0].mxu0
    %v10200 = vadd.f32 %v1818, %v10199
    %10201 = vdwg.mxu0
    %10202 = vmatprep.subr.bf16.mxu0 %v6702
    %10203 = vmatpush1.bf16.msra.mxu0 %v6701
    %10204 = vmatprep.subr.bf16.mxu0 %v6710
    %10205 = vmatpush1.bf16.msra.mxu0 %v6709
    %10206 = vmatprep.subr.bf16.mxu0 %v6718
    %10207 = vmatpush1.bf16.msra.mxu0 %v6717
    %10208 = vmatprep.subr.bf16.mxu0 %v6726
    %10209 = vmatpush1.bf16.msra.mxu0 %v6725
    %10210 = vmatprep.subr.bf16.mxu0 %v6734
    %10211 = vmatpush1.bf16.msra.mxu0 %v6733
    %10212 = vmatprep.subr.bf16.mxu0 %v6742
    %10213 = vmatpush1.bf16.msra.mxu0 %v6741
    %10214 = vmatprep.subr.bf16.mxu0 %v6750
    %10215 = vmatpush1.bf16.msra.mxu0 %v6749
    %10216 = vmatprep.subr.bf16.mxu0 %v6758
    %10217 = vmatpush1.bf16.msra.mxu0 %v6757
    %10218 = vmatprep.subr.bf16.mxu0 %v6766
    %10219 = vmatpush1.bf16.msra.mxu0 %v6765
    %10220 = vmatprep.subr.bf16.mxu0 %v6774
    %10221 = vmatpush1.bf16.msra.mxu0 %v6773
    %10222 = vmatprep.subr.bf16.mxu0 %v6782
    %10223 = vmatpush1.bf16.msra.mxu0 %v6781
    %10224 = vmatprep.subr.bf16.mxu0 %v6790
    %10225 = vmatpush1.bf16.msra.mxu0 %v6789
    %10226 = vmatprep.subr.bf16.mxu0 %v6798
    %10227 = vmatpush1.bf16.msra.mxu0 %v6797
    %10228 = vmatprep.subr.bf16.mxu0 %v6806
    %10229 = vmatpush1.bf16.msra.mxu0 %v6805
    %10230 = vmatprep.subr.bf16.mxu0 %v6814
    %10231 = vmatpush1.bf16.msra.mxu0 %v6813
    %10232 = vmatprep.subr.bf16.mxu0 %v6822
    %10233 = vmatpush1.bf16.msra.mxu0 %v6821
    %10234 = vmatprep.mubr.bf16.mxu0 %v1918
    %10235 = vmatmul.mubr.bf16.gmra.mrb[0].mxu0 %v1917
    %v10236 = vpop.f32.mrb[0].mxu0
    %v10237 = vadd.f32 %v10194, %v10236
    %v10238 = vpop.f32.mrb[0].mxu0
    %v10239 = vadd.f32 %v10196, %v10238
    %v10240 = vpop.f32.mrb[0].mxu0
    %v10241 = vadd.f32 %v10198, %v10240
    %v10242 = vpop.f32.mrb[0].mxu0
    %v10243 = vadd.f32 %v10200, %v10242
    %10244 = vdwg.mxu0
    %10245 = vmatprep.subr.bf16.mxu0 %v6830
    %10246 = vmatpush1.bf16.msra.mxu0 %v6829
    %10247 = vmatprep.subr.bf16.mxu0 %v6838
    %10248 = vmatpush1.bf16.msra.mxu0 %v6837
    %10249 = vmatprep.subr.bf16.mxu0 %v6846
    %10250 = vmatpush1.bf16.msra.mxu0 %v6845
    %10251 = vmatprep.subr.bf16.mxu0 %v6854
    %10252 = vmatpush1.bf16.msra.mxu0 %v6853
    %10253 = vmatprep.subr.bf16.mxu0 %v6862
    %10254 = vmatpush1.bf16.msra.mxu0 %v6861
    %10255 = vmatprep.subr.bf16.mxu0 %v6870
    %10256 = vmatpush1.bf16.msra.mxu0 %v6869
    %10257 = vmatprep.subr.bf16.mxu0 %v6878
    %10258 = vmatpush1.bf16.msra.mxu0 %v6877
    %10259 = vmatprep.subr.bf16.mxu0 %v6886
    %10260 = vmatpush1.bf16.msra.mxu0 %v6885
    %10261 = vmatprep.subr.bf16.mxu0 %v6894
    %10262 = vmatpush1.bf16.msra.mxu0 %v6893
    %10263 = vmatprep.subr.bf16.mxu0 %v6902
    %10264 = vmatpush1.bf16.msra.mxu0 %v6901
    %10265 = vmatprep.subr.bf16.mxu0 %v6910
    %10266 = vmatpush1.bf16.msra.mxu0 %v6909
    %10267 = vmatprep.subr.bf16.mxu0 %v6918
    %10268 = vmatpush1.bf16.msra.mxu0 %v6917
    %10269 = vmatprep.subr.bf16.mxu0 %v6926
    %10270 = vmatpush1.bf16.msra.mxu0 %v6925
    %10271 = vmatprep.subr.bf16.mxu0 %v6934
    %10272 = vmatpush1.bf16.msra.mxu0 %v6933
    %10273 = vmatprep.subr.bf16.mxu0 %v6942
    %10274 = vmatpush1.bf16.msra.mxu0 %v6941
    %10275 = vmatprep.subr.bf16.mxu0 %v6950
    %10276 = vmatpush1.bf16.msra.mxu0 %v6949
    %10277 = vmatprep.mubr.bf16.mxu0 %v1920
    %10278 = vmatmul.mubr.bf16.gmra.mrb[0].mxu0 %v1919
    %v10279 = vpop.f32.mrb[0].mxu0
    %v10280 = vadd.f32 %v10237, %v10279
    %v10281 = vpop.f32.mrb[0].mxu0
    %v10282 = vadd.f32 %v10239, %v10281
    %v10283 = vpop.f32.mrb[0].mxu0
    %v10284 = vadd.f32 %v10241, %v10283
    %v10285 = vpop.f32.mrb[0].mxu0
    %v10286 = vadd.f32 %v10243, %v10285
    %10287 = vdwg.mxu0
    %10288 = vmatprep.subr.bf16.mxu0 %v6958
    %10289 = vmatpush1.bf16.msra.mxu0 %v6957
    %10290 = vmatprep.subr.bf16.mxu0 %v6966
    %10291 = vmatpush1.bf16.msra.mxu0 %v6965
    %10292 = vmatprep.subr.bf16.mxu0 %v6974
    %10293 = vmatpush1.bf16.msra.mxu0 %v6973
    %10294 = vmatprep.subr.bf16.mxu0 %v6982
    %10295 = vmatpush1.bf16.msra.mxu0 %v6981
    %10296 = vmatprep.subr.bf16.mxu0 %v6990
    %10297 = vmatpush1.bf16.msra.mxu0 %v6989
    %10298 = vmatprep.subr.bf16.mxu0 %v6998
    %10299 = vmatpush1.bf16.msra.mxu0 %v6997
    %10300 = vmatprep.subr.bf16.mxu0 %v7006
    %10301 = vmatpush1.bf16.msra.mxu0 %v7005
    %10302 = vmatprep.subr.bf16.mxu0 %v7014
    %10303 = vmatpush1.bf16.msra.mxu0 %v7013
    %10304 = vmatprep.subr.bf16.mxu0 %v7022
    %10305 = vmatpush1.bf16.msra.mxu0 %v7021
    %10306 = vmatprep.subr.bf16.mxu0 %v7030
    %10307 = vmatpush1.bf16.msra.mxu0 %v7029
    %10308 = vmatprep.subr.bf16.mxu0 %v7038
    %10309 = vmatpush1.bf16.msra.mxu0 %v7037
    %10310 = vmatprep.subr.bf16.mxu0 %v7046
    %10311 = vmatpush1.bf16.msra.mxu0 %v7045
    %10312 = vmatprep.subr.bf16.mxu0 %v7054
    %10313 = vmatpush1.bf16.msra.mxu0 %v7053
    %10314 = vmatprep.subr.bf16.mxu0 %v7062
    %10315 = vmatpush1.bf16.msra.mxu0 %v7061
    %10316 = vmatprep.subr.bf16.mxu0 %v7070
    %10317 = vmatpush1.bf16.msra.mxu0 %v7069
    %10318 = vmatprep.subr.bf16.mxu0 %v7078
    %10319 = vmatpush1.bf16.msra.mxu0 %v7077
    %10320 = vmatprep.mubr.bf16.mxu0 %v1922
    %10321 = vmatmul.mubr.bf16.gmra.mrb[0].mxu0 %v1921
    %v10322 = vpop.f32.mrb[0].mxu0
    %v10323 = vadd.f32 %v10280, %v10322
    %v10324 = vpop.f32.mrb[0].mxu0
    %v10325 = vadd.f32 %v10282, %v10324
    %v10326 = vpop.f32.mrb[0].mxu0
    %v10327 = vadd.f32 %v10284, %v10326
    %v10328 = vpop.f32.mrb[0].mxu0
    %v10329 = vadd.f32 %v10286, %v10328
    %10330 = vdwg.mxu0
    %10331 = vmatprep.subr.bf16.mxu0 %v7086
    %10332 = vmatpush1.bf16.msra.mxu0 %v7085
    %10333 = vmatprep.subr.bf16.mxu0 %v7094
    %10334 = vmatpush1.bf16.msra.mxu0 %v7093
    %10335 = vmatprep.subr.bf16.mxu0 %v7102
    %10336 = vmatpush1.bf16.msra.mxu0 %v7101
    %10337 = vmatprep.subr.bf16.mxu0 %v7110
    %10338 = vmatpush1.bf16.msra.mxu0 %v7109
    %10339 = vmatprep.subr.bf16.mxu0 %v7118
    %10340 = vmatpush1.bf16.msra.mxu0 %v7117
    %10341 = vmatprep.subr.bf16.mxu0 %v7126
    %10342 = vmatpush1.bf16.msra.mxu0 %v7125
    %10343 = vmatprep.subr.bf16.mxu0 %v7134
    %10344 = vmatpush1.bf16.msra.mxu0 %v7133
    %10345 = vmatprep.subr.bf16.mxu0 %v7142
    %10346 = vmatpush1.bf16.msra.mxu0 %v7141
    %10347 = vmatprep.subr.bf16.mxu0 %v7150
    %10348 = vmatpush1.bf16.msra.mxu0 %v7149
    %10349 = vmatprep.subr.bf16.mxu0 %v7158
    %10350 = vmatpush1.bf16.msra.mxu0 %v7157
    %10351 = vmatprep.subr.bf16.mxu0 %v7166
    %10352 = vmatpush1.bf16.msra.mxu0 %v7165
    %10353 = vmatprep.subr.bf16.mxu0 %v7174
    %10354 = vmatpush1.bf16.msra.mxu0 %v7173
    %10355 = vmatprep.subr.bf16.mxu0 %v7182
    %10356 = vmatpush1.bf16.msra.mxu0 %v7181
    %10357 = vmatprep.subr.bf16.mxu0 %v7190
    %10358 = vmatpush1.bf16.msra.mxu0 %v7189
    %10359 = vmatprep.subr.bf16.mxu0 %v7198
    %10360 = vmatpush1.bf16.msra.mxu0 %v7197
    %10361 = vmatprep.subr.bf16.mxu0 %v7206
    %10362 = vmatpush1.bf16.msra.mxu0 %v7205
    %10363 = vmatprep.mubr.bf16.mxu0 %v1924
    %10364 = vmatmul.mubr.bf16.gmra.mrb[0].mxu0 %v1923
    %v10365 = vpop.f32.mrb[0].mxu0
    %v10366 = vadd.f32 %v10323, %v10365
    %v10367 = vpop.f32.mrb[0].mxu0
    %v10368 = vadd.f32 %v10325, %v10367
    %v10369 = vpop.f32.mrb[0].mxu0
    %v10370 = vadd.f32 %v10327, %v10369
    %v10371 = vpop.f32.mrb[0].mxu0
    %v10372 = vadd.f32 %v10329, %v10371
    %10373 = vdwg.mxu0
    %10374 = vmatprep.subr.bf16.mxu0 %v7214
    %10375 = vmatpush1.bf16.msra.mxu0 %v7213
    %10376 = vmatprep.subr.bf16.mxu0 %v7222
    %10377 = vmatpush1.bf16.msra.mxu0 %v7221
    %10378 = vmatprep.subr.bf16.mxu0 %v7230
    %10379 = vmatpush1.bf16.msra.mxu0 %v7229
    %10380 = vmatprep.subr.bf16.mxu0 %v7238
    %10381 = vmatpush1.bf16.msra.mxu0 %v7237
    %10382 = vmatprep.subr.bf16.mxu0 %v7246
    %10383 = vmatpush1.bf16.msra.mxu0 %v7245
    %10384 = vmatprep.subr.bf16.mxu0 %v7254
    %10385 = vmatpush1.bf16.msra.mxu0 %v7253
    %10386 = vmatprep.subr.bf16.mxu0 %v7262
    %10387 = vmatpush1.bf16.msra.mxu0 %v7261
    %10388 = vmatprep.subr.bf16.mxu0 %v7270
    %10389 = vmatpush1.bf16.msra.mxu0 %v7269
    %10390 = vmatprep.subr.bf16.mxu0 %v7278
    %10391 = vmatpush1.bf16.msra.mxu0 %v7277
    %10392 = vmatprep.subr.bf16.mxu0 %v7286
    %10393 = vmatpush1.bf16.msra.mxu0 %v7285
    %10394 = vmatprep.subr.bf16.mxu0 %v7294
    %10395 = vmatpush1.bf16.msra.mxu0 %v7293
    %10396 = vmatprep.subr.bf16.mxu0 %v7302
    %10397 = vmatpush1.bf16.msra.mxu0 %v7301
    %10398 = vmatprep.subr.bf16.mxu0 %v7310
    %10399 = vmatpush1.bf16.msra.mxu0 %v7309
    %10400 = vmatprep.subr.bf16.mxu0 %v7318
    %10401 = vmatpush1.bf16.msra.mxu0 %v7317
    %10402 = vmatprep.subr.bf16.mxu0 %v7326
    %10403 = vmatpush1.bf16.msra.mxu0 %v7325
    %10404 = vmatprep.subr.bf16.mxu0 %v7334
    %10405 = vmatpush1.bf16.msra.mxu0 %v7333
    %10406 = vmatprep.mubr.bf16.mxu0 %v1926
    %10407 = vmatmul.mubr.bf16.gmra.mrb[0].mxu0 %v1925
    %v10408 = vpop.f32.mrb[0].mxu0
    %v10409 = vadd.f32 %v10366, %v10408
    %v10410 = vpop.f32.mrb[0].mxu0
    %v10411 = vadd.f32 %v10368, %v10410
    %v10412 = vpop.f32.mrb[0].mxu0
    %v10413 = vadd.f32 %v10370, %v10412
    %v10414 = vpop.f32.mrb[0].mxu0
    %v10415 = vadd.f32 %v10372, %v10414
    %10416 = vdwg.mxu0
    %10417 = vmatprep.subr.bf16.mxu0 %v7342
    %10418 = vmatpush1.bf16.msra.mxu0 %v7341
    %10419 = vmatprep.subr.bf16.mxu0 %v7350
    %10420 = vmatpush1.bf16.msra.mxu0 %v7349
    %10421 = vmatprep.subr.bf16.mxu0 %v7358
    %10422 = vmatpush1.bf16.msra.mxu0 %v7357
    %10423 = vmatprep.subr.bf16.mxu0 %v7366
    %10424 = vmatpush1.bf16.msra.mxu0 %v7365
    %10425 = vmatprep.subr.bf16.mxu0 %v7374
    %10426 = vmatpush1.bf16.msra.mxu0 %v7373
    %10427 = vmatprep.subr.bf16.mxu0 %v7382
    %10428 = vmatpush1.bf16.msra.mxu0 %v7381
    %10429 = vmatprep.subr.bf16.mxu0 %v7390
    %10430 = vmatpush1.bf16.msra.mxu0 %v7389
    %10431 = vmatprep.subr.bf16.mxu0 %v7398
    %10432 = vmatpush1.bf16.msra.mxu0 %v7397
    %10433 = vmatprep.subr.bf16.mxu0 %v7406
    %10434 = vmatpush1.bf16.msra.mxu0 %v7405
    %10435 = vmatprep.subr.bf16.mxu0 %v7414
    %10436 = vmatpush1.bf16.msra.mxu0 %v7413
    %10437 = vmatprep.subr.bf16.mxu0 %v7422
    %10438 = vmatpush1.bf16.msra.mxu0 %v7421
    %10439 = vmatprep.subr.bf16.mxu0 %v7430
    %10440 = vmatpush1.bf16.msra.mxu0 %v7429
    %10441 = vmatprep.subr.bf16.mxu0 %v7438
    %10442 = vmatpush1.bf16.msra.mxu0 %v7437
    %10443 = vmatprep.subr.bf16.mxu0 %v7446
    %10444 = vmatpush1.bf16.msra.mxu0 %v7445
    %10445 = vmatprep.subr.bf16.mxu0 %v7454
    %10446 = vmatpush1.bf16.msra.mxu0 %v7453
    %10447 = vmatprep.subr.bf16.mxu0 %v7462
    %10448 = vmatpush1.bf16.msra.mxu0 %v7461
    %10449 = vmatprep.mubr.bf16.mxu0 %v1928
    %10450 = vmatmul.mubr.bf16.gmra.mrb[0].mxu0 %v1927
    %v10451 = vpop.f32.mrb[0].mxu0
    %v10452 = vadd.f32 %v10409, %v10451
    %v10453 = vpop.f32.mrb[0].mxu0
    %v10454 = vadd.f32 %v10411, %v10453
    %v10455 = vpop.f32.mrb[0].mxu0
    %v10456 = vadd.f32 %v10413, %v10455
    %v10457 = vpop.f32.mrb[0].mxu0
    %v10458 = vadd.f32 %v10415, %v10457
    %10459 = vdwg.mxu0
    %10460 = vmatprep.subr.bf16.mxu0 %v7470
    %10461 = vmatpush1.bf16.msra.mxu0 %v7469
    %10462 = vmatprep.subr.bf16.mxu0 %v7478
    %10463 = vmatpush1.bf16.msra.mxu0 %v7477
    %10464 = vmatprep.subr.bf16.mxu0 %v7486
    %10465 = vmatpush1.bf16.msra.mxu0 %v7485
    %10466 = vmatprep.subr.bf16.mxu0 %v7494
    %10467 = vmatpush1.bf16.msra.mxu0 %v7493
    %10468 = vmatprep.subr.bf16.mxu0 %v7502
    %10469 = vmatpush1.bf16.msra.mxu0 %v7501
    %10470 = vmatprep.subr.bf16.mxu0 %v7510
    %10471 = vmatpush1.bf16.msra.mxu0 %v7509
    %10472 = vmatprep.subr.bf16.mxu0 %v7518
    %10473 = vmatpush1.bf16.msra.mxu0 %v7517
    %10474 = vmatprep.subr.bf16.mxu0 %v7526
    %10475 = vmatpush1.bf16.msra.mxu0 %v7525
    %10476 = vmatprep.subr.bf16.mxu0 %v7534
    %10477 = vmatpush1.bf16.msra.mxu0 %v7533
    %10478 = vmatprep.subr.bf16.mxu0 %v7542
    %10479 = vmatpush1.bf16.msra.mxu0 %v7541
    %10480 = vmatprep.subr.bf16.mxu0 %v7550
    %10481 = vmatpush1.bf16.msra.mxu0 %v7549
    %10482 = vmatprep.subr.bf16.mxu0 %v7558
    %10483 = vmatpush1.bf16.msra.mxu0 %v7557
    %10484 = vmatprep.subr.bf16.mxu0 %v7566
    %10485 = vmatpush1.bf16.msra.mxu0 %v7565
    %10486 = vmatprep.subr.bf16.mxu0 %v7574
    %10487 = vmatpush1.bf16.msra.mxu0 %v7573
    %10488 = vmatprep.subr.bf16.mxu0 %v7582
    %10489 = vmatpush1.bf16.msra.mxu0 %v7581
    %10490 = vmatprep.subr.bf16.mxu0 %v7590
    %10491 = vmatpush1.bf16.msra.mxu0 %v7589
    %10492 = vmatprep.mubr.bf16.mxu0 %v1930
    %10493 = vmatmul.mubr.bf16.gmra.mrb[0].mxu0 %v1929
    %v10494 = vpop.f32.mrb[0].mxu0
    %v10495 = vadd.f32 %v10452, %v10494
    %v10496 = vpop.f32.mrb[0].mxu0
    %v10497 = vadd.f32 %v10454, %v10496
    %v10498 = vpop.f32.mrb[0].mxu0
    %v10499 = vadd.f32 %v10456, %v10498
    %v10500 = vpop.f32.mrb[0].mxu0
    %v10501 = vadd.f32 %v10458, %v10500
    %10502 = vdwg.mxu0
    %10503 = vmatprep.subr.bf16.mxu0 %v7598
    %10504 = vmatpush1.bf16.msra.mxu0 %v7597
    %10505 = vmatprep.subr.bf16.mxu0 %v7606
    %10506 = vmatpush1.bf16.msra.mxu0 %v7605
    %10507 = vmatprep.subr.bf16.mxu0 %v7614
    %10508 = vmatpush1.bf16.msra.mxu0 %v7613
    %10509 = vmatprep.subr.bf16.mxu0 %v7622
    %10510 = vmatpush1.bf16.msra.mxu0 %v7621
    %10511 = vmatprep.subr.bf16.mxu0 %v7630
    %10512 = vmatpush1.bf16.msra.mxu0 %v7629
    %10513 = vmatprep.subr.bf16.mxu0 %v7638
    %10514 = vmatpush1.bf16.msra.mxu0 %v7637
    %10515 = vmatprep.subr.bf16.mxu0 %v7646
    %10516 = vmatpush1.bf16.msra.mxu0 %v7645
    %10517 = vmatprep.subr.bf16.mxu0 %v7654
    %10518 = vmatpush1.bf16.msra.mxu0 %v7653
    %10519 = vmatprep.subr.bf16.mxu0 %v7662
    %10520 = vmatpush1.bf16.msra.mxu0 %v7661
    %10521 = vmatprep.subr.bf16.mxu0 %v7670
    %10522 = vmatpush1.bf16.msra.mxu0 %v7669
    %10523 = vmatprep.subr.bf16.mxu0 %v7678
    %10524 = vmatpush1.bf16.msra.mxu0 %v7677
    %10525 = vmatprep.subr.bf16.mxu0 %v7686
    %10526 = vmatpush1.bf16.msra.mxu0 %v7685
    %10527 = vmatprep.subr.bf16.mxu0 %v7694
    %10528 = vmatpush1.bf16.msra.mxu0 %v7693
    %10529 = vmatprep.subr.bf16.mxu0 %v7702
    %10530 = vmatpush1.bf16.msra.mxu0 %v7701
    %10531 = vmatprep.subr.bf16.mxu0 %v7710
    %10532 = vmatpush1.bf16.msra.mxu0 %v7709
    %10533 = vmatprep.subr.bf16.mxu0 %v7718
    %10534 = vmatpush1.bf16.msra.mxu0 %v7717
    %10535 = vmatprep.mubr.bf16.mxu0 %v1932
    %10536 = vmatmul.mubr.bf16.gmra.mrb[0].mxu0 %v1931
    %v10537 = vpop.f32.mrb[0].mxu0
    %v10538 = vadd.f32 %v10495, %v10537
    %v10539 = vpop.f32.mrb[0].mxu0
    %v10540 = vadd.f32 %v10497, %v10539
    %v10541 = vpop.f32.mrb[0].mxu0
    %v10542 = vadd.f32 %v10499, %v10541
    %v10543 = vpop.f32.mrb[0].mxu0
    %v10544 = vadd.f32 %v10501, %v10543
    %10545 = vdwg.mxu0
    %10546 = vmatprep.subr.bf16.mxu0 %v7726
    %10547 = vmatpush1.bf16.msra.mxu0 %v7725
    %10548 = vmatprep.subr.bf16.mxu0 %v7734
    %10549 = vmatpush1.bf16.msra.mxu0 %v7733
    %10550 = vmatprep.subr.bf16.mxu0 %v7742
    %10551 = vmatpush1.bf16.msra.mxu0 %v7741
    %10552 = vmatprep.subr.bf16.mxu0 %v7750
    %10553 = vmatpush1.bf16.msra.mxu0 %v7749
    %10554 = vmatprep.subr.bf16.mxu0 %v7758
    %10555 = vmatpush1.bf16.msra.mxu0 %v7757
    %10556 = vmatprep.subr.bf16.mxu0 %v7766
    %10557 = vmatpush1.bf16.msra.mxu0 %v7765
    %10558 = vmatprep.subr.bf16.mxu0 %v7774
    %10559 = vmatpush1.bf16.msra.mxu0 %v7773
    %10560 = vmatprep.subr.bf16.mxu0 %v7782
    %10561 = vmatpush1.bf16.msra.mxu0 %v7781
    %10562 = vmatprep.subr.bf16.mxu0 %v7790
    %10563 = vmatpush1.bf16.msra.mxu0 %v7789
    %10564 = vmatprep.subr.bf16.mxu0 %v7798
    %10565 = vmatpush1.bf16.msra.mxu0 %v7797
    %10566 = vmatprep.subr.bf16.mxu0 %v7806
    %10567 = vmatpush1.bf16.msra.mxu0 %v7805
    %10568 = vmatprep.subr.bf16.mxu0 %v7814
    %10569 = vmatpush1.bf16.msra.mxu0 %v7813
    %10570 = vmatprep.subr.bf16.mxu0 %v7822
    %10571 = vmatpush1.bf16.msra.mxu0 %v7821
    %10572 = vmatprep.subr.bf16.mxu0 %v7830
    %10573 = vmatpush1.bf16.msra.mxu0 %v7829
    %10574 = vmatprep.subr.bf16.mxu0 %v7838
    %10575 = vmatpush1.bf16.msra.mxu0 %v7837
    %10576 = vmatprep.subr.bf16.mxu0 %v7846
    %10577 = vmatpush1.bf16.msra.mxu0 %v7845
    %10578 = vmatprep.mubr.bf16.mxu0 %v1934
    %10579 = vmatmul.mubr.bf16.gmra.mrb[0].mxu0 %v1933
    %v10580 = vpop.f32.mrb[0].mxu0
    %v10581 = vadd.f32 %v10538, %v10580
    %v10582 = vpop.f32.mrb[0].mxu0
    %v10583 = vadd.f32 %v10540, %v10582
    %v10584 = vpop.f32.mrb[0].mxu0
    %v10585 = vadd.f32 %v10542, %v10584
    %v10586 = vpop.f32.mrb[0].mxu0
    %v10587 = vadd.f32 %v10544, %v10586
    %10588 = vdwg.mxu0
    %10589 = vmatprep.subr.bf16.mxu0 %v7854
    %10590 = vmatpush1.bf16.msra.mxu0 %v7853
    %10591 = vmatprep.subr.bf16.mxu0 %v7862
    %10592 = vmatpush1.bf16.msra.mxu0 %v7861
    %10593 = vmatprep.subr.bf16.mxu0 %v7870
    %10594 = vmatpush1.bf16.msra.mxu0 %v7869
    %10595 = vmatprep.subr.bf16.mxu0 %v7878
    %10596 = vmatpush1.bf16.msra.mxu0 %v7877
    %10597 = vmatprep.subr.bf16.mxu0 %v7886
    %10598 = vmatpush1.bf16.msra.mxu0 %v7885
    %10599 = vmatprep.subr.bf16.mxu0 %v7894
    %10600 = vmatpush1.bf16.msra.mxu0 %v7893
    %10601 = vmatprep.subr.bf16.mxu0 %v7902
    %10602 = vmatpush1.bf16.msra.mxu0 %v7901
    %10603 = vmatprep.subr.bf16.mxu0 %v7910
    %10604 = vmatpush1.bf16.msra.mxu0 %v7909
    %10605 = vmatprep.subr.bf16.mxu0 %v7918
    %10606 = vmatpush1.bf16.msra.mxu0 %v7917
    %10607 = vmatprep.subr.bf16.mxu0 %v7926
    %10608 = vmatpush1.bf16.msra.mxu0 %v7925
    %10609 = vmatprep.subr.bf16.mxu0 %v7934
    %10610 = vmatpush1.bf16.msra.mxu0 %v7933
    %10611 = vmatprep.subr.bf16.mxu0 %v7942
    %10612 = vmatpush1.bf16.msra.mxu0 %v7941
    %10613 = vmatprep.subr.bf16.mxu0 %v7950
    %10614 = vmatpush1.bf16.msra.mxu0 %v7949
    %10615 = vmatprep.subr.bf16.mxu0 %v7958
    %10616 = vmatpush1.bf16.msra.mxu0 %v7957
    %10617 = vmatprep.subr.bf16.mxu0 %v7966
    %10618 = vmatpush1.bf16.msra.mxu0 %v7965
    %10619 = vmatprep.subr.bf16.mxu0 %v7974
    %10620 = vmatpush1.bf16.msra.mxu0 %v7973
    %10621 = vmatprep.mubr.bf16.mxu0 %v1936
    %10622 = vmatmul.mubr.bf16.gmra.mrb[0].mxu0 %v1935
    %v10623 = vpop.f32.mrb[0].mxu0
    %v10624 = vadd.f32 %v10581, %v10623
    %v10625 = vpop.f32.mrb[0].mxu0
    %v10626 = vadd.f32 %v10583, %v10625
    %v10627 = vpop.f32.mrb[0].mxu0
    %v10628 = vadd.f32 %v10585, %v10627
    %v10629 = vpop.f32.mrb[0].mxu0
    %v10630 = vadd.f32 %v10587, %v10629
    %10631 = vdwg.mxu0
    %10632 = vmatprep.subr.bf16.mxu0 %v7982
    %10633 = vmatpush1.bf16.msra.mxu0 %v7981
    %10634 = vmatprep.subr.bf16.mxu0 %v7990
    %10635 = vmatpush1.bf16.msra.mxu0 %v7989
    %10636 = vmatprep.subr.bf16.mxu0 %v7998
    %10637 = vmatpush1.bf16.msra.mxu0 %v7997
    %10638 = vmatprep.subr.bf16.mxu0 %v8006
    %10639 = vmatpush1.bf16.msra.mxu0 %v8005
    %10640 = vmatprep.subr.bf16.mxu0 %v8014
    %10641 = vmatpush1.bf16.msra.mxu0 %v8013
    %10642 = vmatprep.subr.bf16.mxu0 %v8022
    %10643 = vmatpush1.bf16.msra.mxu0 %v8021
    %10644 = vmatprep.subr.bf16.mxu0 %v8030
    %10645 = vmatpush1.bf16.msra.mxu0 %v8029
    %10646 = vmatprep.subr.bf16.mxu0 %v8038
    %10647 = vmatpush1.bf16.msra.mxu0 %v8037
    %10648 = vmatprep.subr.bf16.mxu0 %v8046
    %10649 = vmatpush1.bf16.msra.mxu0 %v8045
    %10650 = vmatprep.subr.bf16.mxu0 %v8054
    %10651 = vmatpush1.bf16.msra.mxu0 %v8053
    %10652 = vmatprep.subr.bf16.mxu0 %v8062
    %10653 = vmatpush1.bf16.msra.mxu0 %v8061
    %10654 = vmatprep.subr.bf16.mxu0 %v8070
    %10655 = vmatpush1.bf16.msra.mxu0 %v8069
    %10656 = vmatprep.subr.bf16.mxu0 %v8078
    %10657 = vmatpush1.bf16.msra.mxu0 %v8077
    %10658 = vmatprep.subr.bf16.mxu0 %v8086
    %10659 = vmatpush1.bf16.msra.mxu0 %v8085
    %10660 = vmatprep.subr.bf16.mxu0 %v8094
    %10661 = vmatpush1.bf16.msra.mxu0 %v8093
    %10662 = vmatprep.subr.bf16.mxu0 %v8102
    %10663 = vmatpush1.bf16.msra.mxu0 %v8101
    %10664 = vmatprep.mubr.bf16.mxu0 %v1938
    %10665 = vmatmul.mubr.bf16.gmra.mrb[0].mxu0 %v1937
    %v10666 = vpop.f32.mrb[0].mxu0
    %v10667 = vadd.f32 %v10624, %v10666
    %v10668 = vpop.f32.mrb[0].mxu0
    %v10669 = vadd.f32 %v10626, %v10668
    %v10670 = vpop.f32.mrb[0].mxu0
    %v10671 = vadd.f32 %v10628, %v10670
    %v10672 = vpop.f32.mrb[0].mxu0
    %v10673 = vadd.f32 %v10630, %v10672
    %10674 = vdwg.mxu0
    %10675 = vmatprep.subr.bf16.mxu0 %v6576
    %10676 = vmatpush1.bf16.msra.mxu0 %v6575
    %10677 = vmatprep.subr.bf16.mxu0 %v6584
    %10678 = vmatpush1.bf16.msra.mxu0 %v6583
    %10679 = vmatprep.subr.bf16.mxu0 %v6592
    %10680 = vmatpush1.bf16.msra.mxu0 %v6591
    %10681 = vmatprep.subr.bf16.mxu0 %v6600
    %10682 = vmatpush1.bf16.msra.mxu0 %v6599
    %10683 = vmatprep.subr.bf16.mxu0 %v6608
    %10684 = vmatpush1.bf16.msra.mxu0 %v6607
    %10685 = vmatprep.subr.bf16.mxu0 %v6616
    %10686 = vmatpush1.bf16.msra.mxu0 %v6615
    %10687 = vmatprep.subr.bf16.mxu0 %v6624
    %10688 = vmatpush1.bf16.msra.mxu0 %v6623
    %10689 = vmatprep.subr.bf16.mxu0 %v6632
    %10690 = vmatpush1.bf16.msra.mxu0 %v6631
    %10691 = vmatprep.subr.bf16.mxu0 %v6640
    %10692 = vmatpush1.bf16.msra.mxu0 %v6639
    %10693 = vmatprep.subr.bf16.mxu0 %v6648
    %10694 = vmatpush1.bf16.msra.mxu0 %v6647
    %10695 = vmatprep.subr.bf16.mxu0 %v6656
    %10696 = vmatpush1.bf16.msra.mxu0 %v6655
    %10697 = vmatprep.subr.bf16.mxu0 %v6664
    %10698 = vmatpush1.bf16.msra.mxu0 %v6663
    %10699 = vmatprep.subr.bf16.mxu0 %v6672
    %10700 = vmatpush1.bf16.msra.mxu0 %v6671
    %10701 = vmatprep.subr.bf16.mxu0 %v6680
    %10702 = vmatpush1.bf16.msra.mxu0 %v6679
    %10703 = vmatprep.subr.bf16.mxu0 %v6688
    %10704 = vmatpush1.bf16.msra.mxu0 %v6687
    %10705 = vmatprep.subr.bf16.mxu0 %v6696
    %10706 = vmatpush1.bf16.msra.mxu0 %v6695
    %10707 = vmatprep.mubr.bf16.mxu0 %v1916
    %10708 = vmatmul.mubr.bf16.gmra.mrb[0].mxu0 %v1915
    %v10709 = vpop.f32.mrb[0].mxu0
    %v10710 = vadd.f32 %v1822, %v10709
    %v10711 = vpop.f32.mrb[0].mxu0
    %v10712 = vadd.f32 %v1826, %v10711
    %v10713 = vpop.f32.mrb[0].mxu0
    %v10714 = vadd.f32 %v1822, %v10713
    %v10715 = vpop.f32.mrb[0].mxu0
    %v10716 = vadd.f32 %v1826, %v10715
    %10717 = vdwg.mxu0
    %10718 = vmatprep.subr.bf16.mxu0 %v6704
    %10719 = vmatpush1.bf16.msra.mxu0 %v6703
    %10720 = vmatprep.subr.bf16.mxu0 %v6712
    %10721 = vmatpush1.bf16.msra.mxu0 %v6711
    %10722 = vmatprep.subr.bf16.mxu0 %v6720
    %10723 = vmatpush1.bf16.msra.mxu0 %v6719
    %10724 = vmatprep.subr.bf16.mxu0 %v6728
    %10725 = vmatpush1.bf16.msra.mxu0 %v6727
    %10726 = vmatprep.subr.bf16.mxu0 %v6736
    %10727 = vmatpush1.bf16.msra.mxu0 %v6735
    %10728 = vmatprep.subr.bf16.mxu0 %v6744
    %10729 = vmatpush1.bf16.msra.mxu0 %v6743
    %10730 = vmatprep.subr.bf16.mxu0 %v6752
    %10731 = vmatpush1.bf16.msra.mxu0 %v6751
    %10732 = vmatprep.subr.bf16.mxu0 %v6760
    %10733 = vmatpush1.bf16.msra.mxu0 %v6759
    %10734 = vmatprep.subr.bf16.mxu0 %v6768
    %10735 = vmatpush1.bf16.msra.mxu0 %v6767
    %10736 = vmatprep.subr.bf16.mxu0 %v6776
    %10737 = vmatpush1.bf16.msra.mxu0 %v6775
    %10738 = vmatprep.subr.bf16.mxu0 %v6784
    %10739 = vmatpush1.bf16.msra.mxu0 %v6783
    %10740 = vmatprep.subr.bf16.mxu0 %v6792
    %10741 = vmatpush1.bf16.msra.mxu0 %v6791
    %10742 = vmatprep.subr.bf16.mxu0 %v6800
    %10743 = vmatpush1.bf16.msra.mxu0 %v6799
    %10744 = vmatprep.subr.bf16.mxu0 %v6808
    %10745 = vmatpush1.bf16.msra.mxu0 %v6807
    %10746 = vmatprep.subr.bf16.mxu0 %v6816
    %10747 = vmatpush1.bf16.msra.mxu0 %v6815
    %10748 = vmatprep.subr.bf16.mxu0 %v6824
    %10749 = vmatpush1.bf16.msra.mxu0 %v6823
    %10750 = vmatprep.mubr.bf16.mxu0 %v1918
    %10751 = vmatmul.mubr.bf16.gmra.mrb[0].mxu0 %v1917
    %v10752 = vpop.f32.mrb[0].mxu0
    %v10753 = vadd.f32 %v10710, %v10752
    %v10754 = vpop.f32.mrb[0].mxu0
    %v10755 = vadd.f32 %v10712, %v10754
    %v10756 = vpop.f32.mrb[0].mxu0
    %v10757 = vadd.f32 %v10714, %v10756
    %v10758 = vpop.f32.mrb[0].mxu0
    %v10759 = vadd.f32 %v10716, %v10758
    %10760 = vdwg.mxu0
    %10761 = vmatprep.subr.bf16.mxu0 %v6832
    %10762 = vmatpush1.bf16.msra.mxu0 %v6831
    %10763 = vmatprep.subr.bf16.mxu0 %v6840
    %10764 = vmatpush1.bf16.msra.mxu0 %v6839
    %10765 = vmatprep.subr.bf16.mxu0 %v6848
    %10766 = vmatpush1.bf16.msra.mxu0 %v6847
    %10767 = vmatprep.subr.bf16.mxu0 %v6856
    %10768 = vmatpush1.bf16.msra.mxu0 %v6855
    %10769 = vmatprep.subr.bf16.mxu0 %v6864
    %10770 = vmatpush1.bf16.msra.mxu0 %v6863
    %10771 = vmatprep.subr.bf16.mxu0 %v6872
    %10772 = vmatpush1.bf16.msra.mxu0 %v6871
    %10773 = vmatprep.subr.bf16.mxu0 %v6880
    %10774 = vmatpush1.bf16.msra.mxu0 %v6879
    %10775 = vmatprep.subr.bf16.mxu0 %v6888
    %10776 = vmatpush1.bf16.msra.mxu0 %v6887
    %10777 = vmatprep.subr.bf16.mxu0 %v6896
    %10778 = vmatpush1.bf16.msra.mxu0 %v6895
    %10779 = vmatprep.subr.bf16.mxu0 %v6904
    %10780 = vmatpush1.bf16.msra.mxu0 %v6903
    %10781 = vmatprep.subr.bf16.mxu0 %v6912
    %10782 = vmatpush1.bf16.msra.mxu0 %v6911
    %10783 = vmatprep.subr.bf16.mxu0 %v6920
    %10784 = vmatpush1.bf16.msra.mxu0 %v6919
    %10785 = vmatprep.subr.bf16.mxu0 %v6928
    %10786 = vmatpush1.bf16.msra.mxu0 %v6927
    %10787 = vmatprep.subr.bf16.mxu0 %v6936
    %10788 = vmatpush1.bf16.msra.mxu0 %v6935
    %10789 = vmatprep.subr.bf16.mxu0 %v6944
    %10790 = vmatpush1.bf16.msra.mxu0 %v6943
    %10791 = vmatprep.subr.bf16.mxu0 %v6952
    %10792 = vmatpush1.bf16.msra.mxu0 %v6951
    %10793 = vmatprep.mubr.bf16.mxu0 %v1920
    %10794 = vmatmul.mubr.bf16.gmra.mrb[0].mxu0 %v1919
    %v10795 = vpop.f32.mrb[0].mxu0
    %v10796 = vadd.f32 %v10753, %v10795
    %v10797 = vpop.f32.mrb[0].mxu0
    %v10798 = vadd.f32 %v10755, %v10797
    %v10799 = vpop.f32.mrb[0].mxu0
    %v10800 = vadd.f32 %v10757, %v10799
    %v10801 = vpop.f32.mrb[0].mxu0
    %v10802 = vadd.f32 %v10759, %v10801
    %10803 = vdwg.mxu0
    %10804 = vmatprep.subr.bf16.mxu0 %v6960
    %10805 = vmatpush1.bf16.msra.mxu0 %v6959
    %10806 = vmatprep.subr.bf16.mxu0 %v6968
    %10807 = vmatpush1.bf16.msra.mxu0 %v6967
    %10808 = vmatprep.subr.bf16.mxu0 %v6976
    %10809 = vmatpush1.bf16.msra.mxu0 %v6975
    %10810 = vmatprep.subr.bf16.mxu0 %v6984
    %10811 = vmatpush1.bf16.msra.mxu0 %v6983
    %10812 = vmatprep.subr.bf16.mxu0 %v6992
    %10813 = vmatpush1.bf16.msra.mxu0 %v6991
    %10814 = vmatprep.subr.bf16.mxu0 %v7000
    %10815 = vmatpush1.bf16.msra.mxu0 %v6999
    %10816 = vmatprep.subr.bf16.mxu0 %v7008
    %10817 = vmatpush1.bf16.msra.mxu0 %v7007
    %10818 = vmatprep.subr.bf16.mxu0 %v7016
    %10819 = vmatpush1.bf16.msra.mxu0 %v7015
    %10820 = vmatprep.subr.bf16.mxu0 %v7024
    %10821 = vmatpush1.bf16.msra.mxu0 %v7023
    %10822 = vmatprep.subr.bf16.mxu0 %v7032
    %10823 = vmatpush1.bf16.msra.mxu0 %v7031
    %10824 = vmatprep.subr.bf16.mxu0 %v7040
    %10825 = vmatpush1.bf16.msra.mxu0 %v7039
    %10826 = vmatprep.subr.bf16.mxu0 %v7048
    %10827 = vmatpush1.bf16.msra.mxu0 %v7047
    %10828 = vmatprep.subr.bf16.mxu0 %v7056
    %10829 = vmatpush1.bf16.msra.mxu0 %v7055
    %10830 = vmatprep.subr.bf16.mxu0 %v7064
    %10831 = vmatpush1.bf16.msra.mxu0 %v7063
    %10832 = vmatprep.subr.bf16.mxu0 %v7072
    %10833 = vmatpush1.bf16.msra.mxu0 %v7071
    %10834 = vmatprep.subr.bf16.mxu0 %v7080
    %10835 = vmatpush1.bf16.msra.mxu0 %v7079
    %10836 = vmatprep.mubr.bf16.mxu0 %v1922
    %10837 = vmatmul.mubr.bf16.gmra.mrb[0].mxu0 %v1921
    %v10838 = vpop.f32.mrb[0].mxu0
    %v10839 = vadd.f32 %v10796, %v10838
    %v10840 = vpop.f32.mrb[0].mxu0
    %v10841 = vadd.f32 %v10798, %v10840
    %v10842 = vpop.f32.mrb[0].mxu0
    %v10843 = vadd.f32 %v10800, %v10842
    %v10844 = vpop.f32.mrb[0].mxu0
    %v10845 = vadd.f32 %v10802, %v10844
    %10846 = vdwg.mxu0
    %10847 = vmatprep.subr.bf16.mxu0 %v7088
    %10848 = vmatpush1.bf16.msra.mxu0 %v7087
    %10849 = vmatprep.subr.bf16.mxu0 %v7096
    %10850 = vmatpush1.bf16.msra.mxu0 %v7095
    %10851 = vmatprep.subr.bf16.mxu0 %v7104
    %10852 = vmatpush1.bf16.msra.mxu0 %v7103
    %10853 = vmatprep.subr.bf16.mxu0 %v7112
    %10854 = vmatpush1.bf16.msra.mxu0 %v7111
    %10855 = vmatprep.subr.bf16.mxu0 %v7120
    %10856 = vmatpush1.bf16.msra.mxu0 %v7119
    %10857 = vmatprep.subr.bf16.mxu0 %v7128
    %10858 = vmatpush1.bf16.msra.mxu0 %v7127
    %10859 = vmatprep.subr.bf16.mxu0 %v7136
    %10860 = vmatpush1.bf16.msra.mxu0 %v7135
    %10861 = vmatprep.subr.bf16.mxu0 %v7144
    %10862 = vmatpush1.bf16.msra.mxu0 %v7143
    %10863 = vmatprep.subr.bf16.mxu0 %v7152
    %10864 = vmatpush1.bf16.msra.mxu0 %v7151
    %10865 = vmatprep.subr.bf16.mxu0 %v7160
    %10866 = vmatpush1.bf16.msra.mxu0 %v7159
    %10867 = vmatprep.subr.bf16.mxu0 %v7168
    %10868 = vmatpush1.bf16.msra.mxu0 %v7167
    %10869 = vmatprep.subr.bf16.mxu0 %v7176
    %10870 = vmatpush1.bf16.msra.mxu0 %v7175
    %10871 = vmatprep.subr.bf16.mxu0 %v7184
    %10872 = vmatpush1.bf16.msra.mxu0 %v7183
    %10873 = vmatprep.subr.bf16.mxu0 %v7192
    %10874 = vmatpush1.bf16.msra.mxu0 %v7191
    %10875 = vmatprep.subr.bf16.mxu0 %v7200
    %10876 = vmatpush1.bf16.msra.mxu0 %v7199
    %10877 = vmatprep.subr.bf16.mxu0 %v7208
    %10878 = vmatpush1.bf16.msra.mxu0 %v7207
    %10879 = vmatprep.mubr.bf16.mxu0 %v1924
    %10880 = vmatmul.mubr.bf16.gmra.mrb[0].mxu0 %v1923
    %v10881 = vpop.f32.mrb[0].mxu0
    %v10882 = vadd.f32 %v10839, %v10881
    %v10883 = vpop.f32.mrb[0].mxu0
    %v10884 = vadd.f32 %v10841, %v10883
    %v10885 = vpop.f32.mrb[0].mxu0
    %v10886 = vadd.f32 %v10843, %v10885
    %v10887 = vpop.f32.mrb[0].mxu0
    %v10888 = vadd.f32 %v10845, %v10887
    %10889 = vdwg.mxu0
    %10890 = vmatprep.subr.bf16.mxu0 %v7216
    %10891 = vmatpush1.bf16.msra.mxu0 %v7215
    %10892 = vmatprep.subr.bf16.mxu0 %v7224
    %10893 = vmatpush1.bf16.msra.mxu0 %v7223
    %10894 = vmatprep.subr.bf16.mxu0 %v7232
    %10895 = vmatpush1.bf16.msra.mxu0 %v7231
    %10896 = vmatprep.subr.bf16.mxu0 %v7240
    %10897 = vmatpush1.bf16.msra.mxu0 %v7239
    %10898 = vmatprep.subr.bf16.mxu0 %v7248
    %10899 = vmatpush1.bf16.msra.mxu0 %v7247
    %10900 = vmatprep.subr.bf16.mxu0 %v7256
    %10901 = vmatpush1.bf16.msra.mxu0 %v7255
    %10902 = vmatprep.subr.bf16.mxu0 %v7264
    %10903 = vmatpush1.bf16.msra.mxu0 %v7263
    %10904 = vmatprep.subr.bf16.mxu0 %v7272
    %10905 = vmatpush1.bf16.msra.mxu0 %v7271
    %10906 = vmatprep.subr.bf16.mxu0 %v7280
    %10907 = vmatpush1.bf16.msra.mxu0 %v7279
    %10908 = vmatprep.subr.bf16.mxu0 %v7288
    %10909 = vmatpush1.bf16.msra.mxu0 %v7287
    %10910 = vmatprep.subr.bf16.mxu0 %v7296
    %10911 = vmatpush1.bf16.msra.mxu0 %v7295
    %10912 = vmatprep.subr.bf16.mxu0 %v7304
    %10913 = vmatpush1.bf16.msra.mxu0 %v7303
    %10914 = vmatprep.subr.bf16.mxu0 %v7312
    %10915 = vmatpush1.bf16.msra.mxu0 %v7311
    %10916 = vmatprep.subr.bf16.mxu0 %v7320
    %10917 = vmatpush1.bf16.msra.mxu0 %v7319
    %10918 = vmatprep.subr.bf16.mxu0 %v7328
    %10919 = vmatpush1.bf16.msra.mxu0 %v7327
    %10920 = vmatprep.subr.bf16.mxu0 %v7336
    %10921 = vmatpush1.bf16.msra.mxu0 %v7335
    %10922 = vmatprep.mubr.bf16.mxu0 %v1926
    %10923 = vmatmul.mubr.bf16.gmra.mrb[0].mxu0 %v1925
    %v10924 = vpop.f32.mrb[0].mxu0
    %v10925 = vadd.f32 %v10882, %v10924
    %v10926 = vpop.f32.mrb[0].mxu0
    %v10927 = vadd.f32 %v10884, %v10926
    %v10928 = vpop.f32.mrb[0].mxu0
    %v10929 = vadd.f32 %v10886, %v10928
    %v10930 = vpop.f32.mrb[0].mxu0
    %v10931 = vadd.f32 %v10888, %v10930
    %10932 = vdwg.mxu0
    %10933 = vmatprep.subr.bf16.mxu0 %v7344
    %10934 = vmatpush1.bf16.msra.mxu0 %v7343
    %10935 = vmatprep.subr.bf16.mxu0 %v7352
    %10936 = vmatpush1.bf16.msra.mxu0 %v7351
    %10937 = vmatprep.subr.bf16.mxu0 %v7360
    %10938 = vmatpush1.bf16.msra.mxu0 %v7359
    %10939 = vmatprep.subr.bf16.mxu0 %v7368
    %10940 = vmatpush1.bf16.msra.mxu0 %v7367
    %10941 = vmatprep.subr.bf16.mxu0 %v7376
    %10942 = vmatpush1.bf16.msra.mxu0 %v7375
    %10943 = vmatprep.subr.bf16.mxu0 %v7384
    %10944 = vmatpush1.bf16.msra.mxu0 %v7383
    %10945 = vmatprep.subr.bf16.mxu0 %v7392
    %10946 = vmatpush1.bf16.msra.mxu0 %v7391
    %10947 = vmatprep.subr.bf16.mxu0 %v7400
    %10948 = vmatpush1.bf16.msra.mxu0 %v7399
    %10949 = vmatprep.subr.bf16.mxu0 %v7408
    %10950 = vmatpush1.bf16.msra.mxu0 %v7407
    %10951 = vmatprep.subr.bf16.mxu0 %v7416
    %10952 = vmatpush1.bf16.msra.mxu0 %v7415
    %10953 = vmatprep.subr.bf16.mxu0 %v7424
    %10954 = vmatpush1.bf16.msra.mxu0 %v7423
    %10955 = vmatprep.subr.bf16.mxu0 %v7432
    %10956 = vmatpush1.bf16.msra.mxu0 %v7431
    %10957 = vmatprep.subr.bf16.mxu0 %v7440
    %10958 = vmatpush1.bf16.msra.mxu0 %v7439
    %10959 = vmatprep.subr.bf16.mxu0 %v7448
    %10960 = vmatpush1.bf16.msra.mxu0 %v7447
    %10961 = vmatprep.subr.bf16.mxu0 %v7456
    %10962 = vmatpush1.bf16.msra.mxu0 %v7455
    %10963 = vmatprep.subr.bf16.mxu0 %v7464
    %10964 = vmatpush1.bf16.msra.mxu0 %v7463
    %10965 = vmatprep.mubr.bf16.mxu0 %v1928
    %10966 = vmatmul.mubr.bf16.gmra.mrb[0].mxu0 %v1927
    %v10967 = vpop.f32.mrb[0].mxu0
    %v10968 = vadd.f32 %v10925, %v10967
    %v10969 = vpop.f32.mrb[0].mxu0
    %v10970 = vadd.f32 %v10927, %v10969
    %v10971 = vpop.f32.mrb[0].mxu0
    %v10972 = vadd.f32 %v10929, %v10971
    %v10973 = vpop.f32.mrb[0].mxu0
    %v10974 = vadd.f32 %v10931, %v10973
    %10975 = vdwg.mxu0
    %10976 = vmatprep.subr.bf16.mxu0 %v7472
    %10977 = vmatpush1.bf16.msra.mxu0 %v7471
    %10978 = vmatprep.subr.bf16.mxu0 %v7480
    %10979 = vmatpush1.bf16.msra.mxu0 %v7479
    %10980 = vmatprep.subr.bf16.mxu0 %v7488
    %10981 = vmatpush1.bf16.msra.mxu0 %v7487
    %10982 = vmatprep.subr.bf16.mxu0 %v7496
    %10983 = vmatpush1.bf16.msra.mxu0 %v7495
    %10984 = vmatprep.subr.bf16.mxu0 %v7504
    %10985 = vmatpush1.bf16.msra.mxu0 %v7503
    %10986 = vmatprep.subr.bf16.mxu0 %v7512
    %10987 = vmatpush1.bf16.msra.mxu0 %v7511
    %10988 = vmatprep.subr.bf16.mxu0 %v7520
    %10989 = vmatpush1.bf16.msra.mxu0 %v7519
    %10990 = vmatprep.subr.bf16.mxu0 %v7528
    %10991 = vmatpush1.bf16.msra.mxu0 %v7527
    %10992 = vmatprep.subr.bf16.mxu0 %v7536
    %10993 = vmatpush1.bf16.msra.mxu0 %v7535
    %10994 = vmatprep.subr.bf16.mxu0 %v7544
    %10995 = vmatpush1.bf16.msra.mxu0 %v7543
    %10996 = vmatprep.subr.bf16.mxu0 %v7552
    %10997 = vmatpush1.bf16.msra.mxu0 %v7551
    %10998 = vmatprep.subr.bf16.mxu0 %v7560
    %10999 = vmatpush1.bf16.msra.mxu0 %v7559
    %11000 = vmatprep.subr.bf16.mxu0 %v7568
    %11001 = vmatpush1.bf16.msra.mxu0 %v7567
    %11002 = vmatprep.subr.bf16.mxu0 %v7576
    %11003 = vmatpush1.bf16.msra.mxu0 %v7575
    %11004 = vmatprep.subr.bf16.mxu0 %v7584
    %11005 = vmatpush1.bf16.msra.mxu0 %v7583
    %11006 = vmatprep.subr.bf16.mxu0 %v7592
    %11007 = vmatpush1.bf16.msra.mxu0 %v7591
    %11008 = vmatprep.mubr.bf16.mxu0 %v1930
    %11009 = vmatmul.mubr.bf16.gmra.mrb[0].mxu0 %v1929
    %v11010 = vpop.f32.mrb[0].mxu0
    %v11011 = vadd.f32 %v10968, %v11010
    %v11012 = vpop.f32.mrb[0].mxu0
    %v11013 = vadd.f32 %v10970, %v11012
    %v11014 = vpop.f32.mrb[0].mxu0
    %v11015 = vadd.f32 %v10972, %v11014
    %v11016 = vpop.f32.mrb[0].mxu0
    %v11017 = vadd.f32 %v10974, %v11016
    %11018 = vdwg.mxu0
    %11019 = vmatprep.subr.bf16.mxu0 %v7600
    %11020 = vmatpush1.bf16.msra.mxu0 %v7599
    %11021 = vmatprep.subr.bf16.mxu0 %v7608
    %11022 = vmatpush1.bf16.msra.mxu0 %v7607
    %11023 = vmatprep.subr.bf16.mxu0 %v7616
    %11024 = vmatpush1.bf16.msra.mxu0 %v7615
    %11025 = vmatprep.subr.bf16.mxu0 %v7624
    %11026 = vmatpush1.bf16.msra.mxu0 %v7623
    %11027 = vmatprep.subr.bf16.mxu0 %v7632
    %11028 = vmatpush1.bf16.msra.mxu0 %v7631
    %11029 = vmatprep.subr.bf16.mxu0 %v7640
    %11030 = vmatpush1.bf16.msra.mxu0 %v7639
    %11031 = vmatprep.subr.bf16.mxu0 %v7648
    %11032 = vmatpush1.bf16.msra.mxu0 %v7647
    %11033 = vmatprep.subr.bf16.mxu0 %v7656
    %11034 = vmatpush1.bf16.msra.mxu0 %v7655
    %11035 = vmatprep.subr.bf16.mxu0 %v7664
    %11036 = vmatpush1.bf16.msra.mxu0 %v7663
    %11037 = vmatprep.subr.bf16.mxu0 %v7672
    %11038 = vmatpush1.bf16.msra.mxu0 %v7671
    %11039 = vmatprep.subr.bf16.mxu0 %v7680
    %11040 = vmatpush1.bf16.msra.mxu0 %v7679
    %11041 = vmatprep.subr.bf16.mxu0 %v7688
    %11042 = vmatpush1.bf16.msra.mxu0 %v7687
    %11043 = vmatprep.subr.bf16.mxu0 %v7696
    %11044 = vmatpush1.bf16.msra.mxu0 %v7695
    %11045 = vmatprep.subr.bf16.mxu0 %v7704
    %11046 = vmatpush1.bf16.msra.mxu0 %v7703
    %11047 = vmatprep.subr.bf16.mxu0 %v7712
    %11048 = vmatpush1.bf16.msra.mxu0 %v7711
    %11049 = vmatprep.subr.bf16.mxu0 %v7720
    %11050 = vmatpush1.bf16.msra.mxu0 %v7719
    %11051 = vmatprep.mubr.bf16.mxu0 %v1932
    %11052 = vmatmul.mubr.bf16.gmra.mrb[0].mxu0 %v1931
    %v11053 = vpop.f32.mrb[0].mxu0
    %v11054 = vadd.f32 %v11011, %v11053
    %v11055 = vpop.f32.mrb[0].mxu0
    %v11056 = vadd.f32 %v11013, %v11055
    %v11057 = vpop.f32.mrb[0].mxu0
    %v11058 = vadd.f32 %v11015, %v11057
    %v11059 = vpop.f32.mrb[0].mxu0
    %v11060 = vadd.f32 %v11017, %v11059
    %11061 = vdwg.mxu0
    %11062 = vmatprep.subr.bf16.mxu0 %v7728
    %11063 = vmatpush1.bf16.msra.mxu0 %v7727
    %11064 = vmatprep.subr.bf16.mxu0 %v7736
    %11065 = vmatpush1.bf16.msra.mxu0 %v7735
    %11066 = vmatprep.subr.bf16.mxu0 %v7744
    %11067 = vmatpush1.bf16.msra.mxu0 %v7743
    %11068 = vmatprep.subr.bf16.mxu0 %v7752
    %11069 = vmatpush1.bf16.msra.mxu0 %v7751
    %11070 = vmatprep.subr.bf16.mxu0 %v7760
    %11071 = vmatpush1.bf16.msra.mxu0 %v7759
    %11072 = vmatprep.subr.bf16.mxu0 %v7768
    %11073 = vmatpush1.bf16.msra.mxu0 %v7767
    %11074 = vmatprep.subr.bf16.mxu0 %v7776
    %11075 = vmatpush1.bf16.msra.mxu0 %v7775
    %11076 = vmatprep.subr.bf16.mxu0 %v7784
    %11077 = vmatpush1.bf16.msra.mxu0 %v7783
    %11078 = vmatprep.subr.bf16.mxu0 %v7792
    %11079 = vmatpush1.bf16.msra.mxu0 %v7791
    %11080 = vmatprep.subr.bf16.mxu0 %v7800
    %11081 = vmatpush1.bf16.msra.mxu0 %v7799
    %11082 = vmatprep.subr.bf16.mxu0 %v7808
    %11083 = vmatpush1.bf16.msra.mxu0 %v7807
    %11084 = vmatprep.subr.bf16.mxu0 %v7816
    %11085 = vmatpush1.bf16.msra.mxu0 %v7815
    %11086 = vmatprep.subr.bf16.mxu0 %v7824
    %11087 = vmatpush1.bf16.msra.mxu0 %v7823
    %11088 = vmatprep.subr.bf16.mxu0 %v7832
    %11089 = vmatpush1.bf16.msra.mxu0 %v7831
    %11090 = vmatprep.subr.bf16.mxu0 %v7840
    %11091 = vmatpush1.bf16.msra.mxu0 %v7839
    %11092 = vmatprep.subr.bf16.mxu0 %v7848
    %11093 = vmatpush1.bf16.msra.mxu0 %v7847
    %11094 = vmatprep.mubr.bf16.mxu0 %v1934
    %11095 = vmatmul.mubr.bf16.gmra.mrb[0].mxu0 %v1933
    %v11096 = vpop.f32.mrb[0].mxu0
    %v11097 = vadd.f32 %v11054, %v11096
    %v11098 = vpop.f32.mrb[0].mxu0
    %v11099 = vadd.f32 %v11056, %v11098
    %v11100 = vpop.f32.mrb[0].mxu0
    %v11101 = vadd.f32 %v11058, %v11100
    %v11102 = vpop.f32.mrb[0].mxu0
    %v11103 = vadd.f32 %v11060, %v11102
    %11104 = vdwg.mxu0
    %11105 = vmatprep.subr.bf16.mxu0 %v7856
    %11106 = vmatpush1.bf16.msra.mxu0 %v7855
    %11107 = vmatprep.subr.bf16.mxu0 %v7864
    %11108 = vmatpush1.bf16.msra.mxu0 %v7863
    %11109 = vmatprep.subr.bf16.mxu0 %v7872
    %11110 = vmatpush1.bf16.msra.mxu0 %v7871
    %11111 = vmatprep.subr.bf16.mxu0 %v7880
    %11112 = vmatpush1.bf16.msra.mxu0 %v7879
    %11113 = vmatprep.subr.bf16.mxu0 %v7888
    %11114 = vmatpush1.bf16.msra.mxu0 %v7887
    %11115 = vmatprep.subr.bf16.mxu0 %v7896
    %11116 = vmatpush1.bf16.msra.mxu0 %v7895
    %11117 = vmatprep.subr.bf16.mxu0 %v7904
    %11118 = vmatpush1.bf16.msra.mxu0 %v7903
    %11119 = vmatprep.subr.bf16.mxu0 %v7912
    %11120 = vmatpush1.bf16.msra.mxu0 %v7911
    %11121 = vmatprep.subr.bf16.mxu0 %v7920
    %11122 = vmatpush1.bf16.msra.mxu0 %v7919
    %11123 = vmatprep.subr.bf16.mxu0 %v7928
    %11124 = vmatpush1.bf16.msra.mxu0 %v7927
    %11125 = vmatprep.subr.bf16.mxu0 %v7936
    %11126 = vmatpush1.bf16.msra.mxu0 %v7935
    %11127 = vmatprep.subr.bf16.mxu0 %v7944
    %11128 = vmatpush1.bf16.msra.mxu0 %v7943
    %11129 = vmatprep.subr.bf16.mxu0 %v7952
    %11130 = vmatpush1.bf16.msra.mxu0 %v7951
    %11131 = vmatprep.subr.bf16.mxu0 %v7960
    %11132 = vmatpush1.bf16.msra.mxu0 %v7959
    %11133 = vmatprep.subr.bf16.mxu0 %v7968
    %11134 = vmatpush1.bf16.msra.mxu0 %v7967
    %11135 = vmatprep.subr.bf16.mxu0 %v7976
    %11136 = vmatpush1.bf16.msra.mxu0 %v7975
    %11137 = vmatprep.mubr.bf16.mxu0 %v1936
    %11138 = vmatmul.mubr.bf16.gmra.mrb[0].mxu0 %v1935
    %v11139 = vpop.f32.mrb[0].mxu0
    %v11140 = vadd.f32 %v11097, %v11139
    %v11141 = vpop.f32.mrb[0].mxu0
    %v11142 = vadd.f32 %v11099, %v11141
    %v11143 = vpop.f32.mrb[0].mxu0
    %v11144 = vadd.f32 %v11101, %v11143
    %v11145 = vpop.f32.mrb[0].mxu0
    %v11146 = vadd.f32 %v11103, %v11145
    %11147 = vdwg.mxu0
    %11148 = vmatprep.subr.bf16.mxu0 %v7984
    %11149 = vmatpush1.bf16.msra.mxu0 %v7983
    %11150 = vmatprep.subr.bf16.mxu0 %v7992
    %11151 = vmatpush1.bf16.msra.mxu0 %v7991
    %11152 = vmatprep.subr.bf16.mxu0 %v8000
    %11153 = vmatpush1.bf16.msra.mxu0 %v7999
    %11154 = vmatprep.subr.bf16.mxu0 %v8008
    %11155 = vmatpush1.bf16.msra.mxu0 %v8007
    %11156 = vmatprep.subr.bf16.mxu0 %v8016
    %11157 = vmatpush1.bf16.msra.mxu0 %v8015
    %11158 = vmatprep.subr.bf16.mxu0 %v8024
    %11159 = vmatpush1.bf16.msra.mxu0 %v8023
    %11160 = vmatprep.subr.bf16.mxu0 %v8032
    %11161 = vmatpush1.bf16.msra.mxu0 %v8031
    %11162 = vmatprep.subr.bf16.mxu0 %v8040
    %11163 = vmatpush1.bf16.msra.mxu0 %v8039
    %11164 = vmatprep.subr.bf16.mxu0 %v8048
    %11165 = vmatpush1.bf16.msra.mxu0 %v8047
    %11166 = vmatprep.subr.bf16.mxu0 %v8056
    %11167 = vmatpush1.bf16.msra.mxu0 %v8055
    %11168 = vmatprep.subr.bf16.mxu0 %v8064
    %11169 = vmatpush1.bf16.msra.mxu0 %v8063
    %11170 = vmatprep.subr.bf16.mxu0 %v8072
    %11171 = vmatpush1.bf16.msra.mxu0 %v8071
    %11172 = vmatprep.subr.bf16.mxu0 %v8080
    %11173 = vmatpush1.bf16.msra.mxu0 %v8079
    %11174 = vmatprep.subr.bf16.mxu0 %v8088
    %11175 = vmatpush1.bf16.msra.mxu0 %v8087
    %11176 = vmatprep.subr.bf16.mxu0 %v8096
    %11177 = vmatpush1.bf16.msra.mxu0 %v8095
    %11178 = vmatprep.subr.bf16.mxu0 %v8104
    %11179 = vmatpush1.bf16.msra.mxu0 %v8103
    %11180 = vmatprep.mubr.bf16.mxu0 %v1938
    %11181 = vmatmul.mubr.bf16.gmra.mrb[0].mxu0 %v1937
    %v11182 = vpop.f32.mrb[0].mxu0
    %v11183 = vadd.f32 %v11140, %v11182
    %v11184 = vpop.f32.mrb[0].mxu0
    %v11185 = vadd.f32 %v11142, %v11184
    %v11186 = vpop.f32.mrb[0].mxu0
    %v11187 = vadd.f32 %v11144, %v11186
    %v11188 = vpop.f32.mrb[0].mxu0
    %v11189 = vadd.f32 %v11146, %v11188
    %11190 = vdwg.mxu0
    %11191 = vmatprep.subr.bf16.mxu0 %v6578
    %11192 = vmatpush1.bf16.msra.mxu0 %v6577
    %11193 = vmatprep.subr.bf16.mxu0 %v6586
    %11194 = vmatpush1.bf16.msra.mxu0 %v6585
    %11195 = vmatprep.subr.bf16.mxu0 %v6594
    %11196 = vmatpush1.bf16.msra.mxu0 %v6593
    %11197 = vmatprep.subr.bf16.mxu0 %v6602
    %11198 = vmatpush1.bf16.msra.mxu0 %v6601
    %11199 = vmatprep.subr.bf16.mxu0 %v6610
    %11200 = vmatpush1.bf16.msra.mxu0 %v6609
    %11201 = vmatprep.subr.bf16.mxu0 %v6618
    %11202 = vmatpush1.bf16.msra.mxu0 %v6617
    %11203 = vmatprep.subr.bf16.mxu0 %v6626
    %11204 = vmatpush1.bf16.msra.mxu0 %v6625
    %11205 = vmatprep.subr.bf16.mxu0 %v6634
    %11206 = vmatpush1.bf16.msra.mxu0 %v6633
    %11207 = vmatprep.subr.bf16.mxu0 %v6642
    %11208 = vmatpush1.bf16.msra.mxu0 %v6641
    %11209 = vmatprep.subr.bf16.mxu0 %v6650
    %11210 = vmatpush1.bf16.msra.mxu0 %v6649
    %11211 = vmatprep.subr.bf16.mxu0 %v6658
    %11212 = vmatpush1.bf16.msra.mxu0 %v6657
    %11213 = vmatprep.subr.bf16.mxu0 %v6666
    %11214 = vmatpush1.bf16.msra.mxu0 %v6665
    %11215 = vmatprep.subr.bf16.mxu0 %v6674
    %11216 = vmatpush1.bf16.msra.mxu0 %v6673
    %11217 = vmatprep.subr.bf16.mxu0 %v6682
    %11218 = vmatpush1.bf16.msra.mxu0 %v6681
    %11219 = vmatprep.subr.bf16.mxu0 %v6690
    %11220 = vmatpush1.bf16.msra.mxu0 %v6689
    %11221 = vmatprep.subr.bf16.mxu0 %v6698
    %11222 = vmatpush1.bf16.msra.mxu0 %v6697
    %11223 = vmatprep.mubr.bf16.mxu0 %v1916
    %11224 = vmatmul.mubr.bf16.gmra.mrb[0].mxu0 %v1915
    %v11225 = vpop.f32.mrb[0].mxu0
    %v11226 = vadd.f32 %v1830, %v11225
    %v11227 = vpop.f32.mrb[0].mxu0
    %v11228 = vadd.f32 %v1834, %v11227
    %v11229 = vpop.f32.mrb[0].mxu0
    %v11230 = vadd.f32 %v1830, %v11229
    %v11231 = vpop.f32.mrb[0].mxu0
    %v11232 = vadd.f32 %v1834, %v11231
    %11233 = vdwg.mxu0
    %11234 = vmatprep.subr.bf16.mxu0 %v6706
    %11235 = vmatpush1.bf16.msra.mxu0 %v6705
    %11236 = vmatprep.subr.bf16.mxu0 %v6714
    %11237 = vmatpush1.bf16.msra.mxu0 %v6713
    %11238 = vmatprep.subr.bf16.mxu0 %v6722
    %11239 = vmatpush1.bf16.msra.mxu0 %v6721
    %11240 = vmatprep.subr.bf16.mxu0 %v6730
    %11241 = vmatpush1.bf16.msra.mxu0 %v6729
    %11242 = vmatprep.subr.bf16.mxu0 %v6738
    %11243 = vmatpush1.bf16.msra.mxu0 %v6737
    %11244 = vmatprep.subr.bf16.mxu0 %v6746
    %11245 = vmatpush1.bf16.msra.mxu0 %v6745
    %11246 = vmatprep.subr.bf16.mxu0 %v6754
    %11247 = vmatpush1.bf16.msra.mxu0 %v6753
    %11248 = vmatprep.subr.bf16.mxu0 %v6762
    %11249 = vmatpush1.bf16.msra.mxu0 %v6761
    %11250 = vmatprep.subr.bf16.mxu0 %v6770
    %11251 = vmatpush1.bf16.msra.mxu0 %v6769
    %11252 = vmatprep.subr.bf16.mxu0 %v6778
    %11253 = vmatpush1.bf16.msra.mxu0 %v6777
    %11254 = vmatprep.subr.bf16.mxu0 %v6786
    %11255 = vmatpush1.bf16.msra.mxu0 %v6785
    %11256 = vmatprep.subr.bf16.mxu0 %v6794
    %11257 = vmatpush1.bf16.msra.mxu0 %v6793
    %11258 = vmatprep.subr.bf16.mxu0 %v6802
    %11259 = vmatpush1.bf16.msra.mxu0 %v6801
    %11260 = vmatprep.subr.bf16.mxu0 %v6810
    %11261 = vmatpush1.bf16.msra.mxu0 %v6809
    %11262 = vmatprep.subr.bf16.mxu0 %v6818
    %11263 = vmatpush1.bf16.msra.mxu0 %v6817
    %11264 = vmatprep.subr.bf16.mxu0 %v6826
    %11265 = vmatpush1.bf16.msra.mxu0 %v6825
    %11266 = vmatprep.mubr.bf16.mxu0 %v1918
    %11267 = vmatmul.mubr.bf16.gmra.mrb[0].mxu0 %v1917
    %v11268 = vpop.f32.mrb[0].mxu0
    %v11269 = vadd.f32 %v11226, %v11268
    %v11270 = vpop.f32.mrb[0].mxu0
    %v11271 = vadd.f32 %v11228, %v11270
    %v11272 = vpop.f32.mrb[0].mxu0
    %v11273 = vadd.f32 %v11230, %v11272
    %v11274 = vpop.f32.mrb[0].mxu0
    %v11275 = vadd.f32 %v11232, %v11274
    %11276 = vdwg.mxu0
    %11277 = vmatprep.subr.bf16.mxu0 %v6834
    %11278 = vmatpush1.bf16.msra.mxu0 %v6833
    %11279 = vmatprep.subr.bf16.mxu0 %v6842
    %11280 = vmatpush1.bf16.msra.mxu0 %v6841
    %11281 = vmatprep.subr.bf16.mxu0 %v6850
    %11282 = vmatpush1.bf16.msra.mxu0 %v6849
    %11283 = vmatprep.subr.bf16.mxu0 %v6858
    %11284 = vmatpush1.bf16.msra.mxu0 %v6857
    %11285 = vmatprep.subr.bf16.mxu0 %v6866
    %11286 = vmatpush1.bf16.msra.mxu0 %v6865
    %11287 = vmatprep.subr.bf16.mxu0 %v6874
    %11288 = vmatpush1.bf16.msra.mxu0 %v6873
    %11289 = vmatprep.subr.bf16.mxu0 %v6882
    %11290 = vmatpush1.bf16.msra.mxu0 %v6881
    %11291 = vmatprep.subr.bf16.mxu0 %v6890
    %11292 = vmatpush1.bf16.msra.mxu0 %v6889
    %11293 = vmatprep.subr.bf16.mxu0 %v6898
    %11294 = vmatpush1.bf16.msra.mxu0 %v6897
    %11295 = vmatprep.subr.bf16.mxu0 %v6906
    %11296 = vmatpush1.bf16.msra.mxu0 %v6905
    %11297 = vmatprep.subr.bf16.mxu0 %v6914
    %11298 = vmatpush1.bf16.msra.mxu0 %v6913
    %11299 = vmatprep.subr.bf16.mxu0 %v6922
    %11300 = vmatpush1.bf16.msra.mxu0 %v6921
    %11301 = vmatprep.subr.bf16.mxu0 %v6930
    %11302 = vmatpush1.bf16.msra.mxu0 %v6929
    %11303 = vmatprep.subr.bf16.mxu0 %v6938
    %11304 = vmatpush1.bf16.msra.mxu0 %v6937
    %11305 = vmatprep.subr.bf16.mxu0 %v6946
    %11306 = vmatpush1.bf16.msra.mxu0 %v6945
    %11307 = vmatprep.subr.bf16.mxu0 %v6954
    %11308 = vmatpush1.bf16.msra.mxu0 %v6953
    %11309 = vmatprep.mubr.bf16.mxu0 %v1920
    %11310 = vmatmul.mubr.bf16.gmra.mrb[0].mxu0 %v1919
    %v11311 = vpop.f32.mrb[0].mxu0
    %v11312 = vadd.f32 %v11269, %v11311
    %v11313 = vpop.f32.mrb[0].mxu0
    %v11314 = vadd.f32 %v11271, %v11313
    %v11315 = vpop.f32.mrb[0].mxu0
    %v11316 = vadd.f32 %v11273, %v11315
    %v11317 = vpop.f32.mrb[0].mxu0
    %v11318 = vadd.f32 %v11275, %v11317
    %11319 = vdwg.mxu0
    %11320 = vmatprep.subr.bf16.mxu0 %v6962
    %11321 = vmatpush1.bf16.msra.mxu0 %v6961
    %11322 = vmatprep.subr.bf16.mxu0 %v6970
    %11323 = vmatpush1.bf16.msra.mxu0 %v6969
    %11324 = vmatprep.subr.bf16.mxu0 %v6978
    %11325 = vmatpush1.bf16.msra.mxu0 %v6977
    %11326 = vmatprep.subr.bf16.mxu0 %v6986
    %11327 = vmatpush1.bf16.msra.mxu0 %v6985
    %11328 = vmatprep.subr.bf16.mxu0 %v6994
    %11329 = vmatpush1.bf16.msra.mxu0 %v6993
    %11330 = vmatprep.subr.bf16.mxu0 %v7002
    %11331 = vmatpush1.bf16.msra.mxu0 %v7001
    %11332 = vmatprep.subr.bf16.mxu0 %v7010
    %11333 = vmatpush1.bf16.msra.mxu0 %v7009
    %11334 = vmatprep.subr.bf16.mxu0 %v7018
    %11335 = vmatpush1.bf16.msra.mxu0 %v7017
    %11336 = vmatprep.subr.bf16.mxu0 %v7026
    %11337 = vmatpush1.bf16.msra.mxu0 %v7025
    %11338 = vmatprep.subr.bf16.mxu0 %v7034
    %11339 = vmatpush1.bf16.msra.mxu0 %v7033
    %11340 = vmatprep.subr.bf16.mxu0 %v7042
    %11341 = vmatpush1.bf16.msra.mxu0 %v7041
    %11342 = vmatprep.subr.bf16.mxu0 %v7050
    %11343 = vmatpush1.bf16.msra.mxu0 %v7049
    %11344 = vmatprep.subr.bf16.mxu0 %v7058
    %11345 = vmatpush1.bf16.msra.mxu0 %v7057
    %11346 = vmatprep.subr.bf16.mxu0 %v7066
    %11347 = vmatpush1.bf16.msra.mxu0 %v7065
    %11348 = vmatprep.subr.bf16.mxu0 %v7074
    %11349 = vmatpush1.bf16.msra.mxu0 %v7073
    %11350 = vmatprep.subr.bf16.mxu0 %v7082
    %11351 = vmatpush1.bf16.msra.mxu0 %v7081
    %11352 = vmatprep.mubr.bf16.mxu0 %v1922
    %11353 = vmatmul.mubr.bf16.gmra.mrb[0].mxu0 %v1921
    %v11354 = vpop.f32.mrb[0].mxu0
    %v11355 = vadd.f32 %v11312, %v11354
    %v11356 = vpop.f32.mrb[0].mxu0
    %v11357 = vadd.f32 %v11314, %v11356
    %v11358 = vpop.f32.mrb[0].mxu0
    %v11359 = vadd.f32 %v11316, %v11358
    %v11360 = vpop.f32.mrb[0].mxu0
    %v11361 = vadd.f32 %v11318, %v11360
    %11362 = vdwg.mxu0
    %11363 = vmatprep.subr.bf16.mxu0 %v7090
    %11364 = vmatpush1.bf16.msra.mxu0 %v7089
    %11365 = vmatprep.subr.bf16.mxu0 %v7098
    %11366 = vmatpush1.bf16.msra.mxu0 %v7097
    %11367 = vmatprep.subr.bf16.mxu0 %v7106
    %11368 = vmatpush1.bf16.msra.mxu0 %v7105
    %11369 = vmatprep.subr.bf16.mxu0 %v7114
    %11370 = vmatpush1.bf16.msra.mxu0 %v7113
    %11371 = vmatprep.subr.bf16.mxu0 %v7122
    %11372 = vmatpush1.bf16.msra.mxu0 %v7121
    %11373 = vmatprep.subr.bf16.mxu0 %v7130
    %11374 = vmatpush1.bf16.msra.mxu0 %v7129
    %11375 = vmatprep.subr.bf16.mxu0 %v7138
    %11376 = vmatpush1.bf16.msra.mxu0 %v7137
    %11377 = vmatprep.subr.bf16.mxu0 %v7146
    %11378 = vmatpush1.bf16.msra.mxu0 %v7145
    %11379 = vmatprep.subr.bf16.mxu0 %v7154
    %11380 = vmatpush1.bf16.msra.mxu0 %v7153
    %11381 = vmatprep.subr.bf16.mxu0 %v7162
    %11382 = vmatpush1.bf16.msra.mxu0 %v7161
    %11383 = vmatprep.subr.bf16.mxu0 %v7170
    %11384 = vmatpush1.bf16.msra.mxu0 %v7169
    %11385 = vmatprep.subr.bf16.mxu0 %v7178
    %11386 = vmatpush1.bf16.msra.mxu0 %v7177
    %11387 = vmatprep.subr.bf16.mxu0 %v7186
    %11388 = vmatpush1.bf16.msra.mxu0 %v7185
    %11389 = vmatprep.subr.bf16.mxu0 %v7194
    %11390 = vmatpush1.bf16.msra.mxu0 %v7193
    %11391 = vmatprep.subr.bf16.mxu0 %v7202
    %11392 = vmatpush1.bf16.msra.mxu0 %v7201
    %11393 = vmatprep.subr.bf16.mxu0 %v7210
    %11394 = vmatpush1.bf16.msra.mxu0 %v7209
    %11395 = vmatprep.mubr.bf16.mxu0 %v1924
    %11396 = vmatmul.mubr.bf16.gmra.mrb[0].mxu0 %v1923
    %v11397 = vpop.f32.mrb[0].mxu0
    %v11398 = vadd.f32 %v11355, %v11397
    %v11399 = vpop.f32.mrb[0].mxu0
    %v11400 = vadd.f32 %v11357, %v11399
    %v11401 = vpop.f32.mrb[0].mxu0
    %v11402 = vadd.f32 %v11359, %v11401
    %v11403 = vpop.f32.mrb[0].mxu0
    %v11404 = vadd.f32 %v11361, %v11403
    %11405 = vdwg.mxu0
    %11406 = vmatprep.subr.bf16.mxu0 %v7218
    %11407 = vmatpush1.bf16.msra.mxu0 %v7217
    %11408 = vmatprep.subr.bf16.mxu0 %v7226
    %11409 = vmatpush1.bf16.msra.mxu0 %v7225
    %11410 = vmatprep.subr.bf16.mxu0 %v7234
    %11411 = vmatpush1.bf16.msra.mxu0 %v7233
    %11412 = vmatprep.subr.bf16.mxu0 %v7242
    %11413 = vmatpush1.bf16.msra.mxu0 %v7241
    %11414 = vmatprep.subr.bf16.mxu0 %v7250
    %11415 = vmatpush1.bf16.msra.mxu0 %v7249
    %11416 = vmatprep.subr.bf16.mxu0 %v7258
    %11417 = vmatpush1.bf16.msra.mxu0 %v7257
    %11418 = vmatprep.subr.bf16.mxu0 %v7266
    %11419 = vmatpush1.bf16.msra.mxu0 %v7265
    %11420 = vmatprep.subr.bf16.mxu0 %v7274
    %11421 = vmatpush1.bf16.msra.mxu0 %v7273
    %11422 = vmatprep.subr.bf16.mxu0 %v7282
    %11423 = vmatpush1.bf16.msra.mxu0 %v7281
    %11424 = vmatprep.subr.bf16.mxu0 %v7290
    %11425 = vmatpush1.bf16.msra.mxu0 %v7289
    %11426 = vmatprep.subr.bf16.mxu0 %v7298
    %11427 = vmatpush1.bf16.msra.mxu0 %v7297
    %11428 = vmatprep.subr.bf16.mxu0 %v7306
    %11429 = vmatpush1.bf16.msra.mxu0 %v7305
    %11430 = vmatprep.subr.bf16.mxu0 %v7314
    %11431 = vmatpush1.bf16.msra.mxu0 %v7313
    %11432 = vmatprep.subr.bf16.mxu0 %v7322
    %11433 = vmatpush1.bf16.msra.mxu0 %v7321
    %11434 = vmatprep.subr.bf16.mxu0 %v7330
    %11435 = vmatpush1.bf16.msra.mxu0 %v7329
    %11436 = vmatprep.subr.bf16.mxu0 %v7338
    %11437 = vmatpush1.bf16.msra.mxu0 %v7337
    %11438 = vmatprep.mubr.bf16.mxu0 %v1926
    %11439 = vmatmul.mubr.bf16.gmra.mrb[0].mxu0 %v1925
    %v11440 = vpop.f32.mrb[0].mxu0
    %v11441 = vadd.f32 %v11398, %v11440
    %v11442 = vpop.f32.mrb[0].mxu0
    %v11443 = vadd.f32 %v11400, %v11442
    %v11444 = vpop.f32.mrb[0].mxu0
    %v11445 = vadd.f32 %v11402, %v11444
    %v11446 = vpop.f32.mrb[0].mxu0
    %v11447 = vadd.f32 %v11404, %v11446
    %11448 = vdwg.mxu0
    %11449 = vmatprep.subr.bf16.mxu0 %v7346
    %11450 = vmatpush1.bf16.msra.mxu0 %v7345
    %11451 = vmatprep.subr.bf16.mxu0 %v7354
    %11452 = vmatpush1.bf16.msra.mxu0 %v7353
    %11453 = vmatprep.subr.bf16.mxu0 %v7362
    %11454 = vmatpush1.bf16.msra.mxu0 %v7361
    %11455 = vmatprep.subr.bf16.mxu0 %v7370
    %11456 = vmatpush1.bf16.msra.mxu0 %v7369
    %11457 = vmatprep.subr.bf16.mxu0 %v7378
    %11458 = vmatpush1.bf16.msra.mxu0 %v7377
    %11459 = vmatprep.subr.bf16.mxu0 %v7386
    %11460 = vmatpush1.bf16.msra.mxu0 %v7385
    %11461 = vmatprep.subr.bf16.mxu0 %v7394
    %11462 = vmatpush1.bf16.msra.mxu0 %v7393
    %11463 = vmatprep.subr.bf16.mxu0 %v7402
    %11464 = vmatpush1.bf16.msra.mxu0 %v7401
    %11465 = vmatprep.subr.bf16.mxu0 %v7410
    %11466 = vmatpush1.bf16.msra.mxu0 %v7409
    %11467 = vmatprep.subr.bf16.mxu0 %v7418
    %11468 = vmatpush1.bf16.msra.mxu0 %v7417
    %11469 = vmatprep.subr.bf16.mxu0 %v7426
    %11470 = vmatpush1.bf16.msra.mxu0 %v7425
    %11471 = vmatprep.subr.bf16.mxu0 %v7434
    %11472 = vmatpush1.bf16.msra.mxu0 %v7433
    %11473 = vmatprep.subr.bf16.mxu0 %v7442
    %11474 = vmatpush1.bf16.msra.mxu0 %v7441
    %11475 = vmatprep.subr.bf16.mxu0 %v7450
    %11476 = vmatpush1.bf16.msra.mxu0 %v7449
    %11477 = vmatprep.subr.bf16.mxu0 %v7458
    %11478 = vmatpush1.bf16.msra.mxu0 %v7457
    %11479 = vmatprep.subr.bf16.mxu0 %v7466
    %11480 = vmatpush1.bf16.msra.mxu0 %v7465
    %11481 = vmatprep.mubr.bf16.mxu0 %v1928
    %11482 = vmatmul.mubr.bf16.gmra.mrb[0].mxu0 %v1927
    %v11483 = vpop.f32.mrb[0].mxu0
    %v11484 = vadd.f32 %v11441, %v11483
    %v11485 = vpop.f32.mrb[0].mxu0
    %v11486 = vadd.f32 %v11443, %v11485
    %v11487 = vpop.f32.mrb[0].mxu0
    %v11488 = vadd.f32 %v11445, %v11487
    %v11489 = vpop.f32.mrb[0].mxu0
    %v11490 = vadd.f32 %v11447, %v11489
    %11491 = vdwg.mxu0
    %11492 = vmatprep.subr.bf16.mxu0 %v7474
    %11493 = vmatpush1.bf16.msra.mxu0 %v7473
    %11494 = vmatprep.subr.bf16.mxu0 %v7482
    %11495 = vmatpush1.bf16.msra.mxu0 %v7481
    %11496 = vmatprep.subr.bf16.mxu0 %v7490
    %11497 = vmatpush1.bf16.msra.mxu0 %v7489
    %11498 = vmatprep.subr.bf16.mxu0 %v7498
    %11499 = vmatpush1.bf16.msra.mxu0 %v7497
    %11500 = vmatprep.subr.bf16.mxu0 %v7506
    %11501 = vmatpush1.bf16.msra.mxu0 %v7505
    %11502 = vmatprep.subr.bf16.mxu0 %v7514
    %11503 = vmatpush1.bf16.msra.mxu0 %v7513
    %11504 = vmatprep.subr.bf16.mxu0 %v7522
    %11505 = vmatpush1.bf16.msra.mxu0 %v7521
    %11506 = vmatprep.subr.bf16.mxu0 %v7530
    %11507 = vmatpush1.bf16.msra.mxu0 %v7529
    %11508 = vmatprep.subr.bf16.mxu0 %v7538
    %11509 = vmatpush1.bf16.msra.mxu0 %v7537
    %11510 = vmatprep.subr.bf16.mxu0 %v7546
    %11511 = vmatpush1.bf16.msra.mxu0 %v7545
    %11512 = vmatprep.subr.bf16.mxu0 %v7554
    %11513 = vmatpush1.bf16.msra.mxu0 %v7553
    %11514 = vmatprep.subr.bf16.mxu0 %v7562
    %11515 = vmatpush1.bf16.msra.mxu0 %v7561
    %11516 = vmatprep.subr.bf16.mxu0 %v7570
    %11517 = vmatpush1.bf16.msra.mxu0 %v7569
    %11518 = vmatprep.subr.bf16.mxu0 %v7578
    %11519 = vmatpush1.bf16.msra.mxu0 %v7577
    %11520 = vmatprep.subr.bf16.mxu0 %v7586
    %11521 = vmatpush1.bf16.msra.mxu0 %v7585
    %11522 = vmatprep.subr.bf16.mxu0 %v7594
    %11523 = vmatpush1.bf16.msra.mxu0 %v7593
    %11524 = vmatprep.mubr.bf16.mxu0 %v1930
    %11525 = vmatmul.mubr.bf16.gmra.mrb[0].mxu0 %v1929
    %v11526 = vpop.f32.mrb[0].mxu0
    %v11527 = vadd.f32 %v11484, %v11526
    %v11528 = vpop.f32.mrb[0].mxu0
    %v11529 = vadd.f32 %v11486, %v11528
    %v11530 = vpop.f32.mrb[0].mxu0
    %v11531 = vadd.f32 %v11488, %v11530
    %v11532 = vpop.f32.mrb[0].mxu0
    %v11533 = vadd.f32 %v11490, %v11532
    %11534 = vdwg.mxu0
    %11535 = vmatprep.subr.bf16.mxu0 %v7602
    %11536 = vmatpush1.bf16.msra.mxu0 %v7601
    %11537 = vmatprep.subr.bf16.mxu0 %v7610
    %11538 = vmatpush1.bf16.msra.mxu0 %v7609
    %11539 = vmatprep.subr.bf16.mxu0 %v7618
    %11540 = vmatpush1.bf16.msra.mxu0 %v7617
    %11541 = vmatprep.subr.bf16.mxu0 %v7626
    %11542 = vmatpush1.bf16.msra.mxu0 %v7625
    %11543 = vmatprep.subr.bf16.mxu0 %v7634
    %11544 = vmatpush1.bf16.msra.mxu0 %v7633
    %11545 = vmatprep.subr.bf16.mxu0 %v7642
    %11546 = vmatpush1.bf16.msra.mxu0 %v7641
    %11547 = vmatprep.subr.bf16.mxu0 %v7650
    %11548 = vmatpush1.bf16.msra.mxu0 %v7649
    %11549 = vmatprep.subr.bf16.mxu0 %v7658
    %11550 = vmatpush1.bf16.msra.mxu0 %v7657
    %11551 = vmatprep.subr.bf16.mxu0 %v7666
    %11552 = vmatpush1.bf16.msra.mxu0 %v7665
    %11553 = vmatprep.subr.bf16.mxu0 %v7674
    %11554 = vmatpush1.bf16.msra.mxu0 %v7673
    %11555 = vmatprep.subr.bf16.mxu0 %v7682
    %11556 = vmatpush1.bf16.msra.mxu0 %v7681
    %11557 = vmatprep.subr.bf16.mxu0 %v7690
    %11558 = vmatpush1.bf16.msra.mxu0 %v7689
    %11559 = vmatprep.subr.bf16.mxu0 %v7698
    %11560 = vmatpush1.bf16.msra.mxu0 %v7697
    %11561 = vmatprep.subr.bf16.mxu0 %v7706
    %11562 = vmatpush1.bf16.msra.mxu0 %v7705
    %11563 = vmatprep.subr.bf16.mxu0 %v7714
    %11564 = vmatpush1.bf16.msra.mxu0 %v7713
    %11565 = vmatprep.subr.bf16.mxu0 %v7722
    %11566 = vmatpush1.bf16.msra.mxu0 %v7721
    %11567 = vmatprep.mubr.bf16.mxu0 %v1932
    %11568 = vmatmul.mubr.bf16.gmra.mrb[0].mxu0 %v1931
    %v11569 = vpop.f32.mrb[0].mxu0
    %v11570 = vadd.f32 %v11527, %v11569
    %v11571 = vpop.f32.mrb[0].mxu0
    %v11572 = vadd.f32 %v11529, %v11571
    %v11573 = vpop.f32.mrb[0].mxu0
    %v11574 = vadd.f32 %v11531, %v11573
    %v11575 = vpop.f32.mrb[0].mxu0
    %v11576 = vadd.f32 %v11533, %v11575
    %11577 = vdwg.mxu0
    %11578 = vmatprep.subr.bf16.mxu0 %v7730
    %11579 = vmatpush1.bf16.msra.mxu0 %v7729
    %11580 = vmatprep.subr.bf16.mxu0 %v7738
    %11581 = vmatpush1.bf16.msra.mxu0 %v7737
    %11582 = vmatprep.subr.bf16.mxu0 %v7746
    %11583 = vmatpush1.bf16.msra.mxu0 %v7745
    %11584 = vmatprep.subr.bf16.mxu0 %v7754
    %11585 = vmatpush1.bf16.msra.mxu0 %v7753
    %11586 = vmatprep.subr.bf16.mxu0 %v7762
    %11587 = vmatpush1.bf16.msra.mxu0 %v7761
    %11588 = vmatprep.subr.bf16.mxu0 %v7770
    %11589 = vmatpush1.bf16.msra.mxu0 %v7769
    %11590 = vmatprep.subr.bf16.mxu0 %v7778
    %11591 = vmatpush1.bf16.msra.mxu0 %v7777
    %11592 = vmatprep.subr.bf16.mxu0 %v7786
    %11593 = vmatpush1.bf16.msra.mxu0 %v7785
    %11594 = vmatprep.subr.bf16.mxu0 %v7794
    %11595 = vmatpush1.bf16.msra.mxu0 %v7793
    %11596 = vmatprep.subr.bf16.mxu0 %v7802
    %11597 = vmatpush1.bf16.msra.mxu0 %v7801
    %11598 = vmatprep.subr.bf16.mxu0 %v7810
    %11599 = vmatpush1.bf16.msra.mxu0 %v7809
    %11600 = vmatprep.subr.bf16.mxu0 %v7818
    %11601 = vmatpush1.bf16.msra.mxu0 %v7817
    %11602 = vmatprep.subr.bf16.mxu0 %v7826
    %11603 = vmatpush1.bf16.msra.mxu0 %v7825
    %11604 = vmatprep.subr.bf16.mxu0 %v7834
    %11605 = vmatpush1.bf16.msra.mxu0 %v7833
    %11606 = vmatprep.subr.bf16.mxu0 %v7842
    %11607 = vmatpush1.bf16.msra.mxu0 %v7841
    %11608 = vmatprep.subr.bf16.mxu0 %v7850
    %11609 = vmatpush1.bf16.msra.mxu0 %v7849
    %11610 = vmatprep.mubr.bf16.mxu0 %v1934
    %11611 = vmatmul.mubr.bf16.gmra.mrb[0].mxu0 %v1933
    %v11612 = vpop.f32.mrb[0].mxu0
    %v11613 = vadd.f32 %v11570, %v11612
    %v11614 = vpop.f32.mrb[0].mxu0
    %v11615 = vadd.f32 %v11572, %v11614
    %v11616 = vpop.f32.mrb[0].mxu0
    %v11617 = vadd.f32 %v11574, %v11616
    %v11618 = vpop.f32.mrb[0].mxu0
    %v11619 = vadd.f32 %v11576, %v11618
    %11620 = vdwg.mxu0
    %11621 = vmatprep.subr.bf16.mxu0 %v7858
    %11622 = vmatpush1.bf16.msra.mxu0 %v7857
    %11623 = vmatprep.subr.bf16.mxu0 %v7866
    %11624 = vmatpush1.bf16.msra.mxu0 %v7865
    %11625 = vmatprep.subr.bf16.mxu0 %v7874
    %11626 = vmatpush1.bf16.msra.mxu0 %v7873
    %11627 = vmatprep.subr.bf16.mxu0 %v7882
    %11628 = vmatpush1.bf16.msra.mxu0 %v7881
    %11629 = vmatprep.subr.bf16.mxu0 %v7890
    %11630 = vmatpush1.bf16.msra.mxu0 %v7889
    %11631 = vmatprep.subr.bf16.mxu0 %v7898
    %11632 = vmatpush1.bf16.msra.mxu0 %v7897
    %11633 = vmatprep.subr.bf16.mxu0 %v7906
    %11634 = vmatpush1.bf16.msra.mxu0 %v7905
    %11635 = vmatprep.subr.bf16.mxu0 %v7914
    %11636 = vmatpush1.bf16.msra.mxu0 %v7913
    %11637 = vmatprep.subr.bf16.mxu0 %v7922
    %11638 = vmatpush1.bf16.msra.mxu0 %v7921
    %11639 = vmatprep.subr.bf16.mxu0 %v7930
    %11640 = vmatpush1.bf16.msra.mxu0 %v7929
    %11641 = vmatprep.subr.bf16.mxu0 %v7938
    %11642 = vmatpush1.bf16.msra.mxu0 %v7937
    %11643 = vmatprep.subr.bf16.mxu0 %v7946
    %11644 = vmatpush1.bf16.msra.mxu0 %v7945
    %11645 = vmatprep.subr.bf16.mxu0 %v7954
    %11646 = vmatpush1.bf16.msra.mxu0 %v7953
    %11647 = vmatprep.subr.bf16.mxu0 %v7962
    %11648 = vmatpush1.bf16.msra.mxu0 %v7961
    %11649 = vmatprep.subr.bf16.mxu0 %v7970
    %11650 = vmatpush1.bf16.msra.mxu0 %v7969
    %11651 = vmatprep.subr.bf16.mxu0 %v7978
    %11652 = vmatpush1.bf16.msra.mxu0 %v7977
    %11653 = vmatprep.mubr.bf16.mxu0 %v1936
    %11654 = vmatmul.mubr.bf16.gmra.mrb[0].mxu0 %v1935
    %v11655 = vpop.f32.mrb[0].mxu0
    %v11656 = vadd.f32 %v11613, %v11655
    %v11657 = vpop.f32.mrb[0].mxu0
    %v11658 = vadd.f32 %v11615, %v11657
    %v11659 = vpop.f32.mrb[0].mxu0
    %v11660 = vadd.f32 %v11617, %v11659
    %v11661 = vpop.f32.mrb[0].mxu0
    %v11662 = vadd.f32 %v11619, %v11661
    %11663 = vdwg.mxu0
    %11664 = vmatprep.subr.bf16.mxu0 %v7986
    %11665 = vmatpush1.bf16.msra.mxu0 %v7985
    %11666 = vmatprep.subr.bf16.mxu0 %v7994
    %11667 = vmatpush1.bf16.msra.mxu0 %v7993
    %11668 = vmatprep.subr.bf16.mxu0 %v8002
    %11669 = vmatpush1.bf16.msra.mxu0 %v8001
    %11670 = vmatprep.subr.bf16.mxu0 %v8010
    %11671 = vmatpush1.bf16.msra.mxu0 %v8009
    %11672 = vmatprep.subr.bf16.mxu0 %v8018
    %11673 = vmatpush1.bf16.msra.mxu0 %v8017
    %11674 = vmatprep.subr.bf16.mxu0 %v8026
    %11675 = vmatpush1.bf16.msra.mxu0 %v8025
    %11676 = vmatprep.subr.bf16.mxu0 %v8034
    %11677 = vmatpush1.bf16.msra.mxu0 %v8033
    %11678 = vmatprep.subr.bf16.mxu0 %v8042
    %11679 = vmatpush1.bf16.msra.mxu0 %v8041
    %11680 = vmatprep.subr.bf16.mxu0 %v8050
    %11681 = vmatpush1.bf16.msra.mxu0 %v8049
    %11682 = vmatprep.subr.bf16.mxu0 %v8058
    %11683 = vmatpush1.bf16.msra.mxu0 %v8057
    %11684 = vmatprep.subr.bf16.mxu0 %v8066
    %11685 = vmatpush1.bf16.msra.mxu0 %v8065
    %11686 = vmatprep.subr.bf16.mxu0 %v8074
    %11687 = vmatpush1.bf16.msra.mxu0 %v8073
    %11688 = vmatprep.subr.bf16.mxu0 %v8082
    %11689 = vmatpush1.bf16.msra.mxu0 %v8081
    %11690 = vmatprep.subr.bf16.mxu0 %v8090
    %11691 = vmatpush1.bf16.msra.mxu0 %v8089
    %11692 = vmatprep.subr.bf16.mxu0 %v8098
    %11693 = vmatpush1.bf16.msra.mxu0 %v8097
    %11694 = vmatprep.subr.bf16.mxu0 %v8106
    %11695 = vmatpush1.bf16.msra.mxu0 %v8105
    %11696 = vmatprep.mubr.bf16.mxu0 %v1938
    %11697 = vmatmul.mubr.bf16.gmra.mrb[0].mxu0 %v1937
    %v11698 = vpop.f32.mrb[0].mxu0
    %v11699 = vadd.f32 %v11656, %v11698
    %v11700 = vpop.f32.mrb[0].mxu0
    %v11701 = vadd.f32 %v11658, %v11700
    %v11702 = vpop.f32.mrb[0].mxu0
    %v11703 = vadd.f32 %v11660, %v11702
    %v11704 = vpop.f32.mrb[0].mxu0
    %v11705 = vadd.f32 %v11662, %v11704
    %11706 = vdwg.mxu0
    %v11707 = vmax.f32 %v10151, 0.0
    %v11708 = vmax.f32 %v10153, 0.0
    %v11709 = vmax.f32 %v10667, 0.0
    %v11710 = vmax.f32 %v10669, 0.0
    %v11711 = vmax.f32 %v11183, 0.0
    %v11712 = vmax.f32 %v11185, 0.0
    %v11713 = vmax.f32 %v11699, 0.0
    %v11714 = vmax.f32 %v11701, 0.0
    %v11715 = vmax.f32 %v10155, 0.0
    %v11716 = vmax.f32 %v10157, 0.0
    %v11717 = vmax.f32 %v10671, 0.0
    %v11718 = vmax.f32 %v10673, 0.0
    %v11719 = vmax.f32 %v11187, 0.0
    %v11720 = vmax.f32 %v11189, 0.0
    %v11721 = vmax.f32 %v11703, 0.0
    %v11722 = vmax.f32 %v11705, 0.0
    %v11723 = vpack.c.bf16 %v11715, %v11707
    %v11724 = vpack.c.bf16 %v11716, %v11708
    %v11725 = vpack.c.bf16 %v11717, %v11709
    %v11726 = vpack.c.bf16 %v11718, %v11710
    %v11727 = vpack.c.bf16 %v11719, %v11711
    %v11728 = vpack.c.bf16 %v11720, %v11712
    %v11729 = vpack.c.bf16 %v11721, %v11713
    %v11730 = vpack.c.bf16 %v11722, %v11714
    %v11731 = vld [vmem:[#allocation8] sm:$0xff]
    %v11732 = vld [vmem:[#allocation8 + $0x8] sm:$0xff]
    %v11733 = vld [vmem:[#allocation8 + $0x10] sm:$0xff]
    %v11734 = vld [vmem:[#allocation8 + $0x18] sm:$0xff]
    %v11735 = vld [vmem:[#allocation8 + $0x20] sm:$0xff]
    %v11736 = vld [vmem:[#allocation8 + $0x28] sm:$0xff]
    %v11737 = vld [vmem:[#allocation8 + $0x30] sm:$0xff]
    %v11738 = vld [vmem:[#allocation8 + $0x38] sm:$0xff]
    %v11739 = vld [vmem:[#allocation8 + $0x40] sm:$0xff]
    %v11740 = vld [vmem:[#allocation8 + $0x48] sm:$0xff]
    %v11741 = vld [vmem:[#allocation8 + $0x50] sm:$0xff]
    %v11742 = vld [vmem:[#allocation8 + $0x58] sm:$0xff]
    %v11743 = vld [vmem:[#allocation8 + $0x60] sm:$0xff]
    %v11744 = vld [vmem:[#allocation8 + $0x68] sm:$0xff]
    %v11745 = vld [vmem:[#allocation8 + $0x70] sm:$0xff]
    %v11746 = vld [vmem:[#allocation8 + $0x78] sm:$0xff]
    %v11747 = vld [vmem:[#allocation8 + $0x80] sm:$0xff]
    %v11748 = vld [vmem:[#allocation8 + $0x88] sm:$0xff]
    %v11749 = vld [vmem:[#allocation8 + $0x90] sm:$0xff]
    %v11750 = vld [vmem:[#allocation8 + $0x98] sm:$0xff]
    %v11751 = vld [vmem:[#allocation8 + $0xa0] sm:$0xff]
    %v11752 = vld [vmem:[#allocation8 + $0xa8] sm:$0xff]
    %v11753 = vld [vmem:[#allocation8 + $0xb0] sm:$0xff]
    %v11754 = vld [vmem:[#allocation8 + $0xb8] sm:$0xff]
    %v11755 = vld [vmem:[#allocation8 + $0xc0] sm:$0xff]
    %v11756 = vld [vmem:[#allocation8 + $0xc8] sm:$0xff]
    %v11757 = vld [vmem:[#allocation8 + $0xd0] sm:$0xff]
    %v11758 = vld [vmem:[#allocation8 + $0xd8] sm:$0xff]
    %v11759 = vld [vmem:[#allocation8 + $0xe0] sm:$0xff]
    %v11760 = vld [vmem:[#allocation8 + $0xe8] sm:$0xff]
    %v11761 = vld [vmem:[#allocation8 + $0xf0] sm:$0xff]
    %v11762 = vld [vmem:[#allocation8 + $0xf8] sm:$0xff]
    %v11763 = vld [vmem:[#allocation8 + $0x100] sm:$0xff]
    %v11764 = vld [vmem:[#allocation8 + $0x108] sm:$0xff]
    %v11765 = vld [vmem:[#allocation8 + $0x110] sm:$0xff]
    %v11766 = vld [vmem:[#allocation8 + $0x118] sm:$0xff]
    %v11767 = vld [vmem:[#allocation8 + $0x120] sm:$0xff]
    %v11768 = vld [vmem:[#allocation8 + $0x128] sm:$0xff]
    %v11769 = vld [vmem:[#allocation8 + $0x130] sm:$0xff]
    %v11770 = vld [vmem:[#allocation8 + $0x138] sm:$0xff]
    %v11771 = vld [vmem:[#allocation8 + $0x140] sm:$0xff]
    %v11772 = vld [vmem:[#allocation8 + $0x148] sm:$0xff]
    %v11773 = vld [vmem:[#allocation8 + $0x150] sm:$0xff]
    %v11774 = vld [vmem:[#allocation8 + $0x158] sm:$0xff]
    %v11775 = vld [vmem:[#allocation8 + $0x160] sm:$0xff]
    %v11776 = vld [vmem:[#allocation8 + $0x168] sm:$0xff]
    %v11777 = vld [vmem:[#allocation8 + $0x170] sm:$0xff]
    %v11778 = vld [vmem:[#allocation8 + $0x178] sm:$0xff]
    %v11779 = vld [vmem:[#allocation8 + $0x180] sm:$0xff]
    %v11780 = vld [vmem:[#allocation8 + $0x188] sm:$0xff]
    %v11781 = vld [vmem:[#allocation8 + $0x190] sm:$0xff]
    %v11782 = vld [vmem:[#allocation8 + $0x198] sm:$0xff]
    %v11783 = vld [vmem:[#allocation8 + $0x1a0] sm:$0xff]
    %v11784 = vld [vmem:[#allocation8 + $0x1a8] sm:$0xff]
    %v11785 = vld [vmem:[#allocation8 + $0x1b0] sm:$0xff]
    %v11786 = vld [vmem:[#allocation8 + $0x1b8] sm:$0xff]
    %v11787 = vld [vmem:[#allocation8 + $0x1c0] sm:$0xff]
    %v11788 = vld [vmem:[#allocation8 + $0x1c8] sm:$0xff]
    %v11789 = vld [vmem:[#allocation8 + $0x1d0] sm:$0xff]
    %v11790 = vld [vmem:[#allocation8 + $0x1d8] sm:$0xff]
    %v11791 = vld [vmem:[#allocation8 + $0x1e0] sm:$0xff]
    %v11792 = vld [vmem:[#allocation8 + $0x1e8] sm:$0xff]
    %v11793 = vld [vmem:[#allocation8 + $0x1f0] sm:$0xff]
    %v11794 = vld [vmem:[#allocation8 + $0x1f8] sm:$0xff]
    %v11795 = vld [vmem:[#allocation8 + $0x200] sm:$0xff]
    %v11796 = vld [vmem:[#allocation8 + $0x208] sm:$0xff]
    %v11797 = vld [vmem:[#allocation8 + $0x210] sm:$0xff]
    %v11798 = vld [vmem:[#allocation8 + $0x218] sm:$0xff]
    %v11799 = vld [vmem:[#allocation8 + $0x220] sm:$0xff]
    %v11800 = vld [vmem:[#allocation8 + $0x228] sm:$0xff]
    %v11801 = vld [vmem:[#allocation8 + $0x230] sm:$0xff]
    %v11802 = vld [vmem:[#allocation8 + $0x238] sm:$0xff]
    %v11803 = vld [vmem:[#allocation8 + $0x240] sm:$0xff]
    %v11804 = vld [vmem:[#allocation8 + $0x248] sm:$0xff]
    %v11805 = vld [vmem:[#allocation8 + $0x250] sm:$0xff]
    %v11806 = vld [vmem:[#allocation8 + $0x258] sm:$0xff]
    %v11807 = vld [vmem:[#allocation8 + $0x260] sm:$0xff]
    %v11808 = vld [vmem:[#allocation8 + $0x268] sm:$0xff]
    %v11809 = vld [vmem:[#allocation8 + $0x270] sm:$0xff]
    %v11810 = vld [vmem:[#allocation8 + $0x278] sm:$0xff]
    %v11811 = vld [vmem:[#allocation8 + $0x280] sm:$0xff]
    %v11812 = vld [vmem:[#allocation8 + $0x288] sm:$0xff]
    %v11813 = vld [vmem:[#allocation8 + $0x290] sm:$0xff]
    %v11814 = vld [vmem:[#allocation8 + $0x298] sm:$0xff]
    %v11815 = vld [vmem:[#allocation8 + $0x2a0] sm:$0xff]
    %v11816 = vld [vmem:[#allocation8 + $0x2a8] sm:$0xff]
    %v11817 = vld [vmem:[#allocation8 + $0x2b0] sm:$0xff]
    %v11818 = vld [vmem:[#allocation8 + $0x2b8] sm:$0xff]
    %v11819 = vld [vmem:[#allocation8 + $0x2c0] sm:$0xff]
    %v11820 = vld [vmem:[#allocation8 + $0x2c8] sm:$0xff]
    %v11821 = vld [vmem:[#allocation8 + $0x2d0] sm:$0xff]
    %v11822 = vld [vmem:[#allocation8 + $0x2d8] sm:$0xff]
    %v11823 = vld [vmem:[#allocation8 + $0x2e0] sm:$0xff]
    %v11824 = vld [vmem:[#allocation8 + $0x2e8] sm:$0xff]
    %v11825 = vld [vmem:[#allocation8 + $0x2f0] sm:$0xff]
    %v11826 = vld [vmem:[#allocation8 + $0x2f8] sm:$0xff]
    %v11827 = vld [vmem:[#allocation8 + $0x300] sm:$0xff]
    %v11828 = vld [vmem:[#allocation8 + $0x308] sm:$0xff]
    %v11829 = vld [vmem:[#allocation8 + $0x310] sm:$0xff]
    %v11830 = vld [vmem:[#allocation8 + $0x318] sm:$0xff]
    %v11831 = vld [vmem:[#allocation8 + $0x320] sm:$0xff]
    %v11832 = vld [vmem:[#allocation8 + $0x328] sm:$0xff]
    %v11833 = vld [vmem:[#allocation8 + $0x330] sm:$0xff]
    %v11834 = vld [vmem:[#allocation8 + $0x338] sm:$0xff]
    %v11835 = vld [vmem:[#allocation8 + $0x340] sm:$0xff]
    %v11836 = vld [vmem:[#allocation8 + $0x348] sm:$0xff]
    %v11837 = vld [vmem:[#allocation8 + $0x350] sm:$0xff]
    %v11838 = vld [vmem:[#allocation8 + $0x358] sm:$0xff]
    %v11839 = vld [vmem:[#allocation8 + $0x360] sm:$0xff]
    %v11840 = vld [vmem:[#allocation8 + $0x368] sm:$0xff]
    %v11841 = vld [vmem:[#allocation8 + $0x370] sm:$0xff]
    %v11842 = vld [vmem:[#allocation8 + $0x378] sm:$0xff]
    %v11843 = vld [vmem:[#allocation8 + $0x380] sm:$0xff]
    %v11844 = vld [vmem:[#allocation8 + $0x388] sm:$0xff]
    %v11845 = vld [vmem:[#allocation8 + $0x390] sm:$0xff]
    %v11846 = vld [vmem:[#allocation8 + $0x398] sm:$0xff]
    %v11847 = vld [vmem:[#allocation8 + $0x3a0] sm:$0xff]
    %v11848 = vld [vmem:[#allocation8 + $0x3a8] sm:$0xff]
    %v11849 = vld [vmem:[#allocation8 + $0x3b0] sm:$0xff]
    %v11850 = vld [vmem:[#allocation8 + $0x3b8] sm:$0xff]
    %v11851 = vld [vmem:[#allocation8 + $0x3c0] sm:$0xff]
    %v11852 = vld [vmem:[#allocation8 + $0x3c8] sm:$0xff]
    %v11853 = vld [vmem:[#allocation8 + $0x3d0] sm:$0xff]
    %v11854 = vld [vmem:[#allocation8 + $0x3d8] sm:$0xff]
    %v11855 = vld [vmem:[#allocation8 + $0x3e0] sm:$0xff]
    %v11856 = vld [vmem:[#allocation8 + $0x3e8] sm:$0xff]
    %v11857 = vld [vmem:[#allocation8 + $0x3f0] sm:$0xff]
    %v11858 = vld [vmem:[#allocation8 + $0x3f8] sm:$0xff]
    %v11859 = vld [vmem:[#allocation8 + $0x400] sm:$0xff]
    %v11860 = vld [vmem:[#allocation8 + $0x408] sm:$0xff]
    %v11861 = vld [vmem:[#allocation8 + $0x410] sm:$0xff]
    %v11862 = vld [vmem:[#allocation8 + $0x418] sm:$0xff]
    %v11863 = vld [vmem:[#allocation8 + $0x420] sm:$0xff]
    %v11864 = vld [vmem:[#allocation8 + $0x428] sm:$0xff]
    %v11865 = vld [vmem:[#allocation8 + $0x430] sm:$0xff]
    %v11866 = vld [vmem:[#allocation8 + $0x438] sm:$0xff]
    %v11867 = vld [vmem:[#allocation8 + $0x440] sm:$0xff]
    %v11868 = vld [vmem:[#allocation8 + $0x448] sm:$0xff]
    %v11869 = vld [vmem:[#allocation8 + $0x450] sm:$0xff]
    %v11870 = vld [vmem:[#allocation8 + $0x458] sm:$0xff]
    %v11871 = vld [vmem:[#allocation8 + $0x460] sm:$0xff]
    %v11872 = vld [vmem:[#allocation8 + $0x468] sm:$0xff]
    %v11873 = vld [vmem:[#allocation8 + $0x470] sm:$0xff]
    %v11874 = vld [vmem:[#allocation8 + $0x478] sm:$0xff]
    %v11875 = vld [vmem:[#allocation8 + $0x480] sm:$0xff]
    %v11876 = vld [vmem:[#allocation8 + $0x488] sm:$0xff]
    %v11877 = vld [vmem:[#allocation8 + $0x490] sm:$0xff]
    %v11878 = vld [vmem:[#allocation8 + $0x498] sm:$0xff]
    %v11879 = vld [vmem:[#allocation8 + $0x4a0] sm:$0xff]
    %v11880 = vld [vmem:[#allocation8 + $0x4a8] sm:$0xff]
    %v11881 = vld [vmem:[#allocation8 + $0x4b0] sm:$0xff]
    %v11882 = vld [vmem:[#allocation8 + $0x4b8] sm:$0xff]
    %v11883 = vld [vmem:[#allocation8 + $0x4c0] sm:$0xff]
    %v11884 = vld [vmem:[#allocation8 + $0x4c8] sm:$0xff]
    %v11885 = vld [vmem:[#allocation8 + $0x4d0] sm:$0xff]
    %v11886 = vld [vmem:[#allocation8 + $0x4d8] sm:$0xff]
    %v11887 = vld [vmem:[#allocation8 + $0x4e0] sm:$0xff]
    %v11888 = vld [vmem:[#allocation8 + $0x4e8] sm:$0xff]
    %v11889 = vld [vmem:[#allocation8 + $0x4f0] sm:$0xff]
    %v11890 = vld [vmem:[#allocation8 + $0x4f8] sm:$0xff]
    %v11891 = vld [vmem:[#allocation8 + $0x500] sm:$0xff]
    %v11892 = vld [vmem:[#allocation8 + $0x508] sm:$0xff]
    %v11893 = vld [vmem:[#allocation8 + $0x510] sm:$0xff]
    %v11894 = vld [vmem:[#allocation8 + $0x518] sm:$0xff]
    %v11895 = vld [vmem:[#allocation8 + $0x520] sm:$0xff]
    %v11896 = vld [vmem:[#allocation8 + $0x528] sm:$0xff]
    %v11897 = vld [vmem:[#allocation8 + $0x530] sm:$0xff]
    %v11898 = vld [vmem:[#allocation8 + $0x538] sm:$0xff]
    %v11899 = vld [vmem:[#allocation8 + $0x540] sm:$0xff]
    %v11900 = vld [vmem:[#allocation8 + $0x548] sm:$0xff]
    %v11901 = vld [vmem:[#allocation8 + $0x550] sm:$0xff]
    %v11902 = vld [vmem:[#allocation8 + $0x558] sm:$0xff]
    %v11903 = vld [vmem:[#allocation8 + $0x560] sm:$0xff]
    %v11904 = vld [vmem:[#allocation8 + $0x568] sm:$0xff]
    %v11905 = vld [vmem:[#allocation8 + $0x570] sm:$0xff]
    %v11906 = vld [vmem:[#allocation8 + $0x578] sm:$0xff]
    %v11907 = vld [vmem:[#allocation8 + $0x580] sm:$0xff]
    %v11908 = vld [vmem:[#allocation8 + $0x588] sm:$0xff]
    %v11909 = vld [vmem:[#allocation8 + $0x590] sm:$0xff]
    %v11910 = vld [vmem:[#allocation8 + $0x598] sm:$0xff]
    %v11911 = vld [vmem:[#allocation8 + $0x5a0] sm:$0xff]
    %v11912 = vld [vmem:[#allocation8 + $0x5a8] sm:$0xff]
    %v11913 = vld [vmem:[#allocation8 + $0x5b0] sm:$0xff]
    %v11914 = vld [vmem:[#allocation8 + $0x5b8] sm:$0xff]
    %v11915 = vld [vmem:[#allocation8 + $0x5c0] sm:$0xff]
    %v11916 = vld [vmem:[#allocation8 + $0x5c8] sm:$0xff]
    %v11917 = vld [vmem:[#allocation8 + $0x5d0] sm:$0xff]
    %v11918 = vld [vmem:[#allocation8 + $0x5d8] sm:$0xff]
    %v11919 = vld [vmem:[#allocation8 + $0x5e0] sm:$0xff]
    %v11920 = vld [vmem:[#allocation8 + $0x5e8] sm:$0xff]
    %v11921 = vld [vmem:[#allocation8 + $0x5f0] sm:$0xff]
    %v11922 = vld [vmem:[#allocation8 + $0x5f8] sm:$0xff]
    %v11923 = vld [vmem:[#allocation8 + $0x600] sm:$0xff]
    %v11924 = vld [vmem:[#allocation8 + $0x608] sm:$0xff]
    %v11925 = vld [vmem:[#allocation8 + $0x610] sm:$0xff]
    %v11926 = vld [vmem:[#allocation8 + $0x618] sm:$0xff]
    %v11927 = vld [vmem:[#allocation8 + $0x620] sm:$0xff]
    %v11928 = vld [vmem:[#allocation8 + $0x628] sm:$0xff]
    %v11929 = vld [vmem:[#allocation8 + $0x630] sm:$0xff]
    %v11930 = vld [vmem:[#allocation8 + $0x638] sm:$0xff]
    %v11931 = vld [vmem:[#allocation8 + $0x640] sm:$0xff]
    %v11932 = vld [vmem:[#allocation8 + $0x648] sm:$0xff]
    %v11933 = vld [vmem:[#allocation8 + $0x650] sm:$0xff]
    %v11934 = vld [vmem:[#allocation8 + $0x658] sm:$0xff]
    %v11935 = vld [vmem:[#allocation8 + $0x660] sm:$0xff]
    %v11936 = vld [vmem:[#allocation8 + $0x668] sm:$0xff]
    %v11937 = vld [vmem:[#allocation8 + $0x670] sm:$0xff]
    %v11938 = vld [vmem:[#allocation8 + $0x678] sm:$0xff]
    %v11939 = vld [vmem:[#allocation8 + $0x680] sm:$0xff]
    %v11940 = vld [vmem:[#allocation8 + $0x688] sm:$0xff]
    %v11941 = vld [vmem:[#allocation8 + $0x690] sm:$0xff]
    %v11942 = vld [vmem:[#allocation8 + $0x698] sm:$0xff]
    %v11943 = vld [vmem:[#allocation8 + $0x6a0] sm:$0xff]
    %v11944 = vld [vmem:[#allocation8 + $0x6a8] sm:$0xff]
    %v11945 = vld [vmem:[#allocation8 + $0x6b0] sm:$0xff]
    %v11946 = vld [vmem:[#allocation8 + $0x6b8] sm:$0xff]
    %v11947 = vld [vmem:[#allocation8 + $0x6c0] sm:$0xff]
    %v11948 = vld [vmem:[#allocation8 + $0x6c8] sm:$0xff]
    %v11949 = vld [vmem:[#allocation8 + $0x6d0] sm:$0xff]
    %v11950 = vld [vmem:[#allocation8 + $0x6d8] sm:$0xff]
    %v11951 = vld [vmem:[#allocation8 + $0x6e0] sm:$0xff]
    %v11952 = vld [vmem:[#allocation8 + $0x6e8] sm:$0xff]
    %v11953 = vld [vmem:[#allocation8 + $0x6f0] sm:$0xff]
    %v11954 = vld [vmem:[#allocation8 + $0x6f8] sm:$0xff]
    %v11955 = vld [vmem:[#allocation8 + $0x700] sm:$0xff]
    %v11956 = vld [vmem:[#allocation8 + $0x708] sm:$0xff]
    %v11957 = vld [vmem:[#allocation8 + $0x710] sm:$0xff]
    %v11958 = vld [vmem:[#allocation8 + $0x718] sm:$0xff]
    %v11959 = vld [vmem:[#allocation8 + $0x720] sm:$0xff]
    %v11960 = vld [vmem:[#allocation8 + $0x728] sm:$0xff]
    %v11961 = vld [vmem:[#allocation8 + $0x730] sm:$0xff]
    %v11962 = vld [vmem:[#allocation8 + $0x738] sm:$0xff]
    %v11963 = vld [vmem:[#allocation8 + $0x740] sm:$0xff]
    %v11964 = vld [vmem:[#allocation8 + $0x748] sm:$0xff]
    %v11965 = vld [vmem:[#allocation8 + $0x750] sm:$0xff]
    %v11966 = vld [vmem:[#allocation8 + $0x758] sm:$0xff]
    %v11967 = vld [vmem:[#allocation8 + $0x760] sm:$0xff]
    %v11968 = vld [vmem:[#allocation8 + $0x768] sm:$0xff]
    %v11969 = vld [vmem:[#allocation8 + $0x770] sm:$0xff]
    %v11970 = vld [vmem:[#allocation8 + $0x778] sm:$0xff]
    %v11971 = vld [vmem:[#allocation8 + $0x780] sm:$0xff]
    %v11972 = vld [vmem:[#allocation8 + $0x788] sm:$0xff]
    %v11973 = vld [vmem:[#allocation8 + $0x790] sm:$0xff]
    %v11974 = vld [vmem:[#allocation8 + $0x798] sm:$0xff]
    %v11975 = vld [vmem:[#allocation8 + $0x7a0] sm:$0xff]
    %v11976 = vld [vmem:[#allocation8 + $0x7a8] sm:$0xff]
    %v11977 = vld [vmem:[#allocation8 + $0x7b0] sm:$0xff]
    %v11978 = vld [vmem:[#allocation8 + $0x7b8] sm:$0xff]
    %v11979 = vld [vmem:[#allocation8 + $0x7c0] sm:$0xff]
    %v11980 = vld [vmem:[#allocation8 + $0x7c8] sm:$0xff]
    %v11981 = vld [vmem:[#allocation8 + $0x7d0] sm:$0xff]
    %v11982 = vld [vmem:[#allocation8 + $0x7d8] sm:$0xff]
    %v11983 = vld [vmem:[#allocation8 + $0x7e0] sm:$0xff]
    %v11984 = vld [vmem:[#allocation8 + $0x7e8] sm:$0xff]
    %v11985 = vld [vmem:[#allocation8 + $0x7f0] sm:$0xff]
    %v11986 = vld [vmem:[#allocation8 + $0x7f8] sm:$0xff]
    %v11987 = vld [vmem:[#allocation10] sm:$0xf]
    %v11989 = vlaneseq
    %v11990 = vshrl.u32 %v11989, 7
    %v11991 = vsub.s32 0, %v11990
    %v11992 = vrot.slane %v11987, %v11991
    %v11993 = vlaneseq
    %v11994 = vshrl.u32 %v11993, 7
    %v11995 = vsub.s32 1, %v11994
    %v11996 = vrot.slane %v11987, %v11995
    %v11997 = vlaneseq
    %v11998 = vshrl.u32 %v11997, 7
    %v11999 = vsub.s32 2, %v11998
    %v12000 = vrot.slane %v11987, %v11999
    %v12001 = vlaneseq
    %v12002 = vshrl.u32 %v12001, 7
    %v12003 = vsub.s32 3, %v12002
    %v12004 = vrot.slane %v11987, %v12003
    %v12265 = vunpack.c.l.b16 %v11731
    %v12266 = vunpack.c.h.b16 %v11731
    %v12267 = vunpack.c.l.b16 %v11732
    %v12268 = vunpack.c.h.b16 %v11732
    %v12269 = vunpack.c.l.b16 %v11733
    %v12270 = vunpack.c.h.b16 %v11733
    %v12271 = vunpack.c.l.b16 %v11734
    %v12272 = vunpack.c.h.b16 %v11734
    %v12273 = vunpack.c.l.b16 %v11735
    %v12274 = vunpack.c.h.b16 %v11735
    %v12275 = vunpack.c.l.b16 %v11736
    %v12276 = vunpack.c.h.b16 %v11736
    %v12277 = vunpack.c.l.b16 %v11737
    %v12278 = vunpack.c.h.b16 %v11737
    %v12279 = vunpack.c.l.b16 %v11738
    %v12280 = vunpack.c.h.b16 %v11738
    %v12281 = vunpack.c.l.b16 %v11739
    %v12282 = vunpack.c.h.b16 %v11739
    %v12283 = vunpack.c.l.b16 %v11740
    %v12284 = vunpack.c.h.b16 %v11740
    %v12285 = vunpack.c.l.b16 %v11741
    %v12286 = vunpack.c.h.b16 %v11741
    %v12287 = vunpack.c.l.b16 %v11742
    %v12288 = vunpack.c.h.b16 %v11742
    %v12289 = vunpack.c.l.b16 %v11743
    %v12290 = vunpack.c.h.b16 %v11743
    %v12291 = vunpack.c.l.b16 %v11744
    %v12292 = vunpack.c.h.b16 %v11744
    %v12293 = vunpack.c.l.b16 %v11745
    %v12294 = vunpack.c.h.b16 %v11745
    %v12295 = vunpack.c.l.b16 %v11746
    %v12296 = vunpack.c.h.b16 %v11746
    %v12297 = vunpack.c.l.b16 %v11747
    %v12298 = vunpack.c.h.b16 %v11747
    %v12299 = vunpack.c.l.b16 %v11748
    %v12300 = vunpack.c.h.b16 %v11748
    %v12301 = vunpack.c.l.b16 %v11749
    %v12302 = vunpack.c.h.b16 %v11749
    %v12303 = vunpack.c.l.b16 %v11750
    %v12304 = vunpack.c.h.b16 %v11750
    %v12305 = vunpack.c.l.b16 %v11751
    %v12306 = vunpack.c.h.b16 %v11751
    %v12307 = vunpack.c.l.b16 %v11752
    %v12308 = vunpack.c.h.b16 %v11752
    %v12309 = vunpack.c.l.b16 %v11753
    %v12310 = vunpack.c.h.b16 %v11753
    %v12311 = vunpack.c.l.b16 %v11754
    %v12312 = vunpack.c.h.b16 %v11754
    %v12313 = vunpack.c.l.b16 %v11755
    %v12314 = vunpack.c.h.b16 %v11755
    %v12315 = vunpack.c.l.b16 %v11756
    %v12316 = vunpack.c.h.b16 %v11756
    %v12317 = vunpack.c.l.b16 %v11757
    %v12318 = vunpack.c.h.b16 %v11757
    %v12319 = vunpack.c.l.b16 %v11758
    %v12320 = vunpack.c.h.b16 %v11758
    %v12321 = vunpack.c.l.b16 %v11759
    %v12322 = vunpack.c.h.b16 %v11759
    %v12323 = vunpack.c.l.b16 %v11760
    %v12324 = vunpack.c.h.b16 %v11760
    %v12325 = vunpack.c.l.b16 %v11761
    %v12326 = vunpack.c.h.b16 %v11761
    %v12327 = vunpack.c.l.b16 %v11762
    %v12328 = vunpack.c.h.b16 %v11762
    %v12329 = vunpack.c.l.b16 %v11763
    %v12330 = vunpack.c.h.b16 %v11763
    %v12331 = vunpack.c.l.b16 %v11764
    %v12332 = vunpack.c.h.b16 %v11764
    %v12333 = vunpack.c.l.b16 %v11765
    %v12334 = vunpack.c.h.b16 %v11765
    %v12335 = vunpack.c.l.b16 %v11766
    %v12336 = vunpack.c.h.b16 %v11766
    %v12337 = vunpack.c.l.b16 %v11767
    %v12338 = vunpack.c.h.b16 %v11767
    %v12339 = vunpack.c.l.b16 %v11768
    %v12340 = vunpack.c.h.b16 %v11768
    %v12341 = vunpack.c.l.b16 %v11769
    %v12342 = vunpack.c.h.b16 %v11769
    %v12343 = vunpack.c.l.b16 %v11770
    %v12344 = vunpack.c.h.b16 %v11770
    %v12345 = vunpack.c.l.b16 %v11771
    %v12346 = vunpack.c.h.b16 %v11771
    %v12347 = vunpack.c.l.b16 %v11772
    %v12348 = vunpack.c.h.b16 %v11772
    %v12349 = vunpack.c.l.b16 %v11773
    %v12350 = vunpack.c.h.b16 %v11773
    %v12351 = vunpack.c.l.b16 %v11774
    %v12352 = vunpack.c.h.b16 %v11774
    %v12353 = vunpack.c.l.b16 %v11775
    %v12354 = vunpack.c.h.b16 %v11775
    %v12355 = vunpack.c.l.b16 %v11776
    %v12356 = vunpack.c.h.b16 %v11776
    %v12357 = vunpack.c.l.b16 %v11777
    %v12358 = vunpack.c.h.b16 %v11777
    %v12359 = vunpack.c.l.b16 %v11778
    %v12360 = vunpack.c.h.b16 %v11778
    %v12361 = vunpack.c.l.b16 %v11779
    %v12362 = vunpack.c.h.b16 %v11779
    %v12363 = vunpack.c.l.b16 %v11780
    %v12364 = vunpack.c.h.b16 %v11780
    %v12365 = vunpack.c.l.b16 %v11781
    %v12366 = vunpack.c.h.b16 %v11781
    %v12367 = vunpack.c.l.b16 %v11782
    %v12368 = vunpack.c.h.b16 %v11782
    %v12369 = vunpack.c.l.b16 %v11783
    %v12370 = vunpack.c.h.b16 %v11783
    %v12371 = vunpack.c.l.b16 %v11784
    %v12372 = vunpack.c.h.b16 %v11784
    %v12373 = vunpack.c.l.b16 %v11785
    %v12374 = vunpack.c.h.b16 %v11785
    %v12375 = vunpack.c.l.b16 %v11786
    %v12376 = vunpack.c.h.b16 %v11786
    %v12377 = vunpack.c.l.b16 %v11787
    %v12378 = vunpack.c.h.b16 %v11787
    %v12379 = vunpack.c.l.b16 %v11788
    %v12380 = vunpack.c.h.b16 %v11788
    %v12381 = vunpack.c.l.b16 %v11789
    %v12382 = vunpack.c.h.b16 %v11789
    %v12383 = vunpack.c.l.b16 %v11790
    %v12384 = vunpack.c.h.b16 %v11790
    %v12385 = vunpack.c.l.b16 %v11791
    %v12386 = vunpack.c.h.b16 %v11791
    %v12387 = vunpack.c.l.b16 %v11792
    %v12388 = vunpack.c.h.b16 %v11792
    %v12389 = vunpack.c.l.b16 %v11793
    %v12390 = vunpack.c.h.b16 %v11793
    %v12391 = vunpack.c.l.b16 %v11794
    %v12392 = vunpack.c.h.b16 %v11794
    %v12393 = vunpack.c.l.b16 %v11795
    %v12394 = vunpack.c.h.b16 %v11795
    %v12395 = vunpack.c.l.b16 %v11796
    %v12396 = vunpack.c.h.b16 %v11796
    %v12397 = vunpack.c.l.b16 %v11797
    %v12398 = vunpack.c.h.b16 %v11797
    %v12399 = vunpack.c.l.b16 %v11798
    %v12400 = vunpack.c.h.b16 %v11798
    %v12401 = vunpack.c.l.b16 %v11799
    %v12402 = vunpack.c.h.b16 %v11799
    %v12403 = vunpack.c.l.b16 %v11800
    %v12404 = vunpack.c.h.b16 %v11800
    %v12405 = vunpack.c.l.b16 %v11801
    %v12406 = vunpack.c.h.b16 %v11801
    %v12407 = vunpack.c.l.b16 %v11802
    %v12408 = vunpack.c.h.b16 %v11802
    %v12409 = vunpack.c.l.b16 %v11803
    %v12410 = vunpack.c.h.b16 %v11803
    %v12411 = vunpack.c.l.b16 %v11804
    %v12412 = vunpack.c.h.b16 %v11804
    %v12413 = vunpack.c.l.b16 %v11805
    %v12414 = vunpack.c.h.b16 %v11805
    %v12415 = vunpack.c.l.b16 %v11806
    %v12416 = vunpack.c.h.b16 %v11806
    %v12417 = vunpack.c.l.b16 %v11807
    %v12418 = vunpack.c.h.b16 %v11807
    %v12419 = vunpack.c.l.b16 %v11808
    %v12420 = vunpack.c.h.b16 %v11808
    %v12421 = vunpack.c.l.b16 %v11809
    %v12422 = vunpack.c.h.b16 %v11809
    %v12423 = vunpack.c.l.b16 %v11810
    %v12424 = vunpack.c.h.b16 %v11810
    %v12425 = vunpack.c.l.b16 %v11811
    %v12426 = vunpack.c.h.b16 %v11811
    %v12427 = vunpack.c.l.b16 %v11812
    %v12428 = vunpack.c.h.b16 %v11812
    %v12429 = vunpack.c.l.b16 %v11813
    %v12430 = vunpack.c.h.b16 %v11813
    %v12431 = vunpack.c.l.b16 %v11814
    %v12432 = vunpack.c.h.b16 %v11814
    %v12433 = vunpack.c.l.b16 %v11815
    %v12434 = vunpack.c.h.b16 %v11815
    %v12435 = vunpack.c.l.b16 %v11816
    %v12436 = vunpack.c.h.b16 %v11816
    %v12437 = vunpack.c.l.b16 %v11817
    %v12438 = vunpack.c.h.b16 %v11817
    %v12439 = vunpack.c.l.b16 %v11818
    %v12440 = vunpack.c.h.b16 %v11818
    %v12441 = vunpack.c.l.b16 %v11819
    %v12442 = vunpack.c.h.b16 %v11819
    %v12443 = vunpack.c.l.b16 %v11820
    %v12444 = vunpack.c.h.b16 %v11820
    %v12445 = vunpack.c.l.b16 %v11821
    %v12446 = vunpack.c.h.b16 %v11821
    %v12447 = vunpack.c.l.b16 %v11822
    %v12448 = vunpack.c.h.b16 %v11822
    %v12449 = vunpack.c.l.b16 %v11823
    %v12450 = vunpack.c.h.b16 %v11823
    %v12451 = vunpack.c.l.b16 %v11824
    %v12452 = vunpack.c.h.b16 %v11824
    %v12453 = vunpack.c.l.b16 %v11825
    %v12454 = vunpack.c.h.b16 %v11825
    %v12455 = vunpack.c.l.b16 %v11826
    %v12456 = vunpack.c.h.b16 %v11826
    %v12457 = vunpack.c.l.b16 %v11827
    %v12458 = vunpack.c.h.b16 %v11827
    %v12459 = vunpack.c.l.b16 %v11828
    %v12460 = vunpack.c.h.b16 %v11828
    %v12461 = vunpack.c.l.b16 %v11829
    %v12462 = vunpack.c.h.b16 %v11829
    %v12463 = vunpack.c.l.b16 %v11830
    %v12464 = vunpack.c.h.b16 %v11830
    %v12465 = vunpack.c.l.b16 %v11831
    %v12466 = vunpack.c.h.b16 %v11831
    %v12467 = vunpack.c.l.b16 %v11832
    %v12468 = vunpack.c.h.b16 %v11832
    %v12469 = vunpack.c.l.b16 %v11833
    %v12470 = vunpack.c.h.b16 %v11833
    %v12471 = vunpack.c.l.b16 %v11834
    %v12472 = vunpack.c.h.b16 %v11834
    %v12473 = vunpack.c.l.b16 %v11835
    %v12474 = vunpack.c.h.b16 %v11835
    %v12475 = vunpack.c.l.b16 %v11836
    %v12476 = vunpack.c.h.b16 %v11836
    %v12477 = vunpack.c.l.b16 %v11837
    %v12478 = vunpack.c.h.b16 %v11837
    %v12479 = vunpack.c.l.b16 %v11838
    %v12480 = vunpack.c.h.b16 %v11838
    %v12481 = vunpack.c.l.b16 %v11839
    %v12482 = vunpack.c.h.b16 %v11839
    %v12483 = vunpack.c.l.b16 %v11840
    %v12484 = vunpack.c.h.b16 %v11840
    %v12485 = vunpack.c.l.b16 %v11841
    %v12486 = vunpack.c.h.b16 %v11841
    %v12487 = vunpack.c.l.b16 %v11842
    %v12488 = vunpack.c.h.b16 %v11842
    %v12489 = vunpack.c.l.b16 %v11843
    %v12490 = vunpack.c.h.b16 %v11843
    %v12491 = vunpack.c.l.b16 %v11844
    %v12492 = vunpack.c.h.b16 %v11844
    %v12493 = vunpack.c.l.b16 %v11845
    %v12494 = vunpack.c.h.b16 %v11845
    %v12495 = vunpack.c.l.b16 %v11846
    %v12496 = vunpack.c.h.b16 %v11846
    %v12497 = vunpack.c.l.b16 %v11847
    %v12498 = vunpack.c.h.b16 %v11847
    %v12499 = vunpack.c.l.b16 %v11848
    %v12500 = vunpack.c.h.b16 %v11848
    %v12501 = vunpack.c.l.b16 %v11849
    %v12502 = vunpack.c.h.b16 %v11849
    %v12503 = vunpack.c.l.b16 %v11850
    %v12504 = vunpack.c.h.b16 %v11850
    %v12505 = vunpack.c.l.b16 %v11851
    %v12506 = vunpack.c.h.b16 %v11851
    %v12507 = vunpack.c.l.b16 %v11852
    %v12508 = vunpack.c.h.b16 %v11852
    %v12509 = vunpack.c.l.b16 %v11853
    %v12510 = vunpack.c.h.b16 %v11853
    %v12511 = vunpack.c.l.b16 %v11854
    %v12512 = vunpack.c.h.b16 %v11854
    %v12513 = vunpack.c.l.b16 %v11855
    %v12514 = vunpack.c.h.b16 %v11855
    %v12515 = vunpack.c.l.b16 %v11856
    %v12516 = vunpack.c.h.b16 %v11856
    %v12517 = vunpack.c.l.b16 %v11857
    %v12518 = vunpack.c.h.b16 %v11857
    %v12519 = vunpack.c.l.b16 %v11858
    %v12520 = vunpack.c.h.b16 %v11858
    %v12521 = vunpack.c.l.b16 %v11859
    %v12522 = vunpack.c.h.b16 %v11859
    %v12523 = vunpack.c.l.b16 %v11860
    %v12524 = vunpack.c.h.b16 %v11860
    %v12525 = vunpack.c.l.b16 %v11861
    %v12526 = vunpack.c.h.b16 %v11861
    %v12527 = vunpack.c.l.b16 %v11862
    %v12528 = vunpack.c.h.b16 %v11862
    %v12529 = vunpack.c.l.b16 %v11863
    %v12530 = vunpack.c.h.b16 %v11863
    %v12531 = vunpack.c.l.b16 %v11864
    %v12532 = vunpack.c.h.b16 %v11864
    %v12533 = vunpack.c.l.b16 %v11865
    %v12534 = vunpack.c.h.b16 %v11865
    %v12535 = vunpack.c.l.b16 %v11866
    %v12536 = vunpack.c.h.b16 %v11866
    %v12537 = vunpack.c.l.b16 %v11867
    %v12538 = vunpack.c.h.b16 %v11867
    %v12539 = vunpack.c.l.b16 %v11868
    %v12540 = vunpack.c.h.b16 %v11868
    %v12541 = vunpack.c.l.b16 %v11869
    %v12542 = vunpack.c.h.b16 %v11869
    %v12543 = vunpack.c.l.b16 %v11870
    %v12544 = vunpack.c.h.b16 %v11870
    %v12545 = vunpack.c.l.b16 %v11871
    %v12546 = vunpack.c.h.b16 %v11871
    %v12547 = vunpack.c.l.b16 %v11872
    %v12548 = vunpack.c.h.b16 %v11872
    %v12549 = vunpack.c.l.b16 %v11873
    %v12550 = vunpack.c.h.b16 %v11873
    %v12551 = vunpack.c.l.b16 %v11874
    %v12552 = vunpack.c.h.b16 %v11874
    %v12553 = vunpack.c.l.b16 %v11875
    %v12554 = vunpack.c.h.b16 %v11875
    %v12555 = vunpack.c.l.b16 %v11876
    %v12556 = vunpack.c.h.b16 %v11876
    %v12557 = vunpack.c.l.b16 %v11877
    %v12558 = vunpack.c.h.b16 %v11877
    %v12559 = vunpack.c.l.b16 %v11878
    %v12560 = vunpack.c.h.b16 %v11878
    %v12561 = vunpack.c.l.b16 %v11879
    %v12562 = vunpack.c.h.b16 %v11879
    %v12563 = vunpack.c.l.b16 %v11880
    %v12564 = vunpack.c.h.b16 %v11880
    %v12565 = vunpack.c.l.b16 %v11881
    %v12566 = vunpack.c.h.b16 %v11881
    %v12567 = vunpack.c.l.b16 %v11882
    %v12568 = vunpack.c.h.b16 %v11882
    %v12569 = vunpack.c.l.b16 %v11883
    %v12570 = vunpack.c.h.b16 %v11883
    %v12571 = vunpack.c.l.b16 %v11884
    %v12572 = vunpack.c.h.b16 %v11884
    %v12573 = vunpack.c.l.b16 %v11885
    %v12574 = vunpack.c.h.b16 %v11885
    %v12575 = vunpack.c.l.b16 %v11886
    %v12576 = vunpack.c.h.b16 %v11886
    %v12577 = vunpack.c.l.b16 %v11887
    %v12578 = vunpack.c.h.b16 %v11887
    %v12579 = vunpack.c.l.b16 %v11888
    %v12580 = vunpack.c.h.b16 %v11888
    %v12581 = vunpack.c.l.b16 %v11889
    %v12582 = vunpack.c.h.b16 %v11889
    %v12583 = vunpack.c.l.b16 %v11890
    %v12584 = vunpack.c.h.b16 %v11890
    %v12585 = vunpack.c.l.b16 %v11891
    %v12586 = vunpack.c.h.b16 %v11891
    %v12587 = vunpack.c.l.b16 %v11892
    %v12588 = vunpack.c.h.b16 %v11892
    %v12589 = vunpack.c.l.b16 %v11893
    %v12590 = vunpack.c.h.b16 %v11893
    %v12591 = vunpack.c.l.b16 %v11894
    %v12592 = vunpack.c.h.b16 %v11894
    %v12593 = vunpack.c.l.b16 %v11895
    %v12594 = vunpack.c.h.b16 %v11895
    %v12595 = vunpack.c.l.b16 %v11896
    %v12596 = vunpack.c.h.b16 %v11896
    %v12597 = vunpack.c.l.b16 %v11897
    %v12598 = vunpack.c.h.b16 %v11897
    %v12599 = vunpack.c.l.b16 %v11898
    %v12600 = vunpack.c.h.b16 %v11898
    %v12601 = vunpack.c.l.b16 %v11899
    %v12602 = vunpack.c.h.b16 %v11899
    %v12603 = vunpack.c.l.b16 %v11900
    %v12604 = vunpack.c.h.b16 %v11900
    %v12605 = vunpack.c.l.b16 %v11901
    %v12606 = vunpack.c.h.b16 %v11901
    %v12607 = vunpack.c.l.b16 %v11902
    %v12608 = vunpack.c.h.b16 %v11902
    %v12609 = vunpack.c.l.b16 %v11903
    %v12610 = vunpack.c.h.b16 %v11903
    %v12611 = vunpack.c.l.b16 %v11904
    %v12612 = vunpack.c.h.b16 %v11904
    %v12613 = vunpack.c.l.b16 %v11905
    %v12614 = vunpack.c.h.b16 %v11905
    %v12615 = vunpack.c.l.b16 %v11906
    %v12616 = vunpack.c.h.b16 %v11906
    %v12617 = vunpack.c.l.b16 %v11907
    %v12618 = vunpack.c.h.b16 %v11907
    %v12619 = vunpack.c.l.b16 %v11908
    %v12620 = vunpack.c.h.b16 %v11908
    %v12621 = vunpack.c.l.b16 %v11909
    %v12622 = vunpack.c.h.b16 %v11909
    %v12623 = vunpack.c.l.b16 %v11910
    %v12624 = vunpack.c.h.b16 %v11910
    %v12625 = vunpack.c.l.b16 %v11911
    %v12626 = vunpack.c.h.b16 %v11911
    %v12627 = vunpack.c.l.b16 %v11912
    %v12628 = vunpack.c.h.b16 %v11912
    %v12629 = vunpack.c.l.b16 %v11913
    %v12630 = vunpack.c.h.b16 %v11913
    %v12631 = vunpack.c.l.b16 %v11914
    %v12632 = vunpack.c.h.b16 %v11914
    %v12633 = vunpack.c.l.b16 %v11915
    %v12634 = vunpack.c.h.b16 %v11915
    %v12635 = vunpack.c.l.b16 %v11916
    %v12636 = vunpack.c.h.b16 %v11916
    %v12637 = vunpack.c.l.b16 %v11917
    %v12638 = vunpack.c.h.b16 %v11917
    %v12639 = vunpack.c.l.b16 %v11918
    %v12640 = vunpack.c.h.b16 %v11918
    %v12641 = vunpack.c.l.b16 %v11919
    %v12642 = vunpack.c.h.b16 %v11919
    %v12643 = vunpack.c.l.b16 %v11920
    %v12644 = vunpack.c.h.b16 %v11920
    %v12645 = vunpack.c.l.b16 %v11921
    %v12646 = vunpack.c.h.b16 %v11921
    %v12647 = vunpack.c.l.b16 %v11922
    %v12648 = vunpack.c.h.b16 %v11922
    %v12649 = vunpack.c.l.b16 %v11923
    %v12650 = vunpack.c.h.b16 %v11923
    %v12651 = vunpack.c.l.b16 %v11924
    %v12652 = vunpack.c.h.b16 %v11924
    %v12653 = vunpack.c.l.b16 %v11925
    %v12654 = vunpack.c.h.b16 %v11925
    %v12655 = vunpack.c.l.b16 %v11926
    %v12656 = vunpack.c.h.b16 %v11926
    %v12657 = vunpack.c.l.b16 %v11927
    %v12658 = vunpack.c.h.b16 %v11927
    %v12659 = vunpack.c.l.b16 %v11928
    %v12660 = vunpack.c.h.b16 %v11928
    %v12661 = vunpack.c.l.b16 %v11929
    %v12662 = vunpack.c.h.b16 %v11929
    %v12663 = vunpack.c.l.b16 %v11930
    %v12664 = vunpack.c.h.b16 %v11930
    %v12665 = vunpack.c.l.b16 %v11931
    %v12666 = vunpack.c.h.b16 %v11931
    %v12667 = vunpack.c.l.b16 %v11932
    %v12668 = vunpack.c.h.b16 %v11932
    %v12669 = vunpack.c.l.b16 %v11933
    %v12670 = vunpack.c.h.b16 %v11933
    %v12671 = vunpack.c.l.b16 %v11934
    %v12672 = vunpack.c.h.b16 %v11934
    %v12673 = vunpack.c.l.b16 %v11935
    %v12674 = vunpack.c.h.b16 %v11935
    %v12675 = vunpack.c.l.b16 %v11936
    %v12676 = vunpack.c.h.b16 %v11936
    %v12677 = vunpack.c.l.b16 %v11937
    %v12678 = vunpack.c.h.b16 %v11937
    %v12679 = vunpack.c.l.b16 %v11938
    %v12680 = vunpack.c.h.b16 %v11938
    %v12681 = vunpack.c.l.b16 %v11939
    %v12682 = vunpack.c.h.b16 %v11939
    %v12683 = vunpack.c.l.b16 %v11940
    %v12684 = vunpack.c.h.b16 %v11940
    %v12685 = vunpack.c.l.b16 %v11941
    %v12686 = vunpack.c.h.b16 %v11941
    %v12687 = vunpack.c.l.b16 %v11942
    %v12688 = vunpack.c.h.b16 %v11942
    %v12689 = vunpack.c.l.b16 %v11943
    %v12690 = vunpack.c.h.b16 %v11943
    %v12691 = vunpack.c.l.b16 %v11944
    %v12692 = vunpack.c.h.b16 %v11944
    %v12693 = vunpack.c.l.b16 %v11945
    %v12694 = vunpack.c.h.b16 %v11945
    %v12695 = vunpack.c.l.b16 %v11946
    %v12696 = vunpack.c.h.b16 %v11946
    %v12697 = vunpack.c.l.b16 %v11947
    %v12698 = vunpack.c.h.b16 %v11947
    %v12699 = vunpack.c.l.b16 %v11948
    %v12700 = vunpack.c.h.b16 %v11948
    %v12701 = vunpack.c.l.b16 %v11949
    %v12702 = vunpack.c.h.b16 %v11949
    %v12703 = vunpack.c.l.b16 %v11950
    %v12704 = vunpack.c.h.b16 %v11950
    %v12705 = vunpack.c.l.b16 %v11951
    %v12706 = vunpack.c.h.b16 %v11951
    %v12707 = vunpack.c.l.b16 %v11952
    %v12708 = vunpack.c.h.b16 %v11952
    %v12709 = vunpack.c.l.b16 %v11953
    %v12710 = vunpack.c.h.b16 %v11953
    %v12711 = vunpack.c.l.b16 %v11954
    %v12712 = vunpack.c.h.b16 %v11954
    %v12713 = vunpack.c.l.b16 %v11955
    %v12714 = vunpack.c.h.b16 %v11955
    %v12715 = vunpack.c.l.b16 %v11956
    %v12716 = vunpack.c.h.b16 %v11956
    %v12717 = vunpack.c.l.b16 %v11957
    %v12718 = vunpack.c.h.b16 %v11957
    %v12719 = vunpack.c.l.b16 %v11958
    %v12720 = vunpack.c.h.b16 %v11958
    %v12721 = vunpack.c.l.b16 %v11959
    %v12722 = vunpack.c.h.b16 %v11959
    %v12723 = vunpack.c.l.b16 %v11960
    %v12724 = vunpack.c.h.b16 %v11960
    %v12725 = vunpack.c.l.b16 %v11961
    %v12726 = vunpack.c.h.b16 %v11961
    %v12727 = vunpack.c.l.b16 %v11962
    %v12728 = vunpack.c.h.b16 %v11962
    %v12729 = vunpack.c.l.b16 %v11963
    %v12730 = vunpack.c.h.b16 %v11963
    %v12731 = vunpack.c.l.b16 %v11964
    %v12732 = vunpack.c.h.b16 %v11964
    %v12733 = vunpack.c.l.b16 %v11965
    %v12734 = vunpack.c.h.b16 %v11965
    %v12735 = vunpack.c.l.b16 %v11966
    %v12736 = vunpack.c.h.b16 %v11966
    %v12737 = vunpack.c.l.b16 %v11967
    %v12738 = vunpack.c.h.b16 %v11967
    %v12739 = vunpack.c.l.b16 %v11968
    %v12740 = vunpack.c.h.b16 %v11968
    %v12741 = vunpack.c.l.b16 %v11969
    %v12742 = vunpack.c.h.b16 %v11969
    %v12743 = vunpack.c.l.b16 %v11970
    %v12744 = vunpack.c.h.b16 %v11970
    %v12745 = vunpack.c.l.b16 %v11971
    %v12746 = vunpack.c.h.b16 %v11971
    %v12747 = vunpack.c.l.b16 %v11972
    %v12748 = vunpack.c.h.b16 %v11972
    %v12749 = vunpack.c.l.b16 %v11973
    %v12750 = vunpack.c.h.b16 %v11973
    %v12751 = vunpack.c.l.b16 %v11974
    %v12752 = vunpack.c.h.b16 %v11974
    %v12753 = vunpack.c.l.b16 %v11975
    %v12754 = vunpack.c.h.b16 %v11975
    %v12755 = vunpack.c.l.b16 %v11976
    %v12756 = vunpack.c.h.b16 %v11976
    %v12757 = vunpack.c.l.b16 %v11977
    %v12758 = vunpack.c.h.b16 %v11977
    %v12759 = vunpack.c.l.b16 %v11978
    %v12760 = vunpack.c.h.b16 %v11978
    %v12761 = vunpack.c.l.b16 %v11979
    %v12762 = vunpack.c.h.b16 %v11979
    %v12763 = vunpack.c.l.b16 %v11980
    %v12764 = vunpack.c.h.b16 %v11980
    %v12765 = vunpack.c.l.b16 %v11981
    %v12766 = vunpack.c.h.b16 %v11981
    %v12767 = vunpack.c.l.b16 %v11982
    %v12768 = vunpack.c.h.b16 %v11982
    %v12769 = vunpack.c.l.b16 %v11983
    %v12770 = vunpack.c.h.b16 %v11983
    %v12771 = vunpack.c.l.b16 %v11984
    %v12772 = vunpack.c.h.b16 %v11984
    %v12773 = vunpack.c.l.b16 %v11985
    %v12774 = vunpack.c.h.b16 %v11985
    %v12775 = vunpack.c.l.b16 %v11986
    %v12776 = vunpack.c.h.b16 %v11986
    %v12777 = vpack.c.b16 %v12269, %v12265
    %v12778 = vpack.c.b16 %v12270, %v12266
    %v12779 = vpack.c.b16 %v12271, %v12267
    %v12780 = vpack.c.b16 %v12272, %v12268
    %v12781 = vpack.c.b16 %v12277, %v12273
    %v12782 = vpack.c.b16 %v12278, %v12274
    %v12783 = vpack.c.b16 %v12279, %v12275
    %v12784 = vpack.c.b16 %v12280, %v12276
    %v12785 = vpack.c.b16 %v12285, %v12281
    %v12786 = vpack.c.b16 %v12286, %v12282
    %v12787 = vpack.c.b16 %v12287, %v12283
    %v12788 = vpack.c.b16 %v12288, %v12284
    %v12789 = vpack.c.b16 %v12293, %v12289
    %v12790 = vpack.c.b16 %v12294, %v12290
    %v12791 = vpack.c.b16 %v12295, %v12291
    %v12792 = vpack.c.b16 %v12296, %v12292
    %v12793 = vpack.c.b16 %v12301, %v12297
    %v12794 = vpack.c.b16 %v12302, %v12298
    %v12795 = vpack.c.b16 %v12303, %v12299
    %v12796 = vpack.c.b16 %v12304, %v12300
    %v12797 = vpack.c.b16 %v12309, %v12305
    %v12798 = vpack.c.b16 %v12310, %v12306
    %v12799 = vpack.c.b16 %v12311, %v12307
    %v12800 = vpack.c.b16 %v12312, %v12308
    %v12801 = vpack.c.b16 %v12317, %v12313
    %v12802 = vpack.c.b16 %v12318, %v12314
    %v12803 = vpack.c.b16 %v12319, %v12315
    %v12804 = vpack.c.b16 %v12320, %v12316
    %v12805 = vpack.c.b16 %v12325, %v12321
    %v12806 = vpack.c.b16 %v12326, %v12322
    %v12807 = vpack.c.b16 %v12327, %v12323
    %v12808 = vpack.c.b16 %v12328, %v12324
    %v12809 = vpack.c.b16 %v12333, %v12329
    %v12810 = vpack.c.b16 %v12334, %v12330
    %v12811 = vpack.c.b16 %v12335, %v12331
    %v12812 = vpack.c.b16 %v12336, %v12332
    %v12813 = vpack.c.b16 %v12341, %v12337
    %v12814 = vpack.c.b16 %v12342, %v12338
    %v12815 = vpack.c.b16 %v12343, %v12339
    %v12816 = vpack.c.b16 %v12344, %v12340
    %v12817 = vpack.c.b16 %v12349, %v12345
    %v12818 = vpack.c.b16 %v12350, %v12346
    %v12819 = vpack.c.b16 %v12351, %v12347
    %v12820 = vpack.c.b16 %v12352, %v12348
    %v12821 = vpack.c.b16 %v12357, %v12353
    %v12822 = vpack.c.b16 %v12358, %v12354
    %v12823 = vpack.c.b16 %v12359, %v12355
    %v12824 = vpack.c.b16 %v12360, %v12356
    %v12825 = vpack.c.b16 %v12365, %v12361
    %v12826 = vpack.c.b16 %v12366, %v12362
    %v12827 = vpack.c.b16 %v12367, %v12363
    %v12828 = vpack.c.b16 %v12368, %v12364
    %v12829 = vpack.c.b16 %v12373, %v12369
    %v12830 = vpack.c.b16 %v12374, %v12370
    %v12831 = vpack.c.b16 %v12375, %v12371
    %v12832 = vpack.c.b16 %v12376, %v12372
    %v12833 = vpack.c.b16 %v12381, %v12377
    %v12834 = vpack.c.b16 %v12382, %v12378
    %v12835 = vpack.c.b16 %v12383, %v12379
    %v12836 = vpack.c.b16 %v12384, %v12380
    %v12837 = vpack.c.b16 %v12389, %v12385
    %v12838 = vpack.c.b16 %v12390, %v12386
    %v12839 = vpack.c.b16 %v12391, %v12387
    %v12840 = vpack.c.b16 %v12392, %v12388
    %v12841 = vpack.c.b16 %v12397, %v12393
    %v12842 = vpack.c.b16 %v12398, %v12394
    %v12843 = vpack.c.b16 %v12399, %v12395
    %v12844 = vpack.c.b16 %v12400, %v12396
    %v12845 = vpack.c.b16 %v12405, %v12401
    %v12846 = vpack.c.b16 %v12406, %v12402
    %v12847 = vpack.c.b16 %v12407, %v12403
    %v12848 = vpack.c.b16 %v12408, %v12404
    %v12849 = vpack.c.b16 %v12413, %v12409
    %v12850 = vpack.c.b16 %v12414, %v12410
    %v12851 = vpack.c.b16 %v12415, %v12411
    %v12852 = vpack.c.b16 %v12416, %v12412
    %v12853 = vpack.c.b16 %v12421, %v12417
    %v12854 = vpack.c.b16 %v12422, %v12418
    %v12855 = vpack.c.b16 %v12423, %v12419
    %v12856 = vpack.c.b16 %v12424, %v12420
    %v12857 = vpack.c.b16 %v12429, %v12425
    %v12858 = vpack.c.b16 %v12430, %v12426
    %v12859 = vpack.c.b16 %v12431, %v12427
    %v12860 = vpack.c.b16 %v12432, %v12428
    %v12861 = vpack.c.b16 %v12437, %v12433
    %v12862 = vpack.c.b16 %v12438, %v12434
    %v12863 = vpack.c.b16 %v12439, %v12435
    %v12864 = vpack.c.b16 %v12440, %v12436
    %v12865 = vpack.c.b16 %v12445, %v12441
    %v12866 = vpack.c.b16 %v12446, %v12442
    %v12867 = vpack.c.b16 %v12447, %v12443
    %v12868 = vpack.c.b16 %v12448, %v12444
    %v12869 = vpack.c.b16 %v12453, %v12449
    %v12870 = vpack.c.b16 %v12454, %v12450
    %v12871 = vpack.c.b16 %v12455, %v12451
    %v12872 = vpack.c.b16 %v12456, %v12452
    %v12873 = vpack.c.b16 %v12461, %v12457
    %v12874 = vpack.c.b16 %v12462, %v12458
    %v12875 = vpack.c.b16 %v12463, %v12459
    %v12876 = vpack.c.b16 %v12464, %v12460
    %v12877 = vpack.c.b16 %v12469, %v12465
    %v12878 = vpack.c.b16 %v12470, %v12466
    %v12879 = vpack.c.b16 %v12471, %v12467
    %v12880 = vpack.c.b16 %v12472, %v12468
    %v12881 = vpack.c.b16 %v12477, %v12473
    %v12882 = vpack.c.b16 %v12478, %v12474
    %v12883 = vpack.c.b16 %v12479, %v12475
    %v12884 = vpack.c.b16 %v12480, %v12476
    %v12885 = vpack.c.b16 %v12485, %v12481
    %v12886 = vpack.c.b16 %v12486, %v12482
    %v12887 = vpack.c.b16 %v12487, %v12483
    %v12888 = vpack.c.b16 %v12488, %v12484
    %v12889 = vpack.c.b16 %v12493, %v12489
    %v12890 = vpack.c.b16 %v12494, %v12490
    %v12891 = vpack.c.b16 %v12495, %v12491
    %v12892 = vpack.c.b16 %v12496, %v12492
    %v12893 = vpack.c.b16 %v12501, %v12497
    %v12894 = vpack.c.b16 %v12502, %v12498
    %v12895 = vpack.c.b16 %v12503, %v12499
    %v12896 = vpack.c.b16 %v12504, %v12500
    %v12897 = vpack.c.b16 %v12509, %v12505
    %v12898 = vpack.c.b16 %v12510, %v12506
    %v12899 = vpack.c.b16 %v12511, %v12507
    %v12900 = vpack.c.b16 %v12512, %v12508
    %v12901 = vpack.c.b16 %v12517, %v12513
    %v12902 = vpack.c.b16 %v12518, %v12514
    %v12903 = vpack.c.b16 %v12519, %v12515
    %v12904 = vpack.c.b16 %v12520, %v12516
    %v12905 = vpack.c.b16 %v12525, %v12521
    %v12906 = vpack.c.b16 %v12526, %v12522
    %v12907 = vpack.c.b16 %v12527, %v12523
    %v12908 = vpack.c.b16 %v12528, %v12524
    %v12909 = vpack.c.b16 %v12533, %v12529
    %v12910 = vpack.c.b16 %v12534, %v12530
    %v12911 = vpack.c.b16 %v12535, %v12531
    %v12912 = vpack.c.b16 %v12536, %v12532
    %v12913 = vpack.c.b16 %v12541, %v12537
    %v12914 = vpack.c.b16 %v12542, %v12538
    %v12915 = vpack.c.b16 %v12543, %v12539
    %v12916 = vpack.c.b16 %v12544, %v12540
    %v12917 = vpack.c.b16 %v12549, %v12545
    %v12918 = vpack.c.b16 %v12550, %v12546
    %v12919 = vpack.c.b16 %v12551, %v12547
    %v12920 = vpack.c.b16 %v12552, %v12548
    %v12921 = vpack.c.b16 %v12557, %v12553
    %v12922 = vpack.c.b16 %v12558, %v12554
    %v12923 = vpack.c.b16 %v12559, %v12555
    %v12924 = vpack.c.b16 %v12560, %v12556
    %v12925 = vpack.c.b16 %v12565, %v12561
    %v12926 = vpack.c.b16 %v12566, %v12562
    %v12927 = vpack.c.b16 %v12567, %v12563
    %v12928 = vpack.c.b16 %v12568, %v12564
    %v12929 = vpack.c.b16 %v12573, %v12569
    %v12930 = vpack.c.b16 %v12574, %v12570
    %v12931 = vpack.c.b16 %v12575, %v12571
    %v12932 = vpack.c.b16 %v12576, %v12572
    %v12933 = vpack.c.b16 %v12581, %v12577
    %v12934 = vpack.c.b16 %v12582, %v12578
    %v12935 = vpack.c.b16 %v12583, %v12579
    %v12936 = vpack.c.b16 %v12584, %v12580
    %v12937 = vpack.c.b16 %v12589, %v12585
    %v12938 = vpack.c.b16 %v12590, %v12586
    %v12939 = vpack.c.b16 %v12591, %v12587
    %v12940 = vpack.c.b16 %v12592, %v12588
    %v12941 = vpack.c.b16 %v12597, %v12593
    %v12942 = vpack.c.b16 %v12598, %v12594
    %v12943 = vpack.c.b16 %v12599, %v12595
    %v12944 = vpack.c.b16 %v12600, %v12596
    %v12945 = vpack.c.b16 %v12605, %v12601
    %v12946 = vpack.c.b16 %v12606, %v12602
    %v12947 = vpack.c.b16 %v12607, %v12603
    %v12948 = vpack.c.b16 %v12608, %v12604
    %v12949 = vpack.c.b16 %v12613, %v12609
    %v12950 = vpack.c.b16 %v12614, %v12610
    %v12951 = vpack.c.b16 %v12615, %v12611
    %v12952 = vpack.c.b16 %v12616, %v12612
    %v12953 = vpack.c.b16 %v12621, %v12617
    %v12954 = vpack.c.b16 %v12622, %v12618
    %v12955 = vpack.c.b16 %v12623, %v12619
    %v12956 = vpack.c.b16 %v12624, %v12620
    %v12957 = vpack.c.b16 %v12629, %v12625
    %v12958 = vpack.c.b16 %v12630, %v12626
    %v12959 = vpack.c.b16 %v12631, %v12627
    %v12960 = vpack.c.b16 %v12632, %v12628
    %v12961 = vpack.c.b16 %v12637, %v12633
    %v12962 = vpack.c.b16 %v12638, %v12634
    %v12963 = vpack.c.b16 %v12639, %v12635
    %v12964 = vpack.c.b16 %v12640, %v12636
    %v12965 = vpack.c.b16 %v12645, %v12641
    %v12966 = vpack.c.b16 %v12646, %v12642
    %v12967 = vpack.c.b16 %v12647, %v12643
    %v12968 = vpack.c.b16 %v12648, %v12644
    %v12969 = vpack.c.b16 %v12653, %v12649
    %v12970 = vpack.c.b16 %v12654, %v12650
    %v12971 = vpack.c.b16 %v12655, %v12651
    %v12972 = vpack.c.b16 %v12656, %v12652
    %v12973 = vpack.c.b16 %v12661, %v12657
    %v12974 = vpack.c.b16 %v12662, %v12658
    %v12975 = vpack.c.b16 %v12663, %v12659
    %v12976 = vpack.c.b16 %v12664, %v12660
    %v12977 = vpack.c.b16 %v12669, %v12665
    %v12978 = vpack.c.b16 %v12670, %v12666
    %v12979 = vpack.c.b16 %v12671, %v12667
    %v12980 = vpack.c.b16 %v12672, %v12668
    %v12981 = vpack.c.b16 %v12677, %v12673
    %v12982 = vpack.c.b16 %v12678, %v12674
    %v12983 = vpack.c.b16 %v12679, %v12675
    %v12984 = vpack.c.b16 %v12680, %v12676
    %v12985 = vpack.c.b16 %v12685, %v12681
    %v12986 = vpack.c.b16 %v12686, %v12682
    %v12987 = vpack.c.b16 %v12687, %v12683
    %v12988 = vpack.c.b16 %v12688, %v12684
    %v12989 = vpack.c.b16 %v12693, %v12689
    %v12990 = vpack.c.b16 %v12694, %v12690
    %v12991 = vpack.c.b16 %v12695, %v12691
    %v12992 = vpack.c.b16 %v12696, %v12692
    %v12993 = vpack.c.b16 %v12701, %v12697
    %v12994 = vpack.c.b16 %v12702, %v12698
    %v12995 = vpack.c.b16 %v12703, %v12699
    %v12996 = vpack.c.b16 %v12704, %v12700
    %v12997 = vpack.c.b16 %v12709, %v12705
    %v12998 = vpack.c.b16 %v12710, %v12706
    %v12999 = vpack.c.b16 %v12711, %v12707
    %v13000 = vpack.c.b16 %v12712, %v12708
    %v13001 = vpack.c.b16 %v12717, %v12713
    %v13002 = vpack.c.b16 %v12718, %v12714
    %v13003 = vpack.c.b16 %v12719, %v12715
    %v13004 = vpack.c.b16 %v12720, %v12716
    %v13005 = vpack.c.b16 %v12725, %v12721
    %v13006 = vpack.c.b16 %v12726, %v12722
    %v13007 = vpack.c.b16 %v12727, %v12723
    %v13008 = vpack.c.b16 %v12728, %v12724
    %v13009 = vpack.c.b16 %v12733, %v12729
    %v13010 = vpack.c.b16 %v12734, %v12730
    %v13011 = vpack.c.b16 %v12735, %v12731
    %v13012 = vpack.c.b16 %v12736, %v12732
    %v13013 = vpack.c.b16 %v12741, %v12737
    %v13014 = vpack.c.b16 %v12742, %v12738
    %v13015 = vpack.c.b16 %v12743, %v12739
    %v13016 = vpack.c.b16 %v12744, %v12740
    %v13017 = vpack.c.b16 %v12749, %v12745
    %v13018 = vpack.c.b16 %v12750, %v12746
    %v13019 = vpack.c.b16 %v12751, %v12747
    %v13020 = vpack.c.b16 %v12752, %v12748
    %v13021 = vpack.c.b16 %v12757, %v12753
    %v13022 = vpack.c.b16 %v12758, %v12754
    %v13023 = vpack.c.b16 %v12759, %v12755
    %v13024 = vpack.c.b16 %v12760, %v12756
    %v13025 = vpack.c.b16 %v12765, %v12761
    %v13026 = vpack.c.b16 %v12766, %v12762
    %v13027 = vpack.c.b16 %v12767, %v12763
    %v13028 = vpack.c.b16 %v12768, %v12764
    %v13029 = vpack.c.b16 %v12773, %v12769
    %v13030 = vpack.c.b16 %v12774, %v12770
    %v13031 = vpack.c.b16 %v12775, %v12771
    %v13032 = vpack.c.b16 %v12776, %v12772
    %13289 = vmatprep.subr.bf16.mxu0 %v12778
    %13290 = vmatpush1.bf16.msra.mxu0 %v12777
    %13291 = vmatprep.subr.bf16.mxu0 %v12782
    %13292 = vmatpush1.bf16.msra.mxu0 %v12781
    %13293 = vmatprep.subr.bf16.mxu0 %v12786
    %13294 = vmatpush1.bf16.msra.mxu0 %v12785
    %13295 = vmatprep.subr.bf16.mxu0 %v12790
    %13296 = vmatpush1.bf16.msra.mxu0 %v12789
    %13297 = vmatprep.subr.bf16.mxu0 %v12794
    %13298 = vmatpush1.bf16.msra.mxu0 %v12793
    %13299 = vmatprep.subr.bf16.mxu0 %v12798
    %13300 = vmatpush1.bf16.msra.mxu0 %v12797
    %13301 = vmatprep.subr.bf16.mxu0 %v12802
    %13302 = vmatpush1.bf16.msra.mxu0 %v12801
    %13303 = vmatprep.subr.bf16.mxu0 %v12806
    %13304 = vmatpush1.bf16.msra.mxu0 %v12805
    %13305 = vmatprep.subr.bf16.mxu0 %v12810
    %13306 = vmatpush1.bf16.msra.mxu0 %v12809
    %13307 = vmatprep.subr.bf16.mxu0 %v12814
    %13308 = vmatpush1.bf16.msra.mxu0 %v12813
    %13309 = vmatprep.subr.bf16.mxu0 %v12818
    %13310 = vmatpush1.bf16.msra.mxu0 %v12817
    %13311 = vmatprep.subr.bf16.mxu0 %v12822
    %13312 = vmatpush1.bf16.msra.mxu0 %v12821
    %13313 = vmatprep.subr.bf16.mxu0 %v12826
    %13314 = vmatpush1.bf16.msra.mxu0 %v12825
    %13315 = vmatprep.subr.bf16.mxu0 %v12830
    %13316 = vmatpush1.bf16.msra.mxu0 %v12829
    %13317 = vmatprep.subr.bf16.mxu0 %v12834
    %13318 = vmatpush1.bf16.msra.mxu0 %v12833
    %13319 = vmatprep.subr.bf16.mxu0 %v12838
    %13320 = vmatpush1.bf16.msra.mxu0 %v12837
    %13321 = vmatprep.mubr.bf16.mxu0 %v11724
    %13322 = vmatmul.mubr.bf16.gmra.mrb[0].mxu0 %v11723
    %v13323 = vpop.f32.mrb[0].mxu0
    %v13324 = vadd.f32 %v11992, %v13323
    %v13325 = vpop.f32.mrb[0].mxu0
    %v13326 = vadd.f32 %v11996, %v13325
    %v13327 = vpop.f32.mrb[0].mxu0
    %v13328 = vadd.f32 %v11992, %v13327
    %v13329 = vpop.f32.mrb[0].mxu0
    %v13330 = vadd.f32 %v11996, %v13329
    %13331 = vdwg.mxu0
    %13332 = vmatprep.subr.bf16.mxu0 %v12842
    %13333 = vmatpush1.bf16.msra.mxu0 %v12841
    %13334 = vmatprep.subr.bf16.mxu0 %v12846
    %13335 = vmatpush1.bf16.msra.mxu0 %v12845
    %13336 = vmatprep.subr.bf16.mxu0 %v12850
    %13337 = vmatpush1.bf16.msra.mxu0 %v12849
    %13338 = vmatprep.subr.bf16.mxu0 %v12854
    %13339 = vmatpush1.bf16.msra.mxu0 %v12853
    %13340 = vmatprep.subr.bf16.mxu0 %v12858
    %13341 = vmatpush1.bf16.msra.mxu0 %v12857
    %13342 = vmatprep.subr.bf16.mxu0 %v12862
    %13343 = vmatpush1.bf16.msra.mxu0 %v12861
    %13344 = vmatprep.subr.bf16.mxu0 %v12866
    %13345 = vmatpush1.bf16.msra.mxu0 %v12865
    %13346 = vmatprep.subr.bf16.mxu0 %v12870
    %13347 = vmatpush1.bf16.msra.mxu0 %v12869
    %13348 = vmatprep.subr.bf16.mxu0 %v12874
    %13349 = vmatpush1.bf16.msra.mxu0 %v12873
    %13350 = vmatprep.subr.bf16.mxu0 %v12878
    %13351 = vmatpush1.bf16.msra.mxu0 %v12877
    %13352 = vmatprep.subr.bf16.mxu0 %v12882
    %13353 = vmatpush1.bf16.msra.mxu0 %v12881
    %13354 = vmatprep.subr.bf16.mxu0 %v12886
    %13355 = vmatpush1.bf16.msra.mxu0 %v12885
    %13356 = vmatprep.subr.bf16.mxu0 %v12890
    %13357 = vmatpush1.bf16.msra.mxu0 %v12889
    %13358 = vmatprep.subr.bf16.mxu0 %v12894
    %13359 = vmatpush1.bf16.msra.mxu0 %v12893
    %13360 = vmatprep.subr.bf16.mxu0 %v12898
    %13361 = vmatpush1.bf16.msra.mxu0 %v12897
    %13362 = vmatprep.subr.bf16.mxu0 %v12902
    %13363 = vmatpush1.bf16.msra.mxu0 %v12901
    %13364 = vmatprep.mubr.bf16.mxu0 %v11726
    %13365 = vmatmul.mubr.bf16.gmra.mrb[0].mxu0 %v11725
    %v13366 = vpop.f32.mrb[0].mxu0
    %v13367 = vadd.f32 %v13324, %v13366
    %v13368 = vpop.f32.mrb[0].mxu0
    %v13369 = vadd.f32 %v13326, %v13368
    %v13370 = vpop.f32.mrb[0].mxu0
    %v13371 = vadd.f32 %v13328, %v13370
    %v13372 = vpop.f32.mrb[0].mxu0
    %v13373 = vadd.f32 %v13330, %v13372
    %13374 = vdwg.mxu0
    %13375 = vmatprep.subr.bf16.mxu0 %v12906
    %13376 = vmatpush1.bf16.msra.mxu0 %v12905
    %13377 = vmatprep.subr.bf16.mxu0 %v12910
    %13378 = vmatpush1.bf16.msra.mxu0 %v12909
    %13379 = vmatprep.subr.bf16.mxu0 %v12914
    %13380 = vmatpush1.bf16.msra.mxu0 %v12913
    %13381 = vmatprep.subr.bf16.mxu0 %v12918
    %13382 = vmatpush1.bf16.msra.mxu0 %v12917
    %13383 = vmatprep.subr.bf16.mxu0 %v12922
    %13384 = vmatpush1.bf16.msra.mxu0 %v12921
    %13385 = vmatprep.subr.bf16.mxu0 %v12926
    %13386 = vmatpush1.bf16.msra.mxu0 %v12925
    %13387 = vmatprep.subr.bf16.mxu0 %v12930
    %13388 = vmatpush1.bf16.msra.mxu0 %v12929
    %13389 = vmatprep.subr.bf16.mxu0 %v12934
    %13390 = vmatpush1.bf16.msra.mxu0 %v12933
    %13391 = vmatprep.subr.bf16.mxu0 %v12938
    %13392 = vmatpush1.bf16.msra.mxu0 %v12937
    %13393 = vmatprep.subr.bf16.mxu0 %v12942
    %13394 = vmatpush1.bf16.msra.mxu0 %v12941
    %13395 = vmatprep.subr.bf16.mxu0 %v12946
    %13396 = vmatpush1.bf16.msra.mxu0 %v12945
    %13397 = vmatprep.subr.bf16.mxu0 %v12950
    %13398 = vmatpush1.bf16.msra.mxu0 %v12949
    %13399 = vmatprep.subr.bf16.mxu0 %v12954
    %13400 = vmatpush1.bf16.msra.mxu0 %v12953
    %13401 = vmatprep.subr.bf16.mxu0 %v12958
    %13402 = vmatpush1.bf16.msra.mxu0 %v12957
    %13403 = vmatprep.subr.bf16.mxu0 %v12962
    %13404 = vmatpush1.bf16.msra.mxu0 %v12961
    %13405 = vmatprep.subr.bf16.mxu0 %v12966
    %13406 = vmatpush1.bf16.msra.mxu0 %v12965
    %13407 = vmatprep.mubr.bf16.mxu0 %v11728
    %13408 = vmatmul.mubr.bf16.gmra.mrb[0].mxu0 %v11727
    %v13409 = vpop.f32.mrb[0].mxu0
    %v13410 = vadd.f32 %v13367, %v13409
    %v13411 = vpop.f32.mrb[0].mxu0
    %v13412 = vadd.f32 %v13369, %v13411
    %v13413 = vpop.f32.mrb[0].mxu0
    %v13414 = vadd.f32 %v13371, %v13413
    %v13415 = vpop.f32.mrb[0].mxu0
    %v13416 = vadd.f32 %v13373, %v13415
    %13417 = vdwg.mxu0
    %13418 = vmatprep.subr.bf16.mxu0 %v12970
    %13419 = vmatpush1.bf16.msra.mxu0 %v12969
    %13420 = vmatprep.subr.bf16.mxu0 %v12974
    %13421 = vmatpush1.bf16.msra.mxu0 %v12973
    %13422 = vmatprep.subr.bf16.mxu0 %v12978
    %13423 = vmatpush1.bf16.msra.mxu0 %v12977
    %13424 = vmatprep.subr.bf16.mxu0 %v12982
    %13425 = vmatpush1.bf16.msra.mxu0 %v12981
    %13426 = vmatprep.subr.bf16.mxu0 %v12986
    %13427 = vmatpush1.bf16.msra.mxu0 %v12985
    %13428 = vmatprep.subr.bf16.mxu0 %v12990
    %13429 = vmatpush1.bf16.msra.mxu0 %v12989
    %13430 = vmatprep.subr.bf16.mxu0 %v12994
    %13431 = vmatpush1.bf16.msra.mxu0 %v12993
    %13432 = vmatprep.subr.bf16.mxu0 %v12998
    %13433 = vmatpush1.bf16.msra.mxu0 %v12997
    %13434 = vmatprep.subr.bf16.mxu0 %v13002
    %13435 = vmatpush1.bf16.msra.mxu0 %v13001
    %13436 = vmatprep.subr.bf16.mxu0 %v13006
    %13437 = vmatpush1.bf16.msra.mxu0 %v13005
    %13438 = vmatprep.subr.bf16.mxu0 %v13010
    %13439 = vmatpush1.bf16.msra.mxu0 %v13009
    %13440 = vmatprep.subr.bf16.mxu0 %v13014
    %13441 = vmatpush1.bf16.msra.mxu0 %v13013
    %13442 = vmatprep.subr.bf16.mxu0 %v13018
    %13443 = vmatpush1.bf16.msra.mxu0 %v13017
    %13444 = vmatprep.subr.bf16.mxu0 %v13022
    %13445 = vmatpush1.bf16.msra.mxu0 %v13021
    %13446 = vmatprep.subr.bf16.mxu0 %v13026
    %13447 = vmatpush1.bf16.msra.mxu0 %v13025
    %13448 = vmatprep.subr.bf16.mxu0 %v13030
    %13449 = vmatpush1.bf16.msra.mxu0 %v13029
    %13450 = vmatprep.mubr.bf16.mxu0 %v11730
    %13451 = vmatmul.mubr.bf16.gmra.mrb[0].mxu0 %v11729
    %v13452 = vpop.f32.mrb[0].mxu0
    %v13453 = vadd.f32 %v13410, %v13452
    %v13454 = vpop.f32.mrb[0].mxu0
    %v13455 = vadd.f32 %v13412, %v13454
    %v13456 = vpop.f32.mrb[0].mxu0
    %v13457 = vadd.f32 %v13414, %v13456
    %v13458 = vpop.f32.mrb[0].mxu0
    %v13459 = vadd.f32 %v13416, %v13458
    %13460 = vdwg.mxu0
    %13461 = vmatprep.subr.bf16.mxu0 %v12780
    %13462 = vmatpush1.bf16.msra.mxu0 %v12779
    %13463 = vmatprep.subr.bf16.mxu0 %v12784
    %13464 = vmatpush1.bf16.msra.mxu0 %v12783
    %13465 = vmatprep.subr.bf16.mxu0 %v12788
    %13466 = vmatpush1.bf16.msra.mxu0 %v12787
    %13467 = vmatprep.subr.bf16.mxu0 %v12792
    %13468 = vmatpush1.bf16.msra.mxu0 %v12791
    %13469 = vmatprep.subr.bf16.mxu0 %v12796
    %13470 = vmatpush1.bf16.msra.mxu0 %v12795
    %13471 = vmatprep.subr.bf16.mxu0 %v12800
    %13472 = vmatpush1.bf16.msra.mxu0 %v12799
    %13473 = vmatprep.subr.bf16.mxu0 %v12804
    %13474 = vmatpush1.bf16.msra.mxu0 %v12803
    %13475 = vmatprep.subr.bf16.mxu0 %v12808
    %13476 = vmatpush1.bf16.msra.mxu0 %v12807
    %13477 = vmatprep.subr.bf16.mxu0 %v12812
    %13478 = vmatpush1.bf16.msra.mxu0 %v12811
    %13479 = vmatprep.subr.bf16.mxu0 %v12816
    %13480 = vmatpush1.bf16.msra.mxu0 %v12815
    %13481 = vmatprep.subr.bf16.mxu0 %v12820
    %13482 = vmatpush1.bf16.msra.mxu0 %v12819
    %13483 = vmatprep.subr.bf16.mxu0 %v12824
    %13484 = vmatpush1.bf16.msra.mxu0 %v12823
    %13485 = vmatprep.subr.bf16.mxu0 %v12828
    %13486 = vmatpush1.bf16.msra.mxu0 %v12827
    %13487 = vmatprep.subr.bf16.mxu0 %v12832
    %13488 = vmatpush1.bf16.msra.mxu0 %v12831
    %13489 = vmatprep.subr.bf16.mxu0 %v12836
    %13490 = vmatpush1.bf16.msra.mxu0 %v12835
    %13491 = vmatprep.subr.bf16.mxu0 %v12840
    %13492 = vmatpush1.bf16.msra.mxu0 %v12839
    %13493 = vmatprep.mubr.bf16.mxu0 %v11724
    %13494 = vmatmul.mubr.bf16.gmra.mrb[0].mxu0 %v11723
    %v13495 = vpop.f32.mrb[0].mxu0
    %v13496 = vadd.f32 %v12000, %v13495
    %v13497 = vpop.f32.mrb[0].mxu0
    %v13498 = vadd.f32 %v12004, %v13497
    %v13499 = vpop.f32.mrb[0].mxu0
    %v13500 = vadd.f32 %v12000, %v13499
    %v13501 = vpop.f32.mrb[0].mxu0
    %v13502 = vadd.f32 %v12004, %v13501
    %13503 = vdwg.mxu0
    %13504 = vmatprep.subr.bf16.mxu0 %v12844
    %13505 = vmatpush1.bf16.msra.mxu0 %v12843
    %13506 = vmatprep.subr.bf16.mxu0 %v12848
    %13507 = vmatpush1.bf16.msra.mxu0 %v12847
    %13508 = vmatprep.subr.bf16.mxu0 %v12852
    %13509 = vmatpush1.bf16.msra.mxu0 %v12851
    %13510 = vmatprep.subr.bf16.mxu0 %v12856
    %13511 = vmatpush1.bf16.msra.mxu0 %v12855
    %13512 = vmatprep.subr.bf16.mxu0 %v12860
    %13513 = vmatpush1.bf16.msra.mxu0 %v12859
    %13514 = vmatprep.subr.bf16.mxu0 %v12864
    %13515 = vmatpush1.bf16.msra.mxu0 %v12863
    %13516 = vmatprep.subr.bf16.mxu0 %v12868
    %13517 = vmatpush1.bf16.msra.mxu0 %v12867
    %13518 = vmatprep.subr.bf16.mxu0 %v12872
    %13519 = vmatpush1.bf16.msra.mxu0 %v12871
    %13520 = vmatprep.subr.bf16.mxu0 %v12876
    %13521 = vmatpush1.bf16.msra.mxu0 %v12875
    %13522 = vmatprep.subr.bf16.mxu0 %v12880
    %13523 = vmatpush1.bf16.msra.mxu0 %v12879
    %13524 = vmatprep.subr.bf16.mxu0 %v12884
    %13525 = vmatpush1.bf16.msra.mxu0 %v12883
    %13526 = vmatprep.subr.bf16.mxu0 %v12888
    %13527 = vmatpush1.bf16.msra.mxu0 %v12887
    %13528 = vmatprep.subr.bf16.mxu0 %v12892
    %13529 = vmatpush1.bf16.msra.mxu0 %v12891
    %13530 = vmatprep.subr.bf16.mxu0 %v12896
    %13531 = vmatpush1.bf16.msra.mxu0 %v12895
    %13532 = vmatprep.subr.bf16.mxu0 %v12900
    %13533 = vmatpush1.bf16.msra.mxu0 %v12899
    %13534 = vmatprep.subr.bf16.mxu0 %v12904
    %13535 = vmatpush1.bf16.msra.mxu0 %v12903
    %13536 = vmatprep.mubr.bf16.mxu0 %v11726
    %13537 = vmatmul.mubr.bf16.gmra.mrb[0].mxu0 %v11725
    %v13538 = vpop.f32.mrb[0].mxu0
    %v13539 = vadd.f32 %v13496, %v13538
    %v13540 = vpop.f32.mrb[0].mxu0
    %v13541 = vadd.f32 %v13498, %v13540
    %v13542 = vpop.f32.mrb[0].mxu0
    %v13543 = vadd.f32 %v13500, %v13542
    %v13544 = vpop.f32.mrb[0].mxu0
    %v13545 = vadd.f32 %v13502, %v13544
    %13546 = vdwg.mxu0
    %13547 = vmatprep.subr.bf16.mxu0 %v12908
    %13548 = vmatpush1.bf16.msra.mxu0 %v12907
    %13549 = vmatprep.subr.bf16.mxu0 %v12912
    %13550 = vmatpush1.bf16.msra.mxu0 %v12911
    %13551 = vmatprep.subr.bf16.mxu0 %v12916
    %13552 = vmatpush1.bf16.msra.mxu0 %v12915
    %13553 = vmatprep.subr.bf16.mxu0 %v12920
    %13554 = vmatpush1.bf16.msra.mxu0 %v12919
    %13555 = vmatprep.subr.bf16.mxu0 %v12924
    %13556 = vmatpush1.bf16.msra.mxu0 %v12923
    %13557 = vmatprep.subr.bf16.mxu0 %v12928
    %13558 = vmatpush1.bf16.msra.mxu0 %v12927
    %13559 = vmatprep.subr.bf16.mxu0 %v12932
    %13560 = vmatpush1.bf16.msra.mxu0 %v12931
    %13561 = vmatprep.subr.bf16.mxu0 %v12936
    %13562 = vmatpush1.bf16.msra.mxu0 %v12935
    %13563 = vmatprep.subr.bf16.mxu0 %v12940
    %13564 = vmatpush1.bf16.msra.mxu0 %v12939
    %13565 = vmatprep.subr.bf16.mxu0 %v12944
    %13566 = vmatpush1.bf16.msra.mxu0 %v12943
    %13567 = vmatprep.subr.bf16.mxu0 %v12948
    %13568 = vmatpush1.bf16.msra.mxu0 %v12947
    %13569 = vmatprep.subr.bf16.mxu0 %v12952
    %13570 = vmatpush1.bf16.msra.mxu0 %v12951
    %13571 = vmatprep.subr.bf16.mxu0 %v12956
    %13572 = vmatpush1.bf16.msra.mxu0 %v12955
    %13573 = vmatprep.subr.bf16.mxu0 %v12960
    %13574 = vmatpush1.bf16.msra.mxu0 %v12959
    %13575 = vmatprep.subr.bf16.mxu0 %v12964
    %13576 = vmatpush1.bf16.msra.mxu0 %v12963
    %13577 = vmatprep.subr.bf16.mxu0 %v12968
    %13578 = vmatpush1.bf16.msra.mxu0 %v12967
    %13579 = vmatprep.mubr.bf16.mxu0 %v11728
    %13580 = vmatmul.mubr.bf16.gmra.mrb[0].mxu0 %v11727
    %v13581 = vpop.f32.mrb[0].mxu0
    %v13582 = vadd.f32 %v13539, %v13581
    %v13583 = vpop.f32.mrb[0].mxu0
    %v13584 = vadd.f32 %v13541, %v13583
    %v13585 = vpop.f32.mrb[0].mxu0
    %v13586 = vadd.f32 %v13543, %v13585
    %v13587 = vpop.f32.mrb[0].mxu0
    %v13588 = vadd.f32 %v13545, %v13587
    %13589 = vdwg.mxu0
    %13590 = vmatprep.subr.bf16.mxu0 %v12972
    %13591 = vmatpush1.bf16.msra.mxu0 %v12971
    %13592 = vmatprep.subr.bf16.mxu0 %v12976
    %13593 = vmatpush1.bf16.msra.mxu0 %v12975
    %13594 = vmatprep.subr.bf16.mxu0 %v12980
    %13595 = vmatpush1.bf16.msra.mxu0 %v12979
    %13596 = vmatprep.subr.bf16.mxu0 %v12984
    %13597 = vmatpush1.bf16.msra.mxu0 %v12983
    %13598 = vmatprep.subr.bf16.mxu0 %v12988
    %13599 = vmatpush1.bf16.msra.mxu0 %v12987
    %13600 = vmatprep.subr.bf16.mxu0 %v12992
    %13601 = vmatpush1.bf16.msra.mxu0 %v12991
    %13602 = vmatprep.subr.bf16.mxu0 %v12996
    %13603 = vmatpush1.bf16.msra.mxu0 %v12995
    %13604 = vmatprep.subr.bf16.mxu0 %v13000
    %13605 = vmatpush1.bf16.msra.mxu0 %v12999
    %13606 = vmatprep.subr.bf16.mxu0 %v13004
    %13607 = vmatpush1.bf16.msra.mxu0 %v13003
    %13608 = vmatprep.subr.bf16.mxu0 %v13008
    %13609 = vmatpush1.bf16.msra.mxu0 %v13007
    %13610 = vmatprep.subr.bf16.mxu0 %v13012
    %13611 = vmatpush1.bf16.msra.mxu0 %v13011
    %13612 = vmatprep.subr.bf16.mxu0 %v13016
    %13613 = vmatpush1.bf16.msra.mxu0 %v13015
    %13614 = vmatprep.subr.bf16.mxu0 %v13020
    %13615 = vmatpush1.bf16.msra.mxu0 %v13019
    %13616 = vmatprep.subr.bf16.mxu0 %v13024
    %13617 = vmatpush1.bf16.msra.mxu0 %v13023
    %13618 = vmatprep.subr.bf16.mxu0 %v13028
    %13619 = vmatpush1.bf16.msra.mxu0 %v13027
    %13620 = vmatprep.subr.bf16.mxu0 %v13032
    %13621 = vmatpush1.bf16.msra.mxu0 %v13031
    %13622 = vmatprep.mubr.bf16.mxu0 %v11730
    %13623 = vmatmul.mubr.bf16.gmra.mrb[0].mxu0 %v11729
    %v13624 = vpop.f32.mrb[0].mxu0
    %v13625 = vadd.f32 %v13582, %v13624
    %v13626 = vpop.f32.mrb[0].mxu0
    %v13627 = vadd.f32 %v13584, %v13626
    %v13628 = vpop.f32.mrb[0].mxu0
    %v13629 = vadd.f32 %v13586, %v13628
    %v13630 = vpop.f32.mrb[0].mxu0
    %v13631 = vadd.f32 %v13588, %v13630
    %13632 = vdwg.mxu0
    %v13633 = vmax.f32 %v13453, 0.0
    %v13634 = vmax.f32 %v13455, 0.0
    %v13635 = vmax.f32 %v13625, 0.0
    %v13636 = vmax.f32 %v13627, 0.0
    %v13637 = vmax.f32 %v13457, 0.0
    %v13638 = vmax.f32 %v13459, 0.0
    %v13639 = vmax.f32 %v13629, 0.0
    %v13640 = vmax.f32 %v13631, 0.0
    %v13641 = vpack.c.bf16 %v13637, %v13633
    %v13642 = vpack.c.bf16 %v13638, %v13634
    %v13643 = vpack.c.bf16 %v13639, %v13635
    %v13644 = vpack.c.bf16 %v13640, %v13636
    %v13645 = vld [vmem:[#allocation11] sm:$0xff]
    %v13646 = vld [vmem:[#allocation11 + $0x8] sm:$0xff]
    %v13647 = vld [vmem:[#allocation11 + $0x10] sm:$0xff]
    %v13648 = vld [vmem:[#allocation11 + $0x18] sm:$0xff]
    %v13649 = vld [vmem:[#allocation11 + $0x20] sm:$0xff]
    %v13650 = vld [vmem:[#allocation11 + $0x28] sm:$0xff]
    %v13651 = vld [vmem:[#allocation11 + $0x30] sm:$0xff]
    %v13652 = vld [vmem:[#allocation11 + $0x38] sm:$0xff]
    %v13653 = vld [vmem:[#allocation11 + $0x40] sm:$0xff]
    %v13654 = vld [vmem:[#allocation11 + $0x48] sm:$0xff]
    %v13655 = vld [vmem:[#allocation11 + $0x50] sm:$0xff]
    %v13656 = vld [vmem:[#allocation11 + $0x58] sm:$0xff]
    %v13657 = vld [vmem:[#allocation11 + $0x60] sm:$0xff]
    %v13658 = vld [vmem:[#allocation11 + $0x68] sm:$0xff]
    %v13659 = vld [vmem:[#allocation11 + $0x70] sm:$0xff]
    %v13660 = vld [vmem:[#allocation11 + $0x78] sm:$0xff]
    %v13661 = vld [vmem:[#allocation11 + $0x80] sm:$0xff]
    %v13662 = vld [vmem:[#allocation11 + $0x88] sm:$0xff]
    %v13663 = vld [vmem:[#allocation11 + $0x90] sm:$0xff]
    %v13664 = vld [vmem:[#allocation11 + $0x98] sm:$0xff]
    %v13665 = vld [vmem:[#allocation11 + $0xa0] sm:$0xff]
    %v13666 = vld [vmem:[#allocation11 + $0xa8] sm:$0xff]
    %v13667 = vld [vmem:[#allocation11 + $0xb0] sm:$0xff]
    %v13668 = vld [vmem:[#allocation11 + $0xb8] sm:$0xff]
    %v13669 = vld [vmem:[#allocation11 + $0xc0] sm:$0xff]
    %v13670 = vld [vmem:[#allocation11 + $0xc8] sm:$0xff]
    %v13671 = vld [vmem:[#allocation11 + $0xd0] sm:$0xff]
    %v13672 = vld [vmem:[#allocation11 + $0xd8] sm:$0xff]
    %v13673 = vld [vmem:[#allocation11 + $0xe0] sm:$0xff]
    %v13674 = vld [vmem:[#allocation11 + $0xe8] sm:$0xff]
    %v13675 = vld [vmem:[#allocation11 + $0xf0] sm:$0xff]
    %v13676 = vld [vmem:[#allocation11 + $0xf8] sm:$0xff]
    %v13677 = vld [vmem:[#allocation11 + $0x100] sm:$0xff]
    %v13678 = vld [vmem:[#allocation11 + $0x108] sm:$0xff]
    %v13679 = vld [vmem:[#allocation11 + $0x110] sm:$0xff]
    %v13680 = vld [vmem:[#allocation11 + $0x118] sm:$0xff]
    %v13681 = vld [vmem:[#allocation11 + $0x120] sm:$0xff]
    %v13682 = vld [vmem:[#allocation11 + $0x128] sm:$0xff]
    %v13683 = vld [vmem:[#allocation11 + $0x130] sm:$0xff]
    %v13684 = vld [vmem:[#allocation11 + $0x138] sm:$0xff]
    %v13685 = vld [vmem:[#allocation11 + $0x140] sm:$0xff]
    %v13686 = vld [vmem:[#allocation11 + $0x148] sm:$0xff]
    %v13687 = vld [vmem:[#allocation11 + $0x150] sm:$0xff]
    %v13688 = vld [vmem:[#allocation11 + $0x158] sm:$0xff]
    %v13689 = vld [vmem:[#allocation11 + $0x160] sm:$0xff]
    %v13690 = vld [vmem:[#allocation11 + $0x168] sm:$0xff]
    %v13691 = vld [vmem:[#allocation11 + $0x170] sm:$0xff]
    %v13692 = vld [vmem:[#allocation11 + $0x178] sm:$0xff]
    %v13693 = vld [vmem:[#allocation11 + $0x180] sm:$0xff]
    %v13694 = vld [vmem:[#allocation11 + $0x188] sm:$0xff]
    %v13695 = vld [vmem:[#allocation11 + $0x190] sm:$0xff]
    %v13696 = vld [vmem:[#allocation11 + $0x198] sm:$0xff]
    %v13697 = vld [vmem:[#allocation11 + $0x1a0] sm:$0xff]
    %v13698 = vld [vmem:[#allocation11 + $0x1a8] sm:$0xff]
    %v13699 = vld [vmem:[#allocation11 + $0x1b0] sm:$0xff]
    %v13700 = vld [vmem:[#allocation11 + $0x1b8] sm:$0xff]
    %v13701 = vld [vmem:[#allocation11 + $0x1c0] sm:$0xff]
    %v13702 = vld [vmem:[#allocation11 + $0x1c8] sm:$0xff]
    %v13703 = vld [vmem:[#allocation11 + $0x1d0] sm:$0xff]
    %v13704 = vld [vmem:[#allocation11 + $0x1d8] sm:$0xff]
    %v13705 = vld [vmem:[#allocation11 + $0x1e0] sm:$0xff]
    %v13706 = vld [vmem:[#allocation11 + $0x1e8] sm:$0xff]
    %v13707 = vld [vmem:[#allocation11 + $0x1f0] sm:$0xff]
    %v13708 = vld [vmem:[#allocation11 + $0x1f8] sm:$0xff]
    %v13709 = vld [vmem:[#allocation13] sm:$0x3]
    %v13711 = vlaneseq
    %v13712 = vshrl.u32 %v13711, 7
    %v13713 = vsub.s32 0, %v13712
    %v13714 = vrot.slane %v13709, %v13713
    %v13715 = vlaneseq
    %v13716 = vshrl.u32 %v13715, 7
    %v13717 = vsub.s32 1, %v13716
    %v13718 = vrot.slane %v13709, %v13717
    %v13785 = vunpack.c.l.b16 %v13645
    %v13786 = vunpack.c.h.b16 %v13645
    %v13787 = vunpack.c.l.b16 %v13646
    %v13788 = vunpack.c.h.b16 %v13646
    %v13789 = vunpack.c.l.b16 %v13647
    %v13790 = vunpack.c.h.b16 %v13647
    %v13791 = vunpack.c.l.b16 %v13648
    %v13792 = vunpack.c.h.b16 %v13648
    %v13793 = vunpack.c.l.b16 %v13649
    %v13794 = vunpack.c.h.b16 %v13649
    %v13795 = vunpack.c.l.b16 %v13650
    %v13796 = vunpack.c.h.b16 %v13650
    %v13797 = vunpack.c.l.b16 %v13651
    %v13798 = vunpack.c.h.b16 %v13651
    %v13799 = vunpack.c.l.b16 %v13652
    %v13800 = vunpack.c.h.b16 %v13652
    %v13801 = vunpack.c.l.b16 %v13653
    %v13802 = vunpack.c.h.b16 %v13653
    %v13803 = vunpack.c.l.b16 %v13654
    %v13804 = vunpack.c.h.b16 %v13654
    %v13805 = vunpack.c.l.b16 %v13655
    %v13806 = vunpack.c.h.b16 %v13655
    %v13807 = vunpack.c.l.b16 %v13656
    %v13808 = vunpack.c.h.b16 %v13656
    %v13809 = vunpack.c.l.b16 %v13657
    %v13810 = vunpack.c.h.b16 %v13657
    %v13811 = vunpack.c.l.b16 %v13658
    %v13812 = vunpack.c.h.b16 %v13658
    %v13813 = vunpack.c.l.b16 %v13659
    %v13814 = vunpack.c.h.b16 %v13659
    %v13815 = vunpack.c.l.b16 %v13660
    %v13816 = vunpack.c.h.b16 %v13660
    %v13817 = vunpack.c.l.b16 %v13661
    %v13818 = vunpack.c.h.b16 %v13661
    %v13819 = vunpack.c.l.b16 %v13662
    %v13820 = vunpack.c.h.b16 %v13662
    %v13821 = vunpack.c.l.b16 %v13663
    %v13822 = vunpack.c.h.b16 %v13663
    %v13823 = vunpack.c.l.b16 %v13664
    %v13824 = vunpack.c.h.b16 %v13664
    %v13825 = vunpack.c.l.b16 %v13665
    %v13826 = vunpack.c.h.b16 %v13665
    %v13827 = vunpack.c.l.b16 %v13666
    %v13828 = vunpack.c.h.b16 %v13666
    %v13829 = vunpack.c.l.b16 %v13667
    %v13830 = vunpack.c.h.b16 %v13667
    %v13831 = vunpack.c.l.b16 %v13668
    %v13832 = vunpack.c.h.b16 %v13668
    %v13833 = vunpack.c.l.b16 %v13669
    %v13834 = vunpack.c.h.b16 %v13669
    %v13835 = vunpack.c.l.b16 %v13670
    %v13836 = vunpack.c.h.b16 %v13670
    %v13837 = vunpack.c.l.b16 %v13671
    %v13838 = vunpack.c.h.b16 %v13671
    %v13839 = vunpack.c.l.b16 %v13672
    %v13840 = vunpack.c.h.b16 %v13672
    %v13841 = vunpack.c.l.b16 %v13673
    %v13842 = vunpack.c.h.b16 %v13673
    %v13843 = vunpack.c.l.b16 %v13674
    %v13844 = vunpack.c.h.b16 %v13674
    %v13845 = vunpack.c.l.b16 %v13675
    %v13846 = vunpack.c.h.b16 %v13675
    %v13847 = vunpack.c.l.b16 %v13676
    %v13848 = vunpack.c.h.b16 %v13676
    %v13849 = vunpack.c.l.b16 %v13677
    %v13850 = vunpack.c.h.b16 %v13677
    %v13851 = vunpack.c.l.b16 %v13678
    %v13852 = vunpack.c.h.b16 %v13678
    %v13853 = vunpack.c.l.b16 %v13679
    %v13854 = vunpack.c.h.b16 %v13679
    %v13855 = vunpack.c.l.b16 %v13680
    %v13856 = vunpack.c.h.b16 %v13680
    %v13857 = vunpack.c.l.b16 %v13681
    %v13858 = vunpack.c.h.b16 %v13681
    %v13859 = vunpack.c.l.b16 %v13682
    %v13860 = vunpack.c.h.b16 %v13682
    %v13861 = vunpack.c.l.b16 %v13683
    %v13862 = vunpack.c.h.b16 %v13683
    %v13863 = vunpack.c.l.b16 %v13684
    %v13864 = vunpack.c.h.b16 %v13684
    %v13865 = vunpack.c.l.b16 %v13685
    %v13866 = vunpack.c.h.b16 %v13685
    %v13867 = vunpack.c.l.b16 %v13686
    %v13868 = vunpack.c.h.b16 %v13686
    %v13869 = vunpack.c.l.b16 %v13687
    %v13870 = vunpack.c.h.b16 %v13687
    %v13871 = vunpack.c.l.b16 %v13688
    %v13872 = vunpack.c.h.b16 %v13688
    %v13873 = vunpack.c.l.b16 %v13689
    %v13874 = vunpack.c.h.b16 %v13689
    %v13875 = vunpack.c.l.b16 %v13690
    %v13876 = vunpack.c.h.b16 %v13690
    %v13877 = vunpack.c.l.b16 %v13691
    %v13878 = vunpack.c.h.b16 %v13691
    %v13879 = vunpack.c.l.b16 %v13692
    %v13880 = vunpack.c.h.b16 %v13692
    %v13881 = vunpack.c.l.b16 %v13693
    %v13882 = vunpack.c.h.b16 %v13693
    %v13883 = vunpack.c.l.b16 %v13694
    %v13884 = vunpack.c.h.b16 %v13694
    %v13885 = vunpack.c.l.b16 %v13695
    %v13886 = vunpack.c.h.b16 %v13695
    %v13887 = vunpack.c.l.b16 %v13696
    %v13888 = vunpack.c.h.b16 %v13696
    %v13889 = vunpack.c.l.b16 %v13697
    %v13890 = vunpack.c.h.b16 %v13697
    %v13891 = vunpack.c.l.b16 %v13698
    %v13892 = vunpack.c.h.b16 %v13698
    %v13893 = vunpack.c.l.b16 %v13699
    %v13894 = vunpack.c.h.b16 %v13699
    %v13895 = vunpack.c.l.b16 %v13700
    %v13896 = vunpack.c.h.b16 %v13700
    %v13897 = vunpack.c.l.b16 %v13701
    %v13898 = vunpack.c.h.b16 %v13701
    %v13899 = vunpack.c.l.b16 %v13702
    %v13900 = vunpack.c.h.b16 %v13702
    %v13901 = vunpack.c.l.b16 %v13703
    %v13902 = vunpack.c.h.b16 %v13703
    %v13903 = vunpack.c.l.b16 %v13704
    %v13904 = vunpack.c.h.b16 %v13704
    %v13905 = vunpack.c.l.b16 %v13705
    %v13906 = vunpack.c.h.b16 %v13705
    %v13907 = vunpack.c.l.b16 %v13706
    %v13908 = vunpack.c.h.b16 %v13706
    %v13909 = vunpack.c.l.b16 %v13707
    %v13910 = vunpack.c.h.b16 %v13707
    %v13911 = vunpack.c.l.b16 %v13708
    %v13912 = vunpack.c.h.b16 %v13708
    %v13913 = vpack.c.b16 %v13787, %v13785
    %v13914 = vpack.c.b16 %v13788, %v13786
    %v13915 = vpack.c.b16 %v13791, %v13789
    %v13916 = vpack.c.b16 %v13792, %v13790
    %v13917 = vpack.c.b16 %v13795, %v13793
    %v13918 = vpack.c.b16 %v13796, %v13794
    %v13919 = vpack.c.b16 %v13799, %v13797
    %v13920 = vpack.c.b16 %v13800, %v13798
    %v13921 = vpack.c.b16 %v13803, %v13801
    %v13922 = vpack.c.b16 %v13804, %v13802
    %v13923 = vpack.c.b16 %v13807, %v13805
    %v13924 = vpack.c.b16 %v13808, %v13806
    %v13925 = vpack.c.b16 %v13811, %v13809
    %v13926 = vpack.c.b16 %v13812, %v13810
    %v13927 = vpack.c.b16 %v13815, %v13813
    %v13928 = vpack.c.b16 %v13816, %v13814
    %v13929 = vpack.c.b16 %v13819, %v13817
    %v13930 = vpack.c.b16 %v13820, %v13818
    %v13931 = vpack.c.b16 %v13823, %v13821
    %v13932 = vpack.c.b16 %v13824, %v13822
    %v13933 = vpack.c.b16 %v13827, %v13825
    %v13934 = vpack.c.b16 %v13828, %v13826
    %v13935 = vpack.c.b16 %v13831, %v13829
    %v13936 = vpack.c.b16 %v13832, %v13830
    %v13937 = vpack.c.b16 %v13835, %v13833
    %v13938 = vpack.c.b16 %v13836, %v13834
    %v13939 = vpack.c.b16 %v13839, %v13837
    %v13940 = vpack.c.b16 %v13840, %v13838
    %v13941 = vpack.c.b16 %v13843, %v13841
    %v13942 = vpack.c.b16 %v13844, %v13842
    %v13943 = vpack.c.b16 %v13847, %v13845
    %v13944 = vpack.c.b16 %v13848, %v13846
    %v13945 = vpack.c.b16 %v13851, %v13849
    %v13946 = vpack.c.b16 %v13852, %v13850
    %v13947 = vpack.c.b16 %v13855, %v13853
    %v13948 = vpack.c.b16 %v13856, %v13854
    %v13949 = vpack.c.b16 %v13859, %v13857
    %v13950 = vpack.c.b16 %v13860, %v13858
    %v13951 = vpack.c.b16 %v13863, %v13861
    %v13952 = vpack.c.b16 %v13864, %v13862
    %v13953 = vpack.c.b16 %v13867, %v13865
    %v13954 = vpack.c.b16 %v13868, %v13866
    %v13955 = vpack.c.b16 %v13871, %v13869
    %v13956 = vpack.c.b16 %v13872, %v13870
    %v13957 = vpack.c.b16 %v13875, %v13873
    %v13958 = vpack.c.b16 %v13876, %v13874
    %v13959 = vpack.c.b16 %v13879, %v13877
    %v13960 = vpack.c.b16 %v13880, %v13878
    %v13961 = vpack.c.b16 %v13883, %v13881
    %v13962 = vpack.c.b16 %v13884, %v13882
    %v13963 = vpack.c.b16 %v13887, %v13885
    %v13964 = vpack.c.b16 %v13888, %v13886
    %v13965 = vpack.c.b16 %v13891, %v13889
    %v13966 = vpack.c.b16 %v13892, %v13890
    %v13967 = vpack.c.b16 %v13895, %v13893
    %v13968 = vpack.c.b16 %v13896, %v13894
    %v13969 = vpack.c.b16 %v13899, %v13897
    %v13970 = vpack.c.b16 %v13900, %v13898
    %v13971 = vpack.c.b16 %v13903, %v13901
    %v13972 = vpack.c.b16 %v13904, %v13902
    %v13973 = vpack.c.b16 %v13907, %v13905
    %v13974 = vpack.c.b16 %v13908, %v13906
    %v13975 = vpack.c.b16 %v13911, %v13909
    %v13976 = vpack.c.b16 %v13912, %v13910
    %14041 = vmatprep.subr.bf16.mxu0 %v13914
    %14042 = vmatpush1.bf16.msra.mxu0 %v13913
    %14043 = vmatprep.subr.bf16.mxu0 %v13916
    %14044 = vmatpush1.bf16.msra.mxu0 %v13915
    %14045 = vmatprep.subr.bf16.mxu0 %v13918
    %14046 = vmatpush1.bf16.msra.mxu0 %v13917
    %14047 = vmatprep.subr.bf16.mxu0 %v13920
    %14048 = vmatpush1.bf16.msra.mxu0 %v13919
    %14049 = vmatprep.subr.bf16.mxu0 %v13922
    %14050 = vmatpush1.bf16.msra.mxu0 %v13921
    %14051 = vmatprep.subr.bf16.mxu0 %v13924
    %14052 = vmatpush1.bf16.msra.mxu0 %v13923
    %14053 = vmatprep.subr.bf16.mxu0 %v13926
    %14054 = vmatpush1.bf16.msra.mxu0 %v13925
    %14055 = vmatprep.subr.bf16.mxu0 %v13928
    %14056 = vmatpush1.bf16.msra.mxu0 %v13927
    %14057 = vmatprep.subr.bf16.mxu0 %v13930
    %14058 = vmatpush1.bf16.msra.mxu0 %v13929
    %14059 = vmatprep.subr.bf16.mxu0 %v13932
    %14060 = vmatpush1.bf16.msra.mxu0 %v13931
    %14061 = vmatprep.subr.bf16.mxu0 %v13934
    %14062 = vmatpush1.bf16.msra.mxu0 %v13933
    %14063 = vmatprep.subr.bf16.mxu0 %v13936
    %14064 = vmatpush1.bf16.msra.mxu0 %v13935
    %14065 = vmatprep.subr.bf16.mxu0 %v13938
    %14066 = vmatpush1.bf16.msra.mxu0 %v13937
    %14067 = vmatprep.subr.bf16.mxu0 %v13940
    %14068 = vmatpush1.bf16.msra.mxu0 %v13939
    %14069 = vmatprep.subr.bf16.mxu0 %v13942
    %14070 = vmatpush1.bf16.msra.mxu0 %v13941
    %14071 = vmatprep.subr.bf16.mxu0 %v13944
    %14072 = vmatpush1.bf16.msra.mxu0 %v13943
    %14073 = vmatprep.mubr.bf16.mxu0 %v13642
    %14074 = vmatmul.mubr.bf16.gmra.mrb[0].mxu0 %v13641
    %v14075 = vpop.f32.mrb[0].mxu0
    %v14076 = vadd.f32 %v13714, %v14075
    %v14077 = vpop.f32.mrb[0].mxu0
    %v14078 = vadd.f32 %v13718, %v14077
    %v14079 = vpop.f32.mrb[0].mxu0
    %v14080 = vadd.f32 %v13714, %v14079
    %v14081 = vpop.f32.mrb[0].mxu0
    %v14082 = vadd.f32 %v13718, %v14081
    %14083 = vdwg.mxu0
    %14084 = vmatprep.subr.bf16.mxu0 %v13946
    %14085 = vmatpush1.bf16.msra.mxu0 %v13945
    %14086 = vmatprep.subr.bf16.mxu0 %v13948
    %14087 = vmatpush1.bf16.msra.mxu0 %v13947
    %14088 = vmatprep.subr.bf16.mxu0 %v13950
    %14089 = vmatpush1.bf16.msra.mxu0 %v13949
    %14090 = vmatprep.subr.bf16.mxu0 %v13952
    %14091 = vmatpush1.bf16.msra.mxu0 %v13951
    %14092 = vmatprep.subr.bf16.mxu0 %v13954
    %14093 = vmatpush1.bf16.msra.mxu0 %v13953
    %14094 = vmatprep.subr.bf16.mxu0 %v13956
    %14095 = vmatpush1.bf16.msra.mxu0 %v13955
    %14096 = vmatprep.subr.bf16.mxu0 %v13958
    %14097 = vmatpush1.bf16.msra.mxu0 %v13957
    %14098 = vmatprep.subr.bf16.mxu0 %v13960
    %14099 = vmatpush1.bf16.msra.mxu0 %v13959
    %14100 = vmatprep.subr.bf16.mxu0 %v13962
    %14101 = vmatpush1.bf16.msra.mxu0 %v13961
    %14102 = vmatprep.subr.bf16.mxu0 %v13964
    %14103 = vmatpush1.bf16.msra.mxu0 %v13963
    %14104 = vmatprep.subr.bf16.mxu0 %v13966
    %14105 = vmatpush1.bf16.msra.mxu0 %v13965
    %14106 = vmatprep.subr.bf16.mxu0 %v13968
    %14107 = vmatpush1.bf16.msra.mxu0 %v13967
    %14108 = vmatprep.subr.bf16.mxu0 %v13970
    %14109 = vmatpush1.bf16.msra.mxu0 %v13969
    %14110 = vmatprep.subr.bf16.mxu0 %v13972
    %14111 = vmatpush1.bf16.msra.mxu0 %v13971
    %14112 = vmatprep.subr.bf16.mxu0 %v13974
    %14113 = vmatpush1.bf16.msra.mxu0 %v13973
    %14114 = vmatprep.subr.bf16.mxu0 %v13976
    %14115 = vmatpush1.bf16.msra.mxu0 %v13975
    %14116 = vmatprep.mubr.bf16.mxu0 %v13644
    %14117 = vmatmul.mubr.bf16.gmra.mrb[0].mxu0 %v13643
    %v14118 = vpop.f32.mrb[0].mxu0
    %v14119 = vadd.f32 %v14076, %v14118
    %v14120 = vpop.f32.mrb[0].mxu0
    %v14121 = vadd.f32 %v14078, %v14120
    %v14122 = vpop.f32.mrb[0].mxu0
    %v14123 = vadd.f32 %v14080, %v14122
    %v14124 = vpop.f32.mrb[0].mxu0
    %v14125 = vadd.f32 %v14082, %v14124
    %14126 = vdwg.mxu0
    %v14127 = vmax.f32 %v14119, 0.0
    %v14128 = vmax.f32 %v14121, 0.0
    %v14129 = vmax.f32 %v14123, 0.0
    %v14130 = vmax.f32 %v14125, 0.0
    %v14131 = vpack.c.bf16 %v14129, %v14127
    %v14132 = vpack.c.bf16 %v14130, %v14128
    %v14133 = vld [vmem:[#allocation14] sm:$0xf]
    %v14134 = vld [vmem:[#allocation14 + $0x4] sm:$0xf]
    %v14135 = vld [vmem:[#allocation14 + $0x8] sm:$0xf]
    %v14136 = vld [vmem:[#allocation14 + $0xc] sm:$0xf]
    %v14137 = vld [vmem:[#allocation14 + $0x10] sm:$0xf]
    %v14138 = vld [vmem:[#allocation14 + $0x14] sm:$0xf]
    %v14139 = vld [vmem:[#allocation14 + $0x18] sm:$0xf]
    %v14140 = vld [vmem:[#allocation14 + $0x1c] sm:$0xf]
    %v14141 = vld [vmem:[#allocation14 + $0x20] sm:$0xf]
    %v14142 = vld [vmem:[#allocation14 + $0x24] sm:$0xf]
    %v14143 = vld [vmem:[#allocation14 + $0x28] sm:$0xf]
    %v14144 = vld [vmem:[#allocation14 + $0x2c] sm:$0xf]
    %v14145 = vld [vmem:[#allocation14 + $0x30] sm:$0xf]
    %v14146 = vld [vmem:[#allocation14 + $0x34] sm:$0xf]
    %v14147 = vld [vmem:[#allocation14 + $0x38] sm:$0xf]
    %v14148 = vld [vmem:[#allocation14 + $0x3c] sm:$0xf]
    %v14149 = vld [vmem:[#allocation14 + $0x40] sm:$0xf]
    %v14150 = vld [vmem:[#allocation14 + $0x44] sm:$0xf]
    %v14151 = vld [vmem:[#allocation14 + $0x48] sm:$0xf]
    %v14152 = vld [vmem:[#allocation14 + $0x4c] sm:$0xf]
    %v14153 = vld [vmem:[#allocation14 + $0x50] sm:$0xf]
    %v14154 = vld [vmem:[#allocation14 + $0x54] sm:$0xf]
    %v14155 = vld [vmem:[#allocation14 + $0x58] sm:$0xf]
    %v14156 = vld [vmem:[#allocation14 + $0x5c] sm:$0xf]
    %v14157 = vld [vmem:[#allocation14 + $0x60] sm:$0xf]
    %v14158 = vld [vmem:[#allocation14 + $0x64] sm:$0xf]
    %v14159 = vld [vmem:[#allocation14 + $0x68] sm:$0xf]
    %v14160 = vld [vmem:[#allocation14 + $0x6c] sm:$0xf]
    %v14161 = vld [vmem:[#allocation14 + $0x70] sm:$0xf]
    %v14162 = vld [vmem:[#allocation14 + $0x74] sm:$0xf]
    %v14163 = vld [vmem:[#allocation14 + $0x78] sm:$0xf]
    %v14164 = vld [vmem:[#allocation14 + $0x7c] sm:$0xf]
    %v14165 = vld [vmem:[#allocation16] sm:$0x1]
    %v14167 = vlaneseq
    %v14168 = vshrl.u32 %v14167, 7
    %v14169 = vsub.s32 0, %v14168
    %v14170 = vrot.slane %v14165, %v14169
    %v14204 = vunpack.c.l.b16 %v14133
    %v14205 = vunpack.c.l.b16 %v14134
    %v14206 = vunpack.c.l.b16 %v14135
    %v14207 = vunpack.c.l.b16 %v14136
    %v14208 = vunpack.c.l.b16 %v14137
    %v14209 = vunpack.c.l.b16 %v14138
    %v14210 = vunpack.c.l.b16 %v14139
    %v14211 = vunpack.c.l.b16 %v14140
    %v14212 = vunpack.c.l.b16 %v14141
    %v14213 = vunpack.c.l.b16 %v14142
    %v14214 = vunpack.c.l.b16 %v14143
    %v14215 = vunpack.c.l.b16 %v14144
    %v14216 = vunpack.c.l.b16 %v14145
    %v14217 = vunpack.c.l.b16 %v14146
    %v14218 = vunpack.c.l.b16 %v14147
    %v14219 = vunpack.c.l.b16 %v14148
    %v14220 = vunpack.c.l.b16 %v14149
    %v14221 = vunpack.c.l.b16 %v14150
    %v14222 = vunpack.c.l.b16 %v14151
    %v14223 = vunpack.c.l.b16 %v14152
    %v14224 = vunpack.c.l.b16 %v14153
    %v14225 = vunpack.c.l.b16 %v14154
    %v14226 = vunpack.c.l.b16 %v14155
    %v14227 = vunpack.c.l.b16 %v14156
    %v14228 = vunpack.c.l.b16 %v14157
    %v14229 = vunpack.c.l.b16 %v14158
    %v14230 = vunpack.c.l.b16 %v14159
    %v14231 = vunpack.c.l.b16 %v14160
    %v14232 = vunpack.c.l.b16 %v14161
    %v14233 = vunpack.c.l.b16 %v14162
    %v14234 = vunpack.c.l.b16 %v14163
    %v14235 = vunpack.c.l.b16 %v14164
    %v14236 = vpack.c.b16 %v14205, %v14204
    %v14237 = vpack.c.b16 %v14207, %v14206
    %v14238 = vpack.c.b16 %v14209, %v14208
    %v14239 = vpack.c.b16 %v14211, %v14210
    %v14240 = vpack.c.b16 %v14213, %v14212
    %v14241 = vpack.c.b16 %v14215, %v14214
    %v14242 = vpack.c.b16 %v14217, %v14216
    %v14243 = vpack.c.b16 %v14219, %v14218
    %v14244 = vpack.c.b16 %v14221, %v14220
    %v14245 = vpack.c.b16 %v14223, %v14222
    %v14246 = vpack.c.b16 %v14225, %v14224
    %v14247 = vpack.c.b16 %v14227, %v14226
    %v14248 = vpack.c.b16 %v14229, %v14228
    %v14249 = vpack.c.b16 %v14231, %v14230
    %v14250 = vpack.c.b16 %v14233, %v14232
    %v14251 = vpack.c.b16 %v14235, %v14234
    %14268 = vmatprep.subr.bf16.mxu0 0
    %14269 = vmatpush1.bf16.msra.mxu0 %v14236
    %14270 = vmatprep.subr.bf16.mxu0 0
    %14271 = vmatpush1.bf16.msra.mxu0 %v14237
    %14272 = vmatprep.subr.bf16.mxu0 0
    %14273 = vmatpush1.bf16.msra.mxu0 %v14238
    %14274 = vmatprep.subr.bf16.mxu0 0
    %14275 = vmatpush1.bf16.msra.mxu0 %v14239
    %14276 = vmatprep.subr.bf16.mxu0 0
    %14277 = vmatpush1.bf16.msra.mxu0 %v14240
    %14278 = vmatprep.subr.bf16.mxu0 0
    %14279 = vmatpush1.bf16.msra.mxu0 %v14241
    %14280 = vmatprep.subr.bf16.mxu0 0
    %14281 = vmatpush1.bf16.msra.mxu0 %v14242
    %14282 = vmatprep.subr.bf16.mxu0 0
    %14283 = vmatpush1.bf16.msra.mxu0 %v14243
    %14284 = vmatprep.subr.bf16.mxu0 0
    %14285 = vmatpush1.bf16.msra.mxu0 %v14244
    %14286 = vmatprep.subr.bf16.mxu0 0
    %14287 = vmatpush1.bf16.msra.mxu0 %v14245
    %14288 = vmatprep.subr.bf16.mxu0 0
    %14289 = vmatpush1.bf16.msra.mxu0 %v14246
    %14290 = vmatprep.subr.bf16.mxu0 0
    %14291 = vmatpush1.bf16.msra.mxu0 %v14247
    %14292 = vmatprep.subr.bf16.mxu0 0
    %14293 = vmatpush1.bf16.msra.mxu0 %v14248
    %14294 = vmatprep.subr.bf16.mxu0 0
    %14295 = vmatpush1.bf16.msra.mxu0 %v14249
    %14296 = vmatprep.subr.bf16.mxu0 0
    %14297 = vmatpush1.bf16.msra.mxu0 %v14250
    %14298 = vmatprep.subr.bf16.mxu0 0
    %14299 = vmatpush1.bf16.msra.mxu0 %v14251
    %14300 = vmatprep.mubr.bf16.mxu0 %v14132
    %14301 = vmatmul.mubr.bf16.gmra.mrb[0].mxu0 %v14131
    %v14302 = vpop.f32.mrb[0].mxu0
    %v14303 = vadd.f32 %v14170, %v14302
    %v14304 = vpop.f32.mrb[0].mxu0
    %v14305 = vpop.f32.mrb[0].mxu0
    %v14306 = vadd.f32 %v14170, %v14305
    %v14307 = vpop.f32.mrb[0].mxu0
    %14308 = vdwg.mxu0
    %v14309 = vmax.f32 %v14303, 0.0
    %v14310 = vmax.f32 %v14306, 0.0
    %v14311 = vpack.c.bf16 %v14310, %v14309
    %v14312 = vld [vmem:[#allocation17] sm:$0xf]
    %v14313 = vld [vmem:[#allocation17 + $0x4] sm:$0xf]
    %v14314 = vld [vmem:[#allocation17 + $0x8] sm:$0xf]
    %v14315 = vld [vmem:[#allocation17 + $0xc] sm:$0xf]
    %v14316 = vld [vmem:[#allocation17 + $0x10] sm:$0xf]
    %v14317 = vld [vmem:[#allocation17 + $0x14] sm:$0xf]
    %v14318 = vld [vmem:[#allocation17 + $0x18] sm:$0xf]
    %v14319 = vld [vmem:[#allocation17 + $0x1c] sm:$0xf]
    %v14320 = vld [vmem:[#allocation17 + $0x20] sm:$0xf]
    %v14321 = vld [vmem:[#allocation17 + $0x24] sm:$0xf]
    %v14322 = vld [vmem:[#allocation17 + $0x28] sm:$0xf]
    %v14323 = vld [vmem:[#allocation17 + $0x2c] sm:$0xf]
    %v14324 = vld [vmem:[#allocation17 + $0x30] sm:$0xf]
    %v14325 = vld [vmem:[#allocation17 + $0x34] sm:$0xf]
    %v14326 = vld [vmem:[#allocation17 + $0x38] sm:$0xf]
    %v14327 = vld [vmem:[#allocation17 + $0x3c] sm:$0xf]
    %v14328 = vld [vmem:[#allocation19] sm:$0x1]
    %v14330 = vlaneseq
    %v14331 = vshrl.u32 %v14330, 7
    %v14332 = vsub.s32 0, %v14331
    %v14333 = vrot.slane %v14328, %v14332
    %v14351 = vunpack.c.l.b16 %v14312
    %v14352 = vunpack.c.l.b16 %v14313
    %v14353 = vunpack.c.l.b16 %v14314
    %v14354 = vunpack.c.l.b16 %v14315
    %v14355 = vunpack.c.l.b16 %v14316
    %v14356 = vunpack.c.l.b16 %v14317
    %v14357 = vunpack.c.l.b16 %v14318
    %v14358 = vunpack.c.l.b16 %v14319
    %v14359 = vunpack.c.l.b16 %v14320
    %v14360 = vunpack.c.l.b16 %v14321
    %v14361 = vunpack.c.l.b16 %v14322
    %v14362 = vunpack.c.l.b16 %v14323
    %v14363 = vunpack.c.l.b16 %v14324
    %v14364 = vunpack.c.l.b16 %v14325
    %v14365 = vunpack.c.l.b16 %v14326
    %v14366 = vunpack.c.l.b16 %v14327
    %v14367 = vpack.c.b16 %v14352, %v14351
    %v14368 = vpack.c.b16 %v14354, %v14353
    %v14369 = vpack.c.b16 %v14356, %v14355
    %v14370 = vpack.c.b16 %v14358, %v14357
    %v14371 = vpack.c.b16 %v14360, %v14359
    %v14372 = vpack.c.b16 %v14362, %v14361
    %v14373 = vpack.c.b16 %v14364, %v14363
    %v14374 = vpack.c.b16 %v14366, %v14365
    %14383 = vmatprep.subr.bf16.mxu0 0
    %14384 = vmatpush1.bf16.msra.mxu0 %v14367
    %14385 = vmatprep.subr.bf16.mxu0 0
    %14386 = vmatpush1.bf16.msra.mxu0 %v14368
    %14387 = vmatprep.subr.bf16.mxu0 0
    %14388 = vmatpush1.bf16.msra.mxu0 %v14369
    %14389 = vmatprep.subr.bf16.mxu0 0
    %14390 = vmatpush1.bf16.msra.mxu0 %v14370
    %14391 = vmatprep.subr.bf16.mxu0 0
    %14392 = vmatpush1.bf16.msra.mxu0 %v14371
    %14393 = vmatprep.subr.bf16.mxu0 0
    %14394 = vmatpush1.bf16.msra.mxu0 %v14372
    %14395 = vmatprep.subr.bf16.mxu0 0
    %14396 = vmatpush1.bf16.msra.mxu0 %v14373
    %14397 = vmatprep.subr.bf16.mxu0 0
    %14398 = vmatpush1.bf16.msra.mxu0 %v14374
    %14399 = vmatprep.subr.bf16.mxu0 0
    %14400 = vmatpush1.bf16.msra.mxu0 0
    %14401 = vmatprep.subr.bf16.mxu0 0
    %14402 = vmatpush1.bf16.msra.mxu0 0
    %14403 = vmatprep.subr.bf16.mxu0 0
    %14404 = vmatpush1.bf16.msra.mxu0 0
    %14405 = vmatprep.subr.bf16.mxu0 0
    %14406 = vmatpush1.bf16.msra.mxu0 0
    %14407 = vmatprep.subr.bf16.mxu0 0
    %14408 = vmatpush1.bf16.msra.mxu0 0
    %14409 = vmatprep.subr.bf16.mxu0 0
    %14410 = vmatpush1.bf16.msra.mxu0 0
    %14411 = vmatprep.subr.bf16.mxu0 0
    %14412 = vmatpush1.bf16.msra.mxu0 0
    %14413 = vmatprep.subr.bf16.mxu0 0
    %14414 = vmatpush1.bf16.msra.mxu0 0
    %14415 = vmatprep.mubr.bf16.mxu0 0
    %14416 = vmatmul.mubr.bf16.gmra.mrb[0].mxu0 %v14311
    %v14417 = vpop.f32.mrb[0].mxu0
    %v14418 = vadd.f32 %v14333, %v14417
    %v14419 = vpop.f32.mrb[0].mxu0
    %v14420 = vpop.f32.mrb[0].mxu0
    %v14421 = vadd.f32 %v14333, %v14420
    %v14422 = vpop.f32.mrb[0].mxu0
    %14423 = vdwg.mxu0
    %v14424 = vmax.f32 %v14418, 0.0
    %v14425 = vmax.f32 %v14421, 0.0
    %v14426 = vpack.c.bf16 %v14425, %v14424
    %v14427 = vld [vmem:[#allocation20] sm:$0xf]
    %v14428 = vld [vmem:[#allocation20 + $0x4] sm:$0xf]
    %v14429 = vld [vmem:[#allocation20 + $0x8] sm:$0xf]
    %v14430 = vld [vmem:[#allocation20 + $0xc] sm:$0xf]
    %v14431 = vld [vmem:[#allocation20 + $0x10] sm:$0xf]
    %v14432 = vld [vmem:[#allocation20 + $0x14] sm:$0xf]
    %v14433 = vld [vmem:[#allocation20 + $0x18] sm:$0xf]
    %v14434 = vld [vmem:[#allocation20 + $0x1c] sm:$0xf]
    %v14435 = vld [vmem:[#allocation20 + $0x20] sm:$0xf]
    %v14436 = vld [vmem:[#allocation20 + $0x24] sm:$0xf]
    %v14437 = vld [vmem:[#allocation20 + $0x28] sm:$0xf]
    %v14438 = vld [vmem:[#allocation20 + $0x2c] sm:$0xf]
    %v14439 = vld [vmem:[#allocation20 + $0x30] sm:$0xf]
    %v14440 = vld [vmem:[#allocation20 + $0x34] sm:$0xf]
    %v14441 = vld [vmem:[#allocation20 + $0x38] sm:$0xf]
    %v14442 = vld [vmem:[#allocation20 + $0x3c] sm:$0xf]
    %v14443 = vld [vmem:[#allocation22] sm:$0x1]
    %v14445 = vlaneseq
    %v14446 = vshrl.u32 %v14445, 7
    %v14447 = vsub.s32 0, %v14446
    %v14448 = vrot.slane %v14443, %v14447
    %v14466 = vunpack.c.l.b16 %v14427
    %v14467 = vunpack.c.l.b16 %v14428
    %v14468 = vunpack.c.l.b16 %v14429
    %v14469 = vunpack.c.l.b16 %v14430
    %v14470 = vunpack.c.l.b16 %v14431
    %v14471 = vunpack.c.l.b16 %v14432
    %v14472 = vunpack.c.l.b16 %v14433
    %v14473 = vunpack.c.l.b16 %v14434
    %v14474 = vunpack.c.l.b16 %v14435
    %v14475 = vunpack.c.l.b16 %v14436
    %v14476 = vunpack.c.l.b16 %v14437
    %v14477 = vunpack.c.l.b16 %v14438
    %v14478 = vunpack.c.l.b16 %v14439
    %v14479 = vunpack.c.l.b16 %v14440
    %v14480 = vunpack.c.l.b16 %v14441
    %v14481 = vunpack.c.l.b16 %v14442
    %v14482 = vpack.c.b16 %v14467, %v14466
    %v14483 = vpack.c.b16 %v14469, %v14468
    %v14484 = vpack.c.b16 %v14471, %v14470
    %v14485 = vpack.c.b16 %v14473, %v14472
    %v14486 = vpack.c.b16 %v14475, %v14474
    %v14487 = vpack.c.b16 %v14477, %v14476
    %v14488 = vpack.c.b16 %v14479, %v14478
    %v14489 = vpack.c.b16 %v14481, %v14480
    %14498 = vmatprep.subr.bf16.mxu0 0
    %14499 = vmatpush1.bf16.msra.mxu0 %v14482
    %14500 = vmatprep.subr.bf16.mxu0 0
    %14501 = vmatpush1.bf16.msra.mxu0 %v14483
    %14502 = vmatprep.subr.bf16.mxu0 0
    %14503 = vmatpush1.bf16.msra.mxu0 %v14484
    %14504 = vmatprep.subr.bf16.mxu0 0
    %14505 = vmatpush1.bf16.msra.mxu0 %v14485
    %14506 = vmatprep.subr.bf16.mxu0 0
    %14507 = vmatpush1.bf16.msra.mxu0 %v14486
    %14508 = vmatprep.subr.bf16.mxu0 0
    %14509 = vmatpush1.bf16.msra.mxu0 %v14487
    %14510 = vmatprep.subr.bf16.mxu0 0
    %14511 = vmatpush1.bf16.msra.mxu0 %v14488
    %14512 = vmatprep.subr.bf16.mxu0 0
    %14513 = vmatpush1.bf16.msra.mxu0 %v14489
    %14514 = vmatprep.subr.bf16.mxu0 0
    %14515 = vmatpush1.bf16.msra.mxu0 0
    %14516 = vmatprep.subr.bf16.mxu0 0
    %14517 = vmatpush1.bf16.msra.mxu0 0
    %14518 = vmatprep.subr.bf16.mxu0 0
    %14519 = vmatpush1.bf16.msra.mxu0 0
    %14520 = vmatprep.subr.bf16.mxu0 0
    %14521 = vmatpush1.bf16.msra.mxu0 0
    %14522 = vmatprep.subr.bf16.mxu0 0
    %14523 = vmatpush1.bf16.msra.mxu0 0
    %14524 = vmatprep.subr.bf16.mxu0 0
    %14525 = vmatpush1.bf16.msra.mxu0 0
    %14526 = vmatprep.subr.bf16.mxu0 0
    %14527 = vmatpush1.bf16.msra.mxu0 0
    %14528 = vmatprep.subr.bf16.mxu0 0
    %14529 = vmatpush1.bf16.msra.mxu0 0
    %14530 = vmatprep.mubr.bf16.mxu0 0
    %14531 = vmatmul.mubr.bf16.gmra.mrb[0].mxu0 %v14426
    %v14532 = vpop.f32.mrb[0].mxu0
    %v14533 = vadd.f32 %v14448, %v14532
    %v14534 = vpop.f32.mrb[0].mxu0
    %v14535 = vpop.f32.mrb[0].mxu0
    %v14536 = vadd.f32 %v14448, %v14535
    %v14537 = vpop.f32.mrb[0].mxu0
    %14538 = vdwg.mxu0
    %v14539 = vmax.f32 %v14533, 0.0
    %v14540 = vmax.f32 %v14536, 0.0
    %v14541 = vpack.c.bf16 %v14540, %v14539
    %v14542 = vld [vmem:[#allocation23] sm:$0xf]
    %v14543 = vld [vmem:[#allocation23 + $0x4] sm:$0xf]
    %v14544 = vld [vmem:[#allocation23 + $0x8] sm:$0xf]
    %v14545 = vld [vmem:[#allocation23 + $0xc] sm:$0xf]
    %v14546 = vld [vmem:[#allocation23 + $0x10] sm:$0xf]
    %v14547 = vld [vmem:[#allocation23 + $0x14] sm:$0xf]
    %v14548 = vld [vmem:[#allocation23 + $0x18] sm:$0xf]
    %v14549 = vld [vmem:[#allocation23 + $0x1c] sm:$0xf]
    %v14550 = vld [vmem:[#allocation23 + $0x20] sm:$0xf]
    %v14551 = vld [vmem:[#allocation23 + $0x24] sm:$0xf]
    %v14552 = vld [vmem:[#allocation23 + $0x28] sm:$0xf]
    %v14553 = vld [vmem:[#allocation23 + $0x2c] sm:$0xf]
    %v14554 = vld [vmem:[#allocation23 + $0x30] sm:$0xf]
    %v14555 = vld [vmem:[#allocation23 + $0x34] sm:$0xf]
    %v14556 = vld [vmem:[#allocation23 + $0x38] sm:$0xf]
    %v14557 = vld [vmem:[#allocation23 + $0x3c] sm:$0xf]
    %v14558 = vld [vmem:[#allocation25] sm:$0x1]
    %v14560 = vlaneseq
    %v14561 = vshrl.u32 %v14560, 7
    %v14562 = vsub.s32 0, %v14561
    %v14563 = vrot.slane %v14558, %v14562
    %v14581 = vunpack.c.l.b16 %v14542
    %v14582 = vunpack.c.l.b16 %v14543
    %v14583 = vunpack.c.l.b16 %v14544
    %v14584 = vunpack.c.l.b16 %v14545
    %v14585 = vunpack.c.l.b16 %v14546
    %v14586 = vunpack.c.l.b16 %v14547
    %v14587 = vunpack.c.l.b16 %v14548
    %v14588 = vunpack.c.l.b16 %v14549
    %v14589 = vunpack.c.l.b16 %v14550
    %v14590 = vunpack.c.l.b16 %v14551
    %v14591 = vunpack.c.l.b16 %v14552
    %v14592 = vunpack.c.l.b16 %v14553
    %v14593 = vunpack.c.l.b16 %v14554
    %v14594 = vunpack.c.l.b16 %v14555
    %v14595 = vunpack.c.l.b16 %v14556
    %v14596 = vunpack.c.l.b16 %v14557
    %v14597 = vpack.c.b16 %v14582, %v14581
    %v14598 = vpack.c.b16 %v14584, %v14583
    %v14599 = vpack.c.b16 %v14586, %v14585
    %v14600 = vpack.c.b16 %v14588, %v14587
    %v14601 = vpack.c.b16 %v14590, %v14589
    %v14602 = vpack.c.b16 %v14592, %v14591
    %v14603 = vpack.c.b16 %v14594, %v14593
    %v14604 = vpack.c.b16 %v14596, %v14595
    %14613 = vmatprep.subr.bf16.mxu0 0
    %14614 = vmatpush1.bf16.msra.mxu0 %v14597
    %14615 = vmatprep.subr.bf16.mxu0 0
    %14616 = vmatpush1.bf16.msra.mxu0 %v14598
    %14617 = vmatprep.subr.bf16.mxu0 0
    %14618 = vmatpush1.bf16.msra.mxu0 %v14599
    %14619 = vmatprep.subr.bf16.mxu0 0
    %14620 = vmatpush1.bf16.msra.mxu0 %v14600
    %14621 = vmatprep.subr.bf16.mxu0 0
    %14622 = vmatpush1.bf16.msra.mxu0 %v14601
    %14623 = vmatprep.subr.bf16.mxu0 0
    %14624 = vmatpush1.bf16.msra.mxu0 %v14602
    %14625 = vmatprep.subr.bf16.mxu0 0
    %14626 = vmatpush1.bf16.msra.mxu0 %v14603
    %14627 = vmatprep.subr.bf16.mxu0 0
    %14628 = vmatpush1.bf16.msra.mxu0 %v14604
    %14629 = vmatprep.subr.bf16.mxu0 0
    %14630 = vmatpush1.bf16.msra.mxu0 0
    %14631 = vmatprep.subr.bf16.mxu0 0
    %14632 = vmatpush1.bf16.msra.mxu0 0
    %14633 = vmatprep.subr.bf16.mxu0 0
    %14634 = vmatpush1.bf16.msra.mxu0 0
    %14635 = vmatprep.subr.bf16.mxu0 0
    %14636 = vmatpush1.bf16.msra.mxu0 0
    %14637 = vmatprep.subr.bf16.mxu0 0
    %14638 = vmatpush1.bf16.msra.mxu0 0
    %14639 = vmatprep.subr.bf16.mxu0 0
    %14640 = vmatpush1.bf16.msra.mxu0 0
    %14641 = vmatprep.subr.bf16.mxu0 0
    %14642 = vmatpush1.bf16.msra.mxu0 0
    %14643 = vmatprep.subr.bf16.mxu0 0
    %14644 = vmatpush1.bf16.msra.mxu0 0
    %14645 = vmatprep.mubr.bf16.mxu0 0
    %14646 = vmatmul.mubr.bf16.gmra.mrb[0].mxu0 %v14541
    %v14647 = vpop.f32.mrb[0].mxu0
    %v14648 = vadd.f32 %v14563, %v14647
    %v14649 = vpop.f32.mrb[0].mxu0
    %v14650 = vpop.f32.mrb[0].mxu0
    %v14651 = vadd.f32 %v14563, %v14650
    %v14652 = vpop.f32.mrb[0].mxu0
    %14653 = vdwg.mxu0
    %14654 = vst [vmem:[#allocation26] sm:$0xff] %v14648
    %14655 = vst [vmem:[#allocation26 + $0x8] sm:$0xff] %v14651
    // Predicated region
    $region122: #{tpu_custom_call.1} parent=1 // pred_check
      _
    $region123: #{tpu_custom_call.1} parent=1 // pred_check_branch
      %14657 = sbr.rel (0) target = $region125
    $region124: #{tpu_custom_call.1} parent=1 // pred_region
      %s14659 = ssub.s32 256, 256
      %14660 = vsyncadd [#allocation4], %s14659
      %s14661 = sshll.u32 [#allocation26], 4
      %s14662 = int_to_ptr.vmem [resolvable:$true] %s14661
      %14667 = dma.vmem_to_hbm [thread:$0]  %s14662, 256, %s15, [#allocation4], 128, 128, 8
    $region125: #{tpu_custom_call.1} parent=1 // pred_fallthru
      _
    // Predicated region
    $region126: #{tpu_custom_call.1} parent=1 // pred_check
      _
    $region127: #{tpu_custom_call.1} parent=1 // pred_check_branch
      %14669 = sbr.rel (0) target = $region129
    $region128: #{tpu_custom_call.1} parent=1 // pred_region
      %14670 = dma.done [#allocation4], 256
    $region129: #{tpu_custom_call.1} parent=1 // pred_fallthru
      _
    %14671 = vsyncpa [#allocation3], 1
    %14672 = vsyncpa [#allocation6], 1
    %14673 = vsyncpa [#allocation9], 1
    %14674 = vsyncpa [#allocation12], 1
    %14675 = vsyncpa [#allocation15], 1
    %14676 = vsyncpa [#allocation18], 1
    %14677 = vsyncpa [#allocation21], 1
    %14678 = vsyncpa [#allocation24], 1
    %14679 = vsyncpa [#allocation4], 1

</llo_original>
